<compile_context>
chip_gen: v7x
topology: tpu7x:2x2x1
jax: 0.10.0
libtpu: 0.0.40
codegen_flags: <defaults>
</compile_context>

<pallas_src>
import functools

import jax
import jax.numpy as jnp
from jax.experimental import pallas as pl
from jax.experimental.pallas import tpu as pltpu

EPS = 1e-5
LANE = 128                        # lane-dense channel padding / out-channel tile
VMEM_LIMIT = 32 * 1024 * 1024     # safe on v5e/v6e (128 MiB) and v7x (64 MiB)


def _round_up(x, m):
    return (x + m - 1) // m * m


def _pick_row_tile(m):
    """Largest tile (multiple of 8) dividing m, preferring big tiles."""
    for t in (1024, 512, 256, 128, 64, 32, 16, 8):
        if m % t == 0:
            return t
    return m


# ---------------------------------------------------------------------------
# In-kernel helpers
# ---------------------------------------------------------------------------
def _write_stats(st_ref, y):
    """st_ref: (2, C) <- per-channel [sum, sum-of-squares] of y (rows, C)."""
    st_ref[0:1, :] = jnp.sum(y, axis=0, keepdims=True)
    st_ref[1:2, :] = jnp.sum(y * y, axis=0, keepdims=True)


def _conv3x3_from_guarded(src_ref, ml, mr, w_ref, *, HW, W, P):
    """3x3 / stride-1 / pad-1 conv from a flattened, zero-guarded activation.

    src_ref : (G, Cin) row-major flattened image; rows [P, P+HW) hold the data,
              with >= W+1 zero guard rows before and after (P multiple of 8).
    ml, mr  : (HW, 1) {0,1} masks killing rows whose left/right neighbour would
              wrap across the image width.
    w_ref   : (9, Cin, TN) taps in (kh, kw) row-major order.
    Returns the (HW, TN) f32 accumulator and the (unshifted) centre slice.
    """
    acc = None
    center = None
    for t in range(9):
        dh, dw = divmod(t, 3)
        off = P + (dh - 1) * W + (dw - 1)
        xt = src_ref[off:off + HW, :]          # contiguous row-shifted slice
        if t == 4:
            center = xt                        # the unpadded image itself
        if dw == 0:
            xt = xt * ml
        elif dw == 2:
            xt = xt * mr
        part = jnp.dot(xt, w_ref[t], preferred_element_type=jnp.float32)
        acc = part if acc is None else acc + part
    return acc, center


# ---------------------------------------------------------------------------
# Kernel 1: conv1 (+ skip 1x1-conv statistics). Bias dropped (cancelled by BN).
# ---------------------------------------------------------------------------
def _conv1_kernel(xg_ref, ml_ref, mr_ref, w1_ref, c1_ref, st1_ref, *, HW, W, P):
    acc, _ = _conv3x3_from_guarded(xg_ref, ml_ref[...], mr_ref[...], w1_ref,
                                   HW=HW, W=W, P=P)
    c1_ref[...] = acc
    _write_stats(st1_ref, acc)


def _conv1_proj_kernel(xg_ref, ml_ref, mr_ref, w1_ref, ws_ref,
                       c1_ref, st1_ref, sts_ref, *, HW, W, P):
    acc, x_center = _conv3x3_from_guarded(xg_ref, ml_ref[...], mr_ref[...],
                                          w1_ref, HW=HW, W=W, P=P)
    c1_ref[...] = acc
    _write_stats(st1_ref, acc)
    # 1x1 projection conv: only its BN statistics are needed here; the (cheap)
    # projection itself is recomputed in the tail kernel instead of being
    # round-tripped through HBM.
    s = jnp.dot(x_center, ws_ref[...], preferred_element_type=jnp.float32)
    _write_stats(sts_ref, s)


# ---------------------------------------------------------------------------
# Kernel 2: BN1-apply + ReLU (fused on load) -> conv2 (+ BN2 statistics)
# ---------------------------------------------------------------------------
def _conv2_kernel(c1_ref, sc1_ref, sh1_ref, ml_ref, mr_ref, w2_ref,
                  c2_ref, st2_ref, hg_ref, *, HW, W, P):
    # Build the zero-guarded flattened relu(BN1(c1)) activation once per image
    # (first output-channel block); it stays resident in VMEM scratch for the
    # remaining output-channel blocks of the same image.
    @pl.when(pl.program_id(1) == 0)
    def _():
        hg_ref[...] = jnp.zeros_like(hg_ref)
        hg_ref[P:P + HW, :] = jnp.maximum(
            c1_ref[...] * sc1_ref[...] + sh1_ref[...], 0.0)

    acc, _ = _conv3x3_from_guarded(hg_ref, ml_ref[...], mr_ref[...], w2_ref,
                                   HW=HW, W=W, P=P)
    c2_ref[...] = acc
    _write_stats(st2_ref, acc)


# ---------------------------------------------------------------------------
# Kernel 3: BN2-apply + skip (identity | recomputed 1x1 conv + BN) + add + ReLU
# ---------------------------------------------------------------------------
def _tail_proj_kernel(c2_ref, x_ref, ws_ref, sc2_ref, sh2_ref, scs_ref,
                      shs_ref, o_ref):
    y = c2_ref[...] * sc2_ref[...] + sh2_ref[...]
    s = jnp.dot(x_ref[...], ws_ref[...], preferred_element_type=jnp.float32)
    o_ref[...] = jnp.maximum(y + s * scs_ref[...] + shs_ref[...], 0.0)


def _tail_identity_kernel(c2_ref, x_ref, sc2_ref, sh2_ref, o_ref):
    y = c2_ref[...] * sc2_ref[...] + sh2_ref[...]
    o_ref[...] = jnp.maximum(y + x_ref[...], 0.0)


# ---------------------------------------------------------------------------
# pallas_call wrappers
# ---------------------------------------------------------------------------
def _conv1_call(xg, mask_l, mask_r, w1, ws, *, HW, W, P, TN):
    N, G, Cin = xg.shape
    Cout = w1.shape[-1]
    nj = Cout // TN
    in_specs = [
        pl.BlockSpec((None, G, Cin), lambda n, j: (n, 0, 0)),
        pl.BlockSpec((HW, 1), lambda n, j: (0, 0)),
        pl.BlockSpec((HW, 1), lambda n, j: (0, 0)),
        pl.BlockSpec((9, Cin, TN), lambda n, j: (0, 0, j)),
    ]
    out_specs = [
        pl.BlockSpec((None, HW, TN), lambda n, j: (n, 0, j)),
        pl.BlockSpec((None, 2, TN), lambda n, j: (n, 0, j)),
    ]
    out_shape = [
        jax.ShapeDtypeStruct((N, HW, Cout), jnp.float32),
        jax.ShapeDtypeStruct((N, 2, Cout), jnp.float32),
    ]
    args = [xg, mask_l, mask_r, w1]
    if ws is not None:
        kernel = functools.partial(_conv1_proj_kernel, HW=HW, W=W, P=P)
        in_specs.append(pl.BlockSpec((Cin, TN), lambda n, j: (0, j)))
        out_specs.append(pl.BlockSpec((None, 2, TN), lambda n, j: (n, 0, j)))
        out_shape.append(jax.ShapeDtypeStruct((N, 2, Cout), jnp.float32))
        args.append(ws)
    else:
        kernel = functools.partial(_conv1_kernel, HW=HW, W=W, P=P)
    return pl.pallas_call(
        kernel,
        grid=(N, nj),
        in_specs=in_specs,
        out_specs=out_specs,
        out_shape=out_shape,
        compiler_params=pltpu.CompilerParams(
            dimension_semantics=("parallel", "arbitrary"),
            vmem_limit_bytes=VMEM_LIMIT,
        ),
    )(*args)


def _conv2_call(c1, scale1, shift1, mask_l, mask_r, w2, *, HW, W, P, G, TN):
    N, _, Cin = c1.shape
    Cout = w2.shape[-1]
    nj = Cout // TN
    kernel = functools.partial(_conv2_kernel, HW=HW, W=W, P=P)
    return pl.pallas_call(
        kernel,
        grid=(N, nj),
        in_specs=[
            pl.BlockSpec((None, HW, Cin), lambda n, j: (n, 0, 0)),
            pl.BlockSpec((1, Cin), lambda n, j: (0, 0)),
            pl.BlockSpec((1, Cin), lambda n, j: (0, 0)),
            pl.BlockSpec((HW, 1), lambda n, j: (0, 0)),
            pl.BlockSpec((HW, 1), lambda n, j: (0, 0)),
            pl.BlockSpec((9, Cin, TN), lambda n, j: (0, 0, j)),
        ],
        out_specs=[
            pl.BlockSpec((None, HW, TN), lambda n, j: (n, 0, j)),
            pl.BlockSpec((None, 2, TN), lambda n, j: (n, 0, j)),
        ],
        out_shape=[
            jax.ShapeDtypeStruct((N, HW, Cout), jnp.float32),
            jax.ShapeDtypeStruct((N, 2, Cout), jnp.float32),
        ],
        scratch_shapes=[pltpu.VMEM((G, Cin), jnp.float32)],
        compiler_params=pltpu.CompilerParams(
            dimension_semantics=("parallel", "arbitrary"),
            vmem_limit_bytes=VMEM_LIMIT,
        ),
    )(c1, scale1, shift1, mask_l, mask_r, w2)


def _tail_call(c2f, xf, ws, scale2, shift2, scale_s, shift_s):
    M, Cout = c2f.shape
    Cin = xf.shape[-1]
    TM = _pick_row_tile(M)

    def vec_spec():
        return pl.BlockSpec((1, Cout), lambda i: (0, 0))

    if ws is not None:
        kernel = _tail_proj_kernel
        in_specs = [
            pl.BlockSpec((TM, Cout), lambda i: (i, 0)),
            pl.BlockSpec((TM, Cin), lambda i: (i, 0)),
            pl.BlockSpec((Cin, Cout), lambda i: (0, 0)),
            vec_spec(), vec_spec(), vec_spec(), vec_spec(),
        ]
        args = (c2f, xf, ws, scale2, shift2, scale_s, shift_s)
    else:
        kernel = _tail_identity_kernel
        in_specs = [
            pl.BlockSpec((TM, Cout), lambda i: (i, 0)),
            pl.BlockSpec((TM, Cin), lambda i: (i, 0)),
            vec_spec(), vec_spec(),
        ]
        args = (c2f, xf, scale2, shift2)
    return pl.pallas_call(
        kernel,
        grid=(M // TM,),
        in_specs=in_specs,
        out_specs=pl.BlockSpec((TM, Cout), lambda i: (i, 0)),
        out_shape=jax.ShapeDtypeStruct((M, Cout), jnp.float32),
        compiler_params=pltpu.CompilerParams(
            dimension_semantics=("parallel",),
            vmem_limit_bytes=VMEM_LIMIT,
        ),
    )(*args)


# ---------------------------------------------------------------------------
# XLA glue: BN finalize (O(C) work) and the ResBlk forward
# ---------------------------------------------------------------------------
def _bn_scale_shift(stats, gamma, beta, count):
    """stats: (N, 2, C) per-image [sum, sum_sq].  Returns (1, C) scale/shift so
    that training-mode BN(x) == x * scale + shift (biased var, eps=1e-5)."""
    s = jnp.sum(stats[:, 0, :], axis=0)
    q = jnp.sum(stats[:, 1, :], axis=0)
    mean = s / count
    var = jnp.maximum(q / count - mean * mean, 0.0)
    scale = gamma * jax.lax.rsqrt(var + EPS)
    shift = beta - mean * scale
    return scale.reshape(1, -1), shift.reshape(1, -1)


def resblk_forward(x_nchw, params):
    N, C_in, H, W = x_nchw.shape
    C_out = params["w1"].shape[-1]
    has_proj = C_in != C_out
    Cp_in, Cp_out = _round_up(C_in, LANE), _round_up(C_out, LANE)
    TN = LANE
    HW = H * W
    M = N * HW
    # zero guard rows before/after the flattened image (>= W + 1, 8-aligned)
    P = _round_up(W + 1, 8)
    Q = _round_up(W + 1, 8)
    G = P + HW + Q

    # ---- layout / padding (cheap XLA glue; all pads are zeros) --------------
    x = jnp.transpose(x_nchw, (0, 2, 3, 1)).astype(jnp.float32)       # NHWC
    x = jnp.pad(x, ((0, 0), (0, 0), (0, 0), (0, Cp_in - C_in)))       # lane pad
    xflat = x.reshape(N, HW, Cp_in)
    xg = jnp.pad(xflat, ((0, 0), (P, Q), (0, 0)))                     # guards

    # column-wrap masks for the width +-1 taps
    w_idx = jnp.arange(HW, dtype=jnp.int32) % W
    mask_l = (w_idx != 0).astype(jnp.float32).reshape(HW, 1)
    mask_r = (w_idx != W - 1).astype(jnp.float32).reshape(HW, 1)

    def pad_w(w, ci, co):
        return jnp.pad(w, ((0, 0), (0, 0), (0, ci - w.shape[2]),
                           (0, co - w.shape[3])))

    def pad_c(v, c):
        return jnp.pad(v, (0, c - v.shape[0]))

    w1 = pad_w(params["w1"], Cp_in, Cp_out).reshape(9, Cp_in, Cp_out)
    w2 = pad_w(params["w2"], Cp_out, Cp_out).reshape(9, Cp_out, Cp_out)
    g1, be1 = pad_c(params["g1"], Cp_out), pad_c(params["be1"], Cp_out)
    g2, be2 = pad_c(params["g2"], Cp_out), pad_c(params["be2"], Cp_out)
    ws = None
    if has_proj:
        ws = jnp.pad(params["ws"].reshape(C_in, C_out),
                     ((0, Cp_in - C_in), (0, Cp_out - C_out)))
        gs, bes = pad_c(params["gs"], Cp_out), pad_c(params["bes"], Cp_out)
    # NOTE: conv biases (b1/b2/bs) are intentionally unused: BN(x + b) == BN(x).

    # ---- kernel 1: conv1 (+ skip-conv statistics) ----------------------------
    if has_proj:
        c1, st1, sts = _conv1_call(xg, mask_l, mask_r, w1, ws,
                                   HW=HW, W=W, P=P, TN=TN)
    else:
        c1, st1 = _conv1_call(xg, mask_l, mask_r, w1, None,
                              HW=HW, W=W, P=P, TN=TN)
    scale1, shift1 = _bn_scale_shift(st1, g1, be1, M)

    # ---- kernel 2: BN1 + ReLU (fused) -> conv2 -------------------------------
    c2, st2 = _conv2_call(c1, scale1, shift1, mask_l, mask_r, w2,
                          HW=HW, W=W, P=P, G=G, TN=TN)
    scale2, shift2 = _bn_scale_shift(st2, g2, be2, M)

    # ---- kernel 3: BN2 + skip + add + ReLU -----------------------------------
    if has_proj:
        scale_s, shift_s = _bn_scale_shift(sts, gs, bes, M)
        out = _tail_call(c2.reshape(M, Cp_out), xflat.reshape(M, Cp_in), ws,
                         scale2, shift2, scale_s, shift_s)
    else:
        out = _tail_call(c2.reshape(M, Cp_out), xflat.reshape(M, Cp_in), None,
                         scale2, shift2, None, None)

    out = out.reshape(N, H, W, Cp_out)[:, :, :, :C_out]
    return jnp.transpose(out, (0, 3, 1, 2))                           # NCHW


# ---------------------------------------------------------------------------
# Pure-JAX reference (faithful to the PyTorch module, incl. conv biases)
# ---------------------------------------------------------------------------
def resblk_reference(x_nchw, params):
    x = jnp.transpose(x_nchw, (0, 2, 3, 1))

    def conv(h, w_hwio, b, pad):
        y = jax.lax.conv_general_dilated(
            h, w_hwio, (1, 1), ((pad, pad), (pad, pad)),
            dimension_numbers=("NHWC", "HWIO", "NHWC"),
            precision=jax.lax.Precision.HIGHEST)
        return y + b

    def bn(h, g, b):
        mean = h.mean(axis=(0, 1, 2), keepdims=True)
        var = ((h - mean) ** 2).mean(axis=(0, 1, 2), keepdims=True)
        return (h - mean) * jax.lax.rsqrt(var + EPS) * g + b

    h = jax.nn.relu(bn(conv(x, params["w1"], params["b1"], 1),
                       params["g1"], params["be1"]))
    o = bn(conv(h, params["w2"], params["b2"], 1), params["g2"], params["be2"])
    if params["w1"].shape[2] != params["w1"].shape[3]:
        skip = bn(conv(x, params["ws"], params["bs"], 0),
                  params["gs"], params["bes"])
    else:
        skip = x
    return jnp.transpose(jax.nn.relu(o + skip), (0, 3, 1, 2))


def init_params(key, ch_in, ch_out):
    ks = jax.random.split(key, 12)
    p = {
        # conv weights stored HWIO (kh, kw, c_in, c_out); biases only feed the
        # reference (they cancel exactly under training-mode BatchNorm).
        "w1": jax.random.normal(ks[0], (3, 3, ch_in, ch_out), jnp.float32) * 0.1,
        "b1": jax.random.normal(ks[1], (ch_out,), jnp.float32) * 0.1,
        "g1": 1.0 + 0.1 * jax.random.normal(ks[2], (ch_out,), jnp.float32),
        "be1": 0.1 * jax.random.normal(ks[3], (ch_out,), jnp.float32),
        "w2": jax.random.normal(ks[4], (3, 3, ch_out, ch_out), jnp.float32) * 0.1,
        "b2": jax.random.normal(ks[5], (ch_out,), jnp.float32) * 0.1,
        "g2": 1.0 + 0.1 * jax.random.normal(ks[6], (ch_out,), jnp.float32),
        "be2": 0.1 * jax.random.normal(ks[7], (ch_out,), jnp.float32),
    }
    if ch_in != ch_out:
        p.update(
            ws=jax.random.normal(ks[8], (1, 1, ch_in, ch_out), jnp.float32) * 0.1,
            bs=jax.random.normal(ks[9], (ch_out,), jnp.float32) * 0.1,
            gs=1.0 + 0.1 * jax.random.normal(ks[10], (ch_out,), jnp.float32),
            bes=0.1 * jax.random.normal(ks[11], (ch_out,), jnp.float32),
        )
    return p


if __name__ == "__main__":
    key = jax.random.PRNGKey(0)
    kx, kp1, kp2 = jax.random.split(key, 3)

    N, CH_IN, CH_OUT, H, W = 2, 4, 8, 16, 16
    fwd = jax.jit(resblk_forward)
    ref_fn = jax.jit(resblk_reference)

    # case 1: ch_in != ch_out  (1x1-conv + BN projection skip)
    x = jax.random.normal(kx, (N, CH_IN, H, W), jnp.float32)
    params = init_params(kp1, CH_IN, CH_OUT)
    out = jax.block_until_ready(fwd(x, params))
    ref = jax.block_until_ready(ref_fn(x, params))
    assert out.shape == (N, CH_OUT, H, W)
    err = float(jnp.max(jnp.abs(out - ref)))
    assert jnp.allclose(out, ref, rtol=1e-3, atol=1e-3), err

    # case 2: ch_in == ch_out  (identity skip)
    x2 = jax.random.normal(kx, (N, CH_OUT, H, W), jnp.float32)
    params2 = init_params(kp2, CH_OUT, CH_OUT)
    out2 = jax.block_until_ready(fwd(x2, params2))
    ref2 = jax.block_until_ready(ref_fn(x2, params2))
    err2 = float(jnp.max(jnp.abs(out2 - ref2)))
    assert jnp.allclose(out2, ref2, rtol=1e-3, atol=1e-3), err2

    print("KERNEL_OK")
</pallas_src>

<mosaic_0001>
module attributes {stable_mosaic.version = 11 : i64} {
  func.func @_conv1_proj_kernel(%arg0: i32, %arg1: i32, %arg2: memref<1x304x128xf32, #tpu.memory_space<vmem>>, %arg3: memref<256x1xf32, #tpu.memory_space<vmem>>, %arg4: memref<256x1xf32, #tpu.memory_space<vmem>>, %arg5: memref<9x128x128xf32, #tpu.memory_space<vmem>>, %arg6: memref<128x128xf32, #tpu.memory_space<vmem>>, %arg7: memref<1x256x128xf32, #tpu.memory_space<vmem>>, %arg8: memref<1x2x128xf32, #tpu.memory_space<vmem>>, %arg9: memref<1x2x128xf32, #tpu.memory_space<vmem>>) attributes {dimension_semantics = [#tpu.dimension_semantics<parallel>, #tpu.dimension_semantics<arbitrary>], iteration_bounds = array<i64: 2, 1>, scalar_prefetch = 0 : i64, scratch_operands = 0 : i64, tpu.core_type = #tpu.core_type<tc>, window_params = [{transform_indices = @transform_0, window_bounds = array<i64: 1, 304, 128>}, {pipeline_mode = #tpu.pipeline_mode<synchronous>, transform_indices = @transform_1, window_bounds = array<i64: 256, 1>}, {pipeline_mode = #tpu.pipeline_mode<synchronous>, transform_indices = @transform_2, window_bounds = array<i64: 256, 1>}, {transform_indices = @transform_3, window_bounds = array<i64: 9, 128, 128>}, {transform_indices = @transform_4, window_bounds = array<i64: 128, 128>}, {transform_indices = @transform_5, window_bounds = array<i64: 1, 256, 128>}, {transform_indices = @transform_6, window_bounds = array<i64: 1, 2, 128>}, {transform_indices = @transform_7, window_bounds = array<i64: 1, 2, 128>}]} {
    %c0 = arith.constant 0 : index
    %c0_0 = arith.constant 0 : index
    %0 = vector.load %arg3[%c0, %c0_0] : memref<256x1xf32, #tpu.memory_space<vmem>>, vector<256x1xf32>
    %c0_1 = arith.constant 0 : index
    %c0_2 = arith.constant 0 : index
    %1 = vector.load %arg4[%c0_1, %c0_2] : memref<256x1xf32, #tpu.memory_space<vmem>>, vector<256x1xf32>
    %c0_3 = arith.constant 0 : index
    %c7 = arith.constant 7 : index
    %c0_4 = arith.constant 0 : index
    %2 = vector.load %arg2[%c0_3, %c7, %c0_4] : memref<1x304x128xf32, #tpu.memory_space<vmem>>, vector<1x256x128xf32>
    %3 = vector.shape_cast %2 : vector<1x256x128xf32> to vector<256x128xf32>
    %4 = vector.broadcast %0 : vector<256x1xf32> to vector<256x128xf32>
    %5 = arith.mulf %3, %4 : vector<256x128xf32>
    %c0_5 = arith.constant 0 : index
    %c0_6 = arith.constant 0 : index
    %c0_7 = arith.constant 0 : index
    %6 = vector.load %arg5[%c0_5, %c0_6, %c0_7] : memref<9x128x128xf32, #tpu.memory_space<vmem>>, vector<1x128x128xf32>
    %7 = vector.shape_cast %6 : vector<1x128x128xf32> to vector<128x128xf32>
    %cst = arith.constant dense<0.000000e+00> : vector<256x128xf32>
    %8 = tpu.matmul %5, %7, %cst {dimension_numbers = #tpu.dot_dimension_numbers<[1], [0], [0], [1], [0, 0, 1, 1], [], []>} : vector<256x128xf32>, vector<128x128xf32>, vector<256x128xf32> -> vector<256x128xf32>
    %c0_8 = arith.constant 0 : index
    %c8 = arith.constant 8 : index
    %c0_9 = arith.constant 0 : index
    %9 = vector.load %arg2[%c0_8, %c8, %c0_9] : memref<1x304x128xf32, #tpu.memory_space<vmem>>, vector<1x256x128xf32>
    %10 = vector.shape_cast %9 : vector<1x256x128xf32> to vector<256x128xf32>
    %c1 = arith.constant 1 : index
    %c0_10 = arith.constant 0 : index
    %c0_11 = arith.constant 0 : index
    %11 = vector.load %arg5[%c1, %c0_10, %c0_11] : memref<9x128x128xf32, #tpu.memory_space<vmem>>, vector<1x128x128xf32>
    %12 = vector.shape_cast %11 : vector<1x128x128xf32> to vector<128x128xf32>
    %cst_12 = arith.constant dense<0.000000e+00> : vector<256x128xf32>
    %13 = tpu.matmul %10, %12, %cst_12 {dimension_numbers = #tpu.dot_dimension_numbers<[1], [0], [0], [1], [0, 0, 1, 1], [], []>} : vector<256x128xf32>, vector<128x128xf32>, vector<256x128xf32> -> vector<256x128xf32>
    %14 = arith.addf %8, %13 : vector<256x128xf32>
    %c0_13 = arith.constant 0 : index
    %c9 = arith.constant 9 : index
    %c0_14 = arith.constant 0 : index
    %15 = vector.load %arg2[%c0_13, %c9, %c0_14] : memref<1x304x128xf32, #tpu.memory_space<vmem>>, vector<1x256x128xf32>
    %16 = vector.shape_cast %15 : vector<1x256x128xf32> to vector<256x128xf32>
    %17 = vector.broadcast %1 : vector<256x1xf32> to vector<256x128xf32>
    %18 = arith.mulf %16, %17 : vector<256x128xf32>
    %c2 = arith.constant 2 : index
    %c0_15 = arith.constant 0 : index
    %c0_16 = arith.constant 0 : index
    %19 = vector.load %arg5[%c2, %c0_15, %c0_16] : memref<9x128x128xf32, #tpu.memory_space<vmem>>, vector<1x128x128xf32>
    %20 = vector.shape_cast %19 : vector<1x128x128xf32> to vector<128x128xf32>
    %cst_17 = arith.constant dense<0.000000e+00> : vector<256x128xf32>
    %21 = tpu.matmul %18, %20, %cst_17 {dimension_numbers = #tpu.dot_dimension_numbers<[1], [0], [0], [1], [0, 0, 1, 1], [], []>} : vector<256x128xf32>, vector<128x128xf32>, vector<256x128xf32> -> vector<256x128xf32>
    %22 = arith.addf %14, %21 : vector<256x128xf32>
    %c0_18 = arith.constant 0 : index
    %c23 = arith.constant 23 : index
    %c0_19 = arith.constant 0 : index
    %23 = vector.load %arg2[%c0_18, %c23, %c0_19] : memref<1x304x128xf32, #tpu.memory_space<vmem>>, vector<1x256x128xf32>
    %24 = vector.shape_cast %23 : vector<1x256x128xf32> to vector<256x128xf32>
    %25 = vector.broadcast %0 : vector<256x1xf32> to vector<256x128xf32>
    %26 = arith.mulf %24, %25 : vector<256x128xf32>
    %c3 = arith.constant 3 : index
    %c0_20 = arith.constant 0 : index
    %c0_21 = arith.constant 0 : index
    %27 = vector.load %arg5[%c3, %c0_20, %c0_21] : memref<9x128x128xf32, #tpu.memory_space<vmem>>, vector<1x128x128xf32>
    %28 = vector.shape_cast %27 : vector<1x128x128xf32> to vector<128x128xf32>
    %cst_22 = arith.constant dense<0.000000e+00> : vector<256x128xf32>
    %29 = tpu.matmul %26, %28, %cst_22 {dimension_numbers = #tpu.dot_dimension_numbers<[1], [0], [0], [1], [0, 0, 1, 1], [], []>} : vector<256x128xf32>, vector<128x128xf32>, vector<256x128xf32> -> vector<256x128xf32>
    %30 = arith.addf %22, %29 : vector<256x128xf32>
    %c0_23 = arith.constant 0 : index
    %c24 = arith.constant 24 : index
    %c0_24 = arith.constant 0 : index
    %31 = vector.load %arg2[%c0_23, %c24, %c0_24] : memref<1x304x128xf32, #tpu.memory_space<vmem>>, vector<1x256x128xf32>
    %32 = vector.shape_cast %31 : vector<1x256x128xf32> to vector<256x128xf32>
    %c4 = arith.constant 4 : index
    %c0_25 = arith.constant 0 : index
    %c0_26 = arith.constant 0 : index
    %33 = vector.load %arg5[%c4, %c0_25, %c0_26] : memref<9x128x128xf32, #tpu.memory_space<vmem>>, vector<1x128x128xf32>
    %34 = vector.shape_cast %33 : vector<1x128x128xf32> to vector<128x128xf32>
    %cst_27 = arith.constant dense<0.000000e+00> : vector<256x128xf32>
    %35 = tpu.matmul %32, %34, %cst_27 {dimension_numbers = #tpu.dot_dimension_numbers<[1], [0], [0], [1], [0, 0, 1, 1], [], []>} : vector<256x128xf32>, vector<128x128xf32>, vector<256x128xf32> -> vector<256x128xf32>
    %36 = arith.addf %30, %35 : vector<256x128xf32>
    %c0_28 = arith.constant 0 : index
    %c25 = arith.constant 25 : index
    %c0_29 = arith.constant 0 : index
    %37 = vector.load %arg2[%c0_28, %c25, %c0_29] : memref<1x304x128xf32, #tpu.memory_space<vmem>>, vector<1x256x128xf32>
    %38 = vector.shape_cast %37 : vector<1x256x128xf32> to vector<256x128xf32>
    %39 = vector.broadcast %1 : vector<256x1xf32> to vector<256x128xf32>
    %40 = arith.mulf %38, %39 : vector<256x128xf32>
    %c5 = arith.constant 5 : index
    %c0_30 = arith.constant 0 : index
    %c0_31 = arith.constant 0 : index
    %41 = vector.load %arg5[%c5, %c0_30, %c0_31] : memref<9x128x128xf32, #tpu.memory_space<vmem>>, vector<1x128x128xf32>
    %42 = vector.shape_cast %41 : vector<1x128x128xf32> to vector<128x128xf32>
    %cst_32 = arith.constant dense<0.000000e+00> : vector<256x128xf32>
    %43 = tpu.matmul %40, %42, %cst_32 {dimension_numbers = #tpu.dot_dimension_numbers<[1], [0], [0], [1], [0, 0, 1, 1], [], []>} : vector<256x128xf32>, vector<128x128xf32>, vector<256x128xf32> -> vector<256x128xf32>
    %44 = arith.addf %36, %43 : vector<256x128xf32>
    %c0_33 = arith.constant 0 : index
    %c39 = arith.constant 39 : index
    %c0_34 = arith.constant 0 : index
    %45 = vector.load %arg2[%c0_33, %c39, %c0_34] : memref<1x304x128xf32, #tpu.memory_space<vmem>>, vector<1x256x128xf32>
    %46 = vector.shape_cast %45 : vector<1x256x128xf32> to vector<256x128xf32>
    %47 = vector.broadcast %0 : vector<256x1xf32> to vector<256x128xf32>
    %48 = arith.mulf %46, %47 : vector<256x128xf32>
    %c6 = arith.constant 6 : index
    %c0_35 = arith.constant 0 : index
    %c0_36 = arith.constant 0 : index
    %49 = vector.load %arg5[%c6, %c0_35, %c0_36] : memref<9x128x128xf32, #tpu.memory_space<vmem>>, vector<1x128x128xf32>
    %50 = vector.shape_cast %49 : vector<1x128x128xf32> to vector<128x128xf32>
    %cst_37 = arith.constant dense<0.000000e+00> : vector<256x128xf32>
    %51 = tpu.matmul %48, %50, %cst_37 {dimension_numbers = #tpu.dot_dimension_numbers<[1], [0], [0], [1], [0, 0, 1, 1], [], []>} : vector<256x128xf32>, vector<128x128xf32>, vector<256x128xf32> -> vector<256x128xf32>
    %52 = arith.addf %44, %51 : vector<256x128xf32>
    %c0_38 = arith.constant 0 : index
    %c40 = arith.constant 40 : index
    %c0_39 = arith.constant 0 : index
    %53 = vector.load %arg2[%c0_38, %c40, %c0_39] : memref<1x304x128xf32, #tpu.memory_space<vmem>>, vector<1x256x128xf32>
    %54 = vector.shape_cast %53 : vector<1x256x128xf32> to vector<256x128xf32>
    %c7_40 = arith.constant 7 : index
    %c0_41 = arith.constant 0 : index
    %c0_42 = arith.constant 0 : index
    %55 = vector.load %arg5[%c7_40, %c0_41, %c0_42] : memref<9x128x128xf32, #tpu.memory_space<vmem>>, vector<1x128x128xf32>
    %56 = vector.shape_cast %55 : vector<1x128x128xf32> to vector<128x128xf32>
    %cst_43 = arith.constant dense<0.000000e+00> : vector<256x128xf32>
    %57 = tpu.matmul %54, %56, %cst_43 {dimension_numbers = #tpu.dot_dimension_numbers<[1], [0], [0], [1], [0, 0, 1, 1], [], []>} : vector<256x128xf32>, vector<128x128xf32>, vector<256x128xf32> -> vector<256x128xf32>
    %58 = arith.addf %52, %57 : vector<256x128xf32>
    %c0_44 = arith.constant 0 : index
    %c41 = arith.constant 41 : index
    %c0_45 = arith.constant 0 : index
    %59 = vector.load %arg2[%c0_44, %c41, %c0_45] : memref<1x304x128xf32, #tpu.memory_space<vmem>>, vector<1x256x128xf32>
    %60 = vector.shape_cast %59 : vector<1x256x128xf32> to vector<256x128xf32>
    %61 = vector.broadcast %1 : vector<256x1xf32> to vector<256x128xf32>
    %62 = arith.mulf %60, %61 : vector<256x128xf32>
    %c8_46 = arith.constant 8 : index
    %c0_47 = arith.constant 0 : index
    %c0_48 = arith.constant 0 : index
    %63 = vector.load %arg5[%c8_46, %c0_47, %c0_48] : memref<9x128x128xf32, #tpu.memory_space<vmem>>, vector<1x128x128xf32>
    %64 = vector.shape_cast %63 : vector<1x128x128xf32> to vector<128x128xf32>
    %cst_49 = arith.constant dense<0.000000e+00> : vector<256x128xf32>
    %65 = tpu.matmul %62, %64, %cst_49 {dimension_numbers = #tpu.dot_dimension_numbers<[1], [0], [0], [1], [0, 0, 1, 1], [], []>} : vector<256x128xf32>, vector<128x128xf32>, vector<256x128xf32> -> vector<256x128xf32>
    %66 = arith.addf %58, %65 : vector<256x128xf32>
    %c0_50 = arith.constant 0 : index
    %c0_51 = arith.constant 0 : index
    %c0_52 = arith.constant 0 : index
    %67 = vector.load %arg7[%c0_50, %c0_51, %c0_52] : memref<1x256x128xf32, #tpu.memory_space<vmem>>, vector<1x256x128xf32>
    %68 = vector.shape_cast %67 : vector<1x256x128xf32> to vector<256x128xf32>
    %69 = vector.shape_cast %66 : vector<256x128xf32> to vector<1x256x128xf32>
    tpu.vector_store %arg7[%c0_50, %c0_51, %c0_52], %69 {strides = array<i32>} : memref<1x256x128xf32, #tpu.memory_space<vmem>>, vector<1x256x128xf32>,
    %cst_53 = arith.constant dense<0.000000e+00> : vector<128xf32>
    %70 = vector.multi_reduction <add>, %66, %cst_53 [0] : vector<256x128xf32> to vector<128xf32>
    %71 = vector.shape_cast %70 : vector<128xf32> to vector<1x128xf32>
    %c0_54 = arith.constant 0 : index
    %c0_55 = arith.constant 0 : index
    %c0_56 = arith.constant 0 : index
    %72 = vector.load %arg8[%c0_54, %c0_55, %c0_56] : memref<1x2x128xf32, #tpu.memory_space<vmem>>, vector<1x1x128xf32>
    %73 = vector.shape_cast %72 : vector<1x1x128xf32> to vector<1x128xf32>
    %74 = vector.shape_cast %71 : vector<1x128xf32> to vector<1x1x128xf32>
    tpu.vector_store %arg8[%c0_54, %c0_55, %c0_56], %74 {strides = array<i32>} : memref<1x2x128xf32, #tpu.memory_space<vmem>>, vector<1x1x128xf32>,
    %75 = arith.mulf %66, %66 : vector<256x128xf32>
    %cst_57 = arith.constant dense<0.000000e+00> : vector<128xf32>
    %76 = vector.multi_reduction <add>, %75, %cst_57 [0] : vector<256x128xf32> to vector<128xf32>
    %77 = vector.shape_cast %76 : vector<128xf32> to vector<1x128xf32>
    %c0_58 = arith.constant 0 : index
    %c1_59 = arith.constant 1 : index
    %c0_60 = arith.constant 0 : index
    %78 = vector.load %arg8[%c0_58, %c1_59, %c0_60] : memref<1x2x128xf32, #tpu.memory_space<vmem>>, vector<1x1x128xf32>
    %79 = vector.shape_cast %78 : vector<1x1x128xf32> to vector<1x128xf32>
    %80 = vector.shape_cast %77 : vector<1x128xf32> to vector<1x1x128xf32>
    tpu.vector_store %arg8[%c0_58, %c1_59, %c0_60], %80 {strides = array<i32>} : memref<1x2x128xf32, #tpu.memory_space<vmem>>, vector<1x1x128xf32>,
    %c0_61 = arith.constant 0 : index
    %c0_62 = arith.constant 0 : index
    %81 = vector.load %arg6[%c0_61, %c0_62] : memref<128x128xf32, #tpu.memory_space<vmem>>, vector<128x128xf32>
    %cst_63 = arith.constant dense<0.000000e+00> : vector<256x128xf32>
    %82 = tpu.matmul %32, %81, %cst_63 {dimension_numbers = #tpu.dot_dimension_numbers<[1], [0], [0], [1], [0, 0, 1, 1], [], []>} : vector<256x128xf32>, vector<128x128xf32>, vector<256x128xf32> -> vector<256x128xf32>
    %cst_64 = arith.constant dense<0.000000e+00> : vector<128xf32>
    %83 = vector.multi_reduction <add>, %82, %cst_64 [0] : vector<256x128xf32> to vector<128xf32>
    %84 = vector.shape_cast %83 : vector<128xf32> to vector<1x128xf32>
    %c0_65 = arith.constant 0 : index
    %c0_66 = arith.constant 0 : index
    %c0_67 = arith.constant 0 : index
    %85 = vector.load %arg9[%c0_65, %c0_66, %c0_67] : memref<1x2x128xf32, #tpu.memory_space<vmem>>, vector<1x1x128xf32>
    %86 = vector.shape_cast %85 : vector<1x1x128xf32> to vector<1x128xf32>
    %87 = vector.shape_cast %84 : vector<1x128xf32> to vector<1x1x128xf32>
    tpu.vector_store %arg9[%c0_65, %c0_66, %c0_67], %87 {strides = array<i32>} : memref<1x2x128xf32, #tpu.memory_space<vmem>>, vector<1x1x128xf32>,
    %88 = arith.mulf %82, %82 : vector<256x128xf32>
    %cst_68 = arith.constant dense<0.000000e+00> : vector<128xf32>
    %89 = vector.multi_reduction <add>, %88, %cst_68 [0] : vector<256x128xf32> to vector<128xf32>
    %90 = vector.shape_cast %89 : vector<128xf32> to vector<1x128xf32>
    %c0_69 = arith.constant 0 : index
    %c1_70 = arith.constant 1 : index
    %c0_71 = arith.constant 0 : index
    %91 = vector.load %arg9[%c0_69, %c1_70, %c0_71] : memref<1x2x128xf32, #tpu.memory_space<vmem>>, vector<1x1x128xf32>
    %92 = vector.shape_cast %91 : vector<1x1x128xf32> to vector<1x128xf32>
    %93 = vector.shape_cast %90 : vector<1x128xf32> to vector<1x1x128xf32>
    tpu.vector_store %arg9[%c0_69, %c1_70, %c0_71], %93 {strides = array<i32>} : memref<1x2x128xf32, #tpu.memory_space<vmem>>, vector<1x1x128xf32>,
    return
  }
  func.func @transform_0(%arg0: i32, %arg1: i32) -> (i32, i32, i32) {
    %c0_i32 = arith.constant 0 : i32
    %c0_i32_0 = arith.constant 0 : i32
    %c0_i32_1 = arith.constant 0 : i32
    return %arg0, %c0_i32, %c0_i32_0 : i32, i32, i32
  }
  func.func @transform_1(%arg0: i32, %arg1: i32) -> (i32, i32) {
    %c0_i32 = arith.constant 0 : i32
    %c0_i32_0 = arith.constant 0 : i32
    %c0_i32_1 = arith.constant 0 : i32
    return %c0_i32, %c0_i32_0 : i32, i32
  }
  func.func @transform_2(%arg0: i32, %arg1: i32) -> (i32, i32) {
    %c0_i32 = arith.constant 0 : i32
    %c0_i32_0 = arith.constant 0 : i32
    %c0_i32_1 = arith.constant 0 : i32
    return %c0_i32, %c0_i32_0 : i32, i32
  }
  func.func @transform_3(%arg0: i32, %arg1: i32) -> (i32, i32, i32) {
    %c0_i32 = arith.constant 0 : i32
    %c0_i32_0 = arith.constant 0 : i32
    %c0_i32_1 = arith.constant 0 : i32
    return %c0_i32, %c0_i32_0, %arg1 : i32, i32, i32
  }
  func.func @transform_4(%arg0: i32, %arg1: i32) -> (i32, i32) {
    %c0_i32 = arith.constant 0 : i32
    %c0_i32_0 = arith.constant 0 : i32
    return %c0_i32, %arg1 : i32, i32
  }
  func.func @transform_5(%arg0: i32, %arg1: i32) -> (i32, i32, i32) {
    %c0_i32 = arith.constant 0 : i32
    %c0_i32_0 = arith.constant 0 : i32
    return %arg0, %c0_i32, %arg1 : i32, i32, i32
  }
  func.func @transform_6(%arg0: i32, %arg1: i32) -> (i32, i32, i32) {
    %c0_i32 = arith.constant 0 : i32
    %c0_i32_0 = arith.constant 0 : i32
    return %arg0, %c0_i32, %arg1 : i32, i32, i32
  }
  func.func @transform_7(%arg0: i32, %arg1: i32) -> (i32, i32, i32) {
    %c0_i32 = arith.constant 0 : i32
    %c0_i32_0 = arith.constant 0 : i32
    return %arg0, %c0_i32, %arg1 : i32, i32, i32
  }
}

module attributes {stable_mosaic.version = 11 : i64} {
  func.func @_conv2_kernel(%arg0: i32, %arg1: i32, %arg2: memref<1x256x128xf32, #tpu.memory_space<vmem>>, %arg3: memref<1x128xf32, #tpu.memory_space<vmem>>, %arg4: memref<1x128xf32, #tpu.memory_space<vmem>>, %arg5: memref<256x1xf32, #tpu.memory_space<vmem>>, %arg6: memref<256x1xf32, #tpu.memory_space<vmem>>, %arg7: memref<9x128x128xf32, #tpu.memory_space<vmem>>, %arg8: memref<1x256x128xf32, #tpu.memory_space<vmem>>, %arg9: memref<1x2x128xf32, #tpu.memory_space<vmem>>, %arg10: memref<304x128xf32, #tpu.memory_space<vmem>>) attributes {dimension_semantics = [#tpu.dimension_semantics<parallel>, #tpu.dimension_semantics<arbitrary>], iteration_bounds = array<i64: 2, 1>, scalar_prefetch = 0 : i64, scratch_operands = 1 : i64, tpu.core_type = #tpu.core_type<tc>, window_params = [{transform_indices = @transform_0, window_bounds = array<i64: 1, 256, 128>}, {pipeline_mode = #tpu.pipeline_mode<synchronous>, transform_indices = @transform_1, window_bounds = array<i64: 1, 128>}, {pipeline_mode = #tpu.pipeline_mode<synchronous>, transform_indices = @transform_2, window_bounds = array<i64: 1, 128>}, {pipeline_mode = #tpu.pipeline_mode<synchronous>, transform_indices = @transform_3, window_bounds = array<i64: 256, 1>}, {pipeline_mode = #tpu.pipeline_mode<synchronous>, transform_indices = @transform_4, window_bounds = array<i64: 256, 1>}, {transform_indices = @transform_5, window_bounds = array<i64: 9, 128, 128>}, {transform_indices = @transform_6, window_bounds = array<i64: 1, 256, 128>}, {transform_indices = @transform_7, window_bounds = array<i64: 1, 2, 128>}]} {
    %c0_i32 = arith.constant 0 : i32
    %0 = arith.cmpi eq, %arg1, %c0_i32 : i32
    %1 = arith.extui %0 : i1 to i32
    %c0_i32_0 = arith.constant 0 : i32
    %2 = arith.cmpi ne, %1, %c0_i32_0 : i32
    scf.if %2 {
      %cst_53 = arith.constant 0.000000e+00 : f32
      %75 = vector.broadcast %cst_53 : f32 to vector<304x128xf32>
      %c0_54 = arith.constant 0 : index
      %c0_55 = arith.constant 0 : index
      %76 = vector.load %arg10[%c0_54, %c0_55] : memref<304x128xf32, #tpu.memory_space<vmem>>, vector<304x128xf32>
      tpu.vector_store %arg10[%c0_54, %c0_55], %75 {strides = array<i32>} : memref<304x128xf32, #tpu.memory_space<vmem>>, vector<304x128xf32>,
      %c0_56 = arith.constant 0 : index
      %c0_57 = arith.constant 0 : index
      %c0_58 = arith.constant 0 : index
      %77 = vector.load %arg2[%c0_56, %c0_57, %c0_58] : memref<1x256x128xf32, #tpu.memory_space<vmem>>, vector<1x256x128xf32>
      %78 = vector.shape_cast %77 : vector<1x256x128xf32> to vector<256x128xf32>
      %c0_59 = arith.constant 0 : index
      %c0_60 = arith.constant 0 : index
      %79 = vector.load %arg3[%c0_59, %c0_60] : memref<1x128xf32, #tpu.memory_space<vmem>>, vector<1x128xf32>
      %80 = vector.broadcast %79 : vector<1x128xf32> to vector<256x128xf32>
      %81 = arith.mulf %78, %80 : vector<256x128xf32>
      %c0_61 = arith.constant 0 : index
      %c0_62 = arith.constant 0 : index
      %82 = vector.load %arg4[%c0_61, %c0_62] : memref<1x128xf32, #tpu.memory_space<vmem>>, vector<1x128xf32>
      %83 = vector.broadcast %82 : vector<1x128xf32> to vector<256x128xf32>
      %84 = arith.addf %81, %83 : vector<256x128xf32>
      %cst_63 = arith.constant 0.000000e+00 : f32
      %85 = vector.broadcast %cst_63 : f32 to vector<256x128xf32>
      %86 = arith.maximumf %84, %85 : vector<256x128xf32>
      %c24_64 = arith.constant 24 : index
      %c0_65 = arith.constant 0 : index
      %87 = vector.load %arg10[%c24_64, %c0_65] : memref<304x128xf32, #tpu.memory_space<vmem>>, vector<256x128xf32>
      tpu.vector_store %arg10[%c24_64, %c0_65], %86 {strides = array<i32>} : memref<304x128xf32, #tpu.memory_space<vmem>>, vector<256x128xf32>,
    } else {
    }
    %c0 = arith.constant 0 : index
    %c0_1 = arith.constant 0 : index
    %3 = vector.load %arg5[%c0, %c0_1] : memref<256x1xf32, #tpu.memory_space<vmem>>, vector<256x1xf32>
    %c0_2 = arith.constant 0 : index
    %c0_3 = arith.constant 0 : index
    %4 = vector.load %arg6[%c0_2, %c0_3] : memref<256x1xf32, #tpu.memory_space<vmem>>, vector<256x1xf32>
    %c7 = arith.constant 7 : index
    %c0_4 = arith.constant 0 : index
    %5 = vector.load %arg10[%c7, %c0_4] : memref<304x128xf32, #tpu.memory_space<vmem>>, vector<256x128xf32>
    %6 = vector.broadcast %3 : vector<256x1xf32> to vector<256x128xf32>
    %7 = arith.mulf %5, %6 : vector<256x128xf32>
    %c0_5 = arith.constant 0 : index
    %c0_6 = arith.constant 0 : index
    %c0_7 = arith.constant 0 : index
    %8 = vector.load %arg7[%c0_5, %c0_6, %c0_7] : memref<9x128x128xf32, #tpu.memory_space<vmem>>, vector<1x128x128xf32>
    %9 = vector.shape_cast %8 : vector<1x128x128xf32> to vector<128x128xf32>
    %cst = arith.constant dense<0.000000e+00> : vector<256x128xf32>
    %10 = tpu.matmul %7, %9, %cst {dimension_numbers = #tpu.dot_dimension_numbers<[1], [0], [0], [1], [0, 0, 1, 1], [], []>} : vector<256x128xf32>, vector<128x128xf32>, vector<256x128xf32> -> vector<256x128xf32>
    %c8 = arith.constant 8 : index
    %c0_8 = arith.constant 0 : index
    %11 = vector.load %arg10[%c8, %c0_8] : memref<304x128xf32, #tpu.memory_space<vmem>>, vector<256x128xf32>
    %c1 = arith.constant 1 : index
    %c0_9 = arith.constant 0 : index
    %c0_10 = arith.constant 0 : index
    %12 = vector.load %arg7[%c1, %c0_9, %c0_10] : memref<9x128x128xf32, #tpu.memory_space<vmem>>, vector<1x128x128xf32>
    %13 = vector.shape_cast %12 : vector<1x128x128xf32> to vector<128x128xf32>
    %cst_11 = arith.constant dense<0.000000e+00> : vector<256x128xf32>
    %14 = tpu.matmul %11, %13, %cst_11 {dimension_numbers = #tpu.dot_dimension_numbers<[1], [0], [0], [1], [0, 0, 1, 1], [], []>} : vector<256x128xf32>, vector<128x128xf32>, vector<256x128xf32> -> vector<256x128xf32>
    %15 = arith.addf %10, %14 : vector<256x128xf32>
    %c9 = arith.constant 9 : index
    %c0_12 = arith.constant 0 : index
    %16 = vector.load %arg10[%c9, %c0_12] : memref<304x128xf32, #tpu.memory_space<vmem>>, vector<256x128xf32>
    %17 = vector.broadcast %4 : vector<256x1xf32> to vector<256x128xf32>
    %18 = arith.mulf %16, %17 : vector<256x128xf32>
    %c2 = arith.constant 2 : index
    %c0_13 = arith.constant 0 : index
    %c0_14 = arith.constant 0 : index
    %19 = vector.load %arg7[%c2, %c0_13, %c0_14] : memref<9x128x128xf32, #tpu.memory_space<vmem>>, vector<1x128x128xf32>
    %20 = vector.shape_cast %19 : vector<1x128x128xf32> to vector<128x128xf32>
    %cst_15 = arith.constant dense<0.000000e+00> : vector<256x128xf32>
    %21 = tpu.matmul %18, %20, %cst_15 {dimension_numbers = #tpu.dot_dimension_numbers<[1], [0], [0], [1], [0, 0, 1, 1], [], []>} : vector<256x128xf32>, vector<128x128xf32>, vector<256x128xf32> -> vector<256x128xf32>
    %22 = arith.addf %15, %21 : vector<256x128xf32>
    %c23 = arith.constant 23 : index
    %c0_16 = arith.constant 0 : index
    %23 = vector.load %arg10[%c23, %c0_16] : memref<304x128xf32, #tpu.memory_space<vmem>>, vector<256x128xf32>
    %24 = vector.broadcast %3 : vector<256x1xf32> to vector<256x128xf32>
    %25 = arith.mulf %23, %24 : vector<256x128xf32>
    %c3 = arith.constant 3 : index
    %c0_17 = arith.constant 0 : index
    %c0_18 = arith.constant 0 : index
    %26 = vector.load %arg7[%c3, %c0_17, %c0_18] : memref<9x128x128xf32, #tpu.memory_space<vmem>>, vector<1x128x128xf32>
    %27 = vector.shape_cast %26 : vector<1x128x128xf32> to vector<128x128xf32>
    %cst_19 = arith.constant dense<0.000000e+00> : vector<256x128xf32>
    %28 = tpu.matmul %25, %27, %cst_19 {dimension_numbers = #tpu.dot_dimension_numbers<[1], [0], [0], [1], [0, 0, 1, 1], [], []>} : vector<256x128xf32>, vector<128x128xf32>, vector<256x128xf32> -> vector<256x128xf32>
    %29 = arith.addf %22, %28 : vector<256x128xf32>
    %c24 = arith.constant 24 : index
    %c0_20 = arith.constant 0 : index
    %30 = vector.load %arg10[%c24, %c0_20] : memref<304x128xf32, #tpu.memory_space<vmem>>, vector<256x128xf32>
    %c4 = arith.constant 4 : index
    %c0_21 = arith.constant 0 : index
    %c0_22 = arith.constant 0 : index
    %31 = vector.load %arg7[%c4, %c0_21, %c0_22] : memref<9x128x128xf32, #tpu.memory_space<vmem>>, vector<1x128x128xf32>
    %32 = vector.shape_cast %31 : vector<1x128x128xf32> to vector<128x128xf32>
    %cst_23 = arith.constant dense<0.000000e+00> : vector<256x128xf32>
    %33 = tpu.matmul %30, %32, %cst_23 {dimension_numbers = #tpu.dot_dimension_numbers<[1], [0], [0], [1], [0, 0, 1, 1], [], []>} : vector<256x128xf32>, vector<128x128xf32>, vector<256x128xf32> -> vector<256x128xf32>
    %34 = arith.addf %29, %33 : vector<256x128xf32>
    %c25 = arith.constant 25 : index
    %c0_24 = arith.constant 0 : index
    %35 = vector.load %arg10[%c25, %c0_24] : memref<304x128xf32, #tpu.memory_space<vmem>>, vector<256x128xf32>
    %36 = vector.broadcast %4 : vector<256x1xf32> to vector<256x128xf32>
    %37 = arith.mulf %35, %36 : vector<256x128xf32>
    %c5 = arith.constant 5 : index
    %c0_25 = arith.constant 0 : index
    %c0_26 = arith.constant 0 : index
    %38 = vector.load %arg7[%c5, %c0_25, %c0_26] : memref<9x128x128xf32, #tpu.memory_space<vmem>>, vector<1x128x128xf32>
    %39 = vector.shape_cast %38 : vector<1x128x128xf32> to vector<128x128xf32>
    %cst_27 = arith.constant dense<0.000000e+00> : vector<256x128xf32>
    %40 = tpu.matmul %37, %39, %cst_27 {dimension_numbers = #tpu.dot_dimension_numbers<[1], [0], [0], [1], [0, 0, 1, 1], [], []>} : vector<256x128xf32>, vector<128x128xf32>, vector<256x128xf32> -> vector<256x128xf32>
    %41 = arith.addf %34, %40 : vector<256x128xf32>
    %c39 = arith.constant 39 : index
    %c0_28 = arith.constant 0 : index
    %42 = vector.load %arg10[%c39, %c0_28] : memref<304x128xf32, #tpu.memory_space<vmem>>, vector<256x128xf32>
    %43 = vector.broadcast %3 : vector<256x1xf32> to vector<256x128xf32>
    %44 = arith.mulf %42, %43 : vector<256x128xf32>
    %c6 = arith.constant 6 : index
    %c0_29 = arith.constant 0 : index
    %c0_30 = arith.constant 0 : index
    %45 = vector.load %arg7[%c6, %c0_29, %c0_30] : memref<9x128x128xf32, #tpu.memory_space<vmem>>, vector<1x128x128xf32>
    %46 = vector.shape_cast %45 : vector<1x128x128xf32> to vector<128x128xf32>
    %cst_31 = arith.constant dense<0.000000e+00> : vector<256x128xf32>
    %47 = tpu.matmul %44, %46, %cst_31 {dimension_numbers = #tpu.dot_dimension_numbers<[1], [0], [0], [1], [0, 0, 1, 1], [], []>} : vector<256x128xf32>, vector<128x128xf32>, vector<256x128xf32> -> vector<256x128xf32>
    %48 = arith.addf %41, %47 : vector<256x128xf32>
    %c40 = arith.constant 40 : index
    %c0_32 = arith.constant 0 : index
    %49 = vector.load %arg10[%c40, %c0_32] : memref<304x128xf32, #tpu.memory_space<vmem>>, vector<256x128xf32>
    %c7_33 = arith.constant 7 : index
    %c0_34 = arith.constant 0 : index
    %c0_35 = arith.constant 0 : index
    %50 = vector.load %arg7[%c7_33, %c0_34, %c0_35] : memref<9x128x128xf32, #tpu.memory_space<vmem>>, vector<1x128x128xf32>
    %51 = vector.shape_cast %50 : vector<1x128x128xf32> to vector<128x128xf32>
    %cst_36 = arith.constant dense<0.000000e+00> : vector<256x128xf32>
    %52 = tpu.matmul %49, %51, %cst_36 {dimension_numbers = #tpu.dot_dimension_numbers<[1], [0], [0], [1], [0, 0, 1, 1], [], []>} : vector<256x128xf32>, vector<128x128xf32>, vector<256x128xf32> -> vector<256x128xf32>
    %53 = arith.addf %48, %52 : vector<256x128xf32>
    %c41 = arith.constant 41 : index
    %c0_37 = arith.constant 0 : index
    %54 = vector.load %arg10[%c41, %c0_37] : memref<304x128xf32, #tpu.memory_space<vmem>>, vector<256x128xf32>
    %55 = vector.broadcast %4 : vector<256x1xf32> to vector<256x128xf32>
    %56 = arith.mulf %54, %55 : vector<256x128xf32>
    %c8_38 = arith.constant 8 : index
    %c0_39 = arith.constant 0 : index
    %c0_40 = arith.constant 0 : index
    %57 = vector.load %arg7[%c8_38, %c0_39, %c0_40] : memref<9x128x128xf32, #tpu.memory_space<vmem>>, vector<1x128x128xf32>
    %58 = vector.shape_cast %57 : vector<1x128x128xf32> to vector<128x128xf32>
    %cst_41 = arith.constant dense<0.000000e+00> : vector<256x128xf32>
    %59 = tpu.matmul %56, %58, %cst_41 {dimension_numbers = #tpu.dot_dimension_numbers<[1], [0], [0], [1], [0, 0, 1, 1], [], []>} : vector<256x128xf32>, vector<128x128xf32>, vector<256x128xf32> -> vector<256x128xf32>
    %60 = arith.addf %53, %59 : vector<256x128xf32>
    %c0_42 = arith.constant 0 : index
    %c0_43 = arith.constant 0 : index
    %c0_44 = arith.constant 0 : index
    %61 = vector.load %arg8[%c0_42, %c0_43, %c0_44] : memref<1x256x128xf32, #tpu.memory_space<vmem>>, vector<1x256x128xf32>
    %62 = vector.shape_cast %61 : vector<1x256x128xf32> to vector<256x128xf32>
    %63 = vector.shape_cast %60 : vector<256x128xf32> to vector<1x256x128xf32>
    tpu.vector_store %arg8[%c0_42, %c0_43, %c0_44], %63 {strides = array<i32>} : memref<1x256x128xf32, #tpu.memory_space<vmem>>, vector<1x256x128xf32>,
    %cst_45 = arith.constant dense<0.000000e+00> : vector<128xf32>
    %64 = vector.multi_reduction <add>, %60, %cst_45 [0] : vector<256x128xf32> to vector<128xf32>
    %65 = vector.shape_cast %64 : vector<128xf32> to vector<1x128xf32>
    %c0_46 = arith.constant 0 : index
    %c0_47 = arith.constant 0 : index
    %c0_48 = arith.constant 0 : index
    %66 = vector.load %arg9[%c0_46, %c0_47, %c0_48] : memref<1x2x128xf32, #tpu.memory_space<vmem>>, vector<1x1x128xf32>
    %67 = vector.shape_cast %66 : vector<1x1x128xf32> to vector<1x128xf32>
    %68 = vector.shape_cast %65 : vector<1x128xf32> to vector<1x1x128xf32>
    tpu.vector_store %arg9[%c0_46, %c0_47, %c0_48], %68 {strides = array<i32>} : memref<1x2x128xf32, #tpu.memory_space<vmem>>, vector<1x1x128xf32>,
    %69 = arith.mulf %60, %60 : vector<256x128xf32>
    %cst_49 = arith.constant dense<0.000000e+00> : vector<128xf32>
    %70 = vector.multi_reduction <add>, %69, %cst_49 [0] : vector<256x128xf32> to vector<128xf32>
    %71 = vector.shape_cast %70 : vector<128xf32> to vector<1x128xf32>
    %c0_50 = arith.constant 0 : index
    %c1_51 = arith.constant 1 : index
    %c0_52 = arith.constant 0 : index
    %72 = vector.load %arg9[%c0_50, %c1_51, %c0_52] : memref<1x2x128xf32, #tpu.memory_space<vmem>>, vector<1x1x128xf32>
    %73 = vector.shape_cast %72 : vector<1x1x128xf32> to vector<1x128xf32>
    %74 = vector.shape_cast %71 : vector<1x128xf32> to vector<1x1x128xf32>
    tpu.vector_store %arg9[%c0_50, %c1_51, %c0_52], %74 {strides = array<i32>} : memref<1x2x128xf32, #tpu.memory_space<vmem>>, vector<1x1x128xf32>,
    return
  }
  func.func @transform_0(%arg0: i32, %arg1: i32) -> (i32, i32, i32) {
    %c0_i32 = arith.constant 0 : i32
    %c0_i32_0 = arith.constant 0 : i32
    %c0_i32_1 = arith.constant 0 : i32
    return %arg0, %c0_i32, %c0_i32_0 : i32, i32, i32
  }
  func.func @transform_1(%arg0: i32, %arg1: i32) -> (i32, i32) {
    %c0_i32 = arith.constant 0 : i32
    %c0_i32_0 = arith.constant 0 : i32
    %c0_i32_1 = arith.constant 0 : i32
    return %c0_i32, %c0_i32_0 : i32, i32
  }
  func.func @transform_2(%arg0: i32, %arg1: i32) -> (i32, i32) {
    %c0_i32 = arith.constant 0 : i32
    %c0_i32_0 = arith.constant 0 : i32
    %c0_i32_1 = arith.constant 0 : i32
    return %c0_i32, %c0_i32_0 : i32, i32
  }
  func.func @transform_3(%arg0: i32, %arg1: i32) -> (i32, i32) {
    %c0_i32 = arith.constant 0 : i32
    %c0_i32_0 = arith.constant 0 : i32
    %c0_i32_1 = arith.constant 0 : i32
    return %c0_i32, %c0_i32_0 : i32, i32
  }
  func.func @transform_4(%arg0: i32, %arg1: i32) -> (i32, i32) {
    %c0_i32 = arith.constant 0 : i32
    %c0_i32_0 = arith.constant 0 : i32
    %c0_i32_1 = arith.constant 0 : i32
    return %c0_i32, %c0_i32_0 : i32, i32
  }
  func.func @transform_5(%arg0: i32, %arg1: i32) -> (i32, i32, i32) {
    %c0_i32 = arith.constant 0 : i32
    %c0_i32_0 = arith.constant 0 : i32
    %c0_i32_1 = arith.constant 0 : i32
    return %c0_i32, %c0_i32_0, %arg1 : i32, i32, i32
  }
  func.func @transform_6(%arg0: i32, %arg1: i32) -> (i32, i32, i32) {
    %c0_i32 = arith.constant 0 : i32
    %c0_i32_0 = arith.constant 0 : i32
    return %arg0, %c0_i32, %arg1 : i32, i32, i32
  }
  func.func @transform_7(%arg0: i32, %arg1: i32) -> (i32, i32, i32) {
    %c0_i32 = arith.constant 0 : i32
    %c0_i32_0 = arith.constant 0 : i32
    return %arg0, %c0_i32, %arg1 : i32, i32, i32
  }
}

module attributes {stable_mosaic.version = 11 : i64} {
  func.func @_tail_proj_kernel(%arg0: i32, %arg1: memref<512x128xf32, #tpu.memory_space<vmem>>, %arg2: memref<512x128xf32, #tpu.memory_space<vmem>>, %arg3: memref<128x128xf32, #tpu.memory_space<vmem>>, %arg4: memref<1x128xf32, #tpu.memory_space<vmem>>, %arg5: memref<1x128xf32, #tpu.memory_space<vmem>>, %arg6: memref<1x128xf32, #tpu.memory_space<vmem>>, %arg7: memref<1x128xf32, #tpu.memory_space<vmem>>, %arg8: memref<512x128xf32, #tpu.memory_space<vmem>>) attributes {dimension_semantics = [#tpu.dimension_semantics<parallel>], iteration_bounds = array<i64: 1>, scalar_prefetch = 0 : i64, scratch_operands = 0 : i64, tpu.core_type = #tpu.core_type<tc>, window_params = [{transform_indices = @transform_0, window_bounds = array<i64: 512, 128>}, {transform_indices = @transform_1, window_bounds = array<i64: 512, 128>}, {pipeline_mode = #tpu.pipeline_mode<synchronous>, transform_indices = @transform_2, window_bounds = array<i64: 128, 128>}, {pipeline_mode = #tpu.pipeline_mode<synchronous>, transform_indices = @transform_3, window_bounds = array<i64: 1, 128>}, {pipeline_mode = #tpu.pipeline_mode<synchronous>, transform_indices = @transform_4, window_bounds = array<i64: 1, 128>}, {pipeline_mode = #tpu.pipeline_mode<synchronous>, transform_indices = @transform_5, window_bounds = array<i64: 1, 128>}, {pipeline_mode = #tpu.pipeline_mode<synchronous>, transform_indices = @transform_6, window_bounds = array<i64: 1, 128>}, {transform_indices = @transform_7, window_bounds = array<i64: 512, 128>}]} {
    %c0 = arith.constant 0 : index
    %c0_0 = arith.constant 0 : index
    %0 = vector.load %arg1[%c0, %c0_0] : memref<512x128xf32, #tpu.memory_space<vmem>>, vector<512x128xf32>
    %c0_1 = arith.constant 0 : index
    %c0_2 = arith.constant 0 : index
    %1 = vector.load %arg4[%c0_1, %c0_2] : memref<1x128xf32, #tpu.memory_space<vmem>>, vector<1x128xf32>
    %2 = vector.broadcast %1 : vector<1x128xf32> to vector<512x128xf32>
    %3 = arith.mulf %0, %2 : vector<512x128xf32>
    %c0_3 = arith.constant 0 : index
    %c0_4 = arith.constant 0 : index
    %4 = vector.load %arg5[%c0_3, %c0_4] : memref<1x128xf32, #tpu.memory_space<vmem>>, vector<1x128xf32>
    %5 = vector.broadcast %4 : vector<1x128xf32> to vector<512x128xf32>
    %6 = arith.addf %3, %5 : vector<512x128xf32>
    %c0_5 = arith.constant 0 : index
    %c0_6 = arith.constant 0 : index
    %7 = vector.load %arg2[%c0_5, %c0_6] : memref<512x128xf32, #tpu.memory_space<vmem>>, vector<512x128xf32>
    %c0_7 = arith.constant 0 : index
    %c0_8 = arith.constant 0 : index
    %8 = vector.load %arg3[%c0_7, %c0_8] : memref<128x128xf32, #tpu.memory_space<vmem>>, vector<128x128xf32>
    %cst = arith.constant dense<0.000000e+00> : vector<512x128xf32>
    %9 = tpu.matmul %7, %8, %cst {dimension_numbers = #tpu.dot_dimension_numbers<[1], [0], [0], [1], [0, 0, 1, 1], [], []>} : vector<512x128xf32>, vector<128x128xf32>, vector<512x128xf32> -> vector<512x128xf32>
    %c0_9 = arith.constant 0 : index
    %c0_10 = arith.constant 0 : index
    %10 = vector.load %arg6[%c0_9, %c0_10] : memref<1x128xf32, #tpu.memory_space<vmem>>, vector<1x128xf32>
    %11 = vector.broadcast %10 : vector<1x128xf32> to vector<512x128xf32>
    %12 = arith.mulf %9, %11 : vector<512x128xf32>
    %13 = arith.addf %6, %12 : vector<512x128xf32>
    %c0_11 = arith.constant 0 : index
    %c0_12 = arith.constant 0 : index
    %14 = vector.load %arg7[%c0_11, %c0_12] : memref<1x128xf32, #tpu.memory_space<vmem>>, vector<1x128xf32>
    %15 = vector.broadcast %14 : vector<1x128xf32> to vector<512x128xf32>
    %16 = arith.addf %13, %15 : vector<512x128xf32>
    %cst_13 = arith.constant 0.000000e+00 : f32
    %17 = vector.broadcast %cst_13 : f32 to vector<512x128xf32>
    %18 = arith.maximumf %16, %17 : vector<512x128xf32>
    %c0_14 = arith.constant 0 : index
    %c0_15 = arith.constant 0 : index
    %19 = vector.load %arg8[%c0_14, %c0_15] : memref<512x128xf32, #tpu.memory_space<vmem>>, vector<512x128xf32>
    tpu.vector_store %arg8[%c0_14, %c0_15], %18 {strides = array<i32>} : memref<512x128xf32, #tpu.memory_space<vmem>>, vector<512x128xf32>,
    return
  }
  func.func @transform_0(%arg0: i32) -> (i32, i32) {
    %c0_i32 = arith.constant 0 : i32
    %c0_i32_0 = arith.constant 0 : i32
    return %arg0, %c0_i32 : i32, i32
  }
  func.func @transform_1(%arg0: i32) -> (i32, i32) {
    %c0_i32 = arith.constant 0 : i32
    %c0_i32_0 = arith.constant 0 : i32
    return %arg0, %c0_i32 : i32, i32
  }
  func.func @transform_2(%arg0: i32) -> (i32, i32) {
    %c0_i32 = arith.constant 0 : i32
    %c0_i32_0 = arith.constant 0 : i32
    %c0_i32_1 = arith.constant 0 : i32
    return %c0_i32, %c0_i32_0 : i32, i32
  }
  func.func @transform_3(%arg0: i32) -> (i32, i32) {
    %c0_i32 = arith.constant 0 : i32
    %c0_i32_0 = arith.constant 0 : i32
    %c0_i32_1 = arith.constant 0 : i32
    return %c0_i32, %c0_i32_0 : i32, i32
  }
  func.func @transform_4(%arg0: i32) -> (i32, i32) {
    %c0_i32 = arith.constant 0 : i32
    %c0_i32_0 = arith.constant 0 : i32
    %c0_i32_1 = arith.constant 0 : i32
    return %c0_i32, %c0_i32_0 : i32, i32
  }
  func.func @transform_5(%arg0: i32) -> (i32, i32) {
    %c0_i32 = arith.constant 0 : i32
    %c0_i32_0 = arith.constant 0 : i32
    %c0_i32_1 = arith.constant 0 : i32
    return %c0_i32, %c0_i32_0 : i32, i32
  }
  func.func @transform_6(%arg0: i32) -> (i32, i32) {
    %c0_i32 = arith.constant 0 : i32
    %c0_i32_0 = arith.constant 0 : i32
    %c0_i32_1 = arith.constant 0 : i32
    return %c0_i32, %c0_i32_0 : i32, i32
  }
  func.func @transform_7(%arg0: i32) -> (i32, i32) {
    %c0_i32 = arith.constant 0 : i32
    %c0_i32_0 = arith.constant 0 : i32
    return %arg0, %c0_i32 : i32, i32
  }
}

</mosaic_0001>

<llo_original>
// kernel: resblk_forward.5
$region0: #{resblk_forward.5}
  #allocation0 [shape = 'u32[]', space=smem, size = 0x4, offset = 0x4, fixed_abs, tag = 'smem constant byte address 0x4 - core index']
  #allocation1 [shape = 'u32[144,128]{1,0:T(1,128)}', space=vmem, size = 0x12000, scoped, tag = 'internal scratch']
  %s0 = inlined_call_operand.vmem [shape: f32[512,128], index: 0, kind: input, shape index: {}]
  %s1 = inlined_call_operand.vmem [shape: f32[512,128], index: 1, kind: input, shape index: {}]
  %s2 = inlined_call_operand.vmem [shape: f32[128,128], index: 2, kind: input, shape index: {}]
  %s3 = inlined_call_operand.vmem [shape: f32[1,128], index: 3, kind: input, shape index: {}]
  %s4 = inlined_call_operand.vmem [shape: f32[1,128], index: 4, kind: input, shape index: {}]
  %s5 = inlined_call_operand.vmem [shape: f32[1,128], index: 5, kind: input, shape index: {}]
  %s6 = inlined_call_operand.vmem [shape: f32[1,128], index: 6, kind: input, shape index: {}]
  %s7 = inlined_call_operand.vmem [shape: f32[512,128], index: 7, kind: output, shape index: {}]
  %s8 = sld [smem:[#allocation0]]
  $region38: #{resblk_forward.5} parent=0
    _
  %s10 = ssub.s32 1, %s8
  %s11 = scalar_select 0, %s10, %s8
  // Predicated region
  $region2: #{resblk_forward.5} parent=0 // pred_check
    _
  $region3: #{resblk_forward.5} parent=0 // pred_check_branch
    %13 = sbr.rel (0) target = $region5
  $region4: #{resblk_forward.5} parent=0 // pred_region
    _
  $region5: #{resblk_forward.5} parent=0 // pred_fallthru
    _
  // Predicated region
  $region6: #{resblk_forward.5} parent=0 // pred_check
    _
  $region7: #{resblk_forward.5} parent=0 // pred_check_branch
    %15 = sbr.rel (0) target = $region9
  $region8: #{resblk_forward.5} parent=0 // pred_region
    _
  $region9: #{resblk_forward.5} parent=0 // pred_fallthru
    _
  // Predicated region
  $region10: #{resblk_forward.5} parent=0 // pred_check
    _
  $region11: #{resblk_forward.5} parent=0 // pred_check_branch
    %17 = sbr.rel (0) target = $region13
  $region12: #{resblk_forward.5} parent=0 // pred_region
    _
  $region13: #{resblk_forward.5} parent=0 // pred_fallthru
    _
  // Predicated region
  $region14: #{resblk_forward.5} parent=0 // pred_check
    _
  $region15: #{resblk_forward.5} parent=0 // pred_check_branch
    %19 = sbr.rel (0) target = $region17
  $region16: #{resblk_forward.5} parent=0 // pred_region
    _
  $region17: #{resblk_forward.5} parent=0 // pred_fallthru
    _
  // Predicated region
  $region18: #{resblk_forward.5} parent=0 // pred_check
    _
  $region19: #{resblk_forward.5} parent=0 // pred_check_branch
    %21 = sbr.rel (0) target = $region21
  $region20: #{resblk_forward.5} parent=0 // pred_region
    _
  $region21: #{resblk_forward.5} parent=0 // pred_fallthru
    _
  // Predicated region
  $region22: #{resblk_forward.5} parent=0 // pred_check
    _
  $region23: #{resblk_forward.5} parent=0 // pred_check_branch
    %23 = sbr.rel (0) target = $region25
  $region24: #{resblk_forward.5} parent=0 // pred_region
    _
  $region25: #{resblk_forward.5} parent=0 // pred_fallthru
    _
  // Predicated region
  $region26: #{resblk_forward.5} parent=0 // pred_check
    _
  $region27: #{resblk_forward.5} parent=0 // pred_check_branch
    %25 = sbr.rel (0) target = $region29
  $region28: #{resblk_forward.5} parent=0 // pred_region
    _
  $region29: #{resblk_forward.5} parent=0 // pred_fallthru
    _
  %v26 = vld [vmem:[%s0] sm:$0xff]
  %v27 = vld [vmem:[%s0 + $0x8] sm:$0xff]
  %v28 = vld [vmem:[%s0 + $0x10] sm:$0xff]
  %v29 = vld [vmem:[%s0 + $0x18] sm:$0xff]
  %v30 = vld [vmem:[%s0 + $0x20] sm:$0xff]
  %v31 = vld [vmem:[%s0 + $0x28] sm:$0xff]
  %v32 = vld [vmem:[%s0 + $0x30] sm:$0xff]
  %v33 = vld [vmem:[%s0 + $0x38] sm:$0xff]
  %v34 = vld [vmem:[%s0 + $0x40] sm:$0xff]
  %v35 = vld [vmem:[%s0 + $0x48] sm:$0xff]
  %v36 = vld [vmem:[%s0 + $0x50] sm:$0xff]
  %v37 = vld [vmem:[%s0 + $0x58] sm:$0xff]
  %v38 = vld [vmem:[%s0 + $0x60] sm:$0xff]
  %v39 = vld [vmem:[%s0 + $0x68] sm:$0xff]
  %v40 = vld [vmem:[%s0 + $0x70] sm:$0xff]
  %v41 = vld [vmem:[%s0 + $0x78] sm:$0xff]
  %v42 = vld [vmem:[%s0 + $0x80] sm:$0xff]
  %v43 = vld [vmem:[%s0 + $0x88] sm:$0xff]
  %v44 = vld [vmem:[%s0 + $0x90] sm:$0xff]
  %v45 = vld [vmem:[%s0 + $0x98] sm:$0xff]
  %v46 = vld [vmem:[%s0 + $0xa0] sm:$0xff]
  %v47 = vld [vmem:[%s0 + $0xa8] sm:$0xff]
  %v48 = vld [vmem:[%s0 + $0xb0] sm:$0xff]
  %v49 = vld [vmem:[%s0 + $0xb8] sm:$0xff]
  %v50 = vld [vmem:[%s0 + $0xc0] sm:$0xff]
  %v51 = vld [vmem:[%s0 + $0xc8] sm:$0xff]
  %v52 = vld [vmem:[%s0 + $0xd0] sm:$0xff]
  %v53 = vld [vmem:[%s0 + $0xd8] sm:$0xff]
  %v54 = vld [vmem:[%s0 + $0xe0] sm:$0xff]
  %v55 = vld [vmem:[%s0 + $0xe8] sm:$0xff]
  %v56 = vld [vmem:[%s0 + $0xf0] sm:$0xff]
  %v57 = vld [vmem:[%s0 + $0xf8] sm:$0xff]
  %v58 = vld [vmem:[%s0 + $0x100] sm:$0xff]
  %v59 = vld [vmem:[%s0 + $0x108] sm:$0xff]
  %v60 = vld [vmem:[%s0 + $0x110] sm:$0xff]
  %v61 = vld [vmem:[%s0 + $0x118] sm:$0xff]
  %v62 = vld [vmem:[%s0 + $0x120] sm:$0xff]
  %v63 = vld [vmem:[%s0 + $0x128] sm:$0xff]
  %v64 = vld [vmem:[%s0 + $0x130] sm:$0xff]
  %v65 = vld [vmem:[%s0 + $0x138] sm:$0xff]
  %v66 = vld [vmem:[%s0 + $0x140] sm:$0xff]
  %v67 = vld [vmem:[%s0 + $0x148] sm:$0xff]
  %v68 = vld [vmem:[%s0 + $0x150] sm:$0xff]
  %v69 = vld [vmem:[%s0 + $0x158] sm:$0xff]
  %v70 = vld [vmem:[%s0 + $0x160] sm:$0xff]
  %v71 = vld [vmem:[%s0 + $0x168] sm:$0xff]
  %v72 = vld [vmem:[%s0 + $0x170] sm:$0xff]
  %v73 = vld [vmem:[%s0 + $0x178] sm:$0xff]
  %v74 = vld [vmem:[%s0 + $0x180] sm:$0xff]
  %v75 = vld [vmem:[%s0 + $0x188] sm:$0xff]
  %v76 = vld [vmem:[%s0 + $0x190] sm:$0xff]
  %v77 = vld [vmem:[%s0 + $0x198] sm:$0xff]
  %v78 = vld [vmem:[%s0 + $0x1a0] sm:$0xff]
  %v79 = vld [vmem:[%s0 + $0x1a8] sm:$0xff]
  %v80 = vld [vmem:[%s0 + $0x1b0] sm:$0xff]
  %v81 = vld [vmem:[%s0 + $0x1b8] sm:$0xff]
  %v82 = vld [vmem:[%s0 + $0x1c0] sm:$0xff]
  %v83 = vld [vmem:[%s0 + $0x1c8] sm:$0xff]
  %v84 = vld [vmem:[%s0 + $0x1d0] sm:$0xff]
  %v85 = vld [vmem:[%s0 + $0x1d8] sm:$0xff]
  %v86 = vld [vmem:[%s0 + $0x1e0] sm:$0xff]
  %v87 = vld [vmem:[%s0 + $0x1e8] sm:$0xff]
  %v88 = vld [vmem:[%s0 + $0x1f0] sm:$0xff]
  %v89 = vld [vmem:[%s0 + $0x1f8] sm:$0xff]
  %v90 = vld [vmem:[%s3] sm:$0x1]
  %v92 = vlaneseq
  %v93 = vshrl.u32 %v92, 7
  %v94 = vsub.s32 0, %v93
  %v95 = vrot.slane %v90, %v94
  %v97 = vmul.f32 %v26, %v95
  %v98 = vmul.f32 %v27, %v95
  %v99 = vmul.f32 %v28, %v95
  %v100 = vmul.f32 %v29, %v95
  %v101 = vmul.f32 %v30, %v95
  %v102 = vmul.f32 %v31, %v95
  %v103 = vmul.f32 %v32, %v95
  %v104 = vmul.f32 %v33, %v95
  %v105 = vmul.f32 %v34, %v95
  %v106 = vmul.f32 %v35, %v95
  %v107 = vmul.f32 %v36, %v95
  %v108 = vmul.f32 %v37, %v95
  %v109 = vmul.f32 %v38, %v95
  %v110 = vmul.f32 %v39, %v95
  %v111 = vmul.f32 %v40, %v95
  %v112 = vmul.f32 %v41, %v95
  %v113 = vmul.f32 %v42, %v95
  %v114 = vmul.f32 %v43, %v95
  %v115 = vmul.f32 %v44, %v95
  %v116 = vmul.f32 %v45, %v95
  %v117 = vmul.f32 %v46, %v95
  %v118 = vmul.f32 %v47, %v95
  %v119 = vmul.f32 %v48, %v95
  %v120 = vmul.f32 %v49, %v95
  %v121 = vmul.f32 %v50, %v95
  %v122 = vmul.f32 %v51, %v95
  %v123 = vmul.f32 %v52, %v95
  %v124 = vmul.f32 %v53, %v95
  %v125 = vmul.f32 %v54, %v95
  %v126 = vmul.f32 %v55, %v95
  %v127 = vmul.f32 %v56, %v95
  %v128 = vmul.f32 %v57, %v95
  %v129 = vmul.f32 %v58, %v95
  %v130 = vmul.f32 %v59, %v95
  %v131 = vmul.f32 %v60, %v95
  %v132 = vmul.f32 %v61, %v95
  %v133 = vmul.f32 %v62, %v95
  %v134 = vmul.f32 %v63, %v95
  %v135 = vmul.f32 %v64, %v95
  %v136 = vmul.f32 %v65, %v95
  %v137 = vmul.f32 %v66, %v95
  %v138 = vmul.f32 %v67, %v95
  %v139 = vmul.f32 %v68, %v95
  %v140 = vmul.f32 %v69, %v95
  %v141 = vmul.f32 %v70, %v95
  %v142 = vmul.f32 %v71, %v95
  %v143 = vmul.f32 %v72, %v95
  %v144 = vmul.f32 %v73, %v95
  %v145 = vmul.f32 %v74, %v95
  %v146 = vmul.f32 %v75, %v95
  %v147 = vmul.f32 %v76, %v95
  %v148 = vmul.f32 %v77, %v95
  %v149 = vmul.f32 %v78, %v95
  %v150 = vmul.f32 %v79, %v95
  %v151 = vmul.f32 %v80, %v95
  %v152 = vmul.f32 %v81, %v95
  %v153 = vmul.f32 %v82, %v95
  %v154 = vmul.f32 %v83, %v95
  %v155 = vmul.f32 %v84, %v95
  %v156 = vmul.f32 %v85, %v95
  %v157 = vmul.f32 %v86, %v95
  %v158 = vmul.f32 %v87, %v95
  %v159 = vmul.f32 %v88, %v95
  %v160 = vmul.f32 %v89, %v95
  %v161 = vld [vmem:[%s4] sm:$0x1]
  %v163 = vlaneseq
  %v164 = vshrl.u32 %v163, 7
  %v165 = vsub.s32 0, %v164
  %v166 = vrot.slane %v161, %v165
  %v168 = vadd.f32 %v97, %v166
  %v169 = vadd.f32 %v98, %v166
  %v170 = vadd.f32 %v99, %v166
  %v171 = vadd.f32 %v100, %v166
  %v172 = vadd.f32 %v101, %v166
  %v173 = vadd.f32 %v102, %v166
  %v174 = vadd.f32 %v103, %v166
  %v175 = vadd.f32 %v104, %v166
  %v176 = vadd.f32 %v105, %v166
  %v177 = vadd.f32 %v106, %v166
  %v178 = vadd.f32 %v107, %v166
  %v179 = vadd.f32 %v108, %v166
  %v180 = vadd.f32 %v109, %v166
  %v181 = vadd.f32 %v110, %v166
  %v182 = vadd.f32 %v111, %v166
  %v183 = vadd.f32 %v112, %v166
  %v184 = vadd.f32 %v113, %v166
  %v185 = vadd.f32 %v114, %v166
  %v186 = vadd.f32 %v115, %v166
  %v187 = vadd.f32 %v116, %v166
  %v188 = vadd.f32 %v117, %v166
  %v189 = vadd.f32 %v118, %v166
  %v190 = vadd.f32 %v119, %v166
  %v191 = vadd.f32 %v120, %v166
  %v192 = vadd.f32 %v121, %v166
  %v193 = vadd.f32 %v122, %v166
  %v194 = vadd.f32 %v123, %v166
  %v195 = vadd.f32 %v124, %v166
  %v196 = vadd.f32 %v125, %v166
  %v197 = vadd.f32 %v126, %v166
  %v198 = vadd.f32 %v127, %v166
  %v199 = vadd.f32 %v128, %v166
  %v200 = vadd.f32 %v129, %v166
  %v201 = vadd.f32 %v130, %v166
  %v202 = vadd.f32 %v131, %v166
  %v203 = vadd.f32 %v132, %v166
  %v204 = vadd.f32 %v133, %v166
  %v205 = vadd.f32 %v134, %v166
  %v206 = vadd.f32 %v135, %v166
  %v207 = vadd.f32 %v136, %v166
  %v208 = vadd.f32 %v137, %v166
  %v209 = vadd.f32 %v138, %v166
  %v210 = vadd.f32 %v139, %v166
  %v211 = vadd.f32 %v140, %v166
  %v212 = vadd.f32 %v141, %v166
  %v213 = vadd.f32 %v142, %v166
  %v214 = vadd.f32 %v143, %v166
  %v215 = vadd.f32 %v144, %v166
  %v216 = vadd.f32 %v145, %v166
  %v217 = vadd.f32 %v146, %v166
  %v218 = vadd.f32 %v147, %v166
  %v219 = vadd.f32 %v148, %v166
  %v220 = vadd.f32 %v149, %v166
  %v221 = vadd.f32 %v150, %v166
  %v222 = vadd.f32 %v151, %v166
  %v223 = vadd.f32 %v152, %v166
  %v224 = vadd.f32 %v153, %v166
  %v225 = vadd.f32 %v154, %v166
  %v226 = vadd.f32 %v155, %v166
  %v227 = vadd.f32 %v156, %v166
  %v228 = vadd.f32 %v157, %v166
  %v229 = vadd.f32 %v158, %v166
  %v230 = vadd.f32 %v159, %v166
  %v231 = vadd.f32 %v160, %v166
  %v232 = vld [vmem:[%s1] sm:$0xff]
  %v233 = vld [vmem:[%s1 + $0x8] sm:$0xff]
  %v234 = vld [vmem:[%s1 + $0x10] sm:$0xff]
  %v235 = vld [vmem:[%s1 + $0x18] sm:$0xff]
  %v236 = vld [vmem:[%s1 + $0x20] sm:$0xff]
  %v237 = vld [vmem:[%s1 + $0x28] sm:$0xff]
  %v238 = vld [vmem:[%s1 + $0x30] sm:$0xff]
  %v239 = vld [vmem:[%s1 + $0x38] sm:$0xff]
  %v240 = vld [vmem:[%s1 + $0x40] sm:$0xff]
  %v241 = vld [vmem:[%s1 + $0x48] sm:$0xff]
  %v242 = vld [vmem:[%s1 + $0x50] sm:$0xff]
  %v243 = vld [vmem:[%s1 + $0x58] sm:$0xff]
  %v244 = vld [vmem:[%s1 + $0x60] sm:$0xff]
  %v245 = vld [vmem:[%s1 + $0x68] sm:$0xff]
  %v246 = vld [vmem:[%s1 + $0x70] sm:$0xff]
  %v247 = vld [vmem:[%s1 + $0x78] sm:$0xff]
  %v248 = vld [vmem:[%s1 + $0x80] sm:$0xff]
  %v249 = vld [vmem:[%s1 + $0x88] sm:$0xff]
  %v250 = vld [vmem:[%s1 + $0x90] sm:$0xff]
  %v251 = vld [vmem:[%s1 + $0x98] sm:$0xff]
  %v252 = vld [vmem:[%s1 + $0xa0] sm:$0xff]
  %v253 = vld [vmem:[%s1 + $0xa8] sm:$0xff]
  %v254 = vld [vmem:[%s1 + $0xb0] sm:$0xff]
  %v255 = vld [vmem:[%s1 + $0xb8] sm:$0xff]
  %v256 = vld [vmem:[%s1 + $0xc0] sm:$0xff]
  %v257 = vld [vmem:[%s1 + $0xc8] sm:$0xff]
  %v258 = vld [vmem:[%s1 + $0xd0] sm:$0xff]
  %v259 = vld [vmem:[%s1 + $0xd8] sm:$0xff]
  %v260 = vld [vmem:[%s1 + $0xe0] sm:$0xff]
  %v261 = vld [vmem:[%s1 + $0xe8] sm:$0xff]
  %v262 = vld [vmem:[%s1 + $0xf0] sm:$0xff]
  %v263 = vld [vmem:[%s1 + $0xf8] sm:$0xff]
  %v264 = vld [vmem:[%s1 + $0x100] sm:$0xff]
  %v265 = vld [vmem:[%s1 + $0x108] sm:$0xff]
  %v266 = vld [vmem:[%s1 + $0x110] sm:$0xff]
  %v267 = vld [vmem:[%s1 + $0x118] sm:$0xff]
  %v268 = vld [vmem:[%s1 + $0x120] sm:$0xff]
  %v269 = vld [vmem:[%s1 + $0x128] sm:$0xff]
  %v270 = vld [vmem:[%s1 + $0x130] sm:$0xff]
  %v271 = vld [vmem:[%s1 + $0x138] sm:$0xff]
  %v272 = vld [vmem:[%s1 + $0x140] sm:$0xff]
  %v273 = vld [vmem:[%s1 + $0x148] sm:$0xff]
  %v274 = vld [vmem:[%s1 + $0x150] sm:$0xff]
  %v275 = vld [vmem:[%s1 + $0x158] sm:$0xff]
  %v276 = vld [vmem:[%s1 + $0x160] sm:$0xff]
  %v277 = vld [vmem:[%s1 + $0x168] sm:$0xff]
  %v278 = vld [vmem:[%s1 + $0x170] sm:$0xff]
  %v279 = vld [vmem:[%s1 + $0x178] sm:$0xff]
  %v280 = vld [vmem:[%s1 + $0x180] sm:$0xff]
  %v281 = vld [vmem:[%s1 + $0x188] sm:$0xff]
  %v282 = vld [vmem:[%s1 + $0x190] sm:$0xff]
  %v283 = vld [vmem:[%s1 + $0x198] sm:$0xff]
  %v284 = vld [vmem:[%s1 + $0x1a0] sm:$0xff]
  %v285 = vld [vmem:[%s1 + $0x1a8] sm:$0xff]
  %v286 = vld [vmem:[%s1 + $0x1b0] sm:$0xff]
  %v287 = vld [vmem:[%s1 + $0x1b8] sm:$0xff]
  %v288 = vld [vmem:[%s1 + $0x1c0] sm:$0xff]
  %v289 = vld [vmem:[%s1 + $0x1c8] sm:$0xff]
  %v290 = vld [vmem:[%s1 + $0x1d0] sm:$0xff]
  %v291 = vld [vmem:[%s1 + $0x1d8] sm:$0xff]
  %v292 = vld [vmem:[%s1 + $0x1e0] sm:$0xff]
  %v293 = vld [vmem:[%s1 + $0x1e8] sm:$0xff]
  %v294 = vld [vmem:[%s1 + $0x1f0] sm:$0xff]
  %v295 = vld [vmem:[%s1 + $0x1f8] sm:$0xff]
  %v296 = vld [vmem:[%s2] sm:$0xff]
  %v297 = vld [vmem:[%s2 + $0x8] sm:$0xff]
  %v298 = vld [vmem:[%s2 + $0x10] sm:$0xff]
  %v299 = vld [vmem:[%s2 + $0x18] sm:$0xff]
  %v300 = vld [vmem:[%s2 + $0x20] sm:$0xff]
  %v301 = vld [vmem:[%s2 + $0x28] sm:$0xff]
  %v302 = vld [vmem:[%s2 + $0x30] sm:$0xff]
  %v303 = vld [vmem:[%s2 + $0x38] sm:$0xff]
  %v304 = vld [vmem:[%s2 + $0x40] sm:$0xff]
  %v305 = vld [vmem:[%s2 + $0x48] sm:$0xff]
  %v306 = vld [vmem:[%s2 + $0x50] sm:$0xff]
  %v307 = vld [vmem:[%s2 + $0x58] sm:$0xff]
  %v308 = vld [vmem:[%s2 + $0x60] sm:$0xff]
  %v309 = vld [vmem:[%s2 + $0x68] sm:$0xff]
  %v310 = vld [vmem:[%s2 + $0x70] sm:$0xff]
  %v311 = vld [vmem:[%s2 + $0x78] sm:$0xff]
  %312 = vmatprep.subr.mxu0 0.0
  %313 = vmatpush1.msra.mxu0 %v296
  %314 = vmatprep.subr.mxu0 0.0
  %315 = vmatpush1.msra.mxu0 %v297
  %316 = vmatprep.subr.mxu0 0.0
  %317 = vmatpush1.msra.mxu0 %v298
  %318 = vmatprep.subr.mxu0 0.0
  %319 = vmatpush1.msra.mxu0 %v299
  %320 = vmatprep.subr.mxu0 0.0
  %321 = vmatpush1.msra.mxu0 %v300
  %322 = vmatprep.subr.mxu0 0.0
  %323 = vmatpush1.msra.mxu0 %v301
  %324 = vmatprep.subr.mxu0 0.0
  %325 = vmatpush1.msra.mxu0 %v302
  %326 = vmatprep.subr.mxu0 0.0
  %327 = vmatpush1.msra.mxu0 %v303
  %328 = vmatprep.subr.mxu0 0.0
  %329 = vmatpush1.msra.mxu0 %v304
  %330 = vmatprep.subr.mxu0 0.0
  %331 = vmatpush1.msra.mxu0 %v305
  %332 = vmatprep.subr.mxu0 0.0
  %333 = vmatpush1.msra.mxu0 %v306
  %334 = vmatprep.subr.mxu0 0.0
  %335 = vmatpush1.msra.mxu0 %v307
  %336 = vmatprep.subr.mxu0 0.0
  %337 = vmatpush1.msra.mxu0 %v308
  %338 = vmatprep.subr.mxu0 0.0
  %339 = vmatpush1.msra.mxu0 %v309
  %340 = vmatprep.subr.mxu0 0.0
  %341 = vmatpush1.msra.mxu0 %v310
  %342 = vmatprep.subr.mxu0 0.0
  %343 = vmatpush1.msra.mxu0 %v311
  %344 = vmatprep.subr.mxu0 0.0
  %345 = vmatpush1.msra.mxu0 0.0
  %346 = vmatprep.subr.mxu0 0.0
  %347 = vmatpush1.msra.mxu0 0.0
  %348 = vmatprep.subr.mxu0 0.0
  %349 = vmatpush1.msra.mxu0 0.0
  %350 = vmatprep.subr.mxu0 0.0
  %351 = vmatpush1.msra.mxu0 0.0
  %352 = vmatprep.subr.mxu0 0.0
  %353 = vmatpush1.msra.mxu0 0.0
  %354 = vmatprep.subr.mxu0 0.0
  %355 = vmatpush1.msra.mxu0 0.0
  %356 = vmatprep.subr.mxu0 0.0
  %357 = vmatpush1.msra.mxu0 0.0
  %358 = vmatprep.subr.mxu0 0.0
  %359 = vmatpush1.msra.mxu0 0.0
  %360 = vmatprep.subr.mxu0 0.0
  %361 = vmatpush1.msra.mxu0 0.0
  %362 = vmatprep.subr.mxu0 0.0
  %363 = vmatpush1.msra.mxu0 0.0
  %364 = vmatprep.subr.mxu0 0.0
  %365 = vmatpush1.msra.mxu0 0.0
  %366 = vmatprep.subr.mxu0 0.0
  %367 = vmatpush1.msra.mxu0 0.0
  %368 = vmatprep.subr.mxu0 0.0
  %369 = vmatpush1.msra.mxu0 0.0
  %370 = vmatprep.subr.mxu0 0.0
  %371 = vmatpush1.msra.mxu0 0.0
  %372 = vmatprep.subr.mxu0 0.0
  %373 = vmatpush1.msra.mxu0 0.0
  %374 = vmatprep.subr.mxu0 0.0
  %375 = vmatpush1.msra.mxu0 0.0
  %376 = vmatprep.mubr.f32.mxu0 0.0
  %377 = vmatmul.mubr.f32.gmra.mrb[0].mxu0 %v232
  %v378 = vpop.f32.mrb[0].mxu0
  %v379 = vadd.f32 0.0, %v378
  %v380 = vpop.f32.mrb[0].mxu0
  %381 = vmatprep.mubr.f32.mxu0 0.0
  %382 = vmatmul.mubr.f32.gmra.mrb[0].mxu0 %v233
  %v383 = vpop.f32.mrb[0].mxu0
  %v384 = vadd.f32 0.0, %v383
  %v385 = vpop.f32.mrb[0].mxu0
  %386 = vmatprep.mubr.f32.mxu0 0.0
  %387 = vmatmul.mubr.f32.gmra.mrb[0].mxu0 %v234
  %v388 = vpop.f32.mrb[0].mxu0
  %v389 = vadd.f32 0.0, %v388
  %v390 = vpop.f32.mrb[0].mxu0
  %391 = vmatprep.mubr.f32.mxu0 0.0
  %392 = vmatmul.mubr.f32.gmra.mrb[0].mxu0 %v235
  %v393 = vpop.f32.mrb[0].mxu0
  %v394 = vadd.f32 0.0, %v393
  %v395 = vpop.f32.mrb[0].mxu0
  %396 = vmatprep.mubr.f32.mxu0 0.0
  %397 = vmatmul.mubr.f32.gmra.mrb[0].mxu0 %v236
  %v398 = vpop.f32.mrb[0].mxu0
  %v399 = vadd.f32 0.0, %v398
  %v400 = vpop.f32.mrb[0].mxu0
  %401 = vmatprep.mubr.f32.mxu0 0.0
  %402 = vmatmul.mubr.f32.gmra.mrb[0].mxu0 %v237
  %v403 = vpop.f32.mrb[0].mxu0
  %v404 = vadd.f32 0.0, %v403
  %v405 = vpop.f32.mrb[0].mxu0
  %406 = vmatprep.mubr.f32.mxu0 0.0
  %407 = vmatmul.mubr.f32.gmra.mrb[0].mxu0 %v238
  %v408 = vpop.f32.mrb[0].mxu0
  %v409 = vadd.f32 0.0, %v408
  %v410 = vpop.f32.mrb[0].mxu0
  %411 = vmatprep.mubr.f32.mxu0 0.0
  %412 = vmatmul.mubr.f32.gmra.mrb[0].mxu0 %v239
  %v413 = vpop.f32.mrb[0].mxu0
  %v414 = vadd.f32 0.0, %v413
  %v415 = vpop.f32.mrb[0].mxu0
  %416 = vmatprep.mubr.f32.mxu0 0.0
  %417 = vmatmul.mubr.f32.gmra.mrb[0].mxu0 %v240
  %v418 = vpop.f32.mrb[0].mxu0
  %v419 = vadd.f32 0.0, %v418
  %v420 = vpop.f32.mrb[0].mxu0
  %421 = vmatprep.mubr.f32.mxu0 0.0
  %422 = vmatmul.mubr.f32.gmra.mrb[0].mxu0 %v241
  %v423 = vpop.f32.mrb[0].mxu0
  %v424 = vadd.f32 0.0, %v423
  %v425 = vpop.f32.mrb[0].mxu0
  %426 = vmatprep.mubr.f32.mxu0 0.0
  %427 = vmatmul.mubr.f32.gmra.mrb[0].mxu0 %v242
  %v428 = vpop.f32.mrb[0].mxu0
  %v429 = vadd.f32 0.0, %v428
  %v430 = vpop.f32.mrb[0].mxu0
  %431 = vmatprep.mubr.f32.mxu0 0.0
  %432 = vmatmul.mubr.f32.gmra.mrb[0].mxu0 %v243
  %v433 = vpop.f32.mrb[0].mxu0
  %v434 = vadd.f32 0.0, %v433
  %v435 = vpop.f32.mrb[0].mxu0
  %436 = vmatprep.mubr.f32.mxu0 0.0
  %437 = vmatmul.mubr.f32.gmra.mrb[0].mxu0 %v244
  %v438 = vpop.f32.mrb[0].mxu0
  %v439 = vadd.f32 0.0, %v438
  %v440 = vpop.f32.mrb[0].mxu0
  %441 = vmatprep.mubr.f32.mxu0 0.0
  %442 = vmatmul.mubr.f32.gmra.mrb[0].mxu0 %v245
  %v443 = vpop.f32.mrb[0].mxu0
  %v444 = vadd.f32 0.0, %v443
  %v445 = vpop.f32.mrb[0].mxu0
  %446 = vmatprep.mubr.f32.mxu0 0.0
  %447 = vmatmul.mubr.f32.gmra.mrb[0].mxu0 %v246
  %v448 = vpop.f32.mrb[0].mxu0
  %v449 = vadd.f32 0.0, %v448
  %v450 = vpop.f32.mrb[0].mxu0
  %451 = vmatprep.mubr.f32.mxu0 0.0
  %452 = vmatmul.mubr.f32.gmra.mrb[0].mxu0 %v247
  %v453 = vpop.f32.mrb[0].mxu0
  %v454 = vadd.f32 0.0, %v453
  %v455 = vpop.f32.mrb[0].mxu0
  %456 = vmatprep.mubr.f32.mxu0 0.0
  %457 = vmatmul.mubr.f32.gmra.mrb[0].mxu0 %v248
  %v458 = vpop.f32.mrb[0].mxu0
  %v459 = vadd.f32 0.0, %v458
  %v460 = vpop.f32.mrb[0].mxu0
  %461 = vmatprep.mubr.f32.mxu0 0.0
  %462 = vmatmul.mubr.f32.gmra.mrb[0].mxu0 %v249
  %v463 = vpop.f32.mrb[0].mxu0
  %v464 = vadd.f32 0.0, %v463
  %v465 = vpop.f32.mrb[0].mxu0
  %466 = vmatprep.mubr.f32.mxu0 0.0
  %467 = vmatmul.mubr.f32.gmra.mrb[0].mxu0 %v250
  %v468 = vpop.f32.mrb[0].mxu0
  %v469 = vadd.f32 0.0, %v468
  %v470 = vpop.f32.mrb[0].mxu0
  %471 = vmatprep.mubr.f32.mxu0 0.0
  %472 = vmatmul.mubr.f32.gmra.mrb[0].mxu0 %v251
  %v473 = vpop.f32.mrb[0].mxu0
  %v474 = vadd.f32 0.0, %v473
  %v475 = vpop.f32.mrb[0].mxu0
  %476 = vmatprep.mubr.f32.mxu0 0.0
  %477 = vmatmul.mubr.f32.gmra.mrb[0].mxu0 %v252
  %v478 = vpop.f32.mrb[0].mxu0
  %v479 = vadd.f32 0.0, %v478
  %v480 = vpop.f32.mrb[0].mxu0
  %481 = vmatprep.mubr.f32.mxu0 0.0
  %482 = vmatmul.mubr.f32.gmra.mrb[0].mxu0 %v253
  %v483 = vpop.f32.mrb[0].mxu0
  %v484 = vadd.f32 0.0, %v483
  %v485 = vpop.f32.mrb[0].mxu0
  %486 = vmatprep.mubr.f32.mxu0 0.0
  %487 = vmatmul.mubr.f32.gmra.mrb[0].mxu0 %v254
  %v488 = vpop.f32.mrb[0].mxu0
  %v489 = vadd.f32 0.0, %v488
  %v490 = vpop.f32.mrb[0].mxu0
  %491 = vmatprep.mubr.f32.mxu0 0.0
  %492 = vmatmul.mubr.f32.gmra.mrb[0].mxu0 %v255
  %v493 = vpop.f32.mrb[0].mxu0
  %v494 = vadd.f32 0.0, %v493
  %v495 = vpop.f32.mrb[0].mxu0
  %496 = vmatprep.mubr.f32.mxu0 0.0
  %497 = vmatmul.mubr.f32.gmra.mrb[0].mxu0 %v256
  %v498 = vpop.f32.mrb[0].mxu0
  %v499 = vadd.f32 0.0, %v498
  %v500 = vpop.f32.mrb[0].mxu0
  %501 = vmatprep.mubr.f32.mxu0 0.0
  %502 = vmatmul.mubr.f32.gmra.mrb[0].mxu0 %v257
  %v503 = vpop.f32.mrb[0].mxu0
  %v504 = vadd.f32 0.0, %v503
  %v505 = vpop.f32.mrb[0].mxu0
  %506 = vmatprep.mubr.f32.mxu0 0.0
  %507 = vmatmul.mubr.f32.gmra.mrb[0].mxu0 %v258
  %v508 = vpop.f32.mrb[0].mxu0
  %v509 = vadd.f32 0.0, %v508
  %v510 = vpop.f32.mrb[0].mxu0
  %511 = vmatprep.mubr.f32.mxu0 0.0
  %512 = vmatmul.mubr.f32.gmra.mrb[0].mxu0 %v259
  %v513 = vpop.f32.mrb[0].mxu0
  %v514 = vadd.f32 0.0, %v513
  %v515 = vpop.f32.mrb[0].mxu0
  %516 = vmatprep.mubr.f32.mxu0 0.0
  %517 = vmatmul.mubr.f32.gmra.mrb[0].mxu0 %v260
  %v518 = vpop.f32.mrb[0].mxu0
  %v519 = vadd.f32 0.0, %v518
  %v520 = vpop.f32.mrb[0].mxu0
  %521 = vmatprep.mubr.f32.mxu0 0.0
  %522 = vmatmul.mubr.f32.gmra.mrb[0].mxu0 %v261
  %v523 = vpop.f32.mrb[0].mxu0
  %v524 = vadd.f32 0.0, %v523
  %v525 = vpop.f32.mrb[0].mxu0
  %526 = vmatprep.mubr.f32.mxu0 0.0
  %527 = vmatmul.mubr.f32.gmra.mrb[0].mxu0 %v262
  %v528 = vpop.f32.mrb[0].mxu0
  %v529 = vadd.f32 0.0, %v528
  %v530 = vpop.f32.mrb[0].mxu0
  %531 = vmatprep.mubr.f32.mxu0 0.0
  %532 = vmatmul.mubr.f32.gmra.mrb[0].mxu0 %v263
  %v533 = vpop.f32.mrb[0].mxu0
  %v534 = vadd.f32 0.0, %v533
  %v535 = vpop.f32.mrb[0].mxu0
  %536 = vmatprep.mubr.f32.mxu0 0.0
  %537 = vmatmul.mubr.f32.gmra.mrb[0].mxu0 %v264
  %v538 = vpop.f32.mrb[0].mxu0
  %v539 = vadd.f32 0.0, %v538
  %v540 = vpop.f32.mrb[0].mxu0
  %541 = vmatprep.mubr.f32.mxu0 0.0
  %542 = vmatmul.mubr.f32.gmra.mrb[0].mxu0 %v265
  %v543 = vpop.f32.mrb[0].mxu0
  %v544 = vadd.f32 0.0, %v543
  %v545 = vpop.f32.mrb[0].mxu0
  %546 = vmatprep.mubr.f32.mxu0 0.0
  %547 = vmatmul.mubr.f32.gmra.mrb[0].mxu0 %v266
  %v548 = vpop.f32.mrb[0].mxu0
  %v549 = vadd.f32 0.0, %v548
  %v550 = vpop.f32.mrb[0].mxu0
  %551 = vmatprep.mubr.f32.mxu0 0.0
  %552 = vmatmul.mubr.f32.gmra.mrb[0].mxu0 %v267
  %v553 = vpop.f32.mrb[0].mxu0
  %v554 = vadd.f32 0.0, %v553
  %v555 = vpop.f32.mrb[0].mxu0
  %556 = vmatprep.mubr.f32.mxu0 0.0
  %557 = vmatmul.mubr.f32.gmra.mrb[0].mxu0 %v268
  %v558 = vpop.f32.mrb[0].mxu0
  %v559 = vadd.f32 0.0, %v558
  %v560 = vpop.f32.mrb[0].mxu0
  %561 = vmatprep.mubr.f32.mxu0 0.0
  %562 = vmatmul.mubr.f32.gmra.mrb[0].mxu0 %v269
  %v563 = vpop.f32.mrb[0].mxu0
  %v564 = vadd.f32 0.0, %v563
  %v565 = vpop.f32.mrb[0].mxu0
  %566 = vmatprep.mubr.f32.mxu0 0.0
  %567 = vmatmul.mubr.f32.gmra.mrb[0].mxu0 %v270
  %v568 = vpop.f32.mrb[0].mxu0
  %v569 = vadd.f32 0.0, %v568
  %v570 = vpop.f32.mrb[0].mxu0
  %571 = vmatprep.mubr.f32.mxu0 0.0
  %572 = vmatmul.mubr.f32.gmra.mrb[0].mxu0 %v271
  %v573 = vpop.f32.mrb[0].mxu0
  %v574 = vadd.f32 0.0, %v573
  %v575 = vpop.f32.mrb[0].mxu0
  %576 = vmatprep.mubr.f32.mxu0 0.0
  %577 = vmatmul.mubr.f32.gmra.mrb[0].mxu0 %v272
  %v578 = vpop.f32.mrb[0].mxu0
  %v579 = vadd.f32 0.0, %v578
  %v580 = vpop.f32.mrb[0].mxu0
  %581 = vmatprep.mubr.f32.mxu0 0.0
  %582 = vmatmul.mubr.f32.gmra.mrb[0].mxu0 %v273
  %v583 = vpop.f32.mrb[0].mxu0
  %v584 = vadd.f32 0.0, %v583
  %v585 = vpop.f32.mrb[0].mxu0
  %586 = vmatprep.mubr.f32.mxu0 0.0
  %587 = vmatmul.mubr.f32.gmra.mrb[0].mxu0 %v274
  %v588 = vpop.f32.mrb[0].mxu0
  %v589 = vadd.f32 0.0, %v588
  %v590 = vpop.f32.mrb[0].mxu0
  %591 = vmatprep.mubr.f32.mxu0 0.0
  %592 = vmatmul.mubr.f32.gmra.mrb[0].mxu0 %v275
  %v593 = vpop.f32.mrb[0].mxu0
  %v594 = vadd.f32 0.0, %v593
  %v595 = vpop.f32.mrb[0].mxu0
  %596 = vmatprep.mubr.f32.mxu0 0.0
  %597 = vmatmul.mubr.f32.gmra.mrb[0].mxu0 %v276
  %v598 = vpop.f32.mrb[0].mxu0
  %v599 = vadd.f32 0.0, %v598
  %v600 = vpop.f32.mrb[0].mxu0
  %601 = vmatprep.mubr.f32.mxu0 0.0
  %602 = vmatmul.mubr.f32.gmra.mrb[0].mxu0 %v277
  %v603 = vpop.f32.mrb[0].mxu0
  %v604 = vadd.f32 0.0, %v603
  %v605 = vpop.f32.mrb[0].mxu0
  %606 = vmatprep.mubr.f32.mxu0 0.0
  %607 = vmatmul.mubr.f32.gmra.mrb[0].mxu0 %v278
  %v608 = vpop.f32.mrb[0].mxu0
  %v609 = vadd.f32 0.0, %v608
  %v610 = vpop.f32.mrb[0].mxu0
  %611 = vmatprep.mubr.f32.mxu0 0.0
  %612 = vmatmul.mubr.f32.gmra.mrb[0].mxu0 %v279
  %v613 = vpop.f32.mrb[0].mxu0
  %v614 = vadd.f32 0.0, %v613
  %v615 = vpop.f32.mrb[0].mxu0
  %616 = vmatprep.mubr.f32.mxu0 0.0
  %617 = vmatmul.mubr.f32.gmra.mrb[0].mxu0 %v280
  %v618 = vpop.f32.mrb[0].mxu0
  %v619 = vadd.f32 0.0, %v618
  %v620 = vpop.f32.mrb[0].mxu0
  %621 = vmatprep.mubr.f32.mxu0 0.0
  %622 = vmatmul.mubr.f32.gmra.mrb[0].mxu0 %v281
  %v623 = vpop.f32.mrb[0].mxu0
  %v624 = vadd.f32 0.0, %v623
  %v625 = vpop.f32.mrb[0].mxu0
  %626 = vmatprep.mubr.f32.mxu0 0.0
  %627 = vmatmul.mubr.f32.gmra.mrb[0].mxu0 %v282
  %v628 = vpop.f32.mrb[0].mxu0
  %v629 = vadd.f32 0.0, %v628
  %v630 = vpop.f32.mrb[0].mxu0
  %631 = vmatprep.mubr.f32.mxu0 0.0
  %632 = vmatmul.mubr.f32.gmra.mrb[0].mxu0 %v283
  %v633 = vpop.f32.mrb[0].mxu0
  %v634 = vadd.f32 0.0, %v633
  %v635 = vpop.f32.mrb[0].mxu0
  %636 = vmatprep.mubr.f32.mxu0 0.0
  %637 = vmatmul.mubr.f32.gmra.mrb[0].mxu0 %v284
  %v638 = vpop.f32.mrb[0].mxu0
  %v639 = vadd.f32 0.0, %v638
  %v640 = vpop.f32.mrb[0].mxu0
  %641 = vmatprep.mubr.f32.mxu0 0.0
  %642 = vmatmul.mubr.f32.gmra.mrb[0].mxu0 %v285
  %v643 = vpop.f32.mrb[0].mxu0
  %v644 = vadd.f32 0.0, %v643
  %v645 = vpop.f32.mrb[0].mxu0
  %646 = vmatprep.mubr.f32.mxu0 0.0
  %647 = vmatmul.mubr.f32.gmra.mrb[0].mxu0 %v286
  %v648 = vpop.f32.mrb[0].mxu0
  %v649 = vadd.f32 0.0, %v648
  %v650 = vpop.f32.mrb[0].mxu0
  %651 = vmatprep.mubr.f32.mxu0 0.0
  %652 = vmatmul.mubr.f32.gmra.mrb[0].mxu0 %v287
  %v653 = vpop.f32.mrb[0].mxu0
  %v654 = vadd.f32 0.0, %v653
  %v655 = vpop.f32.mrb[0].mxu0
  %656 = vmatprep.mubr.f32.mxu0 0.0
  %657 = vmatmul.mubr.f32.gmra.mrb[0].mxu0 %v288
  %v658 = vpop.f32.mrb[0].mxu0
  %v659 = vadd.f32 0.0, %v658
  %v660 = vpop.f32.mrb[0].mxu0
  %661 = vmatprep.mubr.f32.mxu0 0.0
  %662 = vmatmul.mubr.f32.gmra.mrb[0].mxu0 %v289
  %v663 = vpop.f32.mrb[0].mxu0
  %v664 = vadd.f32 0.0, %v663
  %v665 = vpop.f32.mrb[0].mxu0
  %666 = vmatprep.mubr.f32.mxu0 0.0
  %667 = vmatmul.mubr.f32.gmra.mrb[0].mxu0 %v290
  %v668 = vpop.f32.mrb[0].mxu0
  %v669 = vadd.f32 0.0, %v668
  %v670 = vpop.f32.mrb[0].mxu0
  %671 = vmatprep.mubr.f32.mxu0 0.0
  %672 = vmatmul.mubr.f32.gmra.mrb[0].mxu0 %v291
  %v673 = vpop.f32.mrb[0].mxu0
  %v674 = vadd.f32 0.0, %v673
  %v675 = vpop.f32.mrb[0].mxu0
  %676 = vmatprep.mubr.f32.mxu0 0.0
  %677 = vmatmul.mubr.f32.gmra.mrb[0].mxu0 %v292
  %v678 = vpop.f32.mrb[0].mxu0
  %v679 = vadd.f32 0.0, %v678
  %v680 = vpop.f32.mrb[0].mxu0
  %681 = vmatprep.mubr.f32.mxu0 0.0
  %682 = vmatmul.mubr.f32.gmra.mrb[0].mxu0 %v293
  %v683 = vpop.f32.mrb[0].mxu0
  %v684 = vadd.f32 0.0, %v683
  %v685 = vpop.f32.mrb[0].mxu0
  %686 = vmatprep.mubr.f32.mxu0 0.0
  %687 = vmatmul.mubr.f32.gmra.mrb[0].mxu0 %v294
  %v688 = vpop.f32.mrb[0].mxu0
  %v689 = vadd.f32 0.0, %v688
  %v690 = vpop.f32.mrb[0].mxu0
  %691 = vmatprep.mubr.f32.mxu0 0.0
  %692 = vmatmul.mubr.f32.gmra.mrb[0].mxu0 %v295
  %v693 = vpop.f32.mrb[0].mxu0
  %v694 = vadd.f32 0.0, %v693
  %v695 = vpop.f32.mrb[0].mxu0
  %696 = vdwg.mxu0
  %v697 = vld [vmem:[%s5] sm:$0x1]
  %v699 = vlaneseq
  %v700 = vshrl.u32 %v699, 7
  %v701 = vsub.s32 0, %v700
  %v702 = vrot.slane %v697, %v701
  %v704 = vmul.f32 %v379, %v702
  %v705 = vmul.f32 %v384, %v702
  %v706 = vmul.f32 %v389, %v702
  %v707 = vmul.f32 %v394, %v702
  %v708 = vmul.f32 %v399, %v702
  %v709 = vmul.f32 %v404, %v702
  %v710 = vmul.f32 %v409, %v702
  %v711 = vmul.f32 %v414, %v702
  %v712 = vmul.f32 %v419, %v702
  %v713 = vmul.f32 %v424, %v702
  %v714 = vmul.f32 %v429, %v702
  %v715 = vmul.f32 %v434, %v702
  %v716 = vmul.f32 %v439, %v702
  %v717 = vmul.f32 %v444, %v702
  %v718 = vmul.f32 %v449, %v702
  %v719 = vmul.f32 %v454, %v702
  %v720 = vmul.f32 %v459, %v702
  %v721 = vmul.f32 %v464, %v702
  %v722 = vmul.f32 %v469, %v702
  %v723 = vmul.f32 %v474, %v702
  %v724 = vmul.f32 %v479, %v702
  %v725 = vmul.f32 %v484, %v702
  %v726 = vmul.f32 %v489, %v702
  %v727 = vmul.f32 %v494, %v702
  %v728 = vmul.f32 %v499, %v702
  %v729 = vmul.f32 %v504, %v702
  %v730 = vmul.f32 %v509, %v702
  %v731 = vmul.f32 %v514, %v702
  %v732 = vmul.f32 %v519, %v702
  %v733 = vmul.f32 %v524, %v702
  %v734 = vmul.f32 %v529, %v702
  %v735 = vmul.f32 %v534, %v702
  %v736 = vmul.f32 %v539, %v702
  %v737 = vmul.f32 %v544, %v702
  %v738 = vmul.f32 %v549, %v702
  %v739 = vmul.f32 %v554, %v702
  %v740 = vmul.f32 %v559, %v702
  %v741 = vmul.f32 %v564, %v702
  %v742 = vmul.f32 %v569, %v702
  %v743 = vmul.f32 %v574, %v702
  %v744 = vmul.f32 %v579, %v702
  %v745 = vmul.f32 %v584, %v702
  %v746 = vmul.f32 %v589, %v702
  %v747 = vmul.f32 %v594, %v702
  %v748 = vmul.f32 %v599, %v702
  %v749 = vmul.f32 %v604, %v702
  %v750 = vmul.f32 %v609, %v702
  %v751 = vmul.f32 %v614, %v702
  %v752 = vmul.f32 %v619, %v702
  %v753 = vmul.f32 %v624, %v702
  %v754 = vmul.f32 %v629, %v702
  %v755 = vmul.f32 %v634, %v702
  %v756 = vmul.f32 %v639, %v702
  %v757 = vmul.f32 %v644, %v702
  %v758 = vmul.f32 %v649, %v702
  %v759 = vmul.f32 %v654, %v702
  %v760 = vmul.f32 %v659, %v702
  %v761 = vmul.f32 %v664, %v702
  %v762 = vmul.f32 %v669, %v702
  %v763 = vmul.f32 %v674, %v702
  %v764 = vmul.f32 %v679, %v702
  %v765 = vmul.f32 %v684, %v702
  %v766 = vmul.f32 %v689, %v702
  %v767 = vmul.f32 %v694, %v702
  %v768 = vadd.f32 %v168, %v704
  %v769 = vadd.f32 %v169, %v705
  %v770 = vadd.f32 %v170, %v706
  %v771 = vadd.f32 %v171, %v707
  %v772 = vadd.f32 %v172, %v708
  %v773 = vadd.f32 %v173, %v709
  %v774 = vadd.f32 %v174, %v710
  %v775 = vadd.f32 %v175, %v711
  %v776 = vadd.f32 %v176, %v712
  %v777 = vadd.f32 %v177, %v713
  %v778 = vadd.f32 %v178, %v714
  %v779 = vadd.f32 %v179, %v715
  %v780 = vadd.f32 %v180, %v716
  %v781 = vadd.f32 %v181, %v717
  %v782 = vadd.f32 %v182, %v718
  %v783 = vadd.f32 %v183, %v719
  %v784 = vadd.f32 %v184, %v720
  %v785 = vadd.f32 %v185, %v721
  %v786 = vadd.f32 %v186, %v722
  %v787 = vadd.f32 %v187, %v723
  %v788 = vadd.f32 %v188, %v724
  %v789 = vadd.f32 %v189, %v725
  %v790 = vadd.f32 %v190, %v726
  %v791 = vadd.f32 %v191, %v727
  %v792 = vadd.f32 %v192, %v728
  %v793 = vadd.f32 %v193, %v729
  %v794 = vadd.f32 %v194, %v730
  %v795 = vadd.f32 %v195, %v731
  %v796 = vadd.f32 %v196, %v732
  %v797 = vadd.f32 %v197, %v733
  %v798 = vadd.f32 %v198, %v734
  %v799 = vadd.f32 %v199, %v735
  %v800 = vadd.f32 %v200, %v736
  %v801 = vadd.f32 %v201, %v737
  %v802 = vadd.f32 %v202, %v738
  %v803 = vadd.f32 %v203, %v739
  %v804 = vadd.f32 %v204, %v740
  %v805 = vadd.f32 %v205, %v741
  %v806 = vadd.f32 %v206, %v742
  %v807 = vadd.f32 %v207, %v743
  %v808 = vadd.f32 %v208, %v744
  %v809 = vadd.f32 %v209, %v745
  %v810 = vadd.f32 %v210, %v746
  %v811 = vadd.f32 %v211, %v747
  %v812 = vadd.f32 %v212, %v748
  %v813 = vadd.f32 %v213, %v749
  %v814 = vadd.f32 %v214, %v750
  %v815 = vadd.f32 %v215, %v751
  %v816 = vadd.f32 %v216, %v752
  %v817 = vadd.f32 %v217, %v753
  %v818 = vadd.f32 %v218, %v754
  %v819 = vadd.f32 %v219, %v755
  %v820 = vadd.f32 %v220, %v756
  %v821 = vadd.f32 %v221, %v757
  %v822 = vadd.f32 %v222, %v758
  %v823 = vadd.f32 %v223, %v759
  %v824 = vadd.f32 %v224, %v760
  %v825 = vadd.f32 %v225, %v761
  %v826 = vadd.f32 %v226, %v762
  %v827 = vadd.f32 %v227, %v763
  %v828 = vadd.f32 %v228, %v764
  %v829 = vadd.f32 %v229, %v765
  %v830 = vadd.f32 %v230, %v766
  %v831 = vadd.f32 %v231, %v767
  %v832 = vld [vmem:[%s6] sm:$0x1]
  %v834 = vlaneseq
  %v835 = vshrl.u32 %v834, 7
  %v836 = vsub.s32 0, %v835
  %v837 = vrot.slane %v832, %v836
  %v839 = vadd.f32 %v768, %v837
  %v840 = vadd.f32 %v769, %v837
  %v841 = vadd.f32 %v770, %v837
  %v842 = vadd.f32 %v771, %v837
  %v843 = vadd.f32 %v772, %v837
  %v844 = vadd.f32 %v773, %v837
  %v845 = vadd.f32 %v774, %v837
  %v846 = vadd.f32 %v775, %v837
  %v847 = vadd.f32 %v776, %v837
  %v848 = vadd.f32 %v777, %v837
  %v849 = vadd.f32 %v778, %v837
  %v850 = vadd.f32 %v779, %v837
  %v851 = vadd.f32 %v780, %v837
  %v852 = vadd.f32 %v781, %v837
  %v853 = vadd.f32 %v782, %v837
  %v854 = vadd.f32 %v783, %v837
  %v855 = vadd.f32 %v784, %v837
  %v856 = vadd.f32 %v785, %v837
  %v857 = vadd.f32 %v786, %v837
  %v858 = vadd.f32 %v787, %v837
  %v859 = vadd.f32 %v788, %v837
  %v860 = vadd.f32 %v789, %v837
  %v861 = vadd.f32 %v790, %v837
  %v862 = vadd.f32 %v791, %v837
  %v863 = vadd.f32 %v792, %v837
  %v864 = vadd.f32 %v793, %v837
  %v865 = vadd.f32 %v794, %v837
  %v866 = vadd.f32 %v795, %v837
  %v867 = vadd.f32 %v796, %v837
  %v868 = vadd.f32 %v797, %v837
  %v869 = vadd.f32 %v798, %v837
  %v870 = vadd.f32 %v799, %v837
  %v871 = vadd.f32 %v800, %v837
  %v872 = vadd.f32 %v801, %v837
  %v873 = vadd.f32 %v802, %v837
  %v874 = vadd.f32 %v803, %v837
  %v875 = vadd.f32 %v804, %v837
  %v876 = vadd.f32 %v805, %v837
  %v877 = vadd.f32 %v806, %v837
  %v878 = vadd.f32 %v807, %v837
  %v879 = vadd.f32 %v808, %v837
  %v880 = vadd.f32 %v809, %v837
  %v881 = vadd.f32 %v810, %v837
  %v882 = vadd.f32 %v811, %v837
  %v883 = vadd.f32 %v812, %v837
  %v884 = vadd.f32 %v813, %v837
  %v885 = vadd.f32 %v814, %v837
  %v886 = vadd.f32 %v815, %v837
  %v887 = vadd.f32 %v816, %v837
  %v888 = vadd.f32 %v817, %v837
  %v889 = vadd.f32 %v818, %v837
  %v890 = vadd.f32 %v819, %v837
  %v891 = vadd.f32 %v820, %v837
  %v892 = vadd.f32 %v821, %v837
  %v893 = vadd.f32 %v822, %v837
  %v894 = vadd.f32 %v823, %v837
  %v895 = vadd.f32 %v824, %v837
  %v896 = vadd.f32 %v825, %v837
  %v897 = vadd.f32 %v826, %v837
  %v898 = vadd.f32 %v827, %v837
  %v899 = vadd.f32 %v828, %v837
  %v900 = vadd.f32 %v829, %v837
  %v901 = vadd.f32 %v830, %v837
  %v902 = vadd.f32 %v831, %v837
  %v903 = vmax.f32 %v839, 0.0
  %v904 = vmax.f32 %v840, 0.0
  %v905 = vmax.f32 %v841, 0.0
  %v906 = vmax.f32 %v842, 0.0
  %v907 = vmax.f32 %v843, 0.0
  %v908 = vmax.f32 %v844, 0.0
  %v909 = vmax.f32 %v845, 0.0
  %v910 = vmax.f32 %v846, 0.0
  %v911 = vmax.f32 %v847, 0.0
  %v912 = vmax.f32 %v848, 0.0
  %v913 = vmax.f32 %v849, 0.0
  %v914 = vmax.f32 %v850, 0.0
  %v915 = vmax.f32 %v851, 0.0
  %v916 = vmax.f32 %v852, 0.0
  %v917 = vmax.f32 %v853, 0.0
  %v918 = vmax.f32 %v854, 0.0
  %v919 = vmax.f32 %v855, 0.0
  %v920 = vmax.f32 %v856, 0.0
  %v921 = vmax.f32 %v857, 0.0
  %v922 = vmax.f32 %v858, 0.0
  %v923 = vmax.f32 %v859, 0.0
  %v924 = vmax.f32 %v860, 0.0
  %v925 = vmax.f32 %v861, 0.0
  %v926 = vmax.f32 %v862, 0.0
  %v927 = vmax.f32 %v863, 0.0
  %v928 = vmax.f32 %v864, 0.0
  %v929 = vmax.f32 %v865, 0.0
  %v930 = vmax.f32 %v866, 0.0
  %v931 = vmax.f32 %v867, 0.0
  %v932 = vmax.f32 %v868, 0.0
  %v933 = vmax.f32 %v869, 0.0
  %v934 = vmax.f32 %v870, 0.0
  %v935 = vmax.f32 %v871, 0.0
  %v936 = vmax.f32 %v872, 0.0
  %v937 = vmax.f32 %v873, 0.0
  %v938 = vmax.f32 %v874, 0.0
  %v939 = vmax.f32 %v875, 0.0
  %v940 = vmax.f32 %v876, 0.0
  %v941 = vmax.f32 %v877, 0.0
  %v942 = vmax.f32 %v878, 0.0
  %v943 = vmax.f32 %v879, 0.0
  %v944 = vmax.f32 %v880, 0.0
  %v945 = vmax.f32 %v881, 0.0
  %v946 = vmax.f32 %v882, 0.0
  %v947 = vmax.f32 %v883, 0.0
  %v948 = vmax.f32 %v884, 0.0
  %v949 = vmax.f32 %v885, 0.0
  %v950 = vmax.f32 %v886, 0.0
  %v951 = vmax.f32 %v887, 0.0
  %v952 = vmax.f32 %v888, 0.0
  %v953 = vmax.f32 %v889, 0.0
  %v954 = vmax.f32 %v890, 0.0
  %v955 = vmax.f32 %v891, 0.0
  %v956 = vmax.f32 %v892, 0.0
  %v957 = vmax.f32 %v893, 0.0
  %v958 = vmax.f32 %v894, 0.0
  %v959 = vmax.f32 %v895, 0.0
  %v960 = vmax.f32 %v896, 0.0
  %v961 = vmax.f32 %v897, 0.0
  %v962 = vmax.f32 %v898, 0.0
  %v963 = vmax.f32 %v899, 0.0
  %v964 = vmax.f32 %v900, 0.0
  %v965 = vmax.f32 %v901, 0.0
  %v966 = vmax.f32 %v902, 0.0
  %967 = vst [vmem:[%s7] sm:$0xff] %v903
  %968 = vst [vmem:[%s7 + $0x8] sm:$0xff] %v904
  %969 = vst [vmem:[%s7 + $0x10] sm:$0xff] %v905
  %970 = vst [vmem:[%s7 + $0x18] sm:$0xff] %v906
  %971 = vst [vmem:[%s7 + $0x20] sm:$0xff] %v907
  %972 = vst [vmem:[%s7 + $0x28] sm:$0xff] %v908
  %973 = vst [vmem:[%s7 + $0x30] sm:$0xff] %v909
  %974 = vst [vmem:[%s7 + $0x38] sm:$0xff] %v910
  %975 = vst [vmem:[%s7 + $0x40] sm:$0xff] %v911
  %976 = vst [vmem:[%s7 + $0x48] sm:$0xff] %v912
  %977 = vst [vmem:[%s7 + $0x50] sm:$0xff] %v913
  %978 = vst [vmem:[%s7 + $0x58] sm:$0xff] %v914
  %979 = vst [vmem:[%s7 + $0x60] sm:$0xff] %v915
  %980 = vst [vmem:[%s7 + $0x68] sm:$0xff] %v916
  %981 = vst [vmem:[%s7 + $0x70] sm:$0xff] %v917
  %982 = vst [vmem:[%s7 + $0x78] sm:$0xff] %v918
  %983 = vst [vmem:[%s7 + $0x80] sm:$0xff] %v919
  %984 = vst [vmem:[%s7 + $0x88] sm:$0xff] %v920
  %985 = vst [vmem:[%s7 + $0x90] sm:$0xff] %v921
  %986 = vst [vmem:[%s7 + $0x98] sm:$0xff] %v922
  %987 = vst [vmem:[%s7 + $0xa0] sm:$0xff] %v923
  %988 = vst [vmem:[%s7 + $0xa8] sm:$0xff] %v924
  %989 = vst [vmem:[%s7 + $0xb0] sm:$0xff] %v925
  %990 = vst [vmem:[%s7 + $0xb8] sm:$0xff] %v926
  %991 = vst [vmem:[%s7 + $0xc0] sm:$0xff] %v927
  %992 = vst [vmem:[%s7 + $0xc8] sm:$0xff] %v928
  %993 = vst [vmem:[%s7 + $0xd0] sm:$0xff] %v929
  %994 = vst [vmem:[%s7 + $0xd8] sm:$0xff] %v930
  %995 = vst [vmem:[%s7 + $0xe0] sm:$0xff] %v931
  %996 = vst [vmem:[%s7 + $0xe8] sm:$0xff] %v932
  %997 = vst [vmem:[%s7 + $0xf0] sm:$0xff] %v933
  %998 = vst [vmem:[%s7 + $0xf8] sm:$0xff] %v934
  %999 = vst [vmem:[%s7 + $0x100] sm:$0xff] %v935
  %1000 = vst [vmem:[%s7 + $0x108] sm:$0xff] %v936
  %1001 = vst [vmem:[%s7 + $0x110] sm:$0xff] %v937
  %1002 = vst [vmem:[%s7 + $0x118] sm:$0xff] %v938
  %1003 = vst [vmem:[%s7 + $0x120] sm:$0xff] %v939
  %1004 = vst [vmem:[%s7 + $0x128] sm:$0xff] %v940
  %1005 = vst [vmem:[%s7 + $0x130] sm:$0xff] %v941
  %1006 = vst [vmem:[%s7 + $0x138] sm:$0xff] %v942
  %1007 = vst [vmem:[%s7 + $0x140] sm:$0xff] %v943
  %1008 = vst [vmem:[%s7 + $0x148] sm:$0xff] %v944
  %1009 = vst [vmem:[%s7 + $0x150] sm:$0xff] %v945
  %1010 = vst [vmem:[%s7 + $0x158] sm:$0xff] %v946
  %1011 = vst [vmem:[%s7 + $0x160] sm:$0xff] %v947
  %1012 = vst [vmem:[%s7 + $0x168] sm:$0xff] %v948
  %1013 = vst [vmem:[%s7 + $0x170] sm:$0xff] %v949
  %1014 = vst [vmem:[%s7 + $0x178] sm:$0xff] %v950
  %1015 = vst [vmem:[%s7 + $0x180] sm:$0xff] %v951
  %1016 = vst [vmem:[%s7 + $0x188] sm:$0xff] %v952
  %1017 = vst [vmem:[%s7 + $0x190] sm:$0xff] %v953
  %1018 = vst [vmem:[%s7 + $0x198] sm:$0xff] %v954
  %1019 = vst [vmem:[%s7 + $0x1a0] sm:$0xff] %v955
  %1020 = vst [vmem:[%s7 + $0x1a8] sm:$0xff] %v956
  %1021 = vst [vmem:[%s7 + $0x1b0] sm:$0xff] %v957
  %1022 = vst [vmem:[%s7 + $0x1b8] sm:$0xff] %v958
  %1023 = vst [vmem:[%s7 + $0x1c0] sm:$0xff] %v959
  %1024 = vst [vmem:[%s7 + $0x1c8] sm:$0xff] %v960
  %1025 = vst [vmem:[%s7 + $0x1d0] sm:$0xff] %v961
  %1026 = vst [vmem:[%s7 + $0x1d8] sm:$0xff] %v962
  %1027 = vst [vmem:[%s7 + $0x1e0] sm:$0xff] %v963
  %1028 = vst [vmem:[%s7 + $0x1e8] sm:$0xff] %v964
  %1029 = vst [vmem:[%s7 + $0x1f0] sm:$0xff] %v965
  %1030 = vst [vmem:[%s7 + $0x1f8] sm:$0xff] %v966
  // Predicated region
  $region30: #{resblk_forward.5} parent=0 // pred_check
    _
  $region31: #{resblk_forward.5} parent=0 // pred_check_branch
    %1032 = sbr.rel (0) target = $region33
  $region32: #{resblk_forward.5} parent=0 // pred_region
    _
  $region33: #{resblk_forward.5} parent=0 // pred_fallthru
    _
  // Predicated region
  $region34: #{resblk_forward.5} parent=0 // pred_check
    _
  $region35: #{resblk_forward.5} parent=0 // pred_check_branch
    %1034 = sbr.rel (0) target = $region37
  $region36: #{resblk_forward.5} parent=0 // pred_region
    _
  $region37: #{resblk_forward.5} parent=0 // pred_fallthru
    _

// kernel: resblk_forward.4
$region0: #{resblk_forward.4}
  #allocation0 [shape = 'u32[]', space=smem, size = 0x4, offset = 0x4, fixed_abs, tag = 'smem constant byte address 0x4 - core index']
  #allocation1 [shape = 'u32[144,128]{1,0:T(1,128)}', space=vmem, size = 0x12000, scoped, tag = 'internal scratch']
  #allocation2 [shape = 'f32[304,128]{1,0:T(8,128)}', space=vmem, size = 0x26000, scoped, tag = 'scratch operand']
  %s0 = inlined_call_operand.vmem [shape: f32[2,256,128], index: 0, kind: input, shape index: {}]
  %s1 = inlined_call_operand.vmem [shape: f32[1,128], index: 1, kind: input, shape index: {}]
  %s2 = inlined_call_operand.vmem [shape: f32[1,128], index: 2, kind: input, shape index: {}]
  %s3 = inlined_call_operand.vmem [shape: f32[256,1], index: 3, kind: input, shape index: {}]
  %s4 = inlined_call_operand.vmem [shape: f32[256,1], index: 4, kind: input, shape index: {}]
  %s5 = inlined_call_operand.vmem [shape: f32[9,128,128], index: 5, kind: input, shape index: {}]
  %s6 = inlined_call_operand.vmem [shape: f32[2,256,128], index: 6, kind: output, shape index: {0}]
  %s7 = inlined_call_operand.vmem [shape: f32[2,2,128], index: 7, kind: output, shape index: {1}]
  %8 = xla_tuple %s6, %s7
  %s9 = sld [smem:[#allocation0]]
  $region69: #{resblk_forward.4} parent=0
    _
  %s11 = ssub.s32 1, %s9
  %s12 = scalar_select 0, %s11, %s9
  loop: start=0, step=1, limit=4
  $region2: #{resblk_forward.4} parent=0 // loop_pre_header
    _
  $region3: #{resblk_forward.4} parent=0 // loop_header
    %s14 = sphi 0, %s18
    %p15 = scmp.ge.s32.totalorder %s14, 4
    %s21 = sphi 0, %s33
    %s22 = sphi 0, %s29
    %s23 = sphi 0, %s21
    %s24 = sphi 0, %s22
    %s25 = sphi 0, %s23
    %s26 = sphi 0, %s24
    %s36 = sphi 0, %s38
    %s39 = sphi 0, %s36
    %s40 = sphi 0, %s39
    %s56 = sphi 0, %s40
    %s60 = sphi 0, %s60
    %s62 = sphi 0, %s60
    %s63 = sphi 0, %s62
    %s77 = sphi 0, %s63
    %s81 = sphi 0, %s81
    %s83 = sphi 0, %s81
    %s84 = sphi 0, %s83
    %s98 = sphi 0, %s84
    %s102 = sphi 0, %s102
    %s104 = sphi 0, %s102
    %s105 = sphi 0, %s104
    %s119 = sphi 0, %s105
    %s123 = sphi 0, %s123
    %s125 = sphi 0, %s123
    %s126 = sphi 0, %s125
    %s140 = sphi 0, %s126
    %s146 = sphi 0, %s148
    %s149 = sphi 0, %s146
    %s150 = sphi 0, %s149
    %s166 = sphi 0, %s150
    %s174 = sphi 0, %s176
    %s177 = sphi 0, %s174
    %s178 = sphi 0, %s177
    %s194 = sphi 0, %s178
    %s202 = sphi 0, %s204
    %s205 = sphi 0, %s202
    %s206 = sphi 0, %s205
    %s222 = sphi 0, %s206
  $region4: #{resblk_forward.4} parent=0 // loop_header_branch
    %17 = sbr.rel (%p15) target = $region8
  $region5: #{resblk_forward.4} parent=0 // loop_body
    %s19 = ssub.s32 %s14, 1
    %s20 = ssub.s32 %s14, 2
    %s27 = sadd.s32 1, %s22
    %p28 = scmp.ge.s32.totalorder %s27, 1
    %s29 = scalar_select %p28, 0, %s27
    %s30 = sadd.s32 1, %s21
    %s31 = scalar_select %p28, %s30, %s21
    %p32 = scmp.ge.s32.totalorder %s31, 2
    %s33 = scalar_select %p32, 0, %s31
    %s34 = ssub.s32 %s21, %s33
    %p35 = scmp.eq.s32.totalorder %s34, 0
    %s37 = sadd.s32 %s36, 1
    %s38 = scalar_select %p35, %s36, %s37
    %p41 = pneg %p35
    %p42 = scmp.eq.s32.totalorder %s14, 1
    %p43 = por %p41, %p42
    %p44 = scmp.ne.s32.totalorder %s36, %s39
    %p45 = scmp.eq.s32.totalorder %s14, 0
    %p46 = por %p44, %p45
    %p47 = scmp.ne.s32.totalorder %s36, %s39
    %p48 = scmp.eq.s32.totalorder %s19, 1
    %p49 = por %p47, %p48
    %p50 = scmp.ne.s32.totalorder %s39, %s40
    %p51 = scmp.eq.s32.totalorder %s19, 0
    %p52 = por %p50, %p51
    %p53 = scmp.ne.s32.totalorder %s39, %s40
    %p54 = scmp.eq.s32.totalorder %s20, 1
    %p55 = por %p53, %p54
    %p57 = scmp.ne.s32.totalorder %s40, %s56
    %p58 = scmp.eq.s32.totalorder %s20, 0
    %p59 = por %p57, %p58
    %s61 = sadd.s32 %s60, 1
    %p64 = scmp.eq.s32.totalorder %s14, 1
    %p65 = scmp.ne.s32.totalorder %s60, %s62
    %p66 = scmp.eq.s32.totalorder %s14, 0
    %p67 = por %p65, %p66
    %p68 = scmp.ne.s32.totalorder %s60, %s62
    %p69 = scmp.eq.s32.totalorder %s19, 1
    %p70 = por %p68, %p69
    %p71 = scmp.ne.s32.totalorder %s62, %s63
    %p72 = scmp.eq.s32.totalorder %s19, 0
    %p73 = por %p71, %p72
    %p74 = scmp.ne.s32.totalorder %s62, %s63
    %p75 = scmp.eq.s32.totalorder %s20, 1
    %p76 = por %p74, %p75
    %p78 = scmp.ne.s32.totalorder %s63, %s77
    %p79 = scmp.eq.s32.totalorder %s20, 0
    %p80 = por %p78, %p79
    %s82 = sadd.s32 %s81, 1
    %p85 = scmp.eq.s32.totalorder %s14, 1
    %p86 = scmp.ne.s32.totalorder %s81, %s83
    %p87 = scmp.eq.s32.totalorder %s14, 0
    %p88 = por %p86, %p87
    %p89 = scmp.ne.s32.totalorder %s81, %s83
    %p90 = scmp.eq.s32.totalorder %s19, 1
    %p91 = por %p89, %p90
    %p92 = scmp.ne.s32.totalorder %s83, %s84
    %p93 = scmp.eq.s32.totalorder %s19, 0
    %p94 = por %p92, %p93
    %p95 = scmp.ne.s32.totalorder %s83, %s84
    %p96 = scmp.eq.s32.totalorder %s20, 1
    %p97 = por %p95, %p96
    %p99 = scmp.ne.s32.totalorder %s84, %s98
    %p100 = scmp.eq.s32.totalorder %s20, 0
    %p101 = por %p99, %p100
    %s103 = sadd.s32 %s102, 1
    %p106 = scmp.eq.s32.totalorder %s14, 1
    %p107 = scmp.ne.s32.totalorder %s102, %s104
    %p108 = scmp.eq.s32.totalorder %s14, 0
    %p109 = por %p107, %p108
    %p110 = scmp.ne.s32.totalorder %s102, %s104
    %p111 = scmp.eq.s32.totalorder %s19, 1
    %p112 = por %p110, %p111
    %p113 = scmp.ne.s32.totalorder %s104, %s105
    %p114 = scmp.eq.s32.totalorder %s19, 0
    %p115 = por %p113, %p114
    %p116 = scmp.ne.s32.totalorder %s104, %s105
    %p117 = scmp.eq.s32.totalorder %s20, 1
    %p118 = por %p116, %p117
    %p120 = scmp.ne.s32.totalorder %s105, %s119
    %p121 = scmp.eq.s32.totalorder %s20, 0
    %p122 = por %p120, %p121
    %s124 = sadd.s32 %s123, 1
    %p127 = scmp.eq.s32.totalorder %s14, 1
    %p128 = scmp.ne.s32.totalorder %s123, %s125
    %p129 = scmp.eq.s32.totalorder %s14, 0
    %p130 = por %p128, %p129
    %p131 = scmp.ne.s32.totalorder %s123, %s125
    %p132 = scmp.eq.s32.totalorder %s19, 1
    %p133 = por %p131, %p132
    %p134 = scmp.ne.s32.totalorder %s125, %s126
    %p135 = scmp.eq.s32.totalorder %s19, 0
    %p136 = por %p134, %p135
    %p137 = scmp.ne.s32.totalorder %s125, %s126
    %p138 = scmp.eq.s32.totalorder %s20, 1
    %p139 = por %p137, %p138
    %p141 = scmp.ne.s32.totalorder %s126, %s140
    %p142 = scmp.eq.s32.totalorder %s20, 0
    %p143 = por %p141, %p142
    %s144 = ssub.s32 %s22, %s29
    %p145 = scmp.eq.s32.totalorder %s144, 0
    %s147 = sadd.s32 %s146, 1
    %s148 = scalar_select %p145, %s146, %s147
    %p151 = pneg %p145
    %p152 = scmp.eq.s32.totalorder %s14, 1
    %p153 = por %p151, %p152
    %p154 = scmp.ne.s32.totalorder %s146, %s149
    %p155 = scmp.eq.s32.totalorder %s14, 0
    %p156 = por %p154, %p155
    %p157 = scmp.ne.s32.totalorder %s146, %s149
    %p158 = scmp.eq.s32.totalorder %s19, 1
    %p159 = por %p157, %p158
    %p160 = scmp.ne.s32.totalorder %s149, %s150
    %p161 = scmp.eq.s32.totalorder %s19, 0
    %p162 = por %p160, %p161
    %p163 = scmp.ne.s32.totalorder %s149, %s150
    %p164 = scmp.eq.s32.totalorder %s20, 1
    %p165 = por %p163, %p164
    %p167 = scmp.ne.s32.totalorder %s150, %s166
    %p168 = scmp.eq.s32.totalorder %s20, 0
    %p169 = por %p167, %p168
    %s170 = ssub.s32 %s21, %s33
    %s171 = ssub.s32 %s22, %s29
    %s172 = sor.u32 %s170, %s171
    %p173 = scmp.eq.s32.totalorder %s172, 0
    %s175 = sadd.s32 %s174, 1
    %s176 = scalar_select %p173, %s174, %s175
    %p179 = pneg %p173
    %p180 = scmp.eq.s32.totalorder %s14, 1
    %p181 = por %p179, %p180
    %p182 = scmp.ne.s32.totalorder %s174, %s177
    %p183 = scmp.eq.s32.totalorder %s14, 0
    %p184 = por %p182, %p183
    %p185 = scmp.ne.s32.totalorder %s174, %s177
    %p186 = scmp.eq.s32.totalorder %s19, 1
    %p187 = por %p185, %p186
    %p188 = scmp.ne.s32.totalorder %s177, %s178
    %p189 = scmp.eq.s32.totalorder %s19, 0
    %p190 = por %p188, %p189
    %p191 = scmp.ne.s32.totalorder %s177, %s178
    %p192 = scmp.eq.s32.totalorder %s20, 1
    %p193 = por %p191, %p192
    %p195 = scmp.ne.s32.totalorder %s178, %s194
    %p196 = scmp.eq.s32.totalorder %s20, 0
    %p197 = por %p195, %p196
    %s198 = ssub.s32 %s21, %s33
    %s199 = ssub.s32 %s22, %s29
    %s200 = sor.u32 %s198, %s199
    %p201 = scmp.eq.s32.totalorder %s200, 0
    %s203 = sadd.s32 %s202, 1
    %s204 = scalar_select %p201, %s202, %s203
    %p207 = pneg %p201
    %p208 = scmp.eq.s32.totalorder %s14, 1
    %p209 = por %p207, %p208
    %p210 = scmp.ne.s32.totalorder %s202, %s205
    %p211 = scmp.eq.s32.totalorder %s14, 0
    %p212 = por %p210, %p211
    %p213 = scmp.ne.s32.totalorder %s202, %s205
    %p214 = scmp.eq.s32.totalorder %s19, 1
    %p215 = por %p213, %p214
    %p216 = scmp.ne.s32.totalorder %s205, %s206
    %p217 = scmp.eq.s32.totalorder %s19, 0
    %p218 = por %p216, %p217
    %p219 = scmp.ne.s32.totalorder %s205, %s206
    %p220 = scmp.eq.s32.totalorder %s20, 1
    %p221 = por %p219, %p220
    %p223 = scmp.ne.s32.totalorder %s206, %s222
    %p224 = scmp.eq.s32.totalorder %s20, 0
    %p225 = por %p223, %p224
    %p226 = scmp.le.s32.totalorder 1, %s14
    %p227 = scmp.lt.s32.totalorder %s14, 3
    %p228 = pnand %p226, %p227
    %p229 = pneg %p228
    // Predicated region
    $region9: #{resblk_forward.4} parent=5 // pred_check
      _
    $region10: #{resblk_forward.4} parent=5 // pred_check_branch
      %231 = sbr.rel (%p228) target = $region12
    $region11: #{resblk_forward.4} parent=5 // pred_region
      %s232 = ssub.s32 %s14, 1
      // Predicated region
      $region13: #{resblk_forward.4} parent=11 // pred_check
        %p233 = pneg %p73
      $region14: #{resblk_forward.4} parent=11 // pred_check_branch
        %235 = sbr.rel (%p233) target = $region16
      $region15: #{resblk_forward.4} parent=11 // pred_region
        _
      $region16: #{resblk_forward.4} parent=11 // pred_fallthru
        _
      // Predicated region
      $region17: #{resblk_forward.4} parent=11 // pred_check
        %p236 = pneg %p94
      $region18: #{resblk_forward.4} parent=11 // pred_check_branch
        %238 = sbr.rel (%p236) target = $region20
      $region19: #{resblk_forward.4} parent=11 // pred_region
        _
      $region20: #{resblk_forward.4} parent=11 // pred_fallthru
        _
      // Predicated region
      $region21: #{resblk_forward.4} parent=11 // pred_check
        %p239 = pneg %p115
      $region22: #{resblk_forward.4} parent=11 // pred_check_branch
        %241 = sbr.rel (%p239) target = $region24
      $region23: #{resblk_forward.4} parent=11 // pred_region
        _
      $region24: #{resblk_forward.4} parent=11 // pred_fallthru
        _
      // Predicated region
      $region25: #{resblk_forward.4} parent=11 // pred_check
        %p242 = pneg %p136
      $region26: #{resblk_forward.4} parent=11 // pred_check_branch
        %244 = sbr.rel (%p242) target = $region28
      $region27: #{resblk_forward.4} parent=11 // pred_region
        _
      $region28: #{resblk_forward.4} parent=11 // pred_fallthru
        _
      // Predicated region
      $region29: #{resblk_forward.4} parent=11 // pred_check
        %p245 = pneg %p162
      $region30: #{resblk_forward.4} parent=11 // pred_check_branch
        %247 = sbr.rel (%p245) target = $region32
      $region31: #{resblk_forward.4} parent=11 // pred_region
        %p248 = scmp.lt.s32.totalorder %s24, 0
        %s249 = scalar_select %p248, %s24, 0
        %s250 = smul.addr %s249, 8
        %s251 = scalar_lea.vmem %s5, %s250
      $region32: #{resblk_forward.4} parent=11 // pred_fallthru
        _
    $region12: #{resblk_forward.4} parent=5 // pred_fallthru
      _
    %p252 = scmp.lt.s32.totalorder %s14, 2
    // Predicated region
    $region33: #{resblk_forward.4} parent=5 // pred_check
      %p253 = pneg %p252
    $region34: #{resblk_forward.4} parent=5 // pred_check_branch
      %255 = sbr.rel (%p253) target = $region36
    $region35: #{resblk_forward.4} parent=5 // pred_region
      // Predicated region
      $region37: #{resblk_forward.4} parent=35 // pred_check
        %p256 = pneg %p46
      $region38: #{resblk_forward.4} parent=35 // pred_check_branch
        %258 = sbr.rel (%p256) target = $region40
      $region39: #{resblk_forward.4} parent=35 // pred_region
        %p259 = scmp.lt.s32.totalorder %s21, 1
        %s260 = scalar_select %p259, %s21, 1
        %s261 = smul.addr %s260, 32
        %s262 = smul.addr %s261, 8
        %s263 = scalar_lea.vmem %s0, %s262
      $region40: #{resblk_forward.4} parent=35 // pred_fallthru
        _
    $region36: #{resblk_forward.4} parent=5 // pred_fallthru
      _
    %p264 = scmp.le.s32.totalorder 1, %s14
    %p265 = scmp.lt.s32.totalorder %s14, 3
    %p266 = pnand %p264, %p265
    %p267 = pneg %p266
    // Predicated region
    $region41: #{resblk_forward.4} parent=5 // pred_check
      _
    $region42: #{resblk_forward.4} parent=5 // pred_check_branch
      %269 = sbr.rel (%p266) target = $region44
    $region43: #{resblk_forward.4} parent=5 // pred_region
      %s270 = ssub.s32 %s14, 1
      %p271 = scmp.lt.s32.totalorder %s23, 1
      %s272 = scalar_select %p271, %s23, 1
      %s273 = smul.addr %s272, 32
      %s274 = smul.addr %s273, 8
      %s275 = scalar_lea.vmem %s0, %s274
      %p276 = pneg %p52
      %p277 = pneg %p49
      %p278 = pneg %p73
      %p279 = pneg %p70
      %p280 = pneg %p94
      %p281 = pneg %p91
      %p282 = pneg %p115
      %p283 = pneg %p112
      %p284 = pneg %p136
      %p285 = pneg %p133
      %p286 = scmp.lt.s32.totalorder %s24, 0
      %s287 = scalar_select %p286, %s24, 0
      %s288 = smul.addr %s287, 8
      %s289 = scalar_lea.vmem %s5, %s288
      %p290 = pneg %p162
      %p291 = pneg %p159
      %p292 = pneg %p190
      %p293 = pneg %p187
      %p294 = scmp.lt.s32.totalorder %s23, 1
      %s295 = scalar_select %p294, %s23, 1
      %p296 = scmp.lt.s32.totalorder %s24, 0
      %s297 = scalar_select %p296, %s24, 0
      %s298 = smul.addr %s295, 32
      %s299 = sadd.s32 %s297, %s298
      %s300 = smul.addr %s299, 8
      %s301 = scalar_lea.vmem %s6, %s300
      %p302 = pneg %p218
      %p303 = pneg %p215
      %p304 = scmp.lt.s32.totalorder %s23, 1
      %s305 = scalar_select %p304, %s23, 1
      %p306 = scmp.lt.s32.totalorder %s24, 0
      %s307 = scalar_select %p306, %s24, 0
      %s308 = sadd.s32 %s307, %s305
      %s309 = smul.addr %s308, 2
      %s310 = scalar_lea.vmem %s7, %s309
      %p311 = scmp.lt.s32.totalorder %s23, 1
      %s312 = scalar_select %p311, %s23, 1
      %s313 = smul.addr %s312, 32
      %s314 = smul.addr %s313, 8
      %s315 = scalar_lea.vmem %s0, %s314
      %p316 = scmp.lt.s32.totalorder %s24, 0
      %s317 = scalar_select %p316, %s24, 0
      %s318 = smul.addr %s317, 8
      %s319 = scalar_lea.vmem %s5, %s318
      %p320 = scmp.lt.s32.totalorder %s23, 1
      %s321 = scalar_select %p320, %s23, 1
      %p322 = scmp.lt.s32.totalorder %s24, 0
      %s323 = scalar_select %p322, %s24, 0
      %s324 = smul.addr %s321, 32
      %s325 = sadd.s32 %s323, %s324
      %s326 = smul.addr %s325, 8
      %s327 = scalar_lea.vmem %s6, %s326
      %p328 = scmp.lt.s32.totalorder %s23, 1
      %s329 = scalar_select %p328, %s23, 1
      %p330 = scmp.lt.s32.totalorder %s24, 0
      %s331 = scalar_select %p330, %s24, 0
      %s332 = sadd.s32 %s331, %s329
      %s333 = smul.addr %s332, 2
      %s334 = scalar_lea.vmem %s7, %s333
      %p335 = scmp.eq.s32.totalorder %s24, 0
      // Predicated region
      $region45: #{resblk_forward.4} parent=43 // pred_check
        %p336 = pneg %p335
      $region46: #{resblk_forward.4} parent=43 // pred_check_branch
        %338 = sbr.rel (%p336) target = $region48
      $region47: #{resblk_forward.4} parent=43 // pred_region
        %339 = vst [vmem:[#allocation2] sm:$0xff] 0.0
        %340 = vst [vmem:[#allocation2 + $0x8] sm:$0xff] 0.0
        %341 = vst [vmem:[#allocation2 + $0x10] sm:$0xff] 0.0
        %342 = vst [vmem:[#allocation2 + $0x18] sm:$0xff] 0.0
        %343 = vst [vmem:[#allocation2 + $0x20] sm:$0xff] 0.0
        %344 = vst [vmem:[#allocation2 + $0x28] sm:$0xff] 0.0
        %345 = vst [vmem:[#allocation2 + $0x30] sm:$0xff] 0.0
        %346 = vst [vmem:[#allocation2 + $0x38] sm:$0xff] 0.0
        %347 = vst [vmem:[#allocation2 + $0x40] sm:$0xff] 0.0
        %348 = vst [vmem:[#allocation2 + $0x48] sm:$0xff] 0.0
        %349 = vst [vmem:[#allocation2 + $0x50] sm:$0xff] 0.0
        %350 = vst [vmem:[#allocation2 + $0x58] sm:$0xff] 0.0
        %351 = vst [vmem:[#allocation2 + $0x60] sm:$0xff] 0.0
        %352 = vst [vmem:[#allocation2 + $0x68] sm:$0xff] 0.0
        %353 = vst [vmem:[#allocation2 + $0x70] sm:$0xff] 0.0
        %354 = vst [vmem:[#allocation2 + $0x78] sm:$0xff] 0.0
        %355 = vst [vmem:[#allocation2 + $0x80] sm:$0xff] 0.0
        %356 = vst [vmem:[#allocation2 + $0x88] sm:$0xff] 0.0
        %357 = vst [vmem:[#allocation2 + $0x90] sm:$0xff] 0.0
        %358 = vst [vmem:[#allocation2 + $0x98] sm:$0xff] 0.0
        %359 = vst [vmem:[#allocation2 + $0xa0] sm:$0xff] 0.0
        %360 = vst [vmem:[#allocation2 + $0xa8] sm:$0xff] 0.0
        %361 = vst [vmem:[#allocation2 + $0xb0] sm:$0xff] 0.0
        %362 = vst [vmem:[#allocation2 + $0xb8] sm:$0xff] 0.0
        %363 = vst [vmem:[#allocation2 + $0xc0] sm:$0xff] 0.0
        %364 = vst [vmem:[#allocation2 + $0xc8] sm:$0xff] 0.0
        %365 = vst [vmem:[#allocation2 + $0xd0] sm:$0xff] 0.0
        %366 = vst [vmem:[#allocation2 + $0xd8] sm:$0xff] 0.0
        %367 = vst [vmem:[#allocation2 + $0xe0] sm:$0xff] 0.0
        %368 = vst [vmem:[#allocation2 + $0xe8] sm:$0xff] 0.0
        %369 = vst [vmem:[#allocation2 + $0xf0] sm:$0xff] 0.0
        %370 = vst [vmem:[#allocation2 + $0xf8] sm:$0xff] 0.0
        %371 = vst [vmem:[#allocation2 + $0x100] sm:$0xff] 0.0
        %372 = vst [vmem:[#allocation2 + $0x108] sm:$0xff] 0.0
        %373 = vst [vmem:[#allocation2 + $0x110] sm:$0xff] 0.0
        %374 = vst [vmem:[#allocation2 + $0x118] sm:$0xff] 0.0
        %375 = vst [vmem:[#allocation2 + $0x120] sm:$0xff] 0.0
        %376 = vst [vmem:[#allocation2 + $0x128] sm:$0xff] 0.0
        %v377 = vld [vmem:[%s315] sm:$0xff]
        %v378 = vld [vmem:[%s315 + $0x8] sm:$0xff]
        %v379 = vld [vmem:[%s315 + $0x10] sm:$0xff]
        %v380 = vld [vmem:[%s315 + $0x18] sm:$0xff]
        %v381 = vld [vmem:[%s315 + $0x20] sm:$0xff]
        %v382 = vld [vmem:[%s315 + $0x28] sm:$0xff]
        %v383 = vld [vmem:[%s315 + $0x30] sm:$0xff]
        %v384 = vld [vmem:[%s315 + $0x38] sm:$0xff]
        %v385 = vld [vmem:[%s315 + $0x40] sm:$0xff]
        %v386 = vld [vmem:[%s315 + $0x48] sm:$0xff]
        %v387 = vld [vmem:[%s315 + $0x50] sm:$0xff]
        %v388 = vld [vmem:[%s315 + $0x58] sm:$0xff]
        %v389 = vld [vmem:[%s315 + $0x60] sm:$0xff]
        %v390 = vld [vmem:[%s315 + $0x68] sm:$0xff]
        %v391 = vld [vmem:[%s315 + $0x70] sm:$0xff]
        %v392 = vld [vmem:[%s315 + $0x78] sm:$0xff]
        %v393 = vld [vmem:[%s315 + $0x80] sm:$0xff]
        %v394 = vld [vmem:[%s315 + $0x88] sm:$0xff]
        %v395 = vld [vmem:[%s315 + $0x90] sm:$0xff]
        %v396 = vld [vmem:[%s315 + $0x98] sm:$0xff]
        %v397 = vld [vmem:[%s315 + $0xa0] sm:$0xff]
        %v398 = vld [vmem:[%s315 + $0xa8] sm:$0xff]
        %v399 = vld [vmem:[%s315 + $0xb0] sm:$0xff]
        %v400 = vld [vmem:[%s315 + $0xb8] sm:$0xff]
        %v401 = vld [vmem:[%s315 + $0xc0] sm:$0xff]
        %v402 = vld [vmem:[%s315 + $0xc8] sm:$0xff]
        %v403 = vld [vmem:[%s315 + $0xd0] sm:$0xff]
        %v404 = vld [vmem:[%s315 + $0xd8] sm:$0xff]
        %v405 = vld [vmem:[%s315 + $0xe0] sm:$0xff]
        %v406 = vld [vmem:[%s315 + $0xe8] sm:$0xff]
        %v407 = vld [vmem:[%s315 + $0xf0] sm:$0xff]
        %v408 = vld [vmem:[%s315 + $0xf8] sm:$0xff]
        %v409 = vld [vmem:[%s1] sm:$0x1]
        %v411 = vlaneseq
        %v412 = vshrl.u32 %v411, 7
        %v413 = vsub.s32 0, %v412
        %v414 = vrot.slane %v409, %v413
        %v416 = vmul.f32 %v377, %v414
        %v417 = vmul.f32 %v378, %v414
        %v418 = vmul.f32 %v379, %v414
        %v419 = vmul.f32 %v380, %v414
        %v420 = vmul.f32 %v381, %v414
        %v421 = vmul.f32 %v382, %v414
        %v422 = vmul.f32 %v383, %v414
        %v423 = vmul.f32 %v384, %v414
        %v424 = vmul.f32 %v385, %v414
        %v425 = vmul.f32 %v386, %v414
        %v426 = vmul.f32 %v387, %v414
        %v427 = vmul.f32 %v388, %v414
        %v428 = vmul.f32 %v389, %v414
        %v429 = vmul.f32 %v390, %v414
        %v430 = vmul.f32 %v391, %v414
        %v431 = vmul.f32 %v392, %v414
        %v432 = vmul.f32 %v393, %v414
        %v433 = vmul.f32 %v394, %v414
        %v434 = vmul.f32 %v395, %v414
        %v435 = vmul.f32 %v396, %v414
        %v436 = vmul.f32 %v397, %v414
        %v437 = vmul.f32 %v398, %v414
        %v438 = vmul.f32 %v399, %v414
        %v439 = vmul.f32 %v400, %v414
        %v440 = vmul.f32 %v401, %v414
        %v441 = vmul.f32 %v402, %v414
        %v442 = vmul.f32 %v403, %v414
        %v443 = vmul.f32 %v404, %v414
        %v444 = vmul.f32 %v405, %v414
        %v445 = vmul.f32 %v406, %v414
        %v446 = vmul.f32 %v407, %v414
        %v447 = vmul.f32 %v408, %v414
        %v448 = vld [vmem:[%s2] sm:$0x1]
        %v450 = vlaneseq
        %v451 = vshrl.u32 %v450, 7
        %v452 = vsub.s32 0, %v451
        %v453 = vrot.slane %v448, %v452
        %v455 = vadd.f32 %v416, %v453
        %v456 = vadd.f32 %v417, %v453
        %v457 = vadd.f32 %v418, %v453
        %v458 = vadd.f32 %v419, %v453
        %v459 = vadd.f32 %v420, %v453
        %v460 = vadd.f32 %v421, %v453
        %v461 = vadd.f32 %v422, %v453
        %v462 = vadd.f32 %v423, %v453
        %v463 = vadd.f32 %v424, %v453
        %v464 = vadd.f32 %v425, %v453
        %v465 = vadd.f32 %v426, %v453
        %v466 = vadd.f32 %v427, %v453
        %v467 = vadd.f32 %v428, %v453
        %v468 = vadd.f32 %v429, %v453
        %v469 = vadd.f32 %v430, %v453
        %v470 = vadd.f32 %v431, %v453
        %v471 = vadd.f32 %v432, %v453
        %v472 = vadd.f32 %v433, %v453
        %v473 = vadd.f32 %v434, %v453
        %v474 = vadd.f32 %v435, %v453
        %v475 = vadd.f32 %v436, %v453
        %v476 = vadd.f32 %v437, %v453
        %v477 = vadd.f32 %v438, %v453
        %v478 = vadd.f32 %v439, %v453
        %v479 = vadd.f32 %v440, %v453
        %v480 = vadd.f32 %v441, %v453
        %v481 = vadd.f32 %v442, %v453
        %v482 = vadd.f32 %v443, %v453
        %v483 = vadd.f32 %v444, %v453
        %v484 = vadd.f32 %v445, %v453
        %v485 = vadd.f32 %v446, %v453
        %v486 = vadd.f32 %v447, %v453
        %v487 = vmax.f32 %v455, 0.0
        %v488 = vmax.f32 %v456, 0.0
        %v489 = vmax.f32 %v457, 0.0
        %v490 = vmax.f32 %v458, 0.0
        %v491 = vmax.f32 %v459, 0.0
        %v492 = vmax.f32 %v460, 0.0
        %v493 = vmax.f32 %v461, 0.0
        %v494 = vmax.f32 %v462, 0.0
        %v495 = vmax.f32 %v463, 0.0
        %v496 = vmax.f32 %v464, 0.0
        %v497 = vmax.f32 %v465, 0.0
        %v498 = vmax.f32 %v466, 0.0
        %v499 = vmax.f32 %v467, 0.0
        %v500 = vmax.f32 %v468, 0.0
        %v501 = vmax.f32 %v469, 0.0
        %v502 = vmax.f32 %v470, 0.0
        %v503 = vmax.f32 %v471, 0.0
        %v504 = vmax.f32 %v472, 0.0
        %v505 = vmax.f32 %v473, 0.0
        %v506 = vmax.f32 %v474, 0.0
        %v507 = vmax.f32 %v475, 0.0
        %v508 = vmax.f32 %v476, 0.0
        %v509 = vmax.f32 %v477, 0.0
        %v510 = vmax.f32 %v478, 0.0
        %v511 = vmax.f32 %v479, 0.0
        %v512 = vmax.f32 %v480, 0.0
        %v513 = vmax.f32 %v481, 0.0
        %v514 = vmax.f32 %v482, 0.0
        %v515 = vmax.f32 %v483, 0.0
        %v516 = vmax.f32 %v484, 0.0
        %v517 = vmax.f32 %v485, 0.0
        %v518 = vmax.f32 %v486, 0.0
        %519 = vst [vmem:[#allocation2 + $0x18] sm:$0xff] %v487
        %520 = vst [vmem:[#allocation2 + $0x20] sm:$0xff] %v488
        %521 = vst [vmem:[#allocation2 + $0x28] sm:$0xff] %v489
        %522 = vst [vmem:[#allocation2 + $0x30] sm:$0xff] %v490
        %523 = vst [vmem:[#allocation2 + $0x38] sm:$0xff] %v491
        %524 = vst [vmem:[#allocation2 + $0x40] sm:$0xff] %v492
        %525 = vst [vmem:[#allocation2 + $0x48] sm:$0xff] %v493
        %526 = vst [vmem:[#allocation2 + $0x50] sm:$0xff] %v494
        %527 = vst [vmem:[#allocation2 + $0x58] sm:$0xff] %v495
        %528 = vst [vmem:[#allocation2 + $0x60] sm:$0xff] %v496
        %529 = vst [vmem:[#allocation2 + $0x68] sm:$0xff] %v497
        %530 = vst [vmem:[#allocation2 + $0x70] sm:$0xff] %v498
        %531 = vst [vmem:[#allocation2 + $0x78] sm:$0xff] %v499
        %532 = vst [vmem:[#allocation2 + $0x80] sm:$0xff] %v500
        %533 = vst [vmem:[#allocation2 + $0x88] sm:$0xff] %v501
        %534 = vst [vmem:[#allocation2 + $0x90] sm:$0xff] %v502
        %535 = vst [vmem:[#allocation2 + $0x98] sm:$0xff] %v503
        %536 = vst [vmem:[#allocation2 + $0xa0] sm:$0xff] %v504
        %537 = vst [vmem:[#allocation2 + $0xa8] sm:$0xff] %v505
        %538 = vst [vmem:[#allocation2 + $0xb0] sm:$0xff] %v506
        %539 = vst [vmem:[#allocation2 + $0xb8] sm:$0xff] %v507
        %540 = vst [vmem:[#allocation2 + $0xc0] sm:$0xff] %v508
        %541 = vst [vmem:[#allocation2 + $0xc8] sm:$0xff] %v509
        %542 = vst [vmem:[#allocation2 + $0xd0] sm:$0xff] %v510
        %543 = vst [vmem:[#allocation2 + $0xd8] sm:$0xff] %v511
        %544 = vst [vmem:[#allocation2 + $0xe0] sm:$0xff] %v512
        %545 = vst [vmem:[#allocation2 + $0xe8] sm:$0xff] %v513
        %546 = vst [vmem:[#allocation2 + $0xf0] sm:$0xff] %v514
        %547 = vst [vmem:[#allocation2 + $0xf8] sm:$0xff] %v515
        %548 = vst [vmem:[#allocation2 + $0x100] sm:$0xff] %v516
        %549 = vst [vmem:[#allocation2 + $0x108] sm:$0xff] %v517
        %550 = vst [vmem:[#allocation2 + $0x110] sm:$0xff] %v518
      $region48: #{resblk_forward.4} parent=43 // pred_fallthru
        _
      %v551 = vld [vmem:[%s3] sm:$0xff]
      %v552 = vld [vmem:[%s3 + $0x8] sm:$0xff]
      %v553 = vld [vmem:[%s3 + $0x10] sm:$0xff]
      %v554 = vld [vmem:[%s3 + $0x18] sm:$0xff]
      %v555 = vld [vmem:[%s3 + $0x20] sm:$0xff]
      %v556 = vld [vmem:[%s3 + $0x28] sm:$0xff]
      %v557 = vld [vmem:[%s3 + $0x30] sm:$0xff]
      %v558 = vld [vmem:[%s3 + $0x38] sm:$0xff]
      %v559 = vld [vmem:[%s3 + $0x40] sm:$0xff]
      %v560 = vld [vmem:[%s3 + $0x48] sm:$0xff]
      %v561 = vld [vmem:[%s3 + $0x50] sm:$0xff]
      %v562 = vld [vmem:[%s3 + $0x58] sm:$0xff]
      %v563 = vld [vmem:[%s3 + $0x60] sm:$0xff]
      %v564 = vld [vmem:[%s3 + $0x68] sm:$0xff]
      %v565 = vld [vmem:[%s3 + $0x70] sm:$0xff]
      %v566 = vld [vmem:[%s3 + $0x78] sm:$0xff]
      %v567 = vld [vmem:[%s3 + $0x80] sm:$0xff]
      %v568 = vld [vmem:[%s3 + $0x88] sm:$0xff]
      %v569 = vld [vmem:[%s3 + $0x90] sm:$0xff]
      %v570 = vld [vmem:[%s3 + $0x98] sm:$0xff]
      %v571 = vld [vmem:[%s3 + $0xa0] sm:$0xff]
      %v572 = vld [vmem:[%s3 + $0xa8] sm:$0xff]
      %v573 = vld [vmem:[%s3 + $0xb0] sm:$0xff]
      %v574 = vld [vmem:[%s3 + $0xb8] sm:$0xff]
      %v575 = vld [vmem:[%s3 + $0xc0] sm:$0xff]
      %v576 = vld [vmem:[%s3 + $0xc8] sm:$0xff]
      %v577 = vld [vmem:[%s3 + $0xd0] sm:$0xff]
      %v578 = vld [vmem:[%s3 + $0xd8] sm:$0xff]
      %v579 = vld [vmem:[%s3 + $0xe0] sm:$0xff]
      %v580 = vld [vmem:[%s3 + $0xe8] sm:$0xff]
      %v581 = vld [vmem:[%s3 + $0xf0] sm:$0xff]
      %v582 = vld [vmem:[%s3 + $0xf8] sm:$0xff]
      %v583 = vld [vmem:[%s4] sm:$0xff]
      %v584 = vld [vmem:[%s4 + $0x8] sm:$0xff]
      %v585 = vld [vmem:[%s4 + $0x10] sm:$0xff]
      %v586 = vld [vmem:[%s4 + $0x18] sm:$0xff]
      %v587 = vld [vmem:[%s4 + $0x20] sm:$0xff]
      %v588 = vld [vmem:[%s4 + $0x28] sm:$0xff]
      %v589 = vld [vmem:[%s4 + $0x30] sm:$0xff]
      %v590 = vld [vmem:[%s4 + $0x38] sm:$0xff]
      %v591 = vld [vmem:[%s4 + $0x40] sm:$0xff]
      %v592 = vld [vmem:[%s4 + $0x48] sm:$0xff]
      %v593 = vld [vmem:[%s4 + $0x50] sm:$0xff]
      %v594 = vld [vmem:[%s4 + $0x58] sm:$0xff]
      %v595 = vld [vmem:[%s4 + $0x60] sm:$0xff]
      %v596 = vld [vmem:[%s4 + $0x68] sm:$0xff]
      %v597 = vld [vmem:[%s4 + $0x70] sm:$0xff]
      %v598 = vld [vmem:[%s4 + $0x78] sm:$0xff]
      %v599 = vld [vmem:[%s4 + $0x80] sm:$0xff]
      %v600 = vld [vmem:[%s4 + $0x88] sm:$0xff]
      %v601 = vld [vmem:[%s4 + $0x90] sm:$0xff]
      %v602 = vld [vmem:[%s4 + $0x98] sm:$0xff]
      %v603 = vld [vmem:[%s4 + $0xa0] sm:$0xff]
      %v604 = vld [vmem:[%s4 + $0xa8] sm:$0xff]
      %v605 = vld [vmem:[%s4 + $0xb0] sm:$0xff]
      %v606 = vld [vmem:[%s4 + $0xb8] sm:$0xff]
      %v607 = vld [vmem:[%s4 + $0xc0] sm:$0xff]
      %v608 = vld [vmem:[%s4 + $0xc8] sm:$0xff]
      %v609 = vld [vmem:[%s4 + $0xd0] sm:$0xff]
      %v610 = vld [vmem:[%s4 + $0xd8] sm:$0xff]
      %v611 = vld [vmem:[%s4 + $0xe0] sm:$0xff]
      %v612 = vld [vmem:[%s4 + $0xe8] sm:$0xff]
      %v613 = vld [vmem:[%s4 + $0xf0] sm:$0xff]
      %v614 = vld [vmem:[%s4 + $0xf8] sm:$0xff]
      %v615 = vld [vmem:[#allocation2 + $0x7] sm:$0xff]
      %v616 = vld [vmem:[#allocation2 + $0xf] sm:$0xff]
      %v617 = vld [vmem:[#allocation2 + $0x17] sm:$0xff]
      %v618 = vld [vmem:[#allocation2 + $0x1f] sm:$0xff]
      %v619 = vld [vmem:[#allocation2 + $0x27] sm:$0xff]
      %v620 = vld [vmem:[#allocation2 + $0x2f] sm:$0xff]
      %v621 = vld [vmem:[#allocation2 + $0x37] sm:$0xff]
      %v622 = vld [vmem:[#allocation2 + $0x3f] sm:$0xff]
      %v623 = vld [vmem:[#allocation2 + $0x47] sm:$0xff]
      %v624 = vld [vmem:[#allocation2 + $0x4f] sm:$0xff]
      %v625 = vld [vmem:[#allocation2 + $0x57] sm:$0xff]
      %v626 = vld [vmem:[#allocation2 + $0x5f] sm:$0xff]
      %v627 = vld [vmem:[#allocation2 + $0x67] sm:$0xff]
      %v628 = vld [vmem:[#allocation2 + $0x6f] sm:$0xff]
      %v629 = vld [vmem:[#allocation2 + $0x77] sm:$0xff]
      %v630 = vld [vmem:[#allocation2 + $0x7f] sm:$0xff]
      %v631 = vld [vmem:[#allocation2 + $0x87] sm:$0xff]
      %v632 = vld [vmem:[#allocation2 + $0x8f] sm:$0xff]
      %v633 = vld [vmem:[#allocation2 + $0x97] sm:$0xff]
      %v634 = vld [vmem:[#allocation2 + $0x9f] sm:$0xff]
      %v635 = vld [vmem:[#allocation2 + $0xa7] sm:$0xff]
      %v636 = vld [vmem:[#allocation2 + $0xaf] sm:$0xff]
      %v637 = vld [vmem:[#allocation2 + $0xb7] sm:$0xff]
      %v638 = vld [vmem:[#allocation2 + $0xbf] sm:$0xff]
      %v639 = vld [vmem:[#allocation2 + $0xc7] sm:$0xff]
      %v640 = vld [vmem:[#allocation2 + $0xcf] sm:$0xff]
      %v641 = vld [vmem:[#allocation2 + $0xd7] sm:$0xff]
      %v642 = vld [vmem:[#allocation2 + $0xdf] sm:$0xff]
      %v643 = vld [vmem:[#allocation2 + $0xe7] sm:$0xff]
      %v644 = vld [vmem:[#allocation2 + $0xef] sm:$0xff]
      %v645 = vld [vmem:[#allocation2 + $0xf7] sm:$0xff]
      %v646 = vld [vmem:[#allocation2 + $0xff] sm:$0xff]
      %648 = vset.pattern.permute.xlu0 0
      %649 = vperm.xlu0 %648, %v551
      %v650 = vpop.permute.xlu0 %649
      %653 = vset.pattern.permute.xlu0 0
      %654 = vperm.xlu0 %653, %v552
      %v655 = vpop.permute.xlu0 %654
      %658 = vset.pattern.permute.xlu0 0
      %659 = vperm.xlu0 %658, %v553
      %v660 = vpop.permute.xlu0 %659
      %663 = vset.pattern.permute.xlu0 0
      %664 = vperm.xlu0 %663, %v554
      %v665 = vpop.permute.xlu0 %664
      %668 = vset.pattern.permute.xlu0 0
      %669 = vperm.xlu0 %668, %v555
      %v670 = vpop.permute.xlu0 %669
      %673 = vset.pattern.permute.xlu0 0
      %674 = vperm.xlu0 %673, %v556
      %v675 = vpop.permute.xlu0 %674
      %678 = vset.pattern.permute.xlu0 0
      %679 = vperm.xlu0 %678, %v557
      %v680 = vpop.permute.xlu0 %679
      %683 = vset.pattern.permute.xlu0 0
      %684 = vperm.xlu0 %683, %v558
      %v685 = vpop.permute.xlu0 %684
      %688 = vset.pattern.permute.xlu0 0
      %689 = vperm.xlu0 %688, %v559
      %v690 = vpop.permute.xlu0 %689
      %693 = vset.pattern.permute.xlu0 0
      %694 = vperm.xlu0 %693, %v560
      %v695 = vpop.permute.xlu0 %694
      %698 = vset.pattern.permute.xlu0 0
      %699 = vperm.xlu0 %698, %v561
      %v700 = vpop.permute.xlu0 %699
      %703 = vset.pattern.permute.xlu0 0
      %704 = vperm.xlu0 %703, %v562
      %v705 = vpop.permute.xlu0 %704
      %708 = vset.pattern.permute.xlu0 0
      %709 = vperm.xlu0 %708, %v563
      %v710 = vpop.permute.xlu0 %709
      %713 = vset.pattern.permute.xlu0 0
      %714 = vperm.xlu0 %713, %v564
      %v715 = vpop.permute.xlu0 %714
      %718 = vset.pattern.permute.xlu0 0
      %719 = vperm.xlu0 %718, %v565
      %v720 = vpop.permute.xlu0 %719
      %723 = vset.pattern.permute.xlu0 0
      %724 = vperm.xlu0 %723, %v566
      %v725 = vpop.permute.xlu0 %724
      %728 = vset.pattern.permute.xlu0 0
      %729 = vperm.xlu0 %728, %v567
      %v730 = vpop.permute.xlu0 %729
      %733 = vset.pattern.permute.xlu0 0
      %734 = vperm.xlu0 %733, %v568
      %v735 = vpop.permute.xlu0 %734
      %738 = vset.pattern.permute.xlu0 0
      %739 = vperm.xlu0 %738, %v569
      %v740 = vpop.permute.xlu0 %739
      %743 = vset.pattern.permute.xlu0 0
      %744 = vperm.xlu0 %743, %v570
      %v745 = vpop.permute.xlu0 %744
      %748 = vset.pattern.permute.xlu0 0
      %749 = vperm.xlu0 %748, %v571
      %v750 = vpop.permute.xlu0 %749
      %753 = vset.pattern.permute.xlu0 0
      %754 = vperm.xlu0 %753, %v572
      %v755 = vpop.permute.xlu0 %754
      %758 = vset.pattern.permute.xlu0 0
      %759 = vperm.xlu0 %758, %v573
      %v760 = vpop.permute.xlu0 %759
      %763 = vset.pattern.permute.xlu0 0
      %764 = vperm.xlu0 %763, %v574
      %v765 = vpop.permute.xlu0 %764
      %768 = vset.pattern.permute.xlu0 0
      %769 = vperm.xlu0 %768, %v575
      %v770 = vpop.permute.xlu0 %769
      %773 = vset.pattern.permute.xlu0 0
      %774 = vperm.xlu0 %773, %v576
      %v775 = vpop.permute.xlu0 %774
      %778 = vset.pattern.permute.xlu0 0
      %779 = vperm.xlu0 %778, %v577
      %v780 = vpop.permute.xlu0 %779
      %783 = vset.pattern.permute.xlu0 0
      %784 = vperm.xlu0 %783, %v578
      %v785 = vpop.permute.xlu0 %784
      %788 = vset.pattern.permute.xlu0 0
      %789 = vperm.xlu0 %788, %v579
      %v790 = vpop.permute.xlu0 %789
      %793 = vset.pattern.permute.xlu0 0
      %794 = vperm.xlu0 %793, %v580
      %v795 = vpop.permute.xlu0 %794
      %798 = vset.pattern.permute.xlu0 0
      %799 = vperm.xlu0 %798, %v581
      %v800 = vpop.permute.xlu0 %799
      %803 = vset.pattern.permute.xlu0 0
      %804 = vperm.xlu0 %803, %v582
      %v805 = vpop.permute.xlu0 %804
      %v807 = vmul.f32 %v615, %v650
      %v808 = vmul.f32 %v616, %v655
      %v809 = vmul.f32 %v617, %v660
      %v810 = vmul.f32 %v618, %v665
      %v811 = vmul.f32 %v619, %v670
      %v812 = vmul.f32 %v620, %v675
      %v813 = vmul.f32 %v621, %v680
      %v814 = vmul.f32 %v622, %v685
      %v815 = vmul.f32 %v623, %v690
      %v816 = vmul.f32 %v624, %v695
      %v817 = vmul.f32 %v625, %v700
      %v818 = vmul.f32 %v626, %v705
      %v819 = vmul.f32 %v627, %v710
      %v820 = vmul.f32 %v628, %v715
      %v821 = vmul.f32 %v629, %v720
      %v822 = vmul.f32 %v630, %v725
      %v823 = vmul.f32 %v631, %v730
      %v824 = vmul.f32 %v632, %v735
      %v825 = vmul.f32 %v633, %v740
      %v826 = vmul.f32 %v634, %v745
      %v827 = vmul.f32 %v635, %v750
      %v828 = vmul.f32 %v636, %v755
      %v829 = vmul.f32 %v637, %v760
      %v830 = vmul.f32 %v638, %v765
      %v831 = vmul.f32 %v639, %v770
      %v832 = vmul.f32 %v640, %v775
      %v833 = vmul.f32 %v641, %v780
      %v834 = vmul.f32 %v642, %v785
      %v835 = vmul.f32 %v643, %v790
      %v836 = vmul.f32 %v644, %v795
      %v837 = vmul.f32 %v645, %v800
      %v838 = vmul.f32 %v646, %v805
      %v839 = vld [vmem:[%s319] sm:$0xff]
      %v840 = vld [vmem:[%s319 + $0x8] sm:$0xff]
      %v841 = vld [vmem:[%s319 + $0x10] sm:$0xff]
      %v842 = vld [vmem:[%s319 + $0x18] sm:$0xff]
      %v843 = vld [vmem:[%s319 + $0x20] sm:$0xff]
      %v844 = vld [vmem:[%s319 + $0x28] sm:$0xff]
      %v845 = vld [vmem:[%s319 + $0x30] sm:$0xff]
      %v846 = vld [vmem:[%s319 + $0x38] sm:$0xff]
      %v847 = vld [vmem:[%s319 + $0x40] sm:$0xff]
      %v848 = vld [vmem:[%s319 + $0x48] sm:$0xff]
      %v849 = vld [vmem:[%s319 + $0x50] sm:$0xff]
      %v850 = vld [vmem:[%s319 + $0x58] sm:$0xff]
      %v851 = vld [vmem:[%s319 + $0x60] sm:$0xff]
      %v852 = vld [vmem:[%s319 + $0x68] sm:$0xff]
      %v853 = vld [vmem:[%s319 + $0x70] sm:$0xff]
      %v854 = vld [vmem:[%s319 + $0x78] sm:$0xff]
      %v855 = vld [vmem:[#allocation2 + $0x8] sm:$0xff]
      %v856 = vld [vmem:[#allocation2 + $0x10] sm:$0xff]
      %v857 = vld [vmem:[#allocation2 + $0x18] sm:$0xff]
      %v858 = vld [vmem:[#allocation2 + $0x20] sm:$0xff]
      %v859 = vld [vmem:[#allocation2 + $0x28] sm:$0xff]
      %v860 = vld [vmem:[#allocation2 + $0x30] sm:$0xff]
      %v861 = vld [vmem:[#allocation2 + $0x38] sm:$0xff]
      %v862 = vld [vmem:[#allocation2 + $0x40] sm:$0xff]
      %v863 = vld [vmem:[#allocation2 + $0x48] sm:$0xff]
      %v864 = vld [vmem:[#allocation2 + $0x50] sm:$0xff]
      %v865 = vld [vmem:[#allocation2 + $0x58] sm:$0xff]
      %v866 = vld [vmem:[#allocation2 + $0x60] sm:$0xff]
      %v867 = vld [vmem:[#allocation2 + $0x68] sm:$0xff]
      %v868 = vld [vmem:[#allocation2 + $0x70] sm:$0xff]
      %v869 = vld [vmem:[#allocation2 + $0x78] sm:$0xff]
      %v870 = vld [vmem:[#allocation2 + $0x80] sm:$0xff]
      %v871 = vld [vmem:[#allocation2 + $0x88] sm:$0xff]
      %v872 = vld [vmem:[#allocation2 + $0x90] sm:$0xff]
      %v873 = vld [vmem:[#allocation2 + $0x98] sm:$0xff]
      %v874 = vld [vmem:[#allocation2 + $0xa0] sm:$0xff]
      %v875 = vld [vmem:[#allocation2 + $0xa8] sm:$0xff]
      %v876 = vld [vmem:[#allocation2 + $0xb0] sm:$0xff]
      %v877 = vld [vmem:[#allocation2 + $0xb8] sm:$0xff]
      %v878 = vld [vmem:[#allocation2 + $0xc0] sm:$0xff]
      %v879 = vld [vmem:[#allocation2 + $0xc8] sm:$0xff]
      %v880 = vld [vmem:[#allocation2 + $0xd0] sm:$0xff]
      %v881 = vld [vmem:[#allocation2 + $0xd8] sm:$0xff]
      %v882 = vld [vmem:[#allocation2 + $0xe0] sm:$0xff]
      %v883 = vld [vmem:[#allocation2 + $0xe8] sm:$0xff]
      %v884 = vld [vmem:[#allocation2 + $0xf0] sm:$0xff]
      %v885 = vld [vmem:[#allocation2 + $0xf8] sm:$0xff]
      %v886 = vld [vmem:[#allocation2 + $0x100] sm:$0xff]
      %s887 = scalar_lea.vmem %s319, 128
      %v888 = vld [vmem:[%s887] sm:$0xff]
      %v889 = vld [vmem:[%s887 + $0x8] sm:$0xff]
      %v890 = vld [vmem:[%s887 + $0x10] sm:$0xff]
      %v891 = vld [vmem:[%s887 + $0x18] sm:$0xff]
      %v892 = vld [vmem:[%s887 + $0x20] sm:$0xff]
      %v893 = vld [vmem:[%s887 + $0x28] sm:$0xff]
      %v894 = vld [vmem:[%s887 + $0x30] sm:$0xff]
      %v895 = vld [vmem:[%s887 + $0x38] sm:$0xff]
      %v896 = vld [vmem:[%s887 + $0x40] sm:$0xff]
      %v897 = vld [vmem:[%s887 + $0x48] sm:$0xff]
      %v898 = vld [vmem:[%s887 + $0x50] sm:$0xff]
      %v899 = vld [vmem:[%s887 + $0x58] sm:$0xff]
      %v900 = vld [vmem:[%s887 + $0x60] sm:$0xff]
      %v901 = vld [vmem:[%s887 + $0x68] sm:$0xff]
      %v902 = vld [vmem:[%s887 + $0x70] sm:$0xff]
      %v903 = vld [vmem:[%s887 + $0x78] sm:$0xff]
      %904 = vmatprep.subr.mxu0 0.0
      %905 = vmatpush1.msra.mxu0 %v888
      %906 = vmatprep.subr.mxu0 0.0
      %907 = vmatpush1.msra.mxu0 %v889
      %908 = vmatprep.subr.mxu0 0.0
      %909 = vmatpush1.msra.mxu0 %v890
      %910 = vmatprep.subr.mxu0 0.0
      %911 = vmatpush1.msra.mxu0 %v891
      %912 = vmatprep.subr.mxu0 0.0
      %913 = vmatpush1.msra.mxu0 %v892
      %914 = vmatprep.subr.mxu0 0.0
      %915 = vmatpush1.msra.mxu0 %v893
      %916 = vmatprep.subr.mxu0 0.0
      %917 = vmatpush1.msra.mxu0 %v894
      %918 = vmatprep.subr.mxu0 0.0
      %919 = vmatpush1.msra.mxu0 %v895
      %920 = vmatprep.subr.mxu0 0.0
      %921 = vmatpush1.msra.mxu0 %v896
      %922 = vmatprep.subr.mxu0 0.0
      %923 = vmatpush1.msra.mxu0 %v897
      %924 = vmatprep.subr.mxu0 0.0
      %925 = vmatpush1.msra.mxu0 %v898
      %926 = vmatprep.subr.mxu0 0.0
      %927 = vmatpush1.msra.mxu0 %v899
      %928 = vmatprep.subr.mxu0 0.0
      %929 = vmatpush1.msra.mxu0 %v900
      %930 = vmatprep.subr.mxu0 0.0
      %931 = vmatpush1.msra.mxu0 %v901
      %932 = vmatprep.subr.mxu0 0.0
      %933 = vmatpush1.msra.mxu0 %v902
      %934 = vmatprep.subr.mxu0 0.0
      %935 = vmatpush1.msra.mxu0 %v903
      %936 = vmatprep.subr.mxu0 0.0
      %937 = vmatpush1.msra.mxu0 0.0
      %938 = vmatprep.subr.mxu0 0.0
      %939 = vmatpush1.msra.mxu0 0.0
      %940 = vmatprep.subr.mxu0 0.0
      %941 = vmatpush1.msra.mxu0 0.0
      %942 = vmatprep.subr.mxu0 0.0
      %943 = vmatpush1.msra.mxu0 0.0
      %944 = vmatprep.subr.mxu0 0.0
      %945 = vmatpush1.msra.mxu0 0.0
      %946 = vmatprep.subr.mxu0 0.0
      %947 = vmatpush1.msra.mxu0 0.0
      %948 = vmatprep.subr.mxu0 0.0
      %949 = vmatpush1.msra.mxu0 0.0
      %950 = vmatprep.subr.mxu0 0.0
      %951 = vmatpush1.msra.mxu0 0.0
      %952 = vmatprep.subr.mxu0 0.0
      %953 = vmatpush1.msra.mxu0 0.0
      %954 = vmatprep.subr.mxu0 0.0
      %955 = vmatpush1.msra.mxu0 0.0
      %956 = vmatprep.subr.mxu0 0.0
      %957 = vmatpush1.msra.mxu0 0.0
      %958 = vmatprep.subr.mxu0 0.0
      %959 = vmatpush1.msra.mxu0 0.0
      %960 = vmatprep.subr.mxu0 0.0
      %961 = vmatpush1.msra.mxu0 0.0
      %962 = vmatprep.subr.mxu0 0.0
      %963 = vmatpush1.msra.mxu0 0.0
      %964 = vmatprep.subr.mxu0 0.0
      %965 = vmatpush1.msra.mxu0 0.0
      %966 = vmatprep.subr.mxu0 0.0
      %967 = vmatpush1.msra.mxu0 0.0
      %968 = vmatprep.mubr.f32.mxu0 0.0
      %969 = vmatmul.mubr.f32.gmra.mrb[0].mxu0 %v855
      %v970 = vpop.f32.mrb[0].mxu0
      %v971 = vadd.f32 0.0, %v970
      %v972 = vpop.f32.mrb[0].mxu0
      %973 = vmatprep.mubr.f32.mxu0 0.0
      %974 = vmatmul.mubr.f32.gmra.mrb[0].mxu0 %v856
      %v975 = vpop.f32.mrb[0].mxu0
      %v976 = vadd.f32 0.0, %v975
      %v977 = vpop.f32.mrb[0].mxu0
      %978 = vmatprep.mubr.f32.mxu0 0.0
      %979 = vmatmul.mubr.f32.gmra.mrb[0].mxu0 %v857
      %v980 = vpop.f32.mrb[0].mxu0
      %v981 = vadd.f32 0.0, %v980
      %v982 = vpop.f32.mrb[0].mxu0
      %983 = vmatprep.mubr.f32.mxu0 0.0
      %984 = vmatmul.mubr.f32.gmra.mrb[0].mxu0 %v858
      %v985 = vpop.f32.mrb[0].mxu0
      %v986 = vadd.f32 0.0, %v985
      %v987 = vpop.f32.mrb[0].mxu0
      %988 = vmatprep.mubr.f32.mxu0 0.0
      %989 = vmatmul.mubr.f32.gmra.mrb[0].mxu0 %v859
      %v990 = vpop.f32.mrb[0].mxu0
      %v991 = vadd.f32 0.0, %v990
      %v992 = vpop.f32.mrb[0].mxu0
      %993 = vmatprep.mubr.f32.mxu0 0.0
      %994 = vmatmul.mubr.f32.gmra.mrb[0].mxu0 %v860
      %v995 = vpop.f32.mrb[0].mxu0
      %v996 = vadd.f32 0.0, %v995
      %v997 = vpop.f32.mrb[0].mxu0
      %998 = vmatprep.mubr.f32.mxu0 0.0
      %999 = vmatmul.mubr.f32.gmra.mrb[0].mxu0 %v861
      %v1000 = vpop.f32.mrb[0].mxu0
      %v1001 = vadd.f32 0.0, %v1000
      %v1002 = vpop.f32.mrb[0].mxu0
      %1003 = vmatprep.mubr.f32.mxu0 0.0
      %1004 = vmatmul.mubr.f32.gmra.mrb[0].mxu0 %v862
      %v1005 = vpop.f32.mrb[0].mxu0
      %v1006 = vadd.f32 0.0, %v1005
      %v1007 = vpop.f32.mrb[0].mxu0
      %1008 = vmatprep.mubr.f32.mxu0 0.0
      %1009 = vmatmul.mubr.f32.gmra.mrb[0].mxu0 %v863
      %v1010 = vpop.f32.mrb[0].mxu0
      %v1011 = vadd.f32 0.0, %v1010
      %v1012 = vpop.f32.mrb[0].mxu0
      %1013 = vmatprep.mubr.f32.mxu0 0.0
      %1014 = vmatmul.mubr.f32.gmra.mrb[0].mxu0 %v864
      %v1015 = vpop.f32.mrb[0].mxu0
      %v1016 = vadd.f32 0.0, %v1015
      %v1017 = vpop.f32.mrb[0].mxu0
      %1018 = vmatprep.mubr.f32.mxu0 0.0
      %1019 = vmatmul.mubr.f32.gmra.mrb[0].mxu0 %v865
      %v1020 = vpop.f32.mrb[0].mxu0
      %v1021 = vadd.f32 0.0, %v1020
      %v1022 = vpop.f32.mrb[0].mxu0
      %1023 = vmatprep.mubr.f32.mxu0 0.0
      %1024 = vmatmul.mubr.f32.gmra.mrb[0].mxu0 %v866
      %v1025 = vpop.f32.mrb[0].mxu0
      %v1026 = vadd.f32 0.0, %v1025
      %v1027 = vpop.f32.mrb[0].mxu0
      %1028 = vmatprep.mubr.f32.mxu0 0.0
      %1029 = vmatmul.mubr.f32.gmra.mrb[0].mxu0 %v867
      %v1030 = vpop.f32.mrb[0].mxu0
      %v1031 = vadd.f32 0.0, %v1030
      %v1032 = vpop.f32.mrb[0].mxu0
      %1033 = vmatprep.mubr.f32.mxu0 0.0
      %1034 = vmatmul.mubr.f32.gmra.mrb[0].mxu0 %v868
      %v1035 = vpop.f32.mrb[0].mxu0
      %v1036 = vadd.f32 0.0, %v1035
      %v1037 = vpop.f32.mrb[0].mxu0
      %1038 = vmatprep.mubr.f32.mxu0 0.0
      %1039 = vmatmul.mubr.f32.gmra.mrb[0].mxu0 %v869
      %v1040 = vpop.f32.mrb[0].mxu0
      %v1041 = vadd.f32 0.0, %v1040
      %v1042 = vpop.f32.mrb[0].mxu0
      %1043 = vmatprep.mubr.f32.mxu0 0.0
      %1044 = vmatmul.mubr.f32.gmra.mrb[0].mxu0 %v870
      %v1045 = vpop.f32.mrb[0].mxu0
      %v1046 = vadd.f32 0.0, %v1045
      %v1047 = vpop.f32.mrb[0].mxu0
      %1048 = vmatprep.mubr.f32.mxu0 0.0
      %1049 = vmatmul.mubr.f32.gmra.mrb[0].mxu0 %v871
      %v1050 = vpop.f32.mrb[0].mxu0
      %v1051 = vadd.f32 0.0, %v1050
      %v1052 = vpop.f32.mrb[0].mxu0
      %1053 = vmatprep.mubr.f32.mxu0 0.0
      %1054 = vmatmul.mubr.f32.gmra.mrb[0].mxu0 %v872
      %v1055 = vpop.f32.mrb[0].mxu0
      %v1056 = vadd.f32 0.0, %v1055
      %v1057 = vpop.f32.mrb[0].mxu0
      %1058 = vmatprep.mubr.f32.mxu0 0.0
      %1059 = vmatmul.mubr.f32.gmra.mrb[0].mxu0 %v873
      %v1060 = vpop.f32.mrb[0].mxu0
      %v1061 = vadd.f32 0.0, %v1060
      %v1062 = vpop.f32.mrb[0].mxu0
      %1063 = vmatprep.mubr.f32.mxu0 0.0
      %1064 = vmatmul.mubr.f32.gmra.mrb[0].mxu0 %v874
      %v1065 = vpop.f32.mrb[0].mxu0
      %v1066 = vadd.f32 0.0, %v1065
      %v1067 = vpop.f32.mrb[0].mxu0
      %1068 = vmatprep.mubr.f32.mxu0 0.0
      %1069 = vmatmul.mubr.f32.gmra.mrb[0].mxu0 %v875
      %v1070 = vpop.f32.mrb[0].mxu0
      %v1071 = vadd.f32 0.0, %v1070
      %v1072 = vpop.f32.mrb[0].mxu0
      %1073 = vmatprep.mubr.f32.mxu0 0.0
      %1074 = vmatmul.mubr.f32.gmra.mrb[0].mxu0 %v876
      %v1075 = vpop.f32.mrb[0].mxu0
      %v1076 = vadd.f32 0.0, %v1075
      %v1077 = vpop.f32.mrb[0].mxu0
      %1078 = vmatprep.mubr.f32.mxu0 0.0
      %1079 = vmatmul.mubr.f32.gmra.mrb[0].mxu0 %v877
      %v1080 = vpop.f32.mrb[0].mxu0
      %v1081 = vadd.f32 0.0, %v1080
      %v1082 = vpop.f32.mrb[0].mxu0
      %1083 = vmatprep.mubr.f32.mxu0 0.0
      %1084 = vmatmul.mubr.f32.gmra.mrb[0].mxu0 %v878
      %v1085 = vpop.f32.mrb[0].mxu0
      %v1086 = vadd.f32 0.0, %v1085
      %v1087 = vpop.f32.mrb[0].mxu0
      %1088 = vmatprep.mubr.f32.mxu0 0.0
      %1089 = vmatmul.mubr.f32.gmra.mrb[0].mxu0 %v879
      %v1090 = vpop.f32.mrb[0].mxu0
      %v1091 = vadd.f32 0.0, %v1090
      %v1092 = vpop.f32.mrb[0].mxu0
      %1093 = vmatprep.mubr.f32.mxu0 0.0
      %1094 = vmatmul.mubr.f32.gmra.mrb[0].mxu0 %v880
      %v1095 = vpop.f32.mrb[0].mxu0
      %v1096 = vadd.f32 0.0, %v1095
      %v1097 = vpop.f32.mrb[0].mxu0
      %1098 = vmatprep.mubr.f32.mxu0 0.0
      %1099 = vmatmul.mubr.f32.gmra.mrb[0].mxu0 %v881
      %v1100 = vpop.f32.mrb[0].mxu0
      %v1101 = vadd.f32 0.0, %v1100
      %v1102 = vpop.f32.mrb[0].mxu0
      %1103 = vmatprep.mubr.f32.mxu0 0.0
      %1104 = vmatmul.mubr.f32.gmra.mrb[0].mxu0 %v882
      %v1105 = vpop.f32.mrb[0].mxu0
      %v1106 = vadd.f32 0.0, %v1105
      %v1107 = vpop.f32.mrb[0].mxu0
      %1108 = vmatprep.mubr.f32.mxu0 0.0
      %1109 = vmatmul.mubr.f32.gmra.mrb[0].mxu0 %v883
      %v1110 = vpop.f32.mrb[0].mxu0
      %v1111 = vadd.f32 0.0, %v1110
      %v1112 = vpop.f32.mrb[0].mxu0
      %1113 = vmatprep.mubr.f32.mxu0 0.0
      %1114 = vmatmul.mubr.f32.gmra.mrb[0].mxu0 %v884
      %v1115 = vpop.f32.mrb[0].mxu0
      %v1116 = vadd.f32 0.0, %v1115
      %v1117 = vpop.f32.mrb[0].mxu0
      %1118 = vmatprep.mubr.f32.mxu0 0.0
      %1119 = vmatmul.mubr.f32.gmra.mrb[0].mxu0 %v885
      %v1120 = vpop.f32.mrb[0].mxu0
      %v1121 = vadd.f32 0.0, %v1120
      %v1122 = vpop.f32.mrb[0].mxu0
      %1123 = vmatprep.mubr.f32.mxu0 0.0
      %1124 = vmatmul.mubr.f32.gmra.mrb[0].mxu0 %v886
      %v1125 = vpop.f32.mrb[0].mxu0
      %v1126 = vadd.f32 0.0, %v1125
      %v1127 = vpop.f32.mrb[0].mxu0
      %1128 = vdwg.mxu0
      %1129 = vmatprep.subr.mxu0 0.0
      %1130 = vmatpush1.msra.mxu0 %v839
      %1131 = vmatprep.subr.mxu0 0.0
      %1132 = vmatpush1.msra.mxu0 %v840
      %1133 = vmatprep.subr.mxu0 0.0
      %1134 = vmatpush1.msra.mxu0 %v841
      %1135 = vmatprep.subr.mxu0 0.0
      %1136 = vmatpush1.msra.mxu0 %v842
      %1137 = vmatprep.subr.mxu0 0.0
      %1138 = vmatpush1.msra.mxu0 %v843
      %1139 = vmatprep.subr.mxu0 0.0
      %1140 = vmatpush1.msra.mxu0 %v844
      %1141 = vmatprep.subr.mxu0 0.0
      %1142 = vmatpush1.msra.mxu0 %v845
      %1143 = vmatprep.subr.mxu0 0.0
      %1144 = vmatpush1.msra.mxu0 %v846
      %1145 = vmatprep.subr.mxu0 0.0
      %1146 = vmatpush1.msra.mxu0 %v847
      %1147 = vmatprep.subr.mxu0 0.0
      %1148 = vmatpush1.msra.mxu0 %v848
      %1149 = vmatprep.subr.mxu0 0.0
      %1150 = vmatpush1.msra.mxu0 %v849
      %1151 = vmatprep.subr.mxu0 0.0
      %1152 = vmatpush1.msra.mxu0 %v850
      %1153 = vmatprep.subr.mxu0 0.0
      %1154 = vmatpush1.msra.mxu0 %v851
      %1155 = vmatprep.subr.mxu0 0.0
      %1156 = vmatpush1.msra.mxu0 %v852
      %1157 = vmatprep.subr.mxu0 0.0
      %1158 = vmatpush1.msra.mxu0 %v853
      %1159 = vmatprep.subr.mxu0 0.0
      %1160 = vmatpush1.msra.mxu0 %v854
      %1161 = vmatprep.subr.mxu0 0.0
      %1162 = vmatpush1.msra.mxu0 0.0
      %1163 = vmatprep.subr.mxu0 0.0
      %1164 = vmatpush1.msra.mxu0 0.0
      %1165 = vmatprep.subr.mxu0 0.0
      %1166 = vmatpush1.msra.mxu0 0.0
      %1167 = vmatprep.subr.mxu0 0.0
      %1168 = vmatpush1.msra.mxu0 0.0
      %1169 = vmatprep.subr.mxu0 0.0
      %1170 = vmatpush1.msra.mxu0 0.0
      %1171 = vmatprep.subr.mxu0 0.0
      %1172 = vmatpush1.msra.mxu0 0.0
      %1173 = vmatprep.subr.mxu0 0.0
      %1174 = vmatpush1.msra.mxu0 0.0
      %1175 = vmatprep.subr.mxu0 0.0
      %1176 = vmatpush1.msra.mxu0 0.0
      %1177 = vmatprep.subr.mxu0 0.0
      %1178 = vmatpush1.msra.mxu0 0.0
      %1179 = vmatprep.subr.mxu0 0.0
      %1180 = vmatpush1.msra.mxu0 0.0
      %1181 = vmatprep.subr.mxu0 0.0
      %1182 = vmatpush1.msra.mxu0 0.0
      %1183 = vmatprep.subr.mxu0 0.0
      %1184 = vmatpush1.msra.mxu0 0.0
      %1185 = vmatprep.subr.mxu0 0.0
      %1186 = vmatpush1.msra.mxu0 0.0
      %1187 = vmatprep.subr.mxu0 0.0
      %1188 = vmatpush1.msra.mxu0 0.0
      %1189 = vmatprep.subr.mxu0 0.0
      %1190 = vmatpush1.msra.mxu0 0.0
      %1191 = vmatprep.subr.mxu0 0.0
      %1192 = vmatpush1.msra.mxu0 0.0
      %1193 = vmatprep.mubr.f32.mxu0 0.0
      %1194 = vmatmul.mubr.f32.gmra.mrb[0].mxu0 %v807
      %v1195 = vpop.f32.mrb[0].mxu0
      %v1196 = vadd.f32 %v971, %v1195
      %v1197 = vpop.f32.mrb[0].mxu0
      %1198 = vmatprep.mubr.f32.mxu0 0.0
      %1199 = vmatmul.mubr.f32.gmra.mrb[0].mxu0 %v808
      %v1200 = vpop.f32.mrb[0].mxu0
      %v1201 = vadd.f32 %v976, %v1200
      %v1202 = vpop.f32.mrb[0].mxu0
      %1203 = vmatprep.mubr.f32.mxu0 0.0
      %1204 = vmatmul.mubr.f32.gmra.mrb[0].mxu0 %v809
      %v1205 = vpop.f32.mrb[0].mxu0
      %v1206 = vadd.f32 %v981, %v1205
      %v1207 = vpop.f32.mrb[0].mxu0
      %1208 = vmatprep.mubr.f32.mxu0 0.0
      %1209 = vmatmul.mubr.f32.gmra.mrb[0].mxu0 %v810
      %v1210 = vpop.f32.mrb[0].mxu0
      %v1211 = vadd.f32 %v986, %v1210
      %v1212 = vpop.f32.mrb[0].mxu0
      %1213 = vmatprep.mubr.f32.mxu0 0.0
      %1214 = vmatmul.mubr.f32.gmra.mrb[0].mxu0 %v811
      %v1215 = vpop.f32.mrb[0].mxu0
      %v1216 = vadd.f32 %v991, %v1215
      %v1217 = vpop.f32.mrb[0].mxu0
      %1218 = vmatprep.mubr.f32.mxu0 0.0
      %1219 = vmatmul.mubr.f32.gmra.mrb[0].mxu0 %v812
      %v1220 = vpop.f32.mrb[0].mxu0
      %v1221 = vadd.f32 %v996, %v1220
      %v1222 = vpop.f32.mrb[0].mxu0
      %1223 = vmatprep.mubr.f32.mxu0 0.0
      %1224 = vmatmul.mubr.f32.gmra.mrb[0].mxu0 %v813
      %v1225 = vpop.f32.mrb[0].mxu0
      %v1226 = vadd.f32 %v1001, %v1225
      %v1227 = vpop.f32.mrb[0].mxu0
      %1228 = vmatprep.mubr.f32.mxu0 0.0
      %1229 = vmatmul.mubr.f32.gmra.mrb[0].mxu0 %v814
      %v1230 = vpop.f32.mrb[0].mxu0
      %v1231 = vadd.f32 %v1006, %v1230
      %v1232 = vpop.f32.mrb[0].mxu0
      %1233 = vmatprep.mubr.f32.mxu0 0.0
      %1234 = vmatmul.mubr.f32.gmra.mrb[0].mxu0 %v815
      %v1235 = vpop.f32.mrb[0].mxu0
      %v1236 = vadd.f32 %v1011, %v1235
      %v1237 = vpop.f32.mrb[0].mxu0
      %1238 = vmatprep.mubr.f32.mxu0 0.0
      %1239 = vmatmul.mubr.f32.gmra.mrb[0].mxu0 %v816
      %v1240 = vpop.f32.mrb[0].mxu0
      %v1241 = vadd.f32 %v1016, %v1240
      %v1242 = vpop.f32.mrb[0].mxu0
      %1243 = vmatprep.mubr.f32.mxu0 0.0
      %1244 = vmatmul.mubr.f32.gmra.mrb[0].mxu0 %v817
      %v1245 = vpop.f32.mrb[0].mxu0
      %v1246 = vadd.f32 %v1021, %v1245
      %v1247 = vpop.f32.mrb[0].mxu0
      %1248 = vmatprep.mubr.f32.mxu0 0.0
      %1249 = vmatmul.mubr.f32.gmra.mrb[0].mxu0 %v818
      %v1250 = vpop.f32.mrb[0].mxu0
      %v1251 = vadd.f32 %v1026, %v1250
      %v1252 = vpop.f32.mrb[0].mxu0
      %1253 = vmatprep.mubr.f32.mxu0 0.0
      %1254 = vmatmul.mubr.f32.gmra.mrb[0].mxu0 %v819
      %v1255 = vpop.f32.mrb[0].mxu0
      %v1256 = vadd.f32 %v1031, %v1255
      %v1257 = vpop.f32.mrb[0].mxu0
      %1258 = vmatprep.mubr.f32.mxu0 0.0
      %1259 = vmatmul.mubr.f32.gmra.mrb[0].mxu0 %v820
      %v1260 = vpop.f32.mrb[0].mxu0
      %v1261 = vadd.f32 %v1036, %v1260
      %v1262 = vpop.f32.mrb[0].mxu0
      %1263 = vmatprep.mubr.f32.mxu0 0.0
      %1264 = vmatmul.mubr.f32.gmra.mrb[0].mxu0 %v821
      %v1265 = vpop.f32.mrb[0].mxu0
      %v1266 = vadd.f32 %v1041, %v1265
      %v1267 = vpop.f32.mrb[0].mxu0
      %1268 = vmatprep.mubr.f32.mxu0 0.0
      %1269 = vmatmul.mubr.f32.gmra.mrb[0].mxu0 %v822
      %v1270 = vpop.f32.mrb[0].mxu0
      %v1271 = vadd.f32 %v1046, %v1270
      %v1272 = vpop.f32.mrb[0].mxu0
      %1273 = vmatprep.mubr.f32.mxu0 0.0
      %1274 = vmatmul.mubr.f32.gmra.mrb[0].mxu0 %v823
      %v1275 = vpop.f32.mrb[0].mxu0
      %v1276 = vadd.f32 %v1051, %v1275
      %v1277 = vpop.f32.mrb[0].mxu0
      %1278 = vmatprep.mubr.f32.mxu0 0.0
      %1279 = vmatmul.mubr.f32.gmra.mrb[0].mxu0 %v824
      %v1280 = vpop.f32.mrb[0].mxu0
      %v1281 = vadd.f32 %v1056, %v1280
      %v1282 = vpop.f32.mrb[0].mxu0
      %1283 = vmatprep.mubr.f32.mxu0 0.0
      %1284 = vmatmul.mubr.f32.gmra.mrb[0].mxu0 %v825
      %v1285 = vpop.f32.mrb[0].mxu0
      %v1286 = vadd.f32 %v1061, %v1285
      %v1287 = vpop.f32.mrb[0].mxu0
      %1288 = vmatprep.mubr.f32.mxu0 0.0
      %1289 = vmatmul.mubr.f32.gmra.mrb[0].mxu0 %v826
      %v1290 = vpop.f32.mrb[0].mxu0
      %v1291 = vadd.f32 %v1066, %v1290
      %v1292 = vpop.f32.mrb[0].mxu0
      %1293 = vmatprep.mubr.f32.mxu0 0.0
      %1294 = vmatmul.mubr.f32.gmra.mrb[0].mxu0 %v827
      %v1295 = vpop.f32.mrb[0].mxu0
      %v1296 = vadd.f32 %v1071, %v1295
      %v1297 = vpop.f32.mrb[0].mxu0
      %1298 = vmatprep.mubr.f32.mxu0 0.0
      %1299 = vmatmul.mubr.f32.gmra.mrb[0].mxu0 %v828
      %v1300 = vpop.f32.mrb[0].mxu0
      %v1301 = vadd.f32 %v1076, %v1300
      %v1302 = vpop.f32.mrb[0].mxu0
      %1303 = vmatprep.mubr.f32.mxu0 0.0
      %1304 = vmatmul.mubr.f32.gmra.mrb[0].mxu0 %v829
      %v1305 = vpop.f32.mrb[0].mxu0
      %v1306 = vadd.f32 %v1081, %v1305
      %v1307 = vpop.f32.mrb[0].mxu0
      %1308 = vmatprep.mubr.f32.mxu0 0.0
      %1309 = vmatmul.mubr.f32.gmra.mrb[0].mxu0 %v830
      %v1310 = vpop.f32.mrb[0].mxu0
      %v1311 = vadd.f32 %v1086, %v1310
      %v1312 = vpop.f32.mrb[0].mxu0
      %1313 = vmatprep.mubr.f32.mxu0 0.0
      %1314 = vmatmul.mubr.f32.gmra.mrb[0].mxu0 %v831
      %v1315 = vpop.f32.mrb[0].mxu0
      %v1316 = vadd.f32 %v1091, %v1315
      %v1317 = vpop.f32.mrb[0].mxu0
      %1318 = vmatprep.mubr.f32.mxu0 0.0
      %1319 = vmatmul.mubr.f32.gmra.mrb[0].mxu0 %v832
      %v1320 = vpop.f32.mrb[0].mxu0
      %v1321 = vadd.f32 %v1096, %v1320
      %v1322 = vpop.f32.mrb[0].mxu0
      %1323 = vmatprep.mubr.f32.mxu0 0.0
      %1324 = vmatmul.mubr.f32.gmra.mrb[0].mxu0 %v833
      %v1325 = vpop.f32.mrb[0].mxu0
      %v1326 = vadd.f32 %v1101, %v1325
      %v1327 = vpop.f32.mrb[0].mxu0
      %1328 = vmatprep.mubr.f32.mxu0 0.0
      %1329 = vmatmul.mubr.f32.gmra.mrb[0].mxu0 %v834
      %v1330 = vpop.f32.mrb[0].mxu0
      %v1331 = vadd.f32 %v1106, %v1330
      %v1332 = vpop.f32.mrb[0].mxu0
      %1333 = vmatprep.mubr.f32.mxu0 0.0
      %1334 = vmatmul.mubr.f32.gmra.mrb[0].mxu0 %v835
      %v1335 = vpop.f32.mrb[0].mxu0
      %v1336 = vadd.f32 %v1111, %v1335
      %v1337 = vpop.f32.mrb[0].mxu0
      %1338 = vmatprep.mubr.f32.mxu0 0.0
      %1339 = vmatmul.mubr.f32.gmra.mrb[0].mxu0 %v836
      %v1340 = vpop.f32.mrb[0].mxu0
      %v1341 = vadd.f32 %v1116, %v1340
      %v1342 = vpop.f32.mrb[0].mxu0
      %1343 = vmatprep.mubr.f32.mxu0 0.0
      %1344 = vmatmul.mubr.f32.gmra.mrb[0].mxu0 %v837
      %v1345 = vpop.f32.mrb[0].mxu0
      %v1346 = vadd.f32 %v1121, %v1345
      %v1347 = vpop.f32.mrb[0].mxu0
      %1348 = vmatprep.mubr.f32.mxu0 0.0
      %1349 = vmatmul.mubr.f32.gmra.mrb[0].mxu0 %v838
      %v1350 = vpop.f32.mrb[0].mxu0
      %v1351 = vadd.f32 %v1126, %v1350
      %v1352 = vpop.f32.mrb[0].mxu0
      %1353 = vdwg.mxu0
      %v1354 = vld [vmem:[#allocation2 + $0x9] sm:$0xff]
      %v1355 = vld [vmem:[#allocation2 + $0x11] sm:$0xff]
      %v1356 = vld [vmem:[#allocation2 + $0x19] sm:$0xff]
      %v1357 = vld [vmem:[#allocation2 + $0x21] sm:$0xff]
      %v1358 = vld [vmem:[#allocation2 + $0x29] sm:$0xff]
      %v1359 = vld [vmem:[#allocation2 + $0x31] sm:$0xff]
      %v1360 = vld [vmem:[#allocation2 + $0x39] sm:$0xff]
      %v1361 = vld [vmem:[#allocation2 + $0x41] sm:$0xff]
      %v1362 = vld [vmem:[#allocation2 + $0x49] sm:$0xff]
      %v1363 = vld [vmem:[#allocation2 + $0x51] sm:$0xff]
      %v1364 = vld [vmem:[#allocation2 + $0x59] sm:$0xff]
      %v1365 = vld [vmem:[#allocation2 + $0x61] sm:$0xff]
      %v1366 = vld [vmem:[#allocation2 + $0x69] sm:$0xff]
      %v1367 = vld [vmem:[#allocation2 + $0x71] sm:$0xff]
      %v1368 = vld [vmem:[#allocation2 + $0x79] sm:$0xff]
      %v1369 = vld [vmem:[#allocation2 + $0x81] sm:$0xff]
      %v1370 = vld [vmem:[#allocation2 + $0x89] sm:$0xff]
      %v1371 = vld [vmem:[#allocation2 + $0x91] sm:$0xff]
      %v1372 = vld [vmem:[#allocation2 + $0x99] sm:$0xff]
      %v1373 = vld [vmem:[#allocation2 + $0xa1] sm:$0xff]
      %v1374 = vld [vmem:[#allocation2 + $0xa9] sm:$0xff]
      %v1375 = vld [vmem:[#allocation2 + $0xb1] sm:$0xff]
      %v1376 = vld [vmem:[#allocation2 + $0xb9] sm:$0xff]
      %v1377 = vld [vmem:[#allocation2 + $0xc1] sm:$0xff]
      %v1378 = vld [vmem:[#allocation2 + $0xc9] sm:$0xff]
      %v1379 = vld [vmem:[#allocation2 + $0xd1] sm:$0xff]
      %v1380 = vld [vmem:[#allocation2 + $0xd9] sm:$0xff]
      %v1381 = vld [vmem:[#allocation2 + $0xe1] sm:$0xff]
      %v1382 = vld [vmem:[#allocation2 + $0xe9] sm:$0xff]
      %v1383 = vld [vmem:[#allocation2 + $0xf1] sm:$0xff]
      %v1384 = vld [vmem:[#allocation2 + $0xf9] sm:$0xff]
      %v1385 = vld [vmem:[#allocation2 + $0x101] sm:$0xff]
      %1387 = vset.pattern.permute.xlu0 0
      %1388 = vperm.xlu0 %1387, %v583
      %v1389 = vpop.permute.xlu0 %1388
      %1392 = vset.pattern.permute.xlu0 0
      %1393 = vperm.xlu0 %1392, %v584
      %v1394 = vpop.permute.xlu0 %1393
      %1397 = vset.pattern.permute.xlu0 0
      %1398 = vperm.xlu0 %1397, %v585
      %v1399 = vpop.permute.xlu0 %1398
      %1402 = vset.pattern.permute.xlu0 0
      %1403 = vperm.xlu0 %1402, %v586
      %v1404 = vpop.permute.xlu0 %1403
      %1407 = vset.pattern.permute.xlu0 0
      %1408 = vperm.xlu0 %1407, %v587
      %v1409 = vpop.permute.xlu0 %1408
      %1412 = vset.pattern.permute.xlu0 0
      %1413 = vperm.xlu0 %1412, %v588
      %v1414 = vpop.permute.xlu0 %1413
      %1417 = vset.pattern.permute.xlu0 0
      %1418 = vperm.xlu0 %1417, %v589
      %v1419 = vpop.permute.xlu0 %1418
      %1422 = vset.pattern.permute.xlu0 0
      %1423 = vperm.xlu0 %1422, %v590
      %v1424 = vpop.permute.xlu0 %1423
      %1427 = vset.pattern.permute.xlu0 0
      %1428 = vperm.xlu0 %1427, %v591
      %v1429 = vpop.permute.xlu0 %1428
      %1432 = vset.pattern.permute.xlu0 0
      %1433 = vperm.xlu0 %1432, %v592
      %v1434 = vpop.permute.xlu0 %1433
      %1437 = vset.pattern.permute.xlu0 0
      %1438 = vperm.xlu0 %1437, %v593
      %v1439 = vpop.permute.xlu0 %1438
      %1442 = vset.pattern.permute.xlu0 0
      %1443 = vperm.xlu0 %1442, %v594
      %v1444 = vpop.permute.xlu0 %1443
      %1447 = vset.pattern.permute.xlu0 0
      %1448 = vperm.xlu0 %1447, %v595
      %v1449 = vpop.permute.xlu0 %1448
      %1452 = vset.pattern.permute.xlu0 0
      %1453 = vperm.xlu0 %1452, %v596
      %v1454 = vpop.permute.xlu0 %1453
      %1457 = vset.pattern.permute.xlu0 0
      %1458 = vperm.xlu0 %1457, %v597
      %v1459 = vpop.permute.xlu0 %1458
      %1462 = vset.pattern.permute.xlu0 0
      %1463 = vperm.xlu0 %1462, %v598
      %v1464 = vpop.permute.xlu0 %1463
      %1467 = vset.pattern.permute.xlu0 0
      %1468 = vperm.xlu0 %1467, %v599
      %v1469 = vpop.permute.xlu0 %1468
      %1472 = vset.pattern.permute.xlu0 0
      %1473 = vperm.xlu0 %1472, %v600
      %v1474 = vpop.permute.xlu0 %1473
      %1477 = vset.pattern.permute.xlu0 0
      %1478 = vperm.xlu0 %1477, %v601
      %v1479 = vpop.permute.xlu0 %1478
      %1482 = vset.pattern.permute.xlu0 0
      %1483 = vperm.xlu0 %1482, %v602
      %v1484 = vpop.permute.xlu0 %1483
      %1487 = vset.pattern.permute.xlu0 0
      %1488 = vperm.xlu0 %1487, %v603
      %v1489 = vpop.permute.xlu0 %1488
      %1492 = vset.pattern.permute.xlu0 0
      %1493 = vperm.xlu0 %1492, %v604
      %v1494 = vpop.permute.xlu0 %1493
      %1497 = vset.pattern.permute.xlu0 0
      %1498 = vperm.xlu0 %1497, %v605
      %v1499 = vpop.permute.xlu0 %1498
      %1502 = vset.pattern.permute.xlu0 0
      %1503 = vperm.xlu0 %1502, %v606
      %v1504 = vpop.permute.xlu0 %1503
      %1507 = vset.pattern.permute.xlu0 0
      %1508 = vperm.xlu0 %1507, %v607
      %v1509 = vpop.permute.xlu0 %1508
      %1512 = vset.pattern.permute.xlu0 0
      %1513 = vperm.xlu0 %1512, %v608
      %v1514 = vpop.permute.xlu0 %1513
      %1517 = vset.pattern.permute.xlu0 0
      %1518 = vperm.xlu0 %1517, %v609
      %v1519 = vpop.permute.xlu0 %1518
      %1522 = vset.pattern.permute.xlu0 0
      %1523 = vperm.xlu0 %1522, %v610
      %v1524 = vpop.permute.xlu0 %1523
      %1527 = vset.pattern.permute.xlu0 0
      %1528 = vperm.xlu0 %1527, %v611
      %v1529 = vpop.permute.xlu0 %1528
      %1532 = vset.pattern.permute.xlu0 0
      %1533 = vperm.xlu0 %1532, %v612
      %v1534 = vpop.permute.xlu0 %1533
      %1537 = vset.pattern.permute.xlu0 0
      %1538 = vperm.xlu0 %1537, %v613
      %v1539 = vpop.permute.xlu0 %1538
      %1542 = vset.pattern.permute.xlu0 0
      %1543 = vperm.xlu0 %1542, %v614
      %v1544 = vpop.permute.xlu0 %1543
      %v1546 = vmul.f32 %v1354, %v1389
      %v1547 = vmul.f32 %v1355, %v1394
      %v1548 = vmul.f32 %v1356, %v1399
      %v1549 = vmul.f32 %v1357, %v1404
      %v1550 = vmul.f32 %v1358, %v1409
      %v1551 = vmul.f32 %v1359, %v1414
      %v1552 = vmul.f32 %v1360, %v1419
      %v1553 = vmul.f32 %v1361, %v1424
      %v1554 = vmul.f32 %v1362, %v1429
      %v1555 = vmul.f32 %v1363, %v1434
      %v1556 = vmul.f32 %v1364, %v1439
      %v1557 = vmul.f32 %v1365, %v1444
      %v1558 = vmul.f32 %v1366, %v1449
      %v1559 = vmul.f32 %v1367, %v1454
      %v1560 = vmul.f32 %v1368, %v1459
      %v1561 = vmul.f32 %v1369, %v1464
      %v1562 = vmul.f32 %v1370, %v1469
      %v1563 = vmul.f32 %v1371, %v1474
      %v1564 = vmul.f32 %v1372, %v1479
      %v1565 = vmul.f32 %v1373, %v1484
      %v1566 = vmul.f32 %v1374, %v1489
      %v1567 = vmul.f32 %v1375, %v1494
      %v1568 = vmul.f32 %v1376, %v1499
      %v1569 = vmul.f32 %v1377, %v1504
      %v1570 = vmul.f32 %v1378, %v1509
      %v1571 = vmul.f32 %v1379, %v1514
      %v1572 = vmul.f32 %v1380, %v1519
      %v1573 = vmul.f32 %v1381, %v1524
      %v1574 = vmul.f32 %v1382, %v1529
      %v1575 = vmul.f32 %v1383, %v1534
      %v1576 = vmul.f32 %v1384, %v1539
      %v1577 = vmul.f32 %v1385, %v1544
      %s1578 = scalar_lea.vmem %s319, 256
      %v1579 = vld [vmem:[%s1578] sm:$0xff]
      %v1580 = vld [vmem:[%s1578 + $0x8] sm:$0xff]
      %v1581 = vld [vmem:[%s1578 + $0x10] sm:$0xff]
      %v1582 = vld [vmem:[%s1578 + $0x18] sm:$0xff]
      %v1583 = vld [vmem:[%s1578 + $0x20] sm:$0xff]
      %v1584 = vld [vmem:[%s1578 + $0x28] sm:$0xff]
      %v1585 = vld [vmem:[%s1578 + $0x30] sm:$0xff]
      %v1586 = vld [vmem:[%s1578 + $0x38] sm:$0xff]
      %v1587 = vld [vmem:[%s1578 + $0x40] sm:$0xff]
      %v1588 = vld [vmem:[%s1578 + $0x48] sm:$0xff]
      %v1589 = vld [vmem:[%s1578 + $0x50] sm:$0xff]
      %v1590 = vld [vmem:[%s1578 + $0x58] sm:$0xff]
      %v1591 = vld [vmem:[%s1578 + $0x60] sm:$0xff]
      %v1592 = vld [vmem:[%s1578 + $0x68] sm:$0xff]
      %v1593 = vld [vmem:[%s1578 + $0x70] sm:$0xff]
      %v1594 = vld [vmem:[%s1578 + $0x78] sm:$0xff]
      %1595 = vmatprep.subr.mxu0 0.0
      %1596 = vmatpush1.msra.mxu0 %v1579
      %1597 = vmatprep.subr.mxu0 0.0
      %1598 = vmatpush1.msra.mxu0 %v1580
      %1599 = vmatprep.subr.mxu0 0.0
      %1600 = vmatpush1.msra.mxu0 %v1581
      %1601 = vmatprep.subr.mxu0 0.0
      %1602 = vmatpush1.msra.mxu0 %v1582
      %1603 = vmatprep.subr.mxu0 0.0
      %1604 = vmatpush1.msra.mxu0 %v1583
      %1605 = vmatprep.subr.mxu0 0.0
      %1606 = vmatpush1.msra.mxu0 %v1584
      %1607 = vmatprep.subr.mxu0 0.0
      %1608 = vmatpush1.msra.mxu0 %v1585
      %1609 = vmatprep.subr.mxu0 0.0
      %1610 = vmatpush1.msra.mxu0 %v1586
      %1611 = vmatprep.subr.mxu0 0.0
      %1612 = vmatpush1.msra.mxu0 %v1587
      %1613 = vmatprep.subr.mxu0 0.0
      %1614 = vmatpush1.msra.mxu0 %v1588
      %1615 = vmatprep.subr.mxu0 0.0
      %1616 = vmatpush1.msra.mxu0 %v1589
      %1617 = vmatprep.subr.mxu0 0.0
      %1618 = vmatpush1.msra.mxu0 %v1590
      %1619 = vmatprep.subr.mxu0 0.0
      %1620 = vmatpush1.msra.mxu0 %v1591
      %1621 = vmatprep.subr.mxu0 0.0
      %1622 = vmatpush1.msra.mxu0 %v1592
      %1623 = vmatprep.subr.mxu0 0.0
      %1624 = vmatpush1.msra.mxu0 %v1593
      %1625 = vmatprep.subr.mxu0 0.0
      %1626 = vmatpush1.msra.mxu0 %v1594
      %1627 = vmatprep.subr.mxu0 0.0
      %1628 = vmatpush1.msra.mxu0 0.0
      %1629 = vmatprep.subr.mxu0 0.0
      %1630 = vmatpush1.msra.mxu0 0.0
      %1631 = vmatprep.subr.mxu0 0.0
      %1632 = vmatpush1.msra.mxu0 0.0
      %1633 = vmatprep.subr.mxu0 0.0
      %1634 = vmatpush1.msra.mxu0 0.0
      %1635 = vmatprep.subr.mxu0 0.0
      %1636 = vmatpush1.msra.mxu0 0.0
      %1637 = vmatprep.subr.mxu0 0.0
      %1638 = vmatpush1.msra.mxu0 0.0
      %1639 = vmatprep.subr.mxu0 0.0
      %1640 = vmatpush1.msra.mxu0 0.0
      %1641 = vmatprep.subr.mxu0 0.0
      %1642 = vmatpush1.msra.mxu0 0.0
      %1643 = vmatprep.subr.mxu0 0.0
      %1644 = vmatpush1.msra.mxu0 0.0
      %1645 = vmatprep.subr.mxu0 0.0
      %1646 = vmatpush1.msra.mxu0 0.0
      %1647 = vmatprep.subr.mxu0 0.0
      %1648 = vmatpush1.msra.mxu0 0.0
      %1649 = vmatprep.subr.mxu0 0.0
      %1650 = vmatpush1.msra.mxu0 0.0
      %1651 = vmatprep.subr.mxu0 0.0
      %1652 = vmatpush1.msra.mxu0 0.0
      %1653 = vmatprep.subr.mxu0 0.0
      %1654 = vmatpush1.msra.mxu0 0.0
      %1655 = vmatprep.subr.mxu0 0.0
      %1656 = vmatpush1.msra.mxu0 0.0
      %1657 = vmatprep.subr.mxu0 0.0
      %1658 = vmatpush1.msra.mxu0 0.0
      %1659 = vmatprep.mubr.f32.mxu0 0.0
      %1660 = vmatmul.mubr.f32.gmra.mrb[0].mxu0 %v1546
      %v1661 = vpop.f32.mrb[0].mxu0
      %v1662 = vadd.f32 0.0, %v1661
      %v1663 = vpop.f32.mrb[0].mxu0
      %1664 = vmatprep.mubr.f32.mxu0 0.0
      %1665 = vmatmul.mubr.f32.gmra.mrb[0].mxu0 %v1547
      %v1666 = vpop.f32.mrb[0].mxu0
      %v1667 = vadd.f32 0.0, %v1666
      %v1668 = vpop.f32.mrb[0].mxu0
      %1669 = vmatprep.mubr.f32.mxu0 0.0
      %1670 = vmatmul.mubr.f32.gmra.mrb[0].mxu0 %v1548
      %v1671 = vpop.f32.mrb[0].mxu0
      %v1672 = vadd.f32 0.0, %v1671
      %v1673 = vpop.f32.mrb[0].mxu0
      %1674 = vmatprep.mubr.f32.mxu0 0.0
      %1675 = vmatmul.mubr.f32.gmra.mrb[0].mxu0 %v1549
      %v1676 = vpop.f32.mrb[0].mxu0
      %v1677 = vadd.f32 0.0, %v1676
      %v1678 = vpop.f32.mrb[0].mxu0
      %1679 = vmatprep.mubr.f32.mxu0 0.0
      %1680 = vmatmul.mubr.f32.gmra.mrb[0].mxu0 %v1550
      %v1681 = vpop.f32.mrb[0].mxu0
      %v1682 = vadd.f32 0.0, %v1681
      %v1683 = vpop.f32.mrb[0].mxu0
      %1684 = vmatprep.mubr.f32.mxu0 0.0
      %1685 = vmatmul.mubr.f32.gmra.mrb[0].mxu0 %v1551
      %v1686 = vpop.f32.mrb[0].mxu0
      %v1687 = vadd.f32 0.0, %v1686
      %v1688 = vpop.f32.mrb[0].mxu0
      %1689 = vmatprep.mubr.f32.mxu0 0.0
      %1690 = vmatmul.mubr.f32.gmra.mrb[0].mxu0 %v1552
      %v1691 = vpop.f32.mrb[0].mxu0
      %v1692 = vadd.f32 0.0, %v1691
      %v1693 = vpop.f32.mrb[0].mxu0
      %1694 = vmatprep.mubr.f32.mxu0 0.0
      %1695 = vmatmul.mubr.f32.gmra.mrb[0].mxu0 %v1553
      %v1696 = vpop.f32.mrb[0].mxu0
      %v1697 = vadd.f32 0.0, %v1696
      %v1698 = vpop.f32.mrb[0].mxu0
      %1699 = vmatprep.mubr.f32.mxu0 0.0
      %1700 = vmatmul.mubr.f32.gmra.mrb[0].mxu0 %v1554
      %v1701 = vpop.f32.mrb[0].mxu0
      %v1702 = vadd.f32 0.0, %v1701
      %v1703 = vpop.f32.mrb[0].mxu0
      %1704 = vmatprep.mubr.f32.mxu0 0.0
      %1705 = vmatmul.mubr.f32.gmra.mrb[0].mxu0 %v1555
      %v1706 = vpop.f32.mrb[0].mxu0
      %v1707 = vadd.f32 0.0, %v1706
      %v1708 = vpop.f32.mrb[0].mxu0
      %1709 = vmatprep.mubr.f32.mxu0 0.0
      %1710 = vmatmul.mubr.f32.gmra.mrb[0].mxu0 %v1556
      %v1711 = vpop.f32.mrb[0].mxu0
      %v1712 = vadd.f32 0.0, %v1711
      %v1713 = vpop.f32.mrb[0].mxu0
      %1714 = vmatprep.mubr.f32.mxu0 0.0
      %1715 = vmatmul.mubr.f32.gmra.mrb[0].mxu0 %v1557
      %v1716 = vpop.f32.mrb[0].mxu0
      %v1717 = vadd.f32 0.0, %v1716
      %v1718 = vpop.f32.mrb[0].mxu0
      %1719 = vmatprep.mubr.f32.mxu0 0.0
      %1720 = vmatmul.mubr.f32.gmra.mrb[0].mxu0 %v1558
      %v1721 = vpop.f32.mrb[0].mxu0
      %v1722 = vadd.f32 0.0, %v1721
      %v1723 = vpop.f32.mrb[0].mxu0
      %1724 = vmatprep.mubr.f32.mxu0 0.0
      %1725 = vmatmul.mubr.f32.gmra.mrb[0].mxu0 %v1559
      %v1726 = vpop.f32.mrb[0].mxu0
      %v1727 = vadd.f32 0.0, %v1726
      %v1728 = vpop.f32.mrb[0].mxu0
      %1729 = vmatprep.mubr.f32.mxu0 0.0
      %1730 = vmatmul.mubr.f32.gmra.mrb[0].mxu0 %v1560
      %v1731 = vpop.f32.mrb[0].mxu0
      %v1732 = vadd.f32 0.0, %v1731
      %v1733 = vpop.f32.mrb[0].mxu0
      %1734 = vmatprep.mubr.f32.mxu0 0.0
      %1735 = vmatmul.mubr.f32.gmra.mrb[0].mxu0 %v1561
      %v1736 = vpop.f32.mrb[0].mxu0
      %v1737 = vadd.f32 0.0, %v1736
      %v1738 = vpop.f32.mrb[0].mxu0
      %1739 = vmatprep.mubr.f32.mxu0 0.0
      %1740 = vmatmul.mubr.f32.gmra.mrb[0].mxu0 %v1562
      %v1741 = vpop.f32.mrb[0].mxu0
      %v1742 = vadd.f32 0.0, %v1741
      %v1743 = vpop.f32.mrb[0].mxu0
      %1744 = vmatprep.mubr.f32.mxu0 0.0
      %1745 = vmatmul.mubr.f32.gmra.mrb[0].mxu0 %v1563
      %v1746 = vpop.f32.mrb[0].mxu0
      %v1747 = vadd.f32 0.0, %v1746
      %v1748 = vpop.f32.mrb[0].mxu0
      %1749 = vmatprep.mubr.f32.mxu0 0.0
      %1750 = vmatmul.mubr.f32.gmra.mrb[0].mxu0 %v1564
      %v1751 = vpop.f32.mrb[0].mxu0
      %v1752 = vadd.f32 0.0, %v1751
      %v1753 = vpop.f32.mrb[0].mxu0
      %1754 = vmatprep.mubr.f32.mxu0 0.0
      %1755 = vmatmul.mubr.f32.gmra.mrb[0].mxu0 %v1565
      %v1756 = vpop.f32.mrb[0].mxu0
      %v1757 = vadd.f32 0.0, %v1756
      %v1758 = vpop.f32.mrb[0].mxu0
      %1759 = vmatprep.mubr.f32.mxu0 0.0
      %1760 = vmatmul.mubr.f32.gmra.mrb[0].mxu0 %v1566
      %v1761 = vpop.f32.mrb[0].mxu0
      %v1762 = vadd.f32 0.0, %v1761
      %v1763 = vpop.f32.mrb[0].mxu0
      %1764 = vmatprep.mubr.f32.mxu0 0.0
      %1765 = vmatmul.mubr.f32.gmra.mrb[0].mxu0 %v1567
      %v1766 = vpop.f32.mrb[0].mxu0
      %v1767 = vadd.f32 0.0, %v1766
      %v1768 = vpop.f32.mrb[0].mxu0
      %1769 = vmatprep.mubr.f32.mxu0 0.0
      %1770 = vmatmul.mubr.f32.gmra.mrb[0].mxu0 %v1568
      %v1771 = vpop.f32.mrb[0].mxu0
      %v1772 = vadd.f32 0.0, %v1771
      %v1773 = vpop.f32.mrb[0].mxu0
      %1774 = vmatprep.mubr.f32.mxu0 0.0
      %1775 = vmatmul.mubr.f32.gmra.mrb[0].mxu0 %v1569
      %v1776 = vpop.f32.mrb[0].mxu0
      %v1777 = vadd.f32 0.0, %v1776
      %v1778 = vpop.f32.mrb[0].mxu0
      %1779 = vmatprep.mubr.f32.mxu0 0.0
      %1780 = vmatmul.mubr.f32.gmra.mrb[0].mxu0 %v1570
      %v1781 = vpop.f32.mrb[0].mxu0
      %v1782 = vadd.f32 0.0, %v1781
      %v1783 = vpop.f32.mrb[0].mxu0
      %1784 = vmatprep.mubr.f32.mxu0 0.0
      %1785 = vmatmul.mubr.f32.gmra.mrb[0].mxu0 %v1571
      %v1786 = vpop.f32.mrb[0].mxu0
      %v1787 = vadd.f32 0.0, %v1786
      %v1788 = vpop.f32.mrb[0].mxu0
      %1789 = vmatprep.mubr.f32.mxu0 0.0
      %1790 = vmatmul.mubr.f32.gmra.mrb[0].mxu0 %v1572
      %v1791 = vpop.f32.mrb[0].mxu0
      %v1792 = vadd.f32 0.0, %v1791
      %v1793 = vpop.f32.mrb[0].mxu0
      %1794 = vmatprep.mubr.f32.mxu0 0.0
      %1795 = vmatmul.mubr.f32.gmra.mrb[0].mxu0 %v1573
      %v1796 = vpop.f32.mrb[0].mxu0
      %v1797 = vadd.f32 0.0, %v1796
      %v1798 = vpop.f32.mrb[0].mxu0
      %1799 = vmatprep.mubr.f32.mxu0 0.0
      %1800 = vmatmul.mubr.f32.gmra.mrb[0].mxu0 %v1574
      %v1801 = vpop.f32.mrb[0].mxu0
      %v1802 = vadd.f32 0.0, %v1801
      %v1803 = vpop.f32.mrb[0].mxu0
      %1804 = vmatprep.mubr.f32.mxu0 0.0
      %1805 = vmatmul.mubr.f32.gmra.mrb[0].mxu0 %v1575
      %v1806 = vpop.f32.mrb[0].mxu0
      %v1807 = vadd.f32 0.0, %v1806
      %v1808 = vpop.f32.mrb[0].mxu0
      %1809 = vmatprep.mubr.f32.mxu0 0.0
      %1810 = vmatmul.mubr.f32.gmra.mrb[0].mxu0 %v1576
      %v1811 = vpop.f32.mrb[0].mxu0
      %v1812 = vadd.f32 0.0, %v1811
      %v1813 = vpop.f32.mrb[0].mxu0
      %1814 = vmatprep.mubr.f32.mxu0 0.0
      %1815 = vmatmul.mubr.f32.gmra.mrb[0].mxu0 %v1577
      %v1816 = vpop.f32.mrb[0].mxu0
      %v1817 = vadd.f32 0.0, %v1816
      %v1818 = vpop.f32.mrb[0].mxu0
      %1819 = vdwg.mxu0
      %v1820 = vadd.f32 %v1196, %v1662
      %v1821 = vadd.f32 %v1201, %v1667
      %v1822 = vadd.f32 %v1206, %v1672
      %v1823 = vadd.f32 %v1211, %v1677
      %v1824 = vadd.f32 %v1216, %v1682
      %v1825 = vadd.f32 %v1221, %v1687
      %v1826 = vadd.f32 %v1226, %v1692
      %v1827 = vadd.f32 %v1231, %v1697
      %v1828 = vadd.f32 %v1236, %v1702
      %v1829 = vadd.f32 %v1241, %v1707
      %v1830 = vadd.f32 %v1246, %v1712
      %v1831 = vadd.f32 %v1251, %v1717
      %v1832 = vadd.f32 %v1256, %v1722
      %v1833 = vadd.f32 %v1261, %v1727
      %v1834 = vadd.f32 %v1266, %v1732
      %v1835 = vadd.f32 %v1271, %v1737
      %v1836 = vadd.f32 %v1276, %v1742
      %v1837 = vadd.f32 %v1281, %v1747
      %v1838 = vadd.f32 %v1286, %v1752
      %v1839 = vadd.f32 %v1291, %v1757
      %v1840 = vadd.f32 %v1296, %v1762
      %v1841 = vadd.f32 %v1301, %v1767
      %v1842 = vadd.f32 %v1306, %v1772
      %v1843 = vadd.f32 %v1311, %v1777
      %v1844 = vadd.f32 %v1316, %v1782
      %v1845 = vadd.f32 %v1321, %v1787
      %v1846 = vadd.f32 %v1326, %v1792
      %v1847 = vadd.f32 %v1331, %v1797
      %v1848 = vadd.f32 %v1336, %v1802
      %v1849 = vadd.f32 %v1341, %v1807
      %v1850 = vadd.f32 %v1346, %v1812
      %v1851 = vadd.f32 %v1351, %v1817
      %v1852 = vld [vmem:[#allocation2 + $0x17] sm:$0xff]
      %v1853 = vld [vmem:[#allocation2 + $0x1f] sm:$0xff]
      %v1854 = vld [vmem:[#allocation2 + $0x27] sm:$0xff]
      %v1855 = vld [vmem:[#allocation2 + $0x2f] sm:$0xff]
      %v1856 = vld [vmem:[#allocation2 + $0x37] sm:$0xff]
      %v1857 = vld [vmem:[#allocation2 + $0x3f] sm:$0xff]
      %v1858 = vld [vmem:[#allocation2 + $0x47] sm:$0xff]
      %v1859 = vld [vmem:[#allocation2 + $0x4f] sm:$0xff]
      %v1860 = vld [vmem:[#allocation2 + $0x57] sm:$0xff]
      %v1861 = vld [vmem:[#allocation2 + $0x5f] sm:$0xff]
      %v1862 = vld [vmem:[#allocation2 + $0x67] sm:$0xff]
      %v1863 = vld [vmem:[#allocation2 + $0x6f] sm:$0xff]
      %v1864 = vld [vmem:[#allocation2 + $0x77] sm:$0xff]
      %v1865 = vld [vmem:[#allocation2 + $0x7f] sm:$0xff]
      %v1866 = vld [vmem:[#allocation2 + $0x87] sm:$0xff]
      %v1867 = vld [vmem:[#allocation2 + $0x8f] sm:$0xff]
      %v1868 = vld [vmem:[#allocation2 + $0x97] sm:$0xff]
      %v1869 = vld [vmem:[#allocation2 + $0x9f] sm:$0xff]
      %v1870 = vld [vmem:[#allocation2 + $0xa7] sm:$0xff]
      %v1871 = vld [vmem:[#allocation2 + $0xaf] sm:$0xff]
      %v1872 = vld [vmem:[#allocation2 + $0xb7] sm:$0xff]
      %v1873 = vld [vmem:[#allocation2 + $0xbf] sm:$0xff]
      %v1874 = vld [vmem:[#allocation2 + $0xc7] sm:$0xff]
      %v1875 = vld [vmem:[#allocation2 + $0xcf] sm:$0xff]
      %v1876 = vld [vmem:[#allocation2 + $0xd7] sm:$0xff]
      %v1877 = vld [vmem:[#allocation2 + $0xdf] sm:$0xff]
      %v1878 = vld [vmem:[#allocation2 + $0xe7] sm:$0xff]
      %v1879 = vld [vmem:[#allocation2 + $0xef] sm:$0xff]
      %v1880 = vld [vmem:[#allocation2 + $0xf7] sm:$0xff]
      %v1881 = vld [vmem:[#allocation2 + $0xff] sm:$0xff]
      %v1882 = vld [vmem:[#allocation2 + $0x107] sm:$0xff]
      %v1883 = vld [vmem:[#allocation2 + $0x10f] sm:$0xff]
      %v1884 = vmul.f32 %v1852, %v650
      %v1885 = vmul.f32 %v1853, %v655
      %v1886 = vmul.f32 %v1854, %v660
      %v1887 = vmul.f32 %v1855, %v665
      %v1888 = vmul.f32 %v1856, %v670
      %v1889 = vmul.f32 %v1857, %v675
      %v1890 = vmul.f32 %v1858, %v680
      %v1891 = vmul.f32 %v1859, %v685
      %v1892 = vmul.f32 %v1860, %v690
      %v1893 = vmul.f32 %v1861, %v695
      %v1894 = vmul.f32 %v1862, %v700
      %v1895 = vmul.f32 %v1863, %v705
      %v1896 = vmul.f32 %v1864, %v710
      %v1897 = vmul.f32 %v1865, %v715
      %v1898 = vmul.f32 %v1866, %v720
      %v1899 = vmul.f32 %v1867, %v725
      %v1900 = vmul.f32 %v1868, %v730
      %v1901 = vmul.f32 %v1869, %v735
      %v1902 = vmul.f32 %v1870, %v740
      %v1903 = vmul.f32 %v1871, %v745
      %v1904 = vmul.f32 %v1872, %v750
      %v1905 = vmul.f32 %v1873, %v755
      %v1906 = vmul.f32 %v1874, %v760
      %v1907 = vmul.f32 %v1875, %v765
      %v1908 = vmul.f32 %v1876, %v770
      %v1909 = vmul.f32 %v1877, %v775
      %v1910 = vmul.f32 %v1878, %v780
      %v1911 = vmul.f32 %v1879, %v785
      %v1912 = vmul.f32 %v1880, %v790
      %v1913 = vmul.f32 %v1881, %v795
      %v1914 = vmul.f32 %v1882, %v800
      %v1915 = vmul.f32 %v1883, %v805
      %s1916 = scalar_lea.vmem %s319, 384
      %v1917 = vld [vmem:[%s1916] sm:$0xff]
      %v1918 = vld [vmem:[%s1916 + $0x8] sm:$0xff]
      %v1919 = vld [vmem:[%s1916 + $0x10] sm:$0xff]
      %v1920 = vld [vmem:[%s1916 + $0x18] sm:$0xff]
      %v1921 = vld [vmem:[%s1916 + $0x20] sm:$0xff]
      %v1922 = vld [vmem:[%s1916 + $0x28] sm:$0xff]
      %v1923 = vld [vmem:[%s1916 + $0x30] sm:$0xff]
      %v1924 = vld [vmem:[%s1916 + $0x38] sm:$0xff]
      %v1925 = vld [vmem:[%s1916 + $0x40] sm:$0xff]
      %v1926 = vld [vmem:[%s1916 + $0x48] sm:$0xff]
      %v1927 = vld [vmem:[%s1916 + $0x50] sm:$0xff]
      %v1928 = vld [vmem:[%s1916 + $0x58] sm:$0xff]
      %v1929 = vld [vmem:[%s1916 + $0x60] sm:$0xff]
      %v1930 = vld [vmem:[%s1916 + $0x68] sm:$0xff]
      %v1931 = vld [vmem:[%s1916 + $0x70] sm:$0xff]
      %v1932 = vld [vmem:[%s1916 + $0x78] sm:$0xff]
      %1933 = vmatprep.subr.mxu0 0.0
      %1934 = vmatpush1.msra.mxu0 %v1917
      %1935 = vmatprep.subr.mxu0 0.0
      %1936 = vmatpush1.msra.mxu0 %v1918
      %1937 = vmatprep.subr.mxu0 0.0
      %1938 = vmatpush1.msra.mxu0 %v1919
      %1939 = vmatprep.subr.mxu0 0.0
      %1940 = vmatpush1.msra.mxu0 %v1920
      %1941 = vmatprep.subr.mxu0 0.0
      %1942 = vmatpush1.msra.mxu0 %v1921
      %1943 = vmatprep.subr.mxu0 0.0
      %1944 = vmatpush1.msra.mxu0 %v1922
      %1945 = vmatprep.subr.mxu0 0.0
      %1946 = vmatpush1.msra.mxu0 %v1923
      %1947 = vmatprep.subr.mxu0 0.0
      %1948 = vmatpush1.msra.mxu0 %v1924
      %1949 = vmatprep.subr.mxu0 0.0
      %1950 = vmatpush1.msra.mxu0 %v1925
      %1951 = vmatprep.subr.mxu0 0.0
      %1952 = vmatpush1.msra.mxu0 %v1926
      %1953 = vmatprep.subr.mxu0 0.0
      %1954 = vmatpush1.msra.mxu0 %v1927
      %1955 = vmatprep.subr.mxu0 0.0
      %1956 = vmatpush1.msra.mxu0 %v1928
      %1957 = vmatprep.subr.mxu0 0.0
      %1958 = vmatpush1.msra.mxu0 %v1929
      %1959 = vmatprep.subr.mxu0 0.0
      %1960 = vmatpush1.msra.mxu0 %v1930
      %1961 = vmatprep.subr.mxu0 0.0
      %1962 = vmatpush1.msra.mxu0 %v1931
      %1963 = vmatprep.subr.mxu0 0.0
      %1964 = vmatpush1.msra.mxu0 %v1932
      %1965 = vmatprep.subr.mxu0 0.0
      %1966 = vmatpush1.msra.mxu0 0.0
      %1967 = vmatprep.subr.mxu0 0.0
      %1968 = vmatpush1.msra.mxu0 0.0
      %1969 = vmatprep.subr.mxu0 0.0
      %1970 = vmatpush1.msra.mxu0 0.0
      %1971 = vmatprep.subr.mxu0 0.0
      %1972 = vmatpush1.msra.mxu0 0.0
      %1973 = vmatprep.subr.mxu0 0.0
      %1974 = vmatpush1.msra.mxu0 0.0
      %1975 = vmatprep.subr.mxu0 0.0
      %1976 = vmatpush1.msra.mxu0 0.0
      %1977 = vmatprep.subr.mxu0 0.0
      %1978 = vmatpush1.msra.mxu0 0.0
      %1979 = vmatprep.subr.mxu0 0.0
      %1980 = vmatpush1.msra.mxu0 0.0
      %1981 = vmatprep.subr.mxu0 0.0
      %1982 = vmatpush1.msra.mxu0 0.0
      %1983 = vmatprep.subr.mxu0 0.0
      %1984 = vmatpush1.msra.mxu0 0.0
      %1985 = vmatprep.subr.mxu0 0.0
      %1986 = vmatpush1.msra.mxu0 0.0
      %1987 = vmatprep.subr.mxu0 0.0
      %1988 = vmatpush1.msra.mxu0 0.0
      %1989 = vmatprep.subr.mxu0 0.0
      %1990 = vmatpush1.msra.mxu0 0.0
      %1991 = vmatprep.subr.mxu0 0.0
      %1992 = vmatpush1.msra.mxu0 0.0
      %1993 = vmatprep.subr.mxu0 0.0
      %1994 = vmatpush1.msra.mxu0 0.0
      %1995 = vmatprep.subr.mxu0 0.0
      %1996 = vmatpush1.msra.mxu0 0.0
      %1997 = vmatprep.mubr.f32.mxu0 0.0
      %1998 = vmatmul.mubr.f32.gmra.mrb[0].mxu0 %v1884
      %v1999 = vpop.f32.mrb[0].mxu0
      %v2000 = vadd.f32 0.0, %v1999
      %v2001 = vpop.f32.mrb[0].mxu0
      %2002 = vmatprep.mubr.f32.mxu0 0.0
      %2003 = vmatmul.mubr.f32.gmra.mrb[0].mxu0 %v1885
      %v2004 = vpop.f32.mrb[0].mxu0
      %v2005 = vadd.f32 0.0, %v2004
      %v2006 = vpop.f32.mrb[0].mxu0
      %2007 = vmatprep.mubr.f32.mxu0 0.0
      %2008 = vmatmul.mubr.f32.gmra.mrb[0].mxu0 %v1886
      %v2009 = vpop.f32.mrb[0].mxu0
      %v2010 = vadd.f32 0.0, %v2009
      %v2011 = vpop.f32.mrb[0].mxu0
      %2012 = vmatprep.mubr.f32.mxu0 0.0
      %2013 = vmatmul.mubr.f32.gmra.mrb[0].mxu0 %v1887
      %v2014 = vpop.f32.mrb[0].mxu0
      %v2015 = vadd.f32 0.0, %v2014
      %v2016 = vpop.f32.mrb[0].mxu0
      %2017 = vmatprep.mubr.f32.mxu0 0.0
      %2018 = vmatmul.mubr.f32.gmra.mrb[0].mxu0 %v1888
      %v2019 = vpop.f32.mrb[0].mxu0
      %v2020 = vadd.f32 0.0, %v2019
      %v2021 = vpop.f32.mrb[0].mxu0
      %2022 = vmatprep.mubr.f32.mxu0 0.0
      %2023 = vmatmul.mubr.f32.gmra.mrb[0].mxu0 %v1889
      %v2024 = vpop.f32.mrb[0].mxu0
      %v2025 = vadd.f32 0.0, %v2024
      %v2026 = vpop.f32.mrb[0].mxu0
      %2027 = vmatprep.mubr.f32.mxu0 0.0
      %2028 = vmatmul.mubr.f32.gmra.mrb[0].mxu0 %v1890
      %v2029 = vpop.f32.mrb[0].mxu0
      %v2030 = vadd.f32 0.0, %v2029
      %v2031 = vpop.f32.mrb[0].mxu0
      %2032 = vmatprep.mubr.f32.mxu0 0.0
      %2033 = vmatmul.mubr.f32.gmra.mrb[0].mxu0 %v1891
      %v2034 = vpop.f32.mrb[0].mxu0
      %v2035 = vadd.f32 0.0, %v2034
      %v2036 = vpop.f32.mrb[0].mxu0
      %2037 = vmatprep.mubr.f32.mxu0 0.0
      %2038 = vmatmul.mubr.f32.gmra.mrb[0].mxu0 %v1892
      %v2039 = vpop.f32.mrb[0].mxu0
      %v2040 = vadd.f32 0.0, %v2039
      %v2041 = vpop.f32.mrb[0].mxu0
      %2042 = vmatprep.mubr.f32.mxu0 0.0
      %2043 = vmatmul.mubr.f32.gmra.mrb[0].mxu0 %v1893
      %v2044 = vpop.f32.mrb[0].mxu0
      %v2045 = vadd.f32 0.0, %v2044
      %v2046 = vpop.f32.mrb[0].mxu0
      %2047 = vmatprep.mubr.f32.mxu0 0.0
      %2048 = vmatmul.mubr.f32.gmra.mrb[0].mxu0 %v1894
      %v2049 = vpop.f32.mrb[0].mxu0
      %v2050 = vadd.f32 0.0, %v2049
      %v2051 = vpop.f32.mrb[0].mxu0
      %2052 = vmatprep.mubr.f32.mxu0 0.0
      %2053 = vmatmul.mubr.f32.gmra.mrb[0].mxu0 %v1895
      %v2054 = vpop.f32.mrb[0].mxu0
      %v2055 = vadd.f32 0.0, %v2054
      %v2056 = vpop.f32.mrb[0].mxu0
      %2057 = vmatprep.mubr.f32.mxu0 0.0
      %2058 = vmatmul.mubr.f32.gmra.mrb[0].mxu0 %v1896
      %v2059 = vpop.f32.mrb[0].mxu0
      %v2060 = vadd.f32 0.0, %v2059
      %v2061 = vpop.f32.mrb[0].mxu0
      %2062 = vmatprep.mubr.f32.mxu0 0.0
      %2063 = vmatmul.mubr.f32.gmra.mrb[0].mxu0 %v1897
      %v2064 = vpop.f32.mrb[0].mxu0
      %v2065 = vadd.f32 0.0, %v2064
      %v2066 = vpop.f32.mrb[0].mxu0
      %2067 = vmatprep.mubr.f32.mxu0 0.0
      %2068 = vmatmul.mubr.f32.gmra.mrb[0].mxu0 %v1898
      %v2069 = vpop.f32.mrb[0].mxu0
      %v2070 = vadd.f32 0.0, %v2069
      %v2071 = vpop.f32.mrb[0].mxu0
      %2072 = vmatprep.mubr.f32.mxu0 0.0
      %2073 = vmatmul.mubr.f32.gmra.mrb[0].mxu0 %v1899
      %v2074 = vpop.f32.mrb[0].mxu0
      %v2075 = vadd.f32 0.0, %v2074
      %v2076 = vpop.f32.mrb[0].mxu0
      %2077 = vmatprep.mubr.f32.mxu0 0.0
      %2078 = vmatmul.mubr.f32.gmra.mrb[0].mxu0 %v1900
      %v2079 = vpop.f32.mrb[0].mxu0
      %v2080 = vadd.f32 0.0, %v2079
      %v2081 = vpop.f32.mrb[0].mxu0
      %2082 = vmatprep.mubr.f32.mxu0 0.0
      %2083 = vmatmul.mubr.f32.gmra.mrb[0].mxu0 %v1901
      %v2084 = vpop.f32.mrb[0].mxu0
      %v2085 = vadd.f32 0.0, %v2084
      %v2086 = vpop.f32.mrb[0].mxu0
      %2087 = vmatprep.mubr.f32.mxu0 0.0
      %2088 = vmatmul.mubr.f32.gmra.mrb[0].mxu0 %v1902
      %v2089 = vpop.f32.mrb[0].mxu0
      %v2090 = vadd.f32 0.0, %v2089
      %v2091 = vpop.f32.mrb[0].mxu0
      %2092 = vmatprep.mubr.f32.mxu0 0.0
      %2093 = vmatmul.mubr.f32.gmra.mrb[0].mxu0 %v1903
      %v2094 = vpop.f32.mrb[0].mxu0
      %v2095 = vadd.f32 0.0, %v2094
      %v2096 = vpop.f32.mrb[0].mxu0
      %2097 = vmatprep.mubr.f32.mxu0 0.0
      %2098 = vmatmul.mubr.f32.gmra.mrb[0].mxu0 %v1904
      %v2099 = vpop.f32.mrb[0].mxu0
      %v2100 = vadd.f32 0.0, %v2099
      %v2101 = vpop.f32.mrb[0].mxu0
      %2102 = vmatprep.mubr.f32.mxu0 0.0
      %2103 = vmatmul.mubr.f32.gmra.mrb[0].mxu0 %v1905
      %v2104 = vpop.f32.mrb[0].mxu0
      %v2105 = vadd.f32 0.0, %v2104
      %v2106 = vpop.f32.mrb[0].mxu0
      %2107 = vmatprep.mubr.f32.mxu0 0.0
      %2108 = vmatmul.mubr.f32.gmra.mrb[0].mxu0 %v1906
      %v2109 = vpop.f32.mrb[0].mxu0
      %v2110 = vadd.f32 0.0, %v2109
      %v2111 = vpop.f32.mrb[0].mxu0
      %2112 = vmatprep.mubr.f32.mxu0 0.0
      %2113 = vmatmul.mubr.f32.gmra.mrb[0].mxu0 %v1907
      %v2114 = vpop.f32.mrb[0].mxu0
      %v2115 = vadd.f32 0.0, %v2114
      %v2116 = vpop.f32.mrb[0].mxu0
      %2117 = vmatprep.mubr.f32.mxu0 0.0
      %2118 = vmatmul.mubr.f32.gmra.mrb[0].mxu0 %v1908
      %v2119 = vpop.f32.mrb[0].mxu0
      %v2120 = vadd.f32 0.0, %v2119
      %v2121 = vpop.f32.mrb[0].mxu0
      %2122 = vmatprep.mubr.f32.mxu0 0.0
      %2123 = vmatmul.mubr.f32.gmra.mrb[0].mxu0 %v1909
      %v2124 = vpop.f32.mrb[0].mxu0
      %v2125 = vadd.f32 0.0, %v2124
      %v2126 = vpop.f32.mrb[0].mxu0
      %2127 = vmatprep.mubr.f32.mxu0 0.0
      %2128 = vmatmul.mubr.f32.gmra.mrb[0].mxu0 %v1910
      %v2129 = vpop.f32.mrb[0].mxu0
      %v2130 = vadd.f32 0.0, %v2129
      %v2131 = vpop.f32.mrb[0].mxu0
      %2132 = vmatprep.mubr.f32.mxu0 0.0
      %2133 = vmatmul.mubr.f32.gmra.mrb[0].mxu0 %v1911
      %v2134 = vpop.f32.mrb[0].mxu0
      %v2135 = vadd.f32 0.0, %v2134
      %v2136 = vpop.f32.mrb[0].mxu0
      %2137 = vmatprep.mubr.f32.mxu0 0.0
      %2138 = vmatmul.mubr.f32.gmra.mrb[0].mxu0 %v1912
      %v2139 = vpop.f32.mrb[0].mxu0
      %v2140 = vadd.f32 0.0, %v2139
      %v2141 = vpop.f32.mrb[0].mxu0
      %2142 = vmatprep.mubr.f32.mxu0 0.0
      %2143 = vmatmul.mubr.f32.gmra.mrb[0].mxu0 %v1913
      %v2144 = vpop.f32.mrb[0].mxu0
      %v2145 = vadd.f32 0.0, %v2144
      %v2146 = vpop.f32.mrb[0].mxu0
      %2147 = vmatprep.mubr.f32.mxu0 0.0
      %2148 = vmatmul.mubr.f32.gmra.mrb[0].mxu0 %v1914
      %v2149 = vpop.f32.mrb[0].mxu0
      %v2150 = vadd.f32 0.0, %v2149
      %v2151 = vpop.f32.mrb[0].mxu0
      %2152 = vmatprep.mubr.f32.mxu0 0.0
      %2153 = vmatmul.mubr.f32.gmra.mrb[0].mxu0 %v1915
      %v2154 = vpop.f32.mrb[0].mxu0
      %v2155 = vadd.f32 0.0, %v2154
      %v2156 = vpop.f32.mrb[0].mxu0
      %2157 = vdwg.mxu0
      %v2158 = vadd.f32 %v1820, %v2000
      %v2159 = vadd.f32 %v1821, %v2005
      %v2160 = vadd.f32 %v1822, %v2010
      %v2161 = vadd.f32 %v1823, %v2015
      %v2162 = vadd.f32 %v1824, %v2020
      %v2163 = vadd.f32 %v1825, %v2025
      %v2164 = vadd.f32 %v1826, %v2030
      %v2165 = vadd.f32 %v1827, %v2035
      %v2166 = vadd.f32 %v1828, %v2040
      %v2167 = vadd.f32 %v1829, %v2045
      %v2168 = vadd.f32 %v1830, %v2050
      %v2169 = vadd.f32 %v1831, %v2055
      %v2170 = vadd.f32 %v1832, %v2060
      %v2171 = vadd.f32 %v1833, %v2065
      %v2172 = vadd.f32 %v1834, %v2070
      %v2173 = vadd.f32 %v1835, %v2075
      %v2174 = vadd.f32 %v1836, %v2080
      %v2175 = vadd.f32 %v1837, %v2085
      %v2176 = vadd.f32 %v1838, %v2090
      %v2177 = vadd.f32 %v1839, %v2095
      %v2178 = vadd.f32 %v1840, %v2100
      %v2179 = vadd.f32 %v1841, %v2105
      %v2180 = vadd.f32 %v1842, %v2110
      %v2181 = vadd.f32 %v1843, %v2115
      %v2182 = vadd.f32 %v1844, %v2120
      %v2183 = vadd.f32 %v1845, %v2125
      %v2184 = vadd.f32 %v1846, %v2130
      %v2185 = vadd.f32 %v1847, %v2135
      %v2186 = vadd.f32 %v1848, %v2140
      %v2187 = vadd.f32 %v1849, %v2145
      %v2188 = vadd.f32 %v1850, %v2150
      %v2189 = vadd.f32 %v1851, %v2155
      %v2190 = vld [vmem:[#allocation2 + $0x18] sm:$0xff]
      %v2191 = vld [vmem:[#allocation2 + $0x20] sm:$0xff]
      %v2192 = vld [vmem:[#allocation2 + $0x28] sm:$0xff]
      %v2193 = vld [vmem:[#allocation2 + $0x30] sm:$0xff]
      %v2194 = vld [vmem:[#allocation2 + $0x38] sm:$0xff]
      %v2195 = vld [vmem:[#allocation2 + $0x40] sm:$0xff]
      %v2196 = vld [vmem:[#allocation2 + $0x48] sm:$0xff]
      %v2197 = vld [vmem:[#allocation2 + $0x50] sm:$0xff]
      %v2198 = vld [vmem:[#allocation2 + $0x58] sm:$0xff]
      %v2199 = vld [vmem:[#allocation2 + $0x60] sm:$0xff]
      %v2200 = vld [vmem:[#allocation2 + $0x68] sm:$0xff]
      %v2201 = vld [vmem:[#allocation2 + $0x70] sm:$0xff]
      %v2202 = vld [vmem:[#allocation2 + $0x78] sm:$0xff]
      %v2203 = vld [vmem:[#allocation2 + $0x80] sm:$0xff]
      %v2204 = vld [vmem:[#allocation2 + $0x88] sm:$0xff]
      %v2205 = vld [vmem:[#allocation2 + $0x90] sm:$0xff]
      %v2206 = vld [vmem:[#allocation2 + $0x98] sm:$0xff]
      %v2207 = vld [vmem:[#allocation2 + $0xa0] sm:$0xff]
      %v2208 = vld [vmem:[#allocation2 + $0xa8] sm:$0xff]
      %v2209 = vld [vmem:[#allocation2 + $0xb0] sm:$0xff]
      %v2210 = vld [vmem:[#allocation2 + $0xb8] sm:$0xff]
      %v2211 = vld [vmem:[#allocation2 + $0xc0] sm:$0xff]
      %v2212 = vld [vmem:[#allocation2 + $0xc8] sm:$0xff]
      %v2213 = vld [vmem:[#allocation2 + $0xd0] sm:$0xff]
      %v2214 = vld [vmem:[#allocation2 + $0xd8] sm:$0xff]
      %v2215 = vld [vmem:[#allocation2 + $0xe0] sm:$0xff]
      %v2216 = vld [vmem:[#allocation2 + $0xe8] sm:$0xff]
      %v2217 = vld [vmem:[#allocation2 + $0xf0] sm:$0xff]
      %v2218 = vld [vmem:[#allocation2 + $0xf8] sm:$0xff]
      %v2219 = vld [vmem:[#allocation2 + $0x100] sm:$0xff]
      %v2220 = vld [vmem:[#allocation2 + $0x108] sm:$0xff]
      %v2221 = vld [vmem:[#allocation2 + $0x110] sm:$0xff]
      %s2222 = scalar_lea.vmem %s319, 512
      %v2223 = vld [vmem:[%s2222] sm:$0xff]
      %v2224 = vld [vmem:[%s2222 + $0x8] sm:$0xff]
      %v2225 = vld [vmem:[%s2222 + $0x10] sm:$0xff]
      %v2226 = vld [vmem:[%s2222 + $0x18] sm:$0xff]
      %v2227 = vld [vmem:[%s2222 + $0x20] sm:$0xff]
      %v2228 = vld [vmem:[%s2222 + $0x28] sm:$0xff]
      %v2229 = vld [vmem:[%s2222 + $0x30] sm:$0xff]
      %v2230 = vld [vmem:[%s2222 + $0x38] sm:$0xff]
      %v2231 = vld [vmem:[%s2222 + $0x40] sm:$0xff]
      %v2232 = vld [vmem:[%s2222 + $0x48] sm:$0xff]
      %v2233 = vld [vmem:[%s2222 + $0x50] sm:$0xff]
      %v2234 = vld [vmem:[%s2222 + $0x58] sm:$0xff]
      %v2235 = vld [vmem:[%s2222 + $0x60] sm:$0xff]
      %v2236 = vld [vmem:[%s2222 + $0x68] sm:$0xff]
      %v2237 = vld [vmem:[%s2222 + $0x70] sm:$0xff]
      %v2238 = vld [vmem:[%s2222 + $0x78] sm:$0xff]
      %2239 = vmatprep.subr.mxu0 0.0
      %2240 = vmatpush1.msra.mxu0 %v2223
      %2241 = vmatprep.subr.mxu0 0.0
      %2242 = vmatpush1.msra.mxu0 %v2224
      %2243 = vmatprep.subr.mxu0 0.0
      %2244 = vmatpush1.msra.mxu0 %v2225
      %2245 = vmatprep.subr.mxu0 0.0
      %2246 = vmatpush1.msra.mxu0 %v2226
      %2247 = vmatprep.subr.mxu0 0.0
      %2248 = vmatpush1.msra.mxu0 %v2227
      %2249 = vmatprep.subr.mxu0 0.0
      %2250 = vmatpush1.msra.mxu0 %v2228
      %2251 = vmatprep.subr.mxu0 0.0
      %2252 = vmatpush1.msra.mxu0 %v2229
      %2253 = vmatprep.subr.mxu0 0.0
      %2254 = vmatpush1.msra.mxu0 %v2230
      %2255 = vmatprep.subr.mxu0 0.0
      %2256 = vmatpush1.msra.mxu0 %v2231
      %2257 = vmatprep.subr.mxu0 0.0
      %2258 = vmatpush1.msra.mxu0 %v2232
      %2259 = vmatprep.subr.mxu0 0.0
      %2260 = vmatpush1.msra.mxu0 %v2233
      %2261 = vmatprep.subr.mxu0 0.0
      %2262 = vmatpush1.msra.mxu0 %v2234
      %2263 = vmatprep.subr.mxu0 0.0
      %2264 = vmatpush1.msra.mxu0 %v2235
      %2265 = vmatprep.subr.mxu0 0.0
      %2266 = vmatpush1.msra.mxu0 %v2236
      %2267 = vmatprep.subr.mxu0 0.0
      %2268 = vmatpush1.msra.mxu0 %v2237
      %2269 = vmatprep.subr.mxu0 0.0
      %2270 = vmatpush1.msra.mxu0 %v2238
      %2271 = vmatprep.subr.mxu0 0.0
      %2272 = vmatpush1.msra.mxu0 0.0
      %2273 = vmatprep.subr.mxu0 0.0
      %2274 = vmatpush1.msra.mxu0 0.0
      %2275 = vmatprep.subr.mxu0 0.0
      %2276 = vmatpush1.msra.mxu0 0.0
      %2277 = vmatprep.subr.mxu0 0.0
      %2278 = vmatpush1.msra.mxu0 0.0
      %2279 = vmatprep.subr.mxu0 0.0
      %2280 = vmatpush1.msra.mxu0 0.0
      %2281 = vmatprep.subr.mxu0 0.0
      %2282 = vmatpush1.msra.mxu0 0.0
      %2283 = vmatprep.subr.mxu0 0.0
      %2284 = vmatpush1.msra.mxu0 0.0
      %2285 = vmatprep.subr.mxu0 0.0
      %2286 = vmatpush1.msra.mxu0 0.0
      %2287 = vmatprep.subr.mxu0 0.0
      %2288 = vmatpush1.msra.mxu0 0.0
      %2289 = vmatprep.subr.mxu0 0.0
      %2290 = vmatpush1.msra.mxu0 0.0
      %2291 = vmatprep.subr.mxu0 0.0
      %2292 = vmatpush1.msra.mxu0 0.0
      %2293 = vmatprep.subr.mxu0 0.0
      %2294 = vmatpush1.msra.mxu0 0.0
      %2295 = vmatprep.subr.mxu0 0.0
      %2296 = vmatpush1.msra.mxu0 0.0
      %2297 = vmatprep.subr.mxu0 0.0
      %2298 = vmatpush1.msra.mxu0 0.0
      %2299 = vmatprep.subr.mxu0 0.0
      %2300 = vmatpush1.msra.mxu0 0.0
      %2301 = vmatprep.subr.mxu0 0.0
      %2302 = vmatpush1.msra.mxu0 0.0
      %2303 = vmatprep.mubr.f32.mxu0 0.0
      %2304 = vmatmul.mubr.f32.gmra.mrb[0].mxu0 %v2190
      %v2305 = vpop.f32.mrb[0].mxu0
      %v2306 = vadd.f32 0.0, %v2305
      %v2307 = vpop.f32.mrb[0].mxu0
      %2308 = vmatprep.mubr.f32.mxu0 0.0
      %2309 = vmatmul.mubr.f32.gmra.mrb[0].mxu0 %v2191
      %v2310 = vpop.f32.mrb[0].mxu0
      %v2311 = vadd.f32 0.0, %v2310
      %v2312 = vpop.f32.mrb[0].mxu0
      %2313 = vmatprep.mubr.f32.mxu0 0.0
      %2314 = vmatmul.mubr.f32.gmra.mrb[0].mxu0 %v2192
      %v2315 = vpop.f32.mrb[0].mxu0
      %v2316 = vadd.f32 0.0, %v2315
      %v2317 = vpop.f32.mrb[0].mxu0
      %2318 = vmatprep.mubr.f32.mxu0 0.0
      %2319 = vmatmul.mubr.f32.gmra.mrb[0].mxu0 %v2193
      %v2320 = vpop.f32.mrb[0].mxu0
      %v2321 = vadd.f32 0.0, %v2320
      %v2322 = vpop.f32.mrb[0].mxu0
      %2323 = vmatprep.mubr.f32.mxu0 0.0
      %2324 = vmatmul.mubr.f32.gmra.mrb[0].mxu0 %v2194
      %v2325 = vpop.f32.mrb[0].mxu0
      %v2326 = vadd.f32 0.0, %v2325
      %v2327 = vpop.f32.mrb[0].mxu0
      %2328 = vmatprep.mubr.f32.mxu0 0.0
      %2329 = vmatmul.mubr.f32.gmra.mrb[0].mxu0 %v2195
      %v2330 = vpop.f32.mrb[0].mxu0
      %v2331 = vadd.f32 0.0, %v2330
      %v2332 = vpop.f32.mrb[0].mxu0
      %2333 = vmatprep.mubr.f32.mxu0 0.0
      %2334 = vmatmul.mubr.f32.gmra.mrb[0].mxu0 %v2196
      %v2335 = vpop.f32.mrb[0].mxu0
      %v2336 = vadd.f32 0.0, %v2335
      %v2337 = vpop.f32.mrb[0].mxu0
      %2338 = vmatprep.mubr.f32.mxu0 0.0
      %2339 = vmatmul.mubr.f32.gmra.mrb[0].mxu0 %v2197
      %v2340 = vpop.f32.mrb[0].mxu0
      %v2341 = vadd.f32 0.0, %v2340
      %v2342 = vpop.f32.mrb[0].mxu0
      %2343 = vmatprep.mubr.f32.mxu0 0.0
      %2344 = vmatmul.mubr.f32.gmra.mrb[0].mxu0 %v2198
      %v2345 = vpop.f32.mrb[0].mxu0
      %v2346 = vadd.f32 0.0, %v2345
      %v2347 = vpop.f32.mrb[0].mxu0
      %2348 = vmatprep.mubr.f32.mxu0 0.0
      %2349 = vmatmul.mubr.f32.gmra.mrb[0].mxu0 %v2199
      %v2350 = vpop.f32.mrb[0].mxu0
      %v2351 = vadd.f32 0.0, %v2350
      %v2352 = vpop.f32.mrb[0].mxu0
      %2353 = vmatprep.mubr.f32.mxu0 0.0
      %2354 = vmatmul.mubr.f32.gmra.mrb[0].mxu0 %v2200
      %v2355 = vpop.f32.mrb[0].mxu0
      %v2356 = vadd.f32 0.0, %v2355
      %v2357 = vpop.f32.mrb[0].mxu0
      %2358 = vmatprep.mubr.f32.mxu0 0.0
      %2359 = vmatmul.mubr.f32.gmra.mrb[0].mxu0 %v2201
      %v2360 = vpop.f32.mrb[0].mxu0
      %v2361 = vadd.f32 0.0, %v2360
      %v2362 = vpop.f32.mrb[0].mxu0
      %2363 = vmatprep.mubr.f32.mxu0 0.0
      %2364 = vmatmul.mubr.f32.gmra.mrb[0].mxu0 %v2202
      %v2365 = vpop.f32.mrb[0].mxu0
      %v2366 = vadd.f32 0.0, %v2365
      %v2367 = vpop.f32.mrb[0].mxu0
      %2368 = vmatprep.mubr.f32.mxu0 0.0
      %2369 = vmatmul.mubr.f32.gmra.mrb[0].mxu0 %v2203
      %v2370 = vpop.f32.mrb[0].mxu0
      %v2371 = vadd.f32 0.0, %v2370
      %v2372 = vpop.f32.mrb[0].mxu0
      %2373 = vmatprep.mubr.f32.mxu0 0.0
      %2374 = vmatmul.mubr.f32.gmra.mrb[0].mxu0 %v2204
      %v2375 = vpop.f32.mrb[0].mxu0
      %v2376 = vadd.f32 0.0, %v2375
      %v2377 = vpop.f32.mrb[0].mxu0
      %2378 = vmatprep.mubr.f32.mxu0 0.0
      %2379 = vmatmul.mubr.f32.gmra.mrb[0].mxu0 %v2205
      %v2380 = vpop.f32.mrb[0].mxu0
      %v2381 = vadd.f32 0.0, %v2380
      %v2382 = vpop.f32.mrb[0].mxu0
      %2383 = vmatprep.mubr.f32.mxu0 0.0
      %2384 = vmatmul.mubr.f32.gmra.mrb[0].mxu0 %v2206
      %v2385 = vpop.f32.mrb[0].mxu0
      %v2386 = vadd.f32 0.0, %v2385
      %v2387 = vpop.f32.mrb[0].mxu0
      %2388 = vmatprep.mubr.f32.mxu0 0.0
      %2389 = vmatmul.mubr.f32.gmra.mrb[0].mxu0 %v2207
      %v2390 = vpop.f32.mrb[0].mxu0
      %v2391 = vadd.f32 0.0, %v2390
      %v2392 = vpop.f32.mrb[0].mxu0
      %2393 = vmatprep.mubr.f32.mxu0 0.0
      %2394 = vmatmul.mubr.f32.gmra.mrb[0].mxu0 %v2208
      %v2395 = vpop.f32.mrb[0].mxu0
      %v2396 = vadd.f32 0.0, %v2395
      %v2397 = vpop.f32.mrb[0].mxu0
      %2398 = vmatprep.mubr.f32.mxu0 0.0
      %2399 = vmatmul.mubr.f32.gmra.mrb[0].mxu0 %v2209
      %v2400 = vpop.f32.mrb[0].mxu0
      %v2401 = vadd.f32 0.0, %v2400
      %v2402 = vpop.f32.mrb[0].mxu0
      %2403 = vmatprep.mubr.f32.mxu0 0.0
      %2404 = vmatmul.mubr.f32.gmra.mrb[0].mxu0 %v2210
      %v2405 = vpop.f32.mrb[0].mxu0
      %v2406 = vadd.f32 0.0, %v2405
      %v2407 = vpop.f32.mrb[0].mxu0
      %2408 = vmatprep.mubr.f32.mxu0 0.0
      %2409 = vmatmul.mubr.f32.gmra.mrb[0].mxu0 %v2211
      %v2410 = vpop.f32.mrb[0].mxu0
      %v2411 = vadd.f32 0.0, %v2410
      %v2412 = vpop.f32.mrb[0].mxu0
      %2413 = vmatprep.mubr.f32.mxu0 0.0
      %2414 = vmatmul.mubr.f32.gmra.mrb[0].mxu0 %v2212
      %v2415 = vpop.f32.mrb[0].mxu0
      %v2416 = vadd.f32 0.0, %v2415
      %v2417 = vpop.f32.mrb[0].mxu0
      %2418 = vmatprep.mubr.f32.mxu0 0.0
      %2419 = vmatmul.mubr.f32.gmra.mrb[0].mxu0 %v2213
      %v2420 = vpop.f32.mrb[0].mxu0
      %v2421 = vadd.f32 0.0, %v2420
      %v2422 = vpop.f32.mrb[0].mxu0
      %2423 = vmatprep.mubr.f32.mxu0 0.0
      %2424 = vmatmul.mubr.f32.gmra.mrb[0].mxu0 %v2214
      %v2425 = vpop.f32.mrb[0].mxu0
      %v2426 = vadd.f32 0.0, %v2425
      %v2427 = vpop.f32.mrb[0].mxu0
      %2428 = vmatprep.mubr.f32.mxu0 0.0
      %2429 = vmatmul.mubr.f32.gmra.mrb[0].mxu0 %v2215
      %v2430 = vpop.f32.mrb[0].mxu0
      %v2431 = vadd.f32 0.0, %v2430
      %v2432 = vpop.f32.mrb[0].mxu0
      %2433 = vmatprep.mubr.f32.mxu0 0.0
      %2434 = vmatmul.mubr.f32.gmra.mrb[0].mxu0 %v2216
      %v2435 = vpop.f32.mrb[0].mxu0
      %v2436 = vadd.f32 0.0, %v2435
      %v2437 = vpop.f32.mrb[0].mxu0
      %2438 = vmatprep.mubr.f32.mxu0 0.0
      %2439 = vmatmul.mubr.f32.gmra.mrb[0].mxu0 %v2217
      %v2440 = vpop.f32.mrb[0].mxu0
      %v2441 = vadd.f32 0.0, %v2440
      %v2442 = vpop.f32.mrb[0].mxu0
      %2443 = vmatprep.mubr.f32.mxu0 0.0
      %2444 = vmatmul.mubr.f32.gmra.mrb[0].mxu0 %v2218
      %v2445 = vpop.f32.mrb[0].mxu0
      %v2446 = vadd.f32 0.0, %v2445
      %v2447 = vpop.f32.mrb[0].mxu0
      %2448 = vmatprep.mubr.f32.mxu0 0.0
      %2449 = vmatmul.mubr.f32.gmra.mrb[0].mxu0 %v2219
      %v2450 = vpop.f32.mrb[0].mxu0
      %v2451 = vadd.f32 0.0, %v2450
      %v2452 = vpop.f32.mrb[0].mxu0
      %2453 = vmatprep.mubr.f32.mxu0 0.0
      %2454 = vmatmul.mubr.f32.gmra.mrb[0].mxu0 %v2220
      %v2455 = vpop.f32.mrb[0].mxu0
      %v2456 = vadd.f32 0.0, %v2455
      %v2457 = vpop.f32.mrb[0].mxu0
      %2458 = vmatprep.mubr.f32.mxu0 0.0
      %2459 = vmatmul.mubr.f32.gmra.mrb[0].mxu0 %v2221
      %v2460 = vpop.f32.mrb[0].mxu0
      %v2461 = vadd.f32 0.0, %v2460
      %v2462 = vpop.f32.mrb[0].mxu0
      %2463 = vdwg.mxu0
      %v2464 = vadd.f32 %v2158, %v2306
      %v2465 = vadd.f32 %v2159, %v2311
      %v2466 = vadd.f32 %v2160, %v2316
      %v2467 = vadd.f32 %v2161, %v2321
      %v2468 = vadd.f32 %v2162, %v2326
      %v2469 = vadd.f32 %v2163, %v2331
      %v2470 = vadd.f32 %v2164, %v2336
      %v2471 = vadd.f32 %v2165, %v2341
      %v2472 = vadd.f32 %v2166, %v2346
      %v2473 = vadd.f32 %v2167, %v2351
      %v2474 = vadd.f32 %v2168, %v2356
      %v2475 = vadd.f32 %v2169, %v2361
      %v2476 = vadd.f32 %v2170, %v2366
      %v2477 = vadd.f32 %v2171, %v2371
      %v2478 = vadd.f32 %v2172, %v2376
      %v2479 = vadd.f32 %v2173, %v2381
      %v2480 = vadd.f32 %v2174, %v2386
      %v2481 = vadd.f32 %v2175, %v2391
      %v2482 = vadd.f32 %v2176, %v2396
      %v2483 = vadd.f32 %v2177, %v2401
      %v2484 = vadd.f32 %v2178, %v2406
      %v2485 = vadd.f32 %v2179, %v2411
      %v2486 = vadd.f32 %v2180, %v2416
      %v2487 = vadd.f32 %v2181, %v2421
      %v2488 = vadd.f32 %v2182, %v2426
      %v2489 = vadd.f32 %v2183, %v2431
      %v2490 = vadd.f32 %v2184, %v2436
      %v2491 = vadd.f32 %v2185, %v2441
      %v2492 = vadd.f32 %v2186, %v2446
      %v2493 = vadd.f32 %v2187, %v2451
      %v2494 = vadd.f32 %v2188, %v2456
      %v2495 = vadd.f32 %v2189, %v2461
      %v2496 = vld [vmem:[#allocation2 + $0x19] sm:$0xff]
      %v2497 = vld [vmem:[#allocation2 + $0x21] sm:$0xff]
      %v2498 = vld [vmem:[#allocation2 + $0x29] sm:$0xff]
      %v2499 = vld [vmem:[#allocation2 + $0x31] sm:$0xff]
      %v2500 = vld [vmem:[#allocation2 + $0x39] sm:$0xff]
      %v2501 = vld [vmem:[#allocation2 + $0x41] sm:$0xff]
      %v2502 = vld [vmem:[#allocation2 + $0x49] sm:$0xff]
      %v2503 = vld [vmem:[#allocation2 + $0x51] sm:$0xff]
      %v2504 = vld [vmem:[#allocation2 + $0x59] sm:$0xff]
      %v2505 = vld [vmem:[#allocation2 + $0x61] sm:$0xff]
      %v2506 = vld [vmem:[#allocation2 + $0x69] sm:$0xff]
      %v2507 = vld [vmem:[#allocation2 + $0x71] sm:$0xff]
      %v2508 = vld [vmem:[#allocation2 + $0x79] sm:$0xff]
      %v2509 = vld [vmem:[#allocation2 + $0x81] sm:$0xff]
      %v2510 = vld [vmem:[#allocation2 + $0x89] sm:$0xff]
      %v2511 = vld [vmem:[#allocation2 + $0x91] sm:$0xff]
      %v2512 = vld [vmem:[#allocation2 + $0x99] sm:$0xff]
      %v2513 = vld [vmem:[#allocation2 + $0xa1] sm:$0xff]
      %v2514 = vld [vmem:[#allocation2 + $0xa9] sm:$0xff]
      %v2515 = vld [vmem:[#allocation2 + $0xb1] sm:$0xff]
      %v2516 = vld [vmem:[#allocation2 + $0xb9] sm:$0xff]
      %v2517 = vld [vmem:[#allocation2 + $0xc1] sm:$0xff]
      %v2518 = vld [vmem:[#allocation2 + $0xc9] sm:$0xff]
      %v2519 = vld [vmem:[#allocation2 + $0xd1] sm:$0xff]
      %v2520 = vld [vmem:[#allocation2 + $0xd9] sm:$0xff]
      %v2521 = vld [vmem:[#allocation2 + $0xe1] sm:$0xff]
      %v2522 = vld [vmem:[#allocation2 + $0xe9] sm:$0xff]
      %v2523 = vld [vmem:[#allocation2 + $0xf1] sm:$0xff]
      %v2524 = vld [vmem:[#allocation2 + $0xf9] sm:$0xff]
      %v2525 = vld [vmem:[#allocation2 + $0x101] sm:$0xff]
      %v2526 = vld [vmem:[#allocation2 + $0x109] sm:$0xff]
      %v2527 = vld [vmem:[#allocation2 + $0x111] sm:$0xff]
      %v2528 = vmul.f32 %v2496, %v1389
      %v2529 = vmul.f32 %v2497, %v1394
      %v2530 = vmul.f32 %v2498, %v1399
      %v2531 = vmul.f32 %v2499, %v1404
      %v2532 = vmul.f32 %v2500, %v1409
      %v2533 = vmul.f32 %v2501, %v1414
      %v2534 = vmul.f32 %v2502, %v1419
      %v2535 = vmul.f32 %v2503, %v1424
      %v2536 = vmul.f32 %v2504, %v1429
      %v2537 = vmul.f32 %v2505, %v1434
      %v2538 = vmul.f32 %v2506, %v1439
      %v2539 = vmul.f32 %v2507, %v1444
      %v2540 = vmul.f32 %v2508, %v1449
      %v2541 = vmul.f32 %v2509, %v1454
      %v2542 = vmul.f32 %v2510, %v1459
      %v2543 = vmul.f32 %v2511, %v1464
      %v2544 = vmul.f32 %v2512, %v1469
      %v2545 = vmul.f32 %v2513, %v1474
      %v2546 = vmul.f32 %v2514, %v1479
      %v2547 = vmul.f32 %v2515, %v1484
      %v2548 = vmul.f32 %v2516, %v1489
      %v2549 = vmul.f32 %v2517, %v1494
      %v2550 = vmul.f32 %v2518, %v1499
      %v2551 = vmul.f32 %v2519, %v1504
      %v2552 = vmul.f32 %v2520, %v1509
      %v2553 = vmul.f32 %v2521, %v1514
      %v2554 = vmul.f32 %v2522, %v1519
      %v2555 = vmul.f32 %v2523, %v1524
      %v2556 = vmul.f32 %v2524, %v1529
      %v2557 = vmul.f32 %v2525, %v1534
      %v2558 = vmul.f32 %v2526, %v1539
      %v2559 = vmul.f32 %v2527, %v1544
      %s2560 = scalar_lea.vmem %s319, 640
      %v2561 = vld [vmem:[%s2560] sm:$0xff]
      %v2562 = vld [vmem:[%s2560 + $0x8] sm:$0xff]
      %v2563 = vld [vmem:[%s2560 + $0x10] sm:$0xff]
      %v2564 = vld [vmem:[%s2560 + $0x18] sm:$0xff]
      %v2565 = vld [vmem:[%s2560 + $0x20] sm:$0xff]
      %v2566 = vld [vmem:[%s2560 + $0x28] sm:$0xff]
      %v2567 = vld [vmem:[%s2560 + $0x30] sm:$0xff]
      %v2568 = vld [vmem:[%s2560 + $0x38] sm:$0xff]
      %v2569 = vld [vmem:[%s2560 + $0x40] sm:$0xff]
      %v2570 = vld [vmem:[%s2560 + $0x48] sm:$0xff]
      %v2571 = vld [vmem:[%s2560 + $0x50] sm:$0xff]
      %v2572 = vld [vmem:[%s2560 + $0x58] sm:$0xff]
      %v2573 = vld [vmem:[%s2560 + $0x60] sm:$0xff]
      %v2574 = vld [vmem:[%s2560 + $0x68] sm:$0xff]
      %v2575 = vld [vmem:[%s2560 + $0x70] sm:$0xff]
      %v2576 = vld [vmem:[%s2560 + $0x78] sm:$0xff]
      %2577 = vmatprep.subr.mxu0 0.0
      %2578 = vmatpush1.msra.mxu0 %v2561
      %2579 = vmatprep.subr.mxu0 0.0
      %2580 = vmatpush1.msra.mxu0 %v2562
      %2581 = vmatprep.subr.mxu0 0.0
      %2582 = vmatpush1.msra.mxu0 %v2563
      %2583 = vmatprep.subr.mxu0 0.0
      %2584 = vmatpush1.msra.mxu0 %v2564
      %2585 = vmatprep.subr.mxu0 0.0
      %2586 = vmatpush1.msra.mxu0 %v2565
      %2587 = vmatprep.subr.mxu0 0.0
      %2588 = vmatpush1.msra.mxu0 %v2566
      %2589 = vmatprep.subr.mxu0 0.0
      %2590 = vmatpush1.msra.mxu0 %v2567
      %2591 = vmatprep.subr.mxu0 0.0
      %2592 = vmatpush1.msra.mxu0 %v2568
      %2593 = vmatprep.subr.mxu0 0.0
      %2594 = vmatpush1.msra.mxu0 %v2569
      %2595 = vmatprep.subr.mxu0 0.0
      %2596 = vmatpush1.msra.mxu0 %v2570
      %2597 = vmatprep.subr.mxu0 0.0
      %2598 = vmatpush1.msra.mxu0 %v2571
      %2599 = vmatprep.subr.mxu0 0.0
      %2600 = vmatpush1.msra.mxu0 %v2572
      %2601 = vmatprep.subr.mxu0 0.0
      %2602 = vmatpush1.msra.mxu0 %v2573
      %2603 = vmatprep.subr.mxu0 0.0
      %2604 = vmatpush1.msra.mxu0 %v2574
      %2605 = vmatprep.subr.mxu0 0.0
      %2606 = vmatpush1.msra.mxu0 %v2575
      %2607 = vmatprep.subr.mxu0 0.0
      %2608 = vmatpush1.msra.mxu0 %v2576
      %2609 = vmatprep.subr.mxu0 0.0
      %2610 = vmatpush1.msra.mxu0 0.0
      %2611 = vmatprep.subr.mxu0 0.0
      %2612 = vmatpush1.msra.mxu0 0.0
      %2613 = vmatprep.subr.mxu0 0.0
      %2614 = vmatpush1.msra.mxu0 0.0
      %2615 = vmatprep.subr.mxu0 0.0
      %2616 = vmatpush1.msra.mxu0 0.0
      %2617 = vmatprep.subr.mxu0 0.0
      %2618 = vmatpush1.msra.mxu0 0.0
      %2619 = vmatprep.subr.mxu0 0.0
      %2620 = vmatpush1.msra.mxu0 0.0
      %2621 = vmatprep.subr.mxu0 0.0
      %2622 = vmatpush1.msra.mxu0 0.0
      %2623 = vmatprep.subr.mxu0 0.0
      %2624 = vmatpush1.msra.mxu0 0.0
      %2625 = vmatprep.subr.mxu0 0.0
      %2626 = vmatpush1.msra.mxu0 0.0
      %2627 = vmatprep.subr.mxu0 0.0
      %2628 = vmatpush1.msra.mxu0 0.0
      %2629 = vmatprep.subr.mxu0 0.0
      %2630 = vmatpush1.msra.mxu0 0.0
      %2631 = vmatprep.subr.mxu0 0.0
      %2632 = vmatpush1.msra.mxu0 0.0
      %2633 = vmatprep.subr.mxu0 0.0
      %2634 = vmatpush1.msra.mxu0 0.0
      %2635 = vmatprep.subr.mxu0 0.0
      %2636 = vmatpush1.msra.mxu0 0.0
      %2637 = vmatprep.subr.mxu0 0.0
      %2638 = vmatpush1.msra.mxu0 0.0
      %2639 = vmatprep.subr.mxu0 0.0
      %2640 = vmatpush1.msra.mxu0 0.0
      %2641 = vmatprep.mubr.f32.mxu0 0.0
      %2642 = vmatmul.mubr.f32.gmra.mrb[0].mxu0 %v2528
      %v2643 = vpop.f32.mrb[0].mxu0
      %v2644 = vadd.f32 0.0, %v2643
      %v2645 = vpop.f32.mrb[0].mxu0
      %2646 = vmatprep.mubr.f32.mxu0 0.0
      %2647 = vmatmul.mubr.f32.gmra.mrb[0].mxu0 %v2529
      %v2648 = vpop.f32.mrb[0].mxu0
      %v2649 = vadd.f32 0.0, %v2648
      %v2650 = vpop.f32.mrb[0].mxu0
      %2651 = vmatprep.mubr.f32.mxu0 0.0
      %2652 = vmatmul.mubr.f32.gmra.mrb[0].mxu0 %v2530
      %v2653 = vpop.f32.mrb[0].mxu0
      %v2654 = vadd.f32 0.0, %v2653
      %v2655 = vpop.f32.mrb[0].mxu0
      %2656 = vmatprep.mubr.f32.mxu0 0.0
      %2657 = vmatmul.mubr.f32.gmra.mrb[0].mxu0 %v2531
      %v2658 = vpop.f32.mrb[0].mxu0
      %v2659 = vadd.f32 0.0, %v2658
      %v2660 = vpop.f32.mrb[0].mxu0
      %2661 = vmatprep.mubr.f32.mxu0 0.0
      %2662 = vmatmul.mubr.f32.gmra.mrb[0].mxu0 %v2532
      %v2663 = vpop.f32.mrb[0].mxu0
      %v2664 = vadd.f32 0.0, %v2663
      %v2665 = vpop.f32.mrb[0].mxu0
      %2666 = vmatprep.mubr.f32.mxu0 0.0
      %2667 = vmatmul.mubr.f32.gmra.mrb[0].mxu0 %v2533
      %v2668 = vpop.f32.mrb[0].mxu0
      %v2669 = vadd.f32 0.0, %v2668
      %v2670 = vpop.f32.mrb[0].mxu0
      %2671 = vmatprep.mubr.f32.mxu0 0.0
      %2672 = vmatmul.mubr.f32.gmra.mrb[0].mxu0 %v2534
      %v2673 = vpop.f32.mrb[0].mxu0
      %v2674 = vadd.f32 0.0, %v2673
      %v2675 = vpop.f32.mrb[0].mxu0
      %2676 = vmatprep.mubr.f32.mxu0 0.0
      %2677 = vmatmul.mubr.f32.gmra.mrb[0].mxu0 %v2535
      %v2678 = vpop.f32.mrb[0].mxu0
      %v2679 = vadd.f32 0.0, %v2678
      %v2680 = vpop.f32.mrb[0].mxu0
      %2681 = vmatprep.mubr.f32.mxu0 0.0
      %2682 = vmatmul.mubr.f32.gmra.mrb[0].mxu0 %v2536
      %v2683 = vpop.f32.mrb[0].mxu0
      %v2684 = vadd.f32 0.0, %v2683
      %v2685 = vpop.f32.mrb[0].mxu0
      %2686 = vmatprep.mubr.f32.mxu0 0.0
      %2687 = vmatmul.mubr.f32.gmra.mrb[0].mxu0 %v2537
      %v2688 = vpop.f32.mrb[0].mxu0
      %v2689 = vadd.f32 0.0, %v2688
      %v2690 = vpop.f32.mrb[0].mxu0
      %2691 = vmatprep.mubr.f32.mxu0 0.0
      %2692 = vmatmul.mubr.f32.gmra.mrb[0].mxu0 %v2538
      %v2693 = vpop.f32.mrb[0].mxu0
      %v2694 = vadd.f32 0.0, %v2693
      %v2695 = vpop.f32.mrb[0].mxu0
      %2696 = vmatprep.mubr.f32.mxu0 0.0
      %2697 = vmatmul.mubr.f32.gmra.mrb[0].mxu0 %v2539
      %v2698 = vpop.f32.mrb[0].mxu0
      %v2699 = vadd.f32 0.0, %v2698
      %v2700 = vpop.f32.mrb[0].mxu0
      %2701 = vmatprep.mubr.f32.mxu0 0.0
      %2702 = vmatmul.mubr.f32.gmra.mrb[0].mxu0 %v2540
      %v2703 = vpop.f32.mrb[0].mxu0
      %v2704 = vadd.f32 0.0, %v2703
      %v2705 = vpop.f32.mrb[0].mxu0
      %2706 = vmatprep.mubr.f32.mxu0 0.0
      %2707 = vmatmul.mubr.f32.gmra.mrb[0].mxu0 %v2541
      %v2708 = vpop.f32.mrb[0].mxu0
      %v2709 = vadd.f32 0.0, %v2708
      %v2710 = vpop.f32.mrb[0].mxu0
      %2711 = vmatprep.mubr.f32.mxu0 0.0
      %2712 = vmatmul.mubr.f32.gmra.mrb[0].mxu0 %v2542
      %v2713 = vpop.f32.mrb[0].mxu0
      %v2714 = vadd.f32 0.0, %v2713
      %v2715 = vpop.f32.mrb[0].mxu0
      %2716 = vmatprep.mubr.f32.mxu0 0.0
      %2717 = vmatmul.mubr.f32.gmra.mrb[0].mxu0 %v2543
      %v2718 = vpop.f32.mrb[0].mxu0
      %v2719 = vadd.f32 0.0, %v2718
      %v2720 = vpop.f32.mrb[0].mxu0
      %2721 = vmatprep.mubr.f32.mxu0 0.0
      %2722 = vmatmul.mubr.f32.gmra.mrb[0].mxu0 %v2544
      %v2723 = vpop.f32.mrb[0].mxu0
      %v2724 = vadd.f32 0.0, %v2723
      %v2725 = vpop.f32.mrb[0].mxu0
      %2726 = vmatprep.mubr.f32.mxu0 0.0
      %2727 = vmatmul.mubr.f32.gmra.mrb[0].mxu0 %v2545
      %v2728 = vpop.f32.mrb[0].mxu0
      %v2729 = vadd.f32 0.0, %v2728
      %v2730 = vpop.f32.mrb[0].mxu0
      %2731 = vmatprep.mubr.f32.mxu0 0.0
      %2732 = vmatmul.mubr.f32.gmra.mrb[0].mxu0 %v2546
      %v2733 = vpop.f32.mrb[0].mxu0
      %v2734 = vadd.f32 0.0, %v2733
      %v2735 = vpop.f32.mrb[0].mxu0
      %2736 = vmatprep.mubr.f32.mxu0 0.0
      %2737 = vmatmul.mubr.f32.gmra.mrb[0].mxu0 %v2547
      %v2738 = vpop.f32.mrb[0].mxu0
      %v2739 = vadd.f32 0.0, %v2738
      %v2740 = vpop.f32.mrb[0].mxu0
      %2741 = vmatprep.mubr.f32.mxu0 0.0
      %2742 = vmatmul.mubr.f32.gmra.mrb[0].mxu0 %v2548
      %v2743 = vpop.f32.mrb[0].mxu0
      %v2744 = vadd.f32 0.0, %v2743
      %v2745 = vpop.f32.mrb[0].mxu0
      %2746 = vmatprep.mubr.f32.mxu0 0.0
      %2747 = vmatmul.mubr.f32.gmra.mrb[0].mxu0 %v2549
      %v2748 = vpop.f32.mrb[0].mxu0
      %v2749 = vadd.f32 0.0, %v2748
      %v2750 = vpop.f32.mrb[0].mxu0
      %2751 = vmatprep.mubr.f32.mxu0 0.0
      %2752 = vmatmul.mubr.f32.gmra.mrb[0].mxu0 %v2550
      %v2753 = vpop.f32.mrb[0].mxu0
      %v2754 = vadd.f32 0.0, %v2753
      %v2755 = vpop.f32.mrb[0].mxu0
      %2756 = vmatprep.mubr.f32.mxu0 0.0
      %2757 = vmatmul.mubr.f32.gmra.mrb[0].mxu0 %v2551
      %v2758 = vpop.f32.mrb[0].mxu0
      %v2759 = vadd.f32 0.0, %v2758
      %v2760 = vpop.f32.mrb[0].mxu0
      %2761 = vmatprep.mubr.f32.mxu0 0.0
      %2762 = vmatmul.mubr.f32.gmra.mrb[0].mxu0 %v2552
      %v2763 = vpop.f32.mrb[0].mxu0
      %v2764 = vadd.f32 0.0, %v2763
      %v2765 = vpop.f32.mrb[0].mxu0
      %2766 = vmatprep.mubr.f32.mxu0 0.0
      %2767 = vmatmul.mubr.f32.gmra.mrb[0].mxu0 %v2553
      %v2768 = vpop.f32.mrb[0].mxu0
      %v2769 = vadd.f32 0.0, %v2768
      %v2770 = vpop.f32.mrb[0].mxu0
      %2771 = vmatprep.mubr.f32.mxu0 0.0
      %2772 = vmatmul.mubr.f32.gmra.mrb[0].mxu0 %v2554
      %v2773 = vpop.f32.mrb[0].mxu0
      %v2774 = vadd.f32 0.0, %v2773
      %v2775 = vpop.f32.mrb[0].mxu0
      %2776 = vmatprep.mubr.f32.mxu0 0.0
      %2777 = vmatmul.mubr.f32.gmra.mrb[0].mxu0 %v2555
      %v2778 = vpop.f32.mrb[0].mxu0
      %v2779 = vadd.f32 0.0, %v2778
      %v2780 = vpop.f32.mrb[0].mxu0
      %2781 = vmatprep.mubr.f32.mxu0 0.0
      %2782 = vmatmul.mubr.f32.gmra.mrb[0].mxu0 %v2556
      %v2783 = vpop.f32.mrb[0].mxu0
      %v2784 = vadd.f32 0.0, %v2783
      %v2785 = vpop.f32.mrb[0].mxu0
      %2786 = vmatprep.mubr.f32.mxu0 0.0
      %2787 = vmatmul.mubr.f32.gmra.mrb[0].mxu0 %v2557
      %v2788 = vpop.f32.mrb[0].mxu0
      %v2789 = vadd.f32 0.0, %v2788
      %v2790 = vpop.f32.mrb[0].mxu0
      %2791 = vmatprep.mubr.f32.mxu0 0.0
      %2792 = vmatmul.mubr.f32.gmra.mrb[0].mxu0 %v2558
      %v2793 = vpop.f32.mrb[0].mxu0
      %v2794 = vadd.f32 0.0, %v2793
      %v2795 = vpop.f32.mrb[0].mxu0
      %2796 = vmatprep.mubr.f32.mxu0 0.0
      %2797 = vmatmul.mubr.f32.gmra.mrb[0].mxu0 %v2559
      %v2798 = vpop.f32.mrb[0].mxu0
      %v2799 = vadd.f32 0.0, %v2798
      %v2800 = vpop.f32.mrb[0].mxu0
      %2801 = vdwg.mxu0
      %v2802 = vadd.f32 %v2464, %v2644
      %v2803 = vadd.f32 %v2465, %v2649
      %v2804 = vadd.f32 %v2466, %v2654
      %v2805 = vadd.f32 %v2467, %v2659
      %v2806 = vadd.f32 %v2468, %v2664
      %v2807 = vadd.f32 %v2469, %v2669
      %v2808 = vadd.f32 %v2470, %v2674
      %v2809 = vadd.f32 %v2471, %v2679
      %v2810 = vadd.f32 %v2472, %v2684
      %v2811 = vadd.f32 %v2473, %v2689
      %v2812 = vadd.f32 %v2474, %v2694
      %v2813 = vadd.f32 %v2475, %v2699
      %v2814 = vadd.f32 %v2476, %v2704
      %v2815 = vadd.f32 %v2477, %v2709
      %v2816 = vadd.f32 %v2478, %v2714
      %v2817 = vadd.f32 %v2479, %v2719
      %v2818 = vadd.f32 %v2480, %v2724
      %v2819 = vadd.f32 %v2481, %v2729
      %v2820 = vadd.f32 %v2482, %v2734
      %v2821 = vadd.f32 %v2483, %v2739
      %v2822 = vadd.f32 %v2484, %v2744
      %v2823 = vadd.f32 %v2485, %v2749
      %v2824 = vadd.f32 %v2486, %v2754
      %v2825 = vadd.f32 %v2487, %v2759
      %v2826 = vadd.f32 %v2488, %v2764
      %v2827 = vadd.f32 %v2489, %v2769
      %v2828 = vadd.f32 %v2490, %v2774
      %v2829 = vadd.f32 %v2491, %v2779
      %v2830 = vadd.f32 %v2492, %v2784
      %v2831 = vadd.f32 %v2493, %v2789
      %v2832 = vadd.f32 %v2494, %v2794
      %v2833 = vadd.f32 %v2495, %v2799
      %v2834 = vld [vmem:[#allocation2 + $0x27] sm:$0xff]
      %v2835 = vld [vmem:[#allocation2 + $0x2f] sm:$0xff]
      %v2836 = vld [vmem:[#allocation2 + $0x37] sm:$0xff]
      %v2837 = vld [vmem:[#allocation2 + $0x3f] sm:$0xff]
      %v2838 = vld [vmem:[#allocation2 + $0x47] sm:$0xff]
      %v2839 = vld [vmem:[#allocation2 + $0x4f] sm:$0xff]
      %v2840 = vld [vmem:[#allocation2 + $0x57] sm:$0xff]
      %v2841 = vld [vmem:[#allocation2 + $0x5f] sm:$0xff]
      %v2842 = vld [vmem:[#allocation2 + $0x67] sm:$0xff]
      %v2843 = vld [vmem:[#allocation2 + $0x6f] sm:$0xff]
      %v2844 = vld [vmem:[#allocation2 + $0x77] sm:$0xff]
      %v2845 = vld [vmem:[#allocation2 + $0x7f] sm:$0xff]
      %v2846 = vld [vmem:[#allocation2 + $0x87] sm:$0xff]
      %v2847 = vld [vmem:[#allocation2 + $0x8f] sm:$0xff]
      %v2848 = vld [vmem:[#allocation2 + $0x97] sm:$0xff]
      %v2849 = vld [vmem:[#allocation2 + $0x9f] sm:$0xff]
      %v2850 = vld [vmem:[#allocation2 + $0xa7] sm:$0xff]
      %v2851 = vld [vmem:[#allocation2 + $0xaf] sm:$0xff]
      %v2852 = vld [vmem:[#allocation2 + $0xb7] sm:$0xff]
      %v2853 = vld [vmem:[#allocation2 + $0xbf] sm:$0xff]
      %v2854 = vld [vmem:[#allocation2 + $0xc7] sm:$0xff]
      %v2855 = vld [vmem:[#allocation2 + $0xcf] sm:$0xff]
      %v2856 = vld [vmem:[#allocation2 + $0xd7] sm:$0xff]
      %v2857 = vld [vmem:[#allocation2 + $0xdf] sm:$0xff]
      %v2858 = vld [vmem:[#allocation2 + $0xe7] sm:$0xff]
      %v2859 = vld [vmem:[#allocation2 + $0xef] sm:$0xff]
      %v2860 = vld [vmem:[#allocation2 + $0xf7] sm:$0xff]
      %v2861 = vld [vmem:[#allocation2 + $0xff] sm:$0xff]
      %v2862 = vld [vmem:[#allocation2 + $0x107] sm:$0xff]
      %v2863 = vld [vmem:[#allocation2 + $0x10f] sm:$0xff]
      %v2864 = vld [vmem:[#allocation2 + $0x117] sm:$0xff]
      %v2865 = vld [vmem:[#allocation2 + $0x11f] sm:$0xff]
      %v2866 = vmul.f32 %v2834, %v650
      %v2867 = vmul.f32 %v2835, %v655
      %v2868 = vmul.f32 %v2836, %v660
      %v2869 = vmul.f32 %v2837, %v665
      %v2870 = vmul.f32 %v2838, %v670
      %v2871 = vmul.f32 %v2839, %v675
      %v2872 = vmul.f32 %v2840, %v680
      %v2873 = vmul.f32 %v2841, %v685
      %v2874 = vmul.f32 %v2842, %v690
      %v2875 = vmul.f32 %v2843, %v695
      %v2876 = vmul.f32 %v2844, %v700
      %v2877 = vmul.f32 %v2845, %v705
      %v2878 = vmul.f32 %v2846, %v710
      %v2879 = vmul.f32 %v2847, %v715
      %v2880 = vmul.f32 %v2848, %v720
      %v2881 = vmul.f32 %v2849, %v725
      %v2882 = vmul.f32 %v2850, %v730
      %v2883 = vmul.f32 %v2851, %v735
      %v2884 = vmul.f32 %v2852, %v740
      %v2885 = vmul.f32 %v2853, %v745
      %v2886 = vmul.f32 %v2854, %v750
      %v2887 = vmul.f32 %v2855, %v755
      %v2888 = vmul.f32 %v2856, %v760
      %v2889 = vmul.f32 %v2857, %v765
      %v2890 = vmul.f32 %v2858, %v770
      %v2891 = vmul.f32 %v2859, %v775
      %v2892 = vmul.f32 %v2860, %v780
      %v2893 = vmul.f32 %v2861, %v785
      %v2894 = vmul.f32 %v2862, %v790
      %v2895 = vmul.f32 %v2863, %v795
      %v2896 = vmul.f32 %v2864, %v800
      %v2897 = vmul.f32 %v2865, %v805
      %s2898 = scalar_lea.vmem %s319, 768
      %v2899 = vld [vmem:[%s2898] sm:$0xff]
      %v2900 = vld [vmem:[%s2898 + $0x8] sm:$0xff]
      %v2901 = vld [vmem:[%s2898 + $0x10] sm:$0xff]
      %v2902 = vld [vmem:[%s2898 + $0x18] sm:$0xff]
      %v2903 = vld [vmem:[%s2898 + $0x20] sm:$0xff]
      %v2904 = vld [vmem:[%s2898 + $0x28] sm:$0xff]
      %v2905 = vld [vmem:[%s2898 + $0x30] sm:$0xff]
      %v2906 = vld [vmem:[%s2898 + $0x38] sm:$0xff]
      %v2907 = vld [vmem:[%s2898 + $0x40] sm:$0xff]
      %v2908 = vld [vmem:[%s2898 + $0x48] sm:$0xff]
      %v2909 = vld [vmem:[%s2898 + $0x50] sm:$0xff]
      %v2910 = vld [vmem:[%s2898 + $0x58] sm:$0xff]
      %v2911 = vld [vmem:[%s2898 + $0x60] sm:$0xff]
      %v2912 = vld [vmem:[%s2898 + $0x68] sm:$0xff]
      %v2913 = vld [vmem:[%s2898 + $0x70] sm:$0xff]
      %v2914 = vld [vmem:[%s2898 + $0x78] sm:$0xff]
      %2915 = vmatprep.subr.mxu0 0.0
      %2916 = vmatpush1.msra.mxu0 %v2899
      %2917 = vmatprep.subr.mxu0 0.0
      %2918 = vmatpush1.msra.mxu0 %v2900
      %2919 = vmatprep.subr.mxu0 0.0
      %2920 = vmatpush1.msra.mxu0 %v2901
      %2921 = vmatprep.subr.mxu0 0.0
      %2922 = vmatpush1.msra.mxu0 %v2902
      %2923 = vmatprep.subr.mxu0 0.0
      %2924 = vmatpush1.msra.mxu0 %v2903
      %2925 = vmatprep.subr.mxu0 0.0
      %2926 = vmatpush1.msra.mxu0 %v2904
      %2927 = vmatprep.subr.mxu0 0.0
      %2928 = vmatpush1.msra.mxu0 %v2905
      %2929 = vmatprep.subr.mxu0 0.0
      %2930 = vmatpush1.msra.mxu0 %v2906
      %2931 = vmatprep.subr.mxu0 0.0
      %2932 = vmatpush1.msra.mxu0 %v2907
      %2933 = vmatprep.subr.mxu0 0.0
      %2934 = vmatpush1.msra.mxu0 %v2908
      %2935 = vmatprep.subr.mxu0 0.0
      %2936 = vmatpush1.msra.mxu0 %v2909
      %2937 = vmatprep.subr.mxu0 0.0
      %2938 = vmatpush1.msra.mxu0 %v2910
      %2939 = vmatprep.subr.mxu0 0.0
      %2940 = vmatpush1.msra.mxu0 %v2911
      %2941 = vmatprep.subr.mxu0 0.0
      %2942 = vmatpush1.msra.mxu0 %v2912
      %2943 = vmatprep.subr.mxu0 0.0
      %2944 = vmatpush1.msra.mxu0 %v2913
      %2945 = vmatprep.subr.mxu0 0.0
      %2946 = vmatpush1.msra.mxu0 %v2914
      %2947 = vmatprep.subr.mxu0 0.0
      %2948 = vmatpush1.msra.mxu0 0.0
      %2949 = vmatprep.subr.mxu0 0.0
      %2950 = vmatpush1.msra.mxu0 0.0
      %2951 = vmatprep.subr.mxu0 0.0
      %2952 = vmatpush1.msra.mxu0 0.0
      %2953 = vmatprep.subr.mxu0 0.0
      %2954 = vmatpush1.msra.mxu0 0.0
      %2955 = vmatprep.subr.mxu0 0.0
      %2956 = vmatpush1.msra.mxu0 0.0
      %2957 = vmatprep.subr.mxu0 0.0
      %2958 = vmatpush1.msra.mxu0 0.0
      %2959 = vmatprep.subr.mxu0 0.0
      %2960 = vmatpush1.msra.mxu0 0.0
      %2961 = vmatprep.subr.mxu0 0.0
      %2962 = vmatpush1.msra.mxu0 0.0
      %2963 = vmatprep.subr.mxu0 0.0
      %2964 = vmatpush1.msra.mxu0 0.0
      %2965 = vmatprep.subr.mxu0 0.0
      %2966 = vmatpush1.msra.mxu0 0.0
      %2967 = vmatprep.subr.mxu0 0.0
      %2968 = vmatpush1.msra.mxu0 0.0
      %2969 = vmatprep.subr.mxu0 0.0
      %2970 = vmatpush1.msra.mxu0 0.0
      %2971 = vmatprep.subr.mxu0 0.0
      %2972 = vmatpush1.msra.mxu0 0.0
      %2973 = vmatprep.subr.mxu0 0.0
      %2974 = vmatpush1.msra.mxu0 0.0
      %2975 = vmatprep.subr.mxu0 0.0
      %2976 = vmatpush1.msra.mxu0 0.0
      %2977 = vmatprep.subr.mxu0 0.0
      %2978 = vmatpush1.msra.mxu0 0.0
      %2979 = vmatprep.mubr.f32.mxu0 0.0
      %2980 = vmatmul.mubr.f32.gmra.mrb[0].mxu0 %v2866
      %v2981 = vpop.f32.mrb[0].mxu0
      %v2982 = vadd.f32 0.0, %v2981
      %v2983 = vpop.f32.mrb[0].mxu0
      %2984 = vmatprep.mubr.f32.mxu0 0.0
      %2985 = vmatmul.mubr.f32.gmra.mrb[0].mxu0 %v2867
      %v2986 = vpop.f32.mrb[0].mxu0
      %v2987 = vadd.f32 0.0, %v2986
      %v2988 = vpop.f32.mrb[0].mxu0
      %2989 = vmatprep.mubr.f32.mxu0 0.0
      %2990 = vmatmul.mubr.f32.gmra.mrb[0].mxu0 %v2868
      %v2991 = vpop.f32.mrb[0].mxu0
      %v2992 = vadd.f32 0.0, %v2991
      %v2993 = vpop.f32.mrb[0].mxu0
      %2994 = vmatprep.mubr.f32.mxu0 0.0
      %2995 = vmatmul.mubr.f32.gmra.mrb[0].mxu0 %v2869
      %v2996 = vpop.f32.mrb[0].mxu0
      %v2997 = vadd.f32 0.0, %v2996
      %v2998 = vpop.f32.mrb[0].mxu0
      %2999 = vmatprep.mubr.f32.mxu0 0.0
      %3000 = vmatmul.mubr.f32.gmra.mrb[0].mxu0 %v2870
      %v3001 = vpop.f32.mrb[0].mxu0
      %v3002 = vadd.f32 0.0, %v3001
      %v3003 = vpop.f32.mrb[0].mxu0
      %3004 = vmatprep.mubr.f32.mxu0 0.0
      %3005 = vmatmul.mubr.f32.gmra.mrb[0].mxu0 %v2871
      %v3006 = vpop.f32.mrb[0].mxu0
      %v3007 = vadd.f32 0.0, %v3006
      %v3008 = vpop.f32.mrb[0].mxu0
      %3009 = vmatprep.mubr.f32.mxu0 0.0
      %3010 = vmatmul.mubr.f32.gmra.mrb[0].mxu0 %v2872
      %v3011 = vpop.f32.mrb[0].mxu0
      %v3012 = vadd.f32 0.0, %v3011
      %v3013 = vpop.f32.mrb[0].mxu0
      %3014 = vmatprep.mubr.f32.mxu0 0.0
      %3015 = vmatmul.mubr.f32.gmra.mrb[0].mxu0 %v2873
      %v3016 = vpop.f32.mrb[0].mxu0
      %v3017 = vadd.f32 0.0, %v3016
      %v3018 = vpop.f32.mrb[0].mxu0
      %3019 = vmatprep.mubr.f32.mxu0 0.0
      %3020 = vmatmul.mubr.f32.gmra.mrb[0].mxu0 %v2874
      %v3021 = vpop.f32.mrb[0].mxu0
      %v3022 = vadd.f32 0.0, %v3021
      %v3023 = vpop.f32.mrb[0].mxu0
      %3024 = vmatprep.mubr.f32.mxu0 0.0
      %3025 = vmatmul.mubr.f32.gmra.mrb[0].mxu0 %v2875
      %v3026 = vpop.f32.mrb[0].mxu0
      %v3027 = vadd.f32 0.0, %v3026
      %v3028 = vpop.f32.mrb[0].mxu0
      %3029 = vmatprep.mubr.f32.mxu0 0.0
      %3030 = vmatmul.mubr.f32.gmra.mrb[0].mxu0 %v2876
      %v3031 = vpop.f32.mrb[0].mxu0
      %v3032 = vadd.f32 0.0, %v3031
      %v3033 = vpop.f32.mrb[0].mxu0
      %3034 = vmatprep.mubr.f32.mxu0 0.0
      %3035 = vmatmul.mubr.f32.gmra.mrb[0].mxu0 %v2877
      %v3036 = vpop.f32.mrb[0].mxu0
      %v3037 = vadd.f32 0.0, %v3036
      %v3038 = vpop.f32.mrb[0].mxu0
      %3039 = vmatprep.mubr.f32.mxu0 0.0
      %3040 = vmatmul.mubr.f32.gmra.mrb[0].mxu0 %v2878
      %v3041 = vpop.f32.mrb[0].mxu0
      %v3042 = vadd.f32 0.0, %v3041
      %v3043 = vpop.f32.mrb[0].mxu0
      %3044 = vmatprep.mubr.f32.mxu0 0.0
      %3045 = vmatmul.mubr.f32.gmra.mrb[0].mxu0 %v2879
      %v3046 = vpop.f32.mrb[0].mxu0
      %v3047 = vadd.f32 0.0, %v3046
      %v3048 = vpop.f32.mrb[0].mxu0
      %3049 = vmatprep.mubr.f32.mxu0 0.0
      %3050 = vmatmul.mubr.f32.gmra.mrb[0].mxu0 %v2880
      %v3051 = vpop.f32.mrb[0].mxu0
      %v3052 = vadd.f32 0.0, %v3051
      %v3053 = vpop.f32.mrb[0].mxu0
      %3054 = vmatprep.mubr.f32.mxu0 0.0
      %3055 = vmatmul.mubr.f32.gmra.mrb[0].mxu0 %v2881
      %v3056 = vpop.f32.mrb[0].mxu0
      %v3057 = vadd.f32 0.0, %v3056
      %v3058 = vpop.f32.mrb[0].mxu0
      %3059 = vmatprep.mubr.f32.mxu0 0.0
      %3060 = vmatmul.mubr.f32.gmra.mrb[0].mxu0 %v2882
      %v3061 = vpop.f32.mrb[0].mxu0
      %v3062 = vadd.f32 0.0, %v3061
      %v3063 = vpop.f32.mrb[0].mxu0
      %3064 = vmatprep.mubr.f32.mxu0 0.0
      %3065 = vmatmul.mubr.f32.gmra.mrb[0].mxu0 %v2883
      %v3066 = vpop.f32.mrb[0].mxu0
      %v3067 = vadd.f32 0.0, %v3066
      %v3068 = vpop.f32.mrb[0].mxu0
      %3069 = vmatprep.mubr.f32.mxu0 0.0
      %3070 = vmatmul.mubr.f32.gmra.mrb[0].mxu0 %v2884
      %v3071 = vpop.f32.mrb[0].mxu0
      %v3072 = vadd.f32 0.0, %v3071
      %v3073 = vpop.f32.mrb[0].mxu0
      %3074 = vmatprep.mubr.f32.mxu0 0.0
      %3075 = vmatmul.mubr.f32.gmra.mrb[0].mxu0 %v2885
      %v3076 = vpop.f32.mrb[0].mxu0
      %v3077 = vadd.f32 0.0, %v3076
      %v3078 = vpop.f32.mrb[0].mxu0
      %3079 = vmatprep.mubr.f32.mxu0 0.0
      %3080 = vmatmul.mubr.f32.gmra.mrb[0].mxu0 %v2886
      %v3081 = vpop.f32.mrb[0].mxu0
      %v3082 = vadd.f32 0.0, %v3081
      %v3083 = vpop.f32.mrb[0].mxu0
      %3084 = vmatprep.mubr.f32.mxu0 0.0
      %3085 = vmatmul.mubr.f32.gmra.mrb[0].mxu0 %v2887
      %v3086 = vpop.f32.mrb[0].mxu0
      %v3087 = vadd.f32 0.0, %v3086
      %v3088 = vpop.f32.mrb[0].mxu0
      %3089 = vmatprep.mubr.f32.mxu0 0.0
      %3090 = vmatmul.mubr.f32.gmra.mrb[0].mxu0 %v2888
      %v3091 = vpop.f32.mrb[0].mxu0
      %v3092 = vadd.f32 0.0, %v3091
      %v3093 = vpop.f32.mrb[0].mxu0
      %3094 = vmatprep.mubr.f32.mxu0 0.0
      %3095 = vmatmul.mubr.f32.gmra.mrb[0].mxu0 %v2889
      %v3096 = vpop.f32.mrb[0].mxu0
      %v3097 = vadd.f32 0.0, %v3096
      %v3098 = vpop.f32.mrb[0].mxu0
      %3099 = vmatprep.mubr.f32.mxu0 0.0
      %3100 = vmatmul.mubr.f32.gmra.mrb[0].mxu0 %v2890
      %v3101 = vpop.f32.mrb[0].mxu0
      %v3102 = vadd.f32 0.0, %v3101
      %v3103 = vpop.f32.mrb[0].mxu0
      %3104 = vmatprep.mubr.f32.mxu0 0.0
      %3105 = vmatmul.mubr.f32.gmra.mrb[0].mxu0 %v2891
      %v3106 = vpop.f32.mrb[0].mxu0
      %v3107 = vadd.f32 0.0, %v3106
      %v3108 = vpop.f32.mrb[0].mxu0
      %3109 = vmatprep.mubr.f32.mxu0 0.0
      %3110 = vmatmul.mubr.f32.gmra.mrb[0].mxu0 %v2892
      %v3111 = vpop.f32.mrb[0].mxu0
      %v3112 = vadd.f32 0.0, %v3111
      %v3113 = vpop.f32.mrb[0].mxu0
      %3114 = vmatprep.mubr.f32.mxu0 0.0
      %3115 = vmatmul.mubr.f32.gmra.mrb[0].mxu0 %v2893
      %v3116 = vpop.f32.mrb[0].mxu0
      %v3117 = vadd.f32 0.0, %v3116
      %v3118 = vpop.f32.mrb[0].mxu0
      %3119 = vmatprep.mubr.f32.mxu0 0.0
      %3120 = vmatmul.mubr.f32.gmra.mrb[0].mxu0 %v2894
      %v3121 = vpop.f32.mrb[0].mxu0
      %v3122 = vadd.f32 0.0, %v3121
      %v3123 = vpop.f32.mrb[0].mxu0
      %3124 = vmatprep.mubr.f32.mxu0 0.0
      %3125 = vmatmul.mubr.f32.gmra.mrb[0].mxu0 %v2895
      %v3126 = vpop.f32.mrb[0].mxu0
      %v3127 = vadd.f32 0.0, %v3126
      %v3128 = vpop.f32.mrb[0].mxu0
      %3129 = vmatprep.mubr.f32.mxu0 0.0
      %3130 = vmatmul.mubr.f32.gmra.mrb[0].mxu0 %v2896
      %v3131 = vpop.f32.mrb[0].mxu0
      %v3132 = vadd.f32 0.0, %v3131
      %v3133 = vpop.f32.mrb[0].mxu0
      %3134 = vmatprep.mubr.f32.mxu0 0.0
      %3135 = vmatmul.mubr.f32.gmra.mrb[0].mxu0 %v2897
      %v3136 = vpop.f32.mrb[0].mxu0
      %v3137 = vadd.f32 0.0, %v3136
      %v3138 = vpop.f32.mrb[0].mxu0
      %3139 = vdwg.mxu0
      %v3140 = vadd.f32 %v2802, %v2982
      %v3141 = vadd.f32 %v2803, %v2987
      %v3142 = vadd.f32 %v2804, %v2992
      %v3143 = vadd.f32 %v2805, %v2997
      %v3144 = vadd.f32 %v2806, %v3002
      %v3145 = vadd.f32 %v2807, %v3007
      %v3146 = vadd.f32 %v2808, %v3012
      %v3147 = vadd.f32 %v2809, %v3017
      %v3148 = vadd.f32 %v2810, %v3022
      %v3149 = vadd.f32 %v2811, %v3027
      %v3150 = vadd.f32 %v2812, %v3032
      %v3151 = vadd.f32 %v2813, %v3037
      %v3152 = vadd.f32 %v2814, %v3042
      %v3153 = vadd.f32 %v2815, %v3047
      %v3154 = vadd.f32 %v2816, %v3052
      %v3155 = vadd.f32 %v2817, %v3057
      %v3156 = vadd.f32 %v2818, %v3062
      %v3157 = vadd.f32 %v2819, %v3067
      %v3158 = vadd.f32 %v2820, %v3072
      %v3159 = vadd.f32 %v2821, %v3077
      %v3160 = vadd.f32 %v2822, %v3082
      %v3161 = vadd.f32 %v2823, %v3087
      %v3162 = vadd.f32 %v2824, %v3092
      %v3163 = vadd.f32 %v2825, %v3097
      %v3164 = vadd.f32 %v2826, %v3102
      %v3165 = vadd.f32 %v2827, %v3107
      %v3166 = vadd.f32 %v2828, %v3112
      %v3167 = vadd.f32 %v2829, %v3117
      %v3168 = vadd.f32 %v2830, %v3122
      %v3169 = vadd.f32 %v2831, %v3127
      %v3170 = vadd.f32 %v2832, %v3132
      %v3171 = vadd.f32 %v2833, %v3137
      %v3172 = vld [vmem:[#allocation2 + $0x28] sm:$0xff]
      %v3173 = vld [vmem:[#allocation2 + $0x30] sm:$0xff]
      %v3174 = vld [vmem:[#allocation2 + $0x38] sm:$0xff]
      %v3175 = vld [vmem:[#allocation2 + $0x40] sm:$0xff]
      %v3176 = vld [vmem:[#allocation2 + $0x48] sm:$0xff]
      %v3177 = vld [vmem:[#allocation2 + $0x50] sm:$0xff]
      %v3178 = vld [vmem:[#allocation2 + $0x58] sm:$0xff]
      %v3179 = vld [vmem:[#allocation2 + $0x60] sm:$0xff]
      %v3180 = vld [vmem:[#allocation2 + $0x68] sm:$0xff]
      %v3181 = vld [vmem:[#allocation2 + $0x70] sm:$0xff]
      %v3182 = vld [vmem:[#allocation2 + $0x78] sm:$0xff]
      %v3183 = vld [vmem:[#allocation2 + $0x80] sm:$0xff]
      %v3184 = vld [vmem:[#allocation2 + $0x88] sm:$0xff]
      %v3185 = vld [vmem:[#allocation2 + $0x90] sm:$0xff]
      %v3186 = vld [vmem:[#allocation2 + $0x98] sm:$0xff]
      %v3187 = vld [vmem:[#allocation2 + $0xa0] sm:$0xff]
      %v3188 = vld [vmem:[#allocation2 + $0xa8] sm:$0xff]
      %v3189 = vld [vmem:[#allocation2 + $0xb0] sm:$0xff]
      %v3190 = vld [vmem:[#allocation2 + $0xb8] sm:$0xff]
      %v3191 = vld [vmem:[#allocation2 + $0xc0] sm:$0xff]
      %v3192 = vld [vmem:[#allocation2 + $0xc8] sm:$0xff]
      %v3193 = vld [vmem:[#allocation2 + $0xd0] sm:$0xff]
      %v3194 = vld [vmem:[#allocation2 + $0xd8] sm:$0xff]
      %v3195 = vld [vmem:[#allocation2 + $0xe0] sm:$0xff]
      %v3196 = vld [vmem:[#allocation2 + $0xe8] sm:$0xff]
      %v3197 = vld [vmem:[#allocation2 + $0xf0] sm:$0xff]
      %v3198 = vld [vmem:[#allocation2 + $0xf8] sm:$0xff]
      %v3199 = vld [vmem:[#allocation2 + $0x100] sm:$0xff]
      %v3200 = vld [vmem:[#allocation2 + $0x108] sm:$0xff]
      %v3201 = vld [vmem:[#allocation2 + $0x110] sm:$0xff]
      %v3202 = vld [vmem:[#allocation2 + $0x118] sm:$0xff]
      %v3203 = vld [vmem:[#allocation2 + $0x120] sm:$0xff]
      %s3204 = scalar_lea.vmem %s319, 896
      %v3205 = vld [vmem:[%s3204] sm:$0xff]
      %v3206 = vld [vmem:[%s3204 + $0x8] sm:$0xff]
      %v3207 = vld [vmem:[%s3204 + $0x10] sm:$0xff]
      %v3208 = vld [vmem:[%s3204 + $0x18] sm:$0xff]
      %v3209 = vld [vmem:[%s3204 + $0x20] sm:$0xff]
      %v3210 = vld [vmem:[%s3204 + $0x28] sm:$0xff]
      %v3211 = vld [vmem:[%s3204 + $0x30] sm:$0xff]
      %v3212 = vld [vmem:[%s3204 + $0x38] sm:$0xff]
      %v3213 = vld [vmem:[%s3204 + $0x40] sm:$0xff]
      %v3214 = vld [vmem:[%s3204 + $0x48] sm:$0xff]
      %v3215 = vld [vmem:[%s3204 + $0x50] sm:$0xff]
      %v3216 = vld [vmem:[%s3204 + $0x58] sm:$0xff]
      %v3217 = vld [vmem:[%s3204 + $0x60] sm:$0xff]
      %v3218 = vld [vmem:[%s3204 + $0x68] sm:$0xff]
      %v3219 = vld [vmem:[%s3204 + $0x70] sm:$0xff]
      %v3220 = vld [vmem:[%s3204 + $0x78] sm:$0xff]
      %3221 = vmatprep.subr.mxu0 0.0
      %3222 = vmatpush1.msra.mxu0 %v3205
      %3223 = vmatprep.subr.mxu0 0.0
      %3224 = vmatpush1.msra.mxu0 %v3206
      %3225 = vmatprep.subr.mxu0 0.0
      %3226 = vmatpush1.msra.mxu0 %v3207
      %3227 = vmatprep.subr.mxu0 0.0
      %3228 = vmatpush1.msra.mxu0 %v3208
      %3229 = vmatprep.subr.mxu0 0.0
      %3230 = vmatpush1.msra.mxu0 %v3209
      %3231 = vmatprep.subr.mxu0 0.0
      %3232 = vmatpush1.msra.mxu0 %v3210
      %3233 = vmatprep.subr.mxu0 0.0
      %3234 = vmatpush1.msra.mxu0 %v3211
      %3235 = vmatprep.subr.mxu0 0.0
      %3236 = vmatpush1.msra.mxu0 %v3212
      %3237 = vmatprep.subr.mxu0 0.0
      %3238 = vmatpush1.msra.mxu0 %v3213
      %3239 = vmatprep.subr.mxu0 0.0
      %3240 = vmatpush1.msra.mxu0 %v3214
      %3241 = vmatprep.subr.mxu0 0.0
      %3242 = vmatpush1.msra.mxu0 %v3215
      %3243 = vmatprep.subr.mxu0 0.0
      %3244 = vmatpush1.msra.mxu0 %v3216
      %3245 = vmatprep.subr.mxu0 0.0
      %3246 = vmatpush1.msra.mxu0 %v3217
      %3247 = vmatprep.subr.mxu0 0.0
      %3248 = vmatpush1.msra.mxu0 %v3218
      %3249 = vmatprep.subr.mxu0 0.0
      %3250 = vmatpush1.msra.mxu0 %v3219
      %3251 = vmatprep.subr.mxu0 0.0
      %3252 = vmatpush1.msra.mxu0 %v3220
      %3253 = vmatprep.subr.mxu0 0.0
      %3254 = vmatpush1.msra.mxu0 0.0
      %3255 = vmatprep.subr.mxu0 0.0
      %3256 = vmatpush1.msra.mxu0 0.0
      %3257 = vmatprep.subr.mxu0 0.0
      %3258 = vmatpush1.msra.mxu0 0.0
      %3259 = vmatprep.subr.mxu0 0.0
      %3260 = vmatpush1.msra.mxu0 0.0
      %3261 = vmatprep.subr.mxu0 0.0
      %3262 = vmatpush1.msra.mxu0 0.0
      %3263 = vmatprep.subr.mxu0 0.0
      %3264 = vmatpush1.msra.mxu0 0.0
      %3265 = vmatprep.subr.mxu0 0.0
      %3266 = vmatpush1.msra.mxu0 0.0
      %3267 = vmatprep.subr.mxu0 0.0
      %3268 = vmatpush1.msra.mxu0 0.0
      %3269 = vmatprep.subr.mxu0 0.0
      %3270 = vmatpush1.msra.mxu0 0.0
      %3271 = vmatprep.subr.mxu0 0.0
      %3272 = vmatpush1.msra.mxu0 0.0
      %3273 = vmatprep.subr.mxu0 0.0
      %3274 = vmatpush1.msra.mxu0 0.0
      %3275 = vmatprep.subr.mxu0 0.0
      %3276 = vmatpush1.msra.mxu0 0.0
      %3277 = vmatprep.subr.mxu0 0.0
      %3278 = vmatpush1.msra.mxu0 0.0
      %3279 = vmatprep.subr.mxu0 0.0
      %3280 = vmatpush1.msra.mxu0 0.0
      %3281 = vmatprep.subr.mxu0 0.0
      %3282 = vmatpush1.msra.mxu0 0.0
      %3283 = vmatprep.subr.mxu0 0.0
      %3284 = vmatpush1.msra.mxu0 0.0
      %3285 = vmatprep.mubr.f32.mxu0 0.0
      %3286 = vmatmul.mubr.f32.gmra.mrb[0].mxu0 %v3172
      %v3287 = vpop.f32.mrb[0].mxu0
      %v3288 = vadd.f32 0.0, %v3287
      %v3289 = vpop.f32.mrb[0].mxu0
      %3290 = vmatprep.mubr.f32.mxu0 0.0
      %3291 = vmatmul.mubr.f32.gmra.mrb[0].mxu0 %v3173
      %v3292 = vpop.f32.mrb[0].mxu0
      %v3293 = vadd.f32 0.0, %v3292
      %v3294 = vpop.f32.mrb[0].mxu0
      %3295 = vmatprep.mubr.f32.mxu0 0.0
      %3296 = vmatmul.mubr.f32.gmra.mrb[0].mxu0 %v3174
      %v3297 = vpop.f32.mrb[0].mxu0
      %v3298 = vadd.f32 0.0, %v3297
      %v3299 = vpop.f32.mrb[0].mxu0
      %3300 = vmatprep.mubr.f32.mxu0 0.0
      %3301 = vmatmul.mubr.f32.gmra.mrb[0].mxu0 %v3175
      %v3302 = vpop.f32.mrb[0].mxu0
      %v3303 = vadd.f32 0.0, %v3302
      %v3304 = vpop.f32.mrb[0].mxu0
      %3305 = vmatprep.mubr.f32.mxu0 0.0
      %3306 = vmatmul.mubr.f32.gmra.mrb[0].mxu0 %v3176
      %v3307 = vpop.f32.mrb[0].mxu0
      %v3308 = vadd.f32 0.0, %v3307
      %v3309 = vpop.f32.mrb[0].mxu0
      %3310 = vmatprep.mubr.f32.mxu0 0.0
      %3311 = vmatmul.mubr.f32.gmra.mrb[0].mxu0 %v3177
      %v3312 = vpop.f32.mrb[0].mxu0
      %v3313 = vadd.f32 0.0, %v3312
      %v3314 = vpop.f32.mrb[0].mxu0
      %3315 = vmatprep.mubr.f32.mxu0 0.0
      %3316 = vmatmul.mubr.f32.gmra.mrb[0].mxu0 %v3178
      %v3317 = vpop.f32.mrb[0].mxu0
      %v3318 = vadd.f32 0.0, %v3317
      %v3319 = vpop.f32.mrb[0].mxu0
      %3320 = vmatprep.mubr.f32.mxu0 0.0
      %3321 = vmatmul.mubr.f32.gmra.mrb[0].mxu0 %v3179
      %v3322 = vpop.f32.mrb[0].mxu0
      %v3323 = vadd.f32 0.0, %v3322
      %v3324 = vpop.f32.mrb[0].mxu0
      %3325 = vmatprep.mubr.f32.mxu0 0.0
      %3326 = vmatmul.mubr.f32.gmra.mrb[0].mxu0 %v3180
      %v3327 = vpop.f32.mrb[0].mxu0
      %v3328 = vadd.f32 0.0, %v3327
      %v3329 = vpop.f32.mrb[0].mxu0
      %3330 = vmatprep.mubr.f32.mxu0 0.0
      %3331 = vmatmul.mubr.f32.gmra.mrb[0].mxu0 %v3181
      %v3332 = vpop.f32.mrb[0].mxu0
      %v3333 = vadd.f32 0.0, %v3332
      %v3334 = vpop.f32.mrb[0].mxu0
      %3335 = vmatprep.mubr.f32.mxu0 0.0
      %3336 = vmatmul.mubr.f32.gmra.mrb[0].mxu0 %v3182
      %v3337 = vpop.f32.mrb[0].mxu0
      %v3338 = vadd.f32 0.0, %v3337
      %v3339 = vpop.f32.mrb[0].mxu0
      %3340 = vmatprep.mubr.f32.mxu0 0.0
      %3341 = vmatmul.mubr.f32.gmra.mrb[0].mxu0 %v3183
      %v3342 = vpop.f32.mrb[0].mxu0
      %v3343 = vadd.f32 0.0, %v3342
      %v3344 = vpop.f32.mrb[0].mxu0
      %3345 = vmatprep.mubr.f32.mxu0 0.0
      %3346 = vmatmul.mubr.f32.gmra.mrb[0].mxu0 %v3184
      %v3347 = vpop.f32.mrb[0].mxu0
      %v3348 = vadd.f32 0.0, %v3347
      %v3349 = vpop.f32.mrb[0].mxu0
      %3350 = vmatprep.mubr.f32.mxu0 0.0
      %3351 = vmatmul.mubr.f32.gmra.mrb[0].mxu0 %v3185
      %v3352 = vpop.f32.mrb[0].mxu0
      %v3353 = vadd.f32 0.0, %v3352
      %v3354 = vpop.f32.mrb[0].mxu0
      %3355 = vmatprep.mubr.f32.mxu0 0.0
      %3356 = vmatmul.mubr.f32.gmra.mrb[0].mxu0 %v3186
      %v3357 = vpop.f32.mrb[0].mxu0
      %v3358 = vadd.f32 0.0, %v3357
      %v3359 = vpop.f32.mrb[0].mxu0
      %3360 = vmatprep.mubr.f32.mxu0 0.0
      %3361 = vmatmul.mubr.f32.gmra.mrb[0].mxu0 %v3187
      %v3362 = vpop.f32.mrb[0].mxu0
      %v3363 = vadd.f32 0.0, %v3362
      %v3364 = vpop.f32.mrb[0].mxu0
      %3365 = vmatprep.mubr.f32.mxu0 0.0
      %3366 = vmatmul.mubr.f32.gmra.mrb[0].mxu0 %v3188
      %v3367 = vpop.f32.mrb[0].mxu0
      %v3368 = vadd.f32 0.0, %v3367
      %v3369 = vpop.f32.mrb[0].mxu0
      %3370 = vmatprep.mubr.f32.mxu0 0.0
      %3371 = vmatmul.mubr.f32.gmra.mrb[0].mxu0 %v3189
      %v3372 = vpop.f32.mrb[0].mxu0
      %v3373 = vadd.f32 0.0, %v3372
      %v3374 = vpop.f32.mrb[0].mxu0
      %3375 = vmatprep.mubr.f32.mxu0 0.0
      %3376 = vmatmul.mubr.f32.gmra.mrb[0].mxu0 %v3190
      %v3377 = vpop.f32.mrb[0].mxu0
      %v3378 = vadd.f32 0.0, %v3377
      %v3379 = vpop.f32.mrb[0].mxu0
      %3380 = vmatprep.mubr.f32.mxu0 0.0
      %3381 = vmatmul.mubr.f32.gmra.mrb[0].mxu0 %v3191
      %v3382 = vpop.f32.mrb[0].mxu0
      %v3383 = vadd.f32 0.0, %v3382
      %v3384 = vpop.f32.mrb[0].mxu0
      %3385 = vmatprep.mubr.f32.mxu0 0.0
      %3386 = vmatmul.mubr.f32.gmra.mrb[0].mxu0 %v3192
      %v3387 = vpop.f32.mrb[0].mxu0
      %v3388 = vadd.f32 0.0, %v3387
      %v3389 = vpop.f32.mrb[0].mxu0
      %3390 = vmatprep.mubr.f32.mxu0 0.0
      %3391 = vmatmul.mubr.f32.gmra.mrb[0].mxu0 %v3193
      %v3392 = vpop.f32.mrb[0].mxu0
      %v3393 = vadd.f32 0.0, %v3392
      %v3394 = vpop.f32.mrb[0].mxu0
      %3395 = vmatprep.mubr.f32.mxu0 0.0
      %3396 = vmatmul.mubr.f32.gmra.mrb[0].mxu0 %v3194
      %v3397 = vpop.f32.mrb[0].mxu0
      %v3398 = vadd.f32 0.0, %v3397
      %v3399 = vpop.f32.mrb[0].mxu0
      %3400 = vmatprep.mubr.f32.mxu0 0.0
      %3401 = vmatmul.mubr.f32.gmra.mrb[0].mxu0 %v3195
      %v3402 = vpop.f32.mrb[0].mxu0
      %v3403 = vadd.f32 0.0, %v3402
      %v3404 = vpop.f32.mrb[0].mxu0
      %3405 = vmatprep.mubr.f32.mxu0 0.0
      %3406 = vmatmul.mubr.f32.gmra.mrb[0].mxu0 %v3196
      %v3407 = vpop.f32.mrb[0].mxu0
      %v3408 = vadd.f32 0.0, %v3407
      %v3409 = vpop.f32.mrb[0].mxu0
      %3410 = vmatprep.mubr.f32.mxu0 0.0
      %3411 = vmatmul.mubr.f32.gmra.mrb[0].mxu0 %v3197
      %v3412 = vpop.f32.mrb[0].mxu0
      %v3413 = vadd.f32 0.0, %v3412
      %v3414 = vpop.f32.mrb[0].mxu0
      %3415 = vmatprep.mubr.f32.mxu0 0.0
      %3416 = vmatmul.mubr.f32.gmra.mrb[0].mxu0 %v3198
      %v3417 = vpop.f32.mrb[0].mxu0
      %v3418 = vadd.f32 0.0, %v3417
      %v3419 = vpop.f32.mrb[0].mxu0
      %3420 = vmatprep.mubr.f32.mxu0 0.0
      %3421 = vmatmul.mubr.f32.gmra.mrb[0].mxu0 %v3199
      %v3422 = vpop.f32.mrb[0].mxu0
      %v3423 = vadd.f32 0.0, %v3422
      %v3424 = vpop.f32.mrb[0].mxu0
      %3425 = vmatprep.mubr.f32.mxu0 0.0
      %3426 = vmatmul.mubr.f32.gmra.mrb[0].mxu0 %v3200
      %v3427 = vpop.f32.mrb[0].mxu0
      %v3428 = vadd.f32 0.0, %v3427
      %v3429 = vpop.f32.mrb[0].mxu0
      %3430 = vmatprep.mubr.f32.mxu0 0.0
      %3431 = vmatmul.mubr.f32.gmra.mrb[0].mxu0 %v3201
      %v3432 = vpop.f32.mrb[0].mxu0
      %v3433 = vadd.f32 0.0, %v3432
      %v3434 = vpop.f32.mrb[0].mxu0
      %3435 = vmatprep.mubr.f32.mxu0 0.0
      %3436 = vmatmul.mubr.f32.gmra.mrb[0].mxu0 %v3202
      %v3437 = vpop.f32.mrb[0].mxu0
      %v3438 = vadd.f32 0.0, %v3437
      %v3439 = vpop.f32.mrb[0].mxu0
      %3440 = vmatprep.mubr.f32.mxu0 0.0
      %3441 = vmatmul.mubr.f32.gmra.mrb[0].mxu0 %v3203
      %v3442 = vpop.f32.mrb[0].mxu0
      %v3443 = vadd.f32 0.0, %v3442
      %v3444 = vpop.f32.mrb[0].mxu0
      %3445 = vdwg.mxu0
      %v3446 = vadd.f32 %v3140, %v3288
      %v3447 = vadd.f32 %v3141, %v3293
      %v3448 = vadd.f32 %v3142, %v3298
      %v3449 = vadd.f32 %v3143, %v3303
      %v3450 = vadd.f32 %v3144, %v3308
      %v3451 = vadd.f32 %v3145, %v3313
      %v3452 = vadd.f32 %v3146, %v3318
      %v3453 = vadd.f32 %v3147, %v3323
      %v3454 = vadd.f32 %v3148, %v3328
      %v3455 = vadd.f32 %v3149, %v3333
      %v3456 = vadd.f32 %v3150, %v3338
      %v3457 = vadd.f32 %v3151, %v3343
      %v3458 = vadd.f32 %v3152, %v3348
      %v3459 = vadd.f32 %v3153, %v3353
      %v3460 = vadd.f32 %v3154, %v3358
      %v3461 = vadd.f32 %v3155, %v3363
      %v3462 = vadd.f32 %v3156, %v3368
      %v3463 = vadd.f32 %v3157, %v3373
      %v3464 = vadd.f32 %v3158, %v3378
      %v3465 = vadd.f32 %v3159, %v3383
      %v3466 = vadd.f32 %v3160, %v3388
      %v3467 = vadd.f32 %v3161, %v3393
      %v3468 = vadd.f32 %v3162, %v3398
      %v3469 = vadd.f32 %v3163, %v3403
      %v3470 = vadd.f32 %v3164, %v3408
      %v3471 = vadd.f32 %v3165, %v3413
      %v3472 = vadd.f32 %v3166, %v3418
      %v3473 = vadd.f32 %v3167, %v3423
      %v3474 = vadd.f32 %v3168, %v3428
      %v3475 = vadd.f32 %v3169, %v3433
      %v3476 = vadd.f32 %v3170, %v3438
      %v3477 = vadd.f32 %v3171, %v3443
      %v3478 = vld [vmem:[#allocation2 + $0x29] sm:$0xff]
      %v3479 = vld [vmem:[#allocation2 + $0x31] sm:$0xff]
      %v3480 = vld [vmem:[#allocation2 + $0x39] sm:$0xff]
      %v3481 = vld [vmem:[#allocation2 + $0x41] sm:$0xff]
      %v3482 = vld [vmem:[#allocation2 + $0x49] sm:$0xff]
      %v3483 = vld [vmem:[#allocation2 + $0x51] sm:$0xff]
      %v3484 = vld [vmem:[#allocation2 + $0x59] sm:$0xff]
      %v3485 = vld [vmem:[#allocation2 + $0x61] sm:$0xff]
      %v3486 = vld [vmem:[#allocation2 + $0x69] sm:$0xff]
      %v3487 = vld [vmem:[#allocation2 + $0x71] sm:$0xff]
      %v3488 = vld [vmem:[#allocation2 + $0x79] sm:$0xff]
      %v3489 = vld [vmem:[#allocation2 + $0x81] sm:$0xff]
      %v3490 = vld [vmem:[#allocation2 + $0x89] sm:$0xff]
      %v3491 = vld [vmem:[#allocation2 + $0x91] sm:$0xff]
      %v3492 = vld [vmem:[#allocation2 + $0x99] sm:$0xff]
      %v3493 = vld [vmem:[#allocation2 + $0xa1] sm:$0xff]
      %v3494 = vld [vmem:[#allocation2 + $0xa9] sm:$0xff]
      %v3495 = vld [vmem:[#allocation2 + $0xb1] sm:$0xff]
      %v3496 = vld [vmem:[#allocation2 + $0xb9] sm:$0xff]
      %v3497 = vld [vmem:[#allocation2 + $0xc1] sm:$0xff]
      %v3498 = vld [vmem:[#allocation2 + $0xc9] sm:$0xff]
      %v3499 = vld [vmem:[#allocation2 + $0xd1] sm:$0xff]
      %v3500 = vld [vmem:[#allocation2 + $0xd9] sm:$0xff]
      %v3501 = vld [vmem:[#allocation2 + $0xe1] sm:$0xff]
      %v3502 = vld [vmem:[#allocation2 + $0xe9] sm:$0xff]
      %v3503 = vld [vmem:[#allocation2 + $0xf1] sm:$0xff]
      %v3504 = vld [vmem:[#allocation2 + $0xf9] sm:$0xff]
      %v3505 = vld [vmem:[#allocation2 + $0x101] sm:$0xff]
      %v3506 = vld [vmem:[#allocation2 + $0x109] sm:$0xff]
      %v3507 = vld [vmem:[#allocation2 + $0x111] sm:$0xff]
      %v3508 = vld [vmem:[#allocation2 + $0x119] sm:$0xff]
      %v3509 = vld [vmem:[#allocation2 + $0x121] sm:$0xff]
      %v3510 = vmul.f32 %v3478, %v1389
      %v3511 = vmul.f32 %v3479, %v1394
      %v3512 = vmul.f32 %v3480, %v1399
      %v3513 = vmul.f32 %v3481, %v1404
      %v3514 = vmul.f32 %v3482, %v1409
      %v3515 = vmul.f32 %v3483, %v1414
      %v3516 = vmul.f32 %v3484, %v1419
      %v3517 = vmul.f32 %v3485, %v1424
      %v3518 = vmul.f32 %v3486, %v1429
      %v3519 = vmul.f32 %v3487, %v1434
      %v3520 = vmul.f32 %v3488, %v1439
      %v3521 = vmul.f32 %v3489, %v1444
      %v3522 = vmul.f32 %v3490, %v1449
      %v3523 = vmul.f32 %v3491, %v1454
      %v3524 = vmul.f32 %v3492, %v1459
      %v3525 = vmul.f32 %v3493, %v1464
      %v3526 = vmul.f32 %v3494, %v1469
      %v3527 = vmul.f32 %v3495, %v1474
      %v3528 = vmul.f32 %v3496, %v1479
      %v3529 = vmul.f32 %v3497, %v1484
      %v3530 = vmul.f32 %v3498, %v1489
      %v3531 = vmul.f32 %v3499, %v1494
      %v3532 = vmul.f32 %v3500, %v1499
      %v3533 = vmul.f32 %v3501, %v1504
      %v3534 = vmul.f32 %v3502, %v1509
      %v3535 = vmul.f32 %v3503, %v1514
      %v3536 = vmul.f32 %v3504, %v1519
      %v3537 = vmul.f32 %v3505, %v1524
      %v3538 = vmul.f32 %v3506, %v1529
      %v3539 = vmul.f32 %v3507, %v1534
      %v3540 = vmul.f32 %v3508, %v1539
      %v3541 = vmul.f32 %v3509, %v1544
      %s3542 = scalar_lea.vmem %s319, 1024
      %v3543 = vld [vmem:[%s3542] sm:$0xff]
      %v3544 = vld [vmem:[%s3542 + $0x8] sm:$0xff]
      %v3545 = vld [vmem:[%s3542 + $0x10] sm:$0xff]
      %v3546 = vld [vmem:[%s3542 + $0x18] sm:$0xff]
      %v3547 = vld [vmem:[%s3542 + $0x20] sm:$0xff]
      %v3548 = vld [vmem:[%s3542 + $0x28] sm:$0xff]
      %v3549 = vld [vmem:[%s3542 + $0x30] sm:$0xff]
      %v3550 = vld [vmem:[%s3542 + $0x38] sm:$0xff]
      %v3551 = vld [vmem:[%s3542 + $0x40] sm:$0xff]
      %v3552 = vld [vmem:[%s3542 + $0x48] sm:$0xff]
      %v3553 = vld [vmem:[%s3542 + $0x50] sm:$0xff]
      %v3554 = vld [vmem:[%s3542 + $0x58] sm:$0xff]
      %v3555 = vld [vmem:[%s3542 + $0x60] sm:$0xff]
      %v3556 = vld [vmem:[%s3542 + $0x68] sm:$0xff]
      %v3557 = vld [vmem:[%s3542 + $0x70] sm:$0xff]
      %v3558 = vld [vmem:[%s3542 + $0x78] sm:$0xff]
      %3559 = vmatprep.subr.mxu0 0.0
      %3560 = vmatpush1.msra.mxu0 %v3543
      %3561 = vmatprep.subr.mxu0 0.0
      %3562 = vmatpush1.msra.mxu0 %v3544
      %3563 = vmatprep.subr.mxu0 0.0
      %3564 = vmatpush1.msra.mxu0 %v3545
      %3565 = vmatprep.subr.mxu0 0.0
      %3566 = vmatpush1.msra.mxu0 %v3546
      %3567 = vmatprep.subr.mxu0 0.0
      %3568 = vmatpush1.msra.mxu0 %v3547
      %3569 = vmatprep.subr.mxu0 0.0
      %3570 = vmatpush1.msra.mxu0 %v3548
      %3571 = vmatprep.subr.mxu0 0.0
      %3572 = vmatpush1.msra.mxu0 %v3549
      %3573 = vmatprep.subr.mxu0 0.0
      %3574 = vmatpush1.msra.mxu0 %v3550
      %3575 = vmatprep.subr.mxu0 0.0
      %3576 = vmatpush1.msra.mxu0 %v3551
      %3577 = vmatprep.subr.mxu0 0.0
      %3578 = vmatpush1.msra.mxu0 %v3552
      %3579 = vmatprep.subr.mxu0 0.0
      %3580 = vmatpush1.msra.mxu0 %v3553
      %3581 = vmatprep.subr.mxu0 0.0
      %3582 = vmatpush1.msra.mxu0 %v3554
      %3583 = vmatprep.subr.mxu0 0.0
      %3584 = vmatpush1.msra.mxu0 %v3555
      %3585 = vmatprep.subr.mxu0 0.0
      %3586 = vmatpush1.msra.mxu0 %v3556
      %3587 = vmatprep.subr.mxu0 0.0
      %3588 = vmatpush1.msra.mxu0 %v3557
      %3589 = vmatprep.subr.mxu0 0.0
      %3590 = vmatpush1.msra.mxu0 %v3558
      %3591 = vmatprep.subr.mxu0 0.0
      %3592 = vmatpush1.msra.mxu0 0.0
      %3593 = vmatprep.subr.mxu0 0.0
      %3594 = vmatpush1.msra.mxu0 0.0
      %3595 = vmatprep.subr.mxu0 0.0
      %3596 = vmatpush1.msra.mxu0 0.0
      %3597 = vmatprep.subr.mxu0 0.0
      %3598 = vmatpush1.msra.mxu0 0.0
      %3599 = vmatprep.subr.mxu0 0.0
      %3600 = vmatpush1.msra.mxu0 0.0
      %3601 = vmatprep.subr.mxu0 0.0
      %3602 = vmatpush1.msra.mxu0 0.0
      %3603 = vmatprep.subr.mxu0 0.0
      %3604 = vmatpush1.msra.mxu0 0.0
      %3605 = vmatprep.subr.mxu0 0.0
      %3606 = vmatpush1.msra.mxu0 0.0
      %3607 = vmatprep.subr.mxu0 0.0
      %3608 = vmatpush1.msra.mxu0 0.0
      %3609 = vmatprep.subr.mxu0 0.0
      %3610 = vmatpush1.msra.mxu0 0.0
      %3611 = vmatprep.subr.mxu0 0.0
      %3612 = vmatpush1.msra.mxu0 0.0
      %3613 = vmatprep.subr.mxu0 0.0
      %3614 = vmatpush1.msra.mxu0 0.0
      %3615 = vmatprep.subr.mxu0 0.0
      %3616 = vmatpush1.msra.mxu0 0.0
      %3617 = vmatprep.subr.mxu0 0.0
      %3618 = vmatpush1.msra.mxu0 0.0
      %3619 = vmatprep.subr.mxu0 0.0
      %3620 = vmatpush1.msra.mxu0 0.0
      %3621 = vmatprep.subr.mxu0 0.0
      %3622 = vmatpush1.msra.mxu0 0.0
      %3623 = vmatprep.mubr.f32.mxu0 0.0
      %3624 = vmatmul.mubr.f32.gmra.mrb[0].mxu0 %v3510
      %v3625 = vpop.f32.mrb[0].mxu0
      %v3626 = vadd.f32 0.0, %v3625
      %v3627 = vpop.f32.mrb[0].mxu0
      %3628 = vmatprep.mubr.f32.mxu0 0.0
      %3629 = vmatmul.mubr.f32.gmra.mrb[0].mxu0 %v3511
      %v3630 = vpop.f32.mrb[0].mxu0
      %v3631 = vadd.f32 0.0, %v3630
      %v3632 = vpop.f32.mrb[0].mxu0
      %3633 = vmatprep.mubr.f32.mxu0 0.0
      %3634 = vmatmul.mubr.f32.gmra.mrb[0].mxu0 %v3512
      %v3635 = vpop.f32.mrb[0].mxu0
      %v3636 = vadd.f32 0.0, %v3635
      %v3637 = vpop.f32.mrb[0].mxu0
      %3638 = vmatprep.mubr.f32.mxu0 0.0
      %3639 = vmatmul.mubr.f32.gmra.mrb[0].mxu0 %v3513
      %v3640 = vpop.f32.mrb[0].mxu0
      %v3641 = vadd.f32 0.0, %v3640
      %v3642 = vpop.f32.mrb[0].mxu0
      %3643 = vmatprep.mubr.f32.mxu0 0.0
      %3644 = vmatmul.mubr.f32.gmra.mrb[0].mxu0 %v3514
      %v3645 = vpop.f32.mrb[0].mxu0
      %v3646 = vadd.f32 0.0, %v3645
      %v3647 = vpop.f32.mrb[0].mxu0
      %3648 = vmatprep.mubr.f32.mxu0 0.0
      %3649 = vmatmul.mubr.f32.gmra.mrb[0].mxu0 %v3515
      %v3650 = vpop.f32.mrb[0].mxu0
      %v3651 = vadd.f32 0.0, %v3650
      %v3652 = vpop.f32.mrb[0].mxu0
      %3653 = vmatprep.mubr.f32.mxu0 0.0
      %3654 = vmatmul.mubr.f32.gmra.mrb[0].mxu0 %v3516
      %v3655 = vpop.f32.mrb[0].mxu0
      %v3656 = vadd.f32 0.0, %v3655
      %v3657 = vpop.f32.mrb[0].mxu0
      %3658 = vmatprep.mubr.f32.mxu0 0.0
      %3659 = vmatmul.mubr.f32.gmra.mrb[0].mxu0 %v3517
      %v3660 = vpop.f32.mrb[0].mxu0
      %v3661 = vadd.f32 0.0, %v3660
      %v3662 = vpop.f32.mrb[0].mxu0
      %3663 = vmatprep.mubr.f32.mxu0 0.0
      %3664 = vmatmul.mubr.f32.gmra.mrb[0].mxu0 %v3518
      %v3665 = vpop.f32.mrb[0].mxu0
      %v3666 = vadd.f32 0.0, %v3665
      %v3667 = vpop.f32.mrb[0].mxu0
      %3668 = vmatprep.mubr.f32.mxu0 0.0
      %3669 = vmatmul.mubr.f32.gmra.mrb[0].mxu0 %v3519
      %v3670 = vpop.f32.mrb[0].mxu0
      %v3671 = vadd.f32 0.0, %v3670
      %v3672 = vpop.f32.mrb[0].mxu0
      %3673 = vmatprep.mubr.f32.mxu0 0.0
      %3674 = vmatmul.mubr.f32.gmra.mrb[0].mxu0 %v3520
      %v3675 = vpop.f32.mrb[0].mxu0
      %v3676 = vadd.f32 0.0, %v3675
      %v3677 = vpop.f32.mrb[0].mxu0
      %3678 = vmatprep.mubr.f32.mxu0 0.0
      %3679 = vmatmul.mubr.f32.gmra.mrb[0].mxu0 %v3521
      %v3680 = vpop.f32.mrb[0].mxu0
      %v3681 = vadd.f32 0.0, %v3680
      %v3682 = vpop.f32.mrb[0].mxu0
      %3683 = vmatprep.mubr.f32.mxu0 0.0
      %3684 = vmatmul.mubr.f32.gmra.mrb[0].mxu0 %v3522
      %v3685 = vpop.f32.mrb[0].mxu0
      %v3686 = vadd.f32 0.0, %v3685
      %v3687 = vpop.f32.mrb[0].mxu0
      %3688 = vmatprep.mubr.f32.mxu0 0.0
      %3689 = vmatmul.mubr.f32.gmra.mrb[0].mxu0 %v3523
      %v3690 = vpop.f32.mrb[0].mxu0
      %v3691 = vadd.f32 0.0, %v3690
      %v3692 = vpop.f32.mrb[0].mxu0
      %3693 = vmatprep.mubr.f32.mxu0 0.0
      %3694 = vmatmul.mubr.f32.gmra.mrb[0].mxu0 %v3524
      %v3695 = vpop.f32.mrb[0].mxu0
      %v3696 = vadd.f32 0.0, %v3695
      %v3697 = vpop.f32.mrb[0].mxu0
      %3698 = vmatprep.mubr.f32.mxu0 0.0
      %3699 = vmatmul.mubr.f32.gmra.mrb[0].mxu0 %v3525
      %v3700 = vpop.f32.mrb[0].mxu0
      %v3701 = vadd.f32 0.0, %v3700
      %v3702 = vpop.f32.mrb[0].mxu0
      %3703 = vmatprep.mubr.f32.mxu0 0.0
      %3704 = vmatmul.mubr.f32.gmra.mrb[0].mxu0 %v3526
      %v3705 = vpop.f32.mrb[0].mxu0
      %v3706 = vadd.f32 0.0, %v3705
      %v3707 = vpop.f32.mrb[0].mxu0
      %3708 = vmatprep.mubr.f32.mxu0 0.0
      %3709 = vmatmul.mubr.f32.gmra.mrb[0].mxu0 %v3527
      %v3710 = vpop.f32.mrb[0].mxu0
      %v3711 = vadd.f32 0.0, %v3710
      %v3712 = vpop.f32.mrb[0].mxu0
      %3713 = vmatprep.mubr.f32.mxu0 0.0
      %3714 = vmatmul.mubr.f32.gmra.mrb[0].mxu0 %v3528
      %v3715 = vpop.f32.mrb[0].mxu0
      %v3716 = vadd.f32 0.0, %v3715
      %v3717 = vpop.f32.mrb[0].mxu0
      %3718 = vmatprep.mubr.f32.mxu0 0.0
      %3719 = vmatmul.mubr.f32.gmra.mrb[0].mxu0 %v3529
      %v3720 = vpop.f32.mrb[0].mxu0
      %v3721 = vadd.f32 0.0, %v3720
      %v3722 = vpop.f32.mrb[0].mxu0
      %3723 = vmatprep.mubr.f32.mxu0 0.0
      %3724 = vmatmul.mubr.f32.gmra.mrb[0].mxu0 %v3530
      %v3725 = vpop.f32.mrb[0].mxu0
      %v3726 = vadd.f32 0.0, %v3725
      %v3727 = vpop.f32.mrb[0].mxu0
      %3728 = vmatprep.mubr.f32.mxu0 0.0
      %3729 = vmatmul.mubr.f32.gmra.mrb[0].mxu0 %v3531
      %v3730 = vpop.f32.mrb[0].mxu0
      %v3731 = vadd.f32 0.0, %v3730
      %v3732 = vpop.f32.mrb[0].mxu0
      %3733 = vmatprep.mubr.f32.mxu0 0.0
      %3734 = vmatmul.mubr.f32.gmra.mrb[0].mxu0 %v3532
      %v3735 = vpop.f32.mrb[0].mxu0
      %v3736 = vadd.f32 0.0, %v3735
      %v3737 = vpop.f32.mrb[0].mxu0
      %3738 = vmatprep.mubr.f32.mxu0 0.0
      %3739 = vmatmul.mubr.f32.gmra.mrb[0].mxu0 %v3533
      %v3740 = vpop.f32.mrb[0].mxu0
      %v3741 = vadd.f32 0.0, %v3740
      %v3742 = vpop.f32.mrb[0].mxu0
      %3743 = vmatprep.mubr.f32.mxu0 0.0
      %3744 = vmatmul.mubr.f32.gmra.mrb[0].mxu0 %v3534
      %v3745 = vpop.f32.mrb[0].mxu0
      %v3746 = vadd.f32 0.0, %v3745
      %v3747 = vpop.f32.mrb[0].mxu0
      %3748 = vmatprep.mubr.f32.mxu0 0.0
      %3749 = vmatmul.mubr.f32.gmra.mrb[0].mxu0 %v3535
      %v3750 = vpop.f32.mrb[0].mxu0
      %v3751 = vadd.f32 0.0, %v3750
      %v3752 = vpop.f32.mrb[0].mxu0
      %3753 = vmatprep.mubr.f32.mxu0 0.0
      %3754 = vmatmul.mubr.f32.gmra.mrb[0].mxu0 %v3536
      %v3755 = vpop.f32.mrb[0].mxu0
      %v3756 = vadd.f32 0.0, %v3755
      %v3757 = vpop.f32.mrb[0].mxu0
      %3758 = vmatprep.mubr.f32.mxu0 0.0
      %3759 = vmatmul.mubr.f32.gmra.mrb[0].mxu0 %v3537
      %v3760 = vpop.f32.mrb[0].mxu0
      %v3761 = vadd.f32 0.0, %v3760
      %v3762 = vpop.f32.mrb[0].mxu0
      %3763 = vmatprep.mubr.f32.mxu0 0.0
      %3764 = vmatmul.mubr.f32.gmra.mrb[0].mxu0 %v3538
      %v3765 = vpop.f32.mrb[0].mxu0
      %v3766 = vadd.f32 0.0, %v3765
      %v3767 = vpop.f32.mrb[0].mxu0
      %3768 = vmatprep.mubr.f32.mxu0 0.0
      %3769 = vmatmul.mubr.f32.gmra.mrb[0].mxu0 %v3539
      %v3770 = vpop.f32.mrb[0].mxu0
      %v3771 = vadd.f32 0.0, %v3770
      %v3772 = vpop.f32.mrb[0].mxu0
      %3773 = vmatprep.mubr.f32.mxu0 0.0
      %3774 = vmatmul.mubr.f32.gmra.mrb[0].mxu0 %v3540
      %v3775 = vpop.f32.mrb[0].mxu0
      %v3776 = vadd.f32 0.0, %v3775
      %v3777 = vpop.f32.mrb[0].mxu0
      %3778 = vmatprep.mubr.f32.mxu0 0.0
      %3779 = vmatmul.mubr.f32.gmra.mrb[0].mxu0 %v3541
      %v3780 = vpop.f32.mrb[0].mxu0
      %v3781 = vadd.f32 0.0, %v3780
      %v3782 = vpop.f32.mrb[0].mxu0
      %3783 = vdwg.mxu0
      %v3784 = vadd.f32 %v3446, %v3626
      %v3785 = vadd.f32 %v3447, %v3631
      %v3786 = vadd.f32 %v3448, %v3636
      %v3787 = vadd.f32 %v3449, %v3641
      %v3788 = vadd.f32 %v3450, %v3646
      %v3789 = vadd.f32 %v3451, %v3651
      %v3790 = vadd.f32 %v3452, %v3656
      %v3791 = vadd.f32 %v3453, %v3661
      %v3792 = vadd.f32 %v3454, %v3666
      %v3793 = vadd.f32 %v3455, %v3671
      %v3794 = vadd.f32 %v3456, %v3676
      %v3795 = vadd.f32 %v3457, %v3681
      %v3796 = vadd.f32 %v3458, %v3686
      %v3797 = vadd.f32 %v3459, %v3691
      %v3798 = vadd.f32 %v3460, %v3696
      %v3799 = vadd.f32 %v3461, %v3701
      %v3800 = vadd.f32 %v3462, %v3706
      %v3801 = vadd.f32 %v3463, %v3711
      %v3802 = vadd.f32 %v3464, %v3716
      %v3803 = vadd.f32 %v3465, %v3721
      %v3804 = vadd.f32 %v3466, %v3726
      %v3805 = vadd.f32 %v3467, %v3731
      %v3806 = vadd.f32 %v3468, %v3736
      %v3807 = vadd.f32 %v3469, %v3741
      %v3808 = vadd.f32 %v3470, %v3746
      %v3809 = vadd.f32 %v3471, %v3751
      %v3810 = vadd.f32 %v3472, %v3756
      %v3811 = vadd.f32 %v3473, %v3761
      %v3812 = vadd.f32 %v3474, %v3766
      %v3813 = vadd.f32 %v3475, %v3771
      %v3814 = vadd.f32 %v3476, %v3776
      %v3815 = vadd.f32 %v3477, %v3781
      %3816 = vst [vmem:[%s327] sm:$0xff] %v3784
      %3817 = vst [vmem:[%s327 + $0x8] sm:$0xff] %v3785
      %3818 = vst [vmem:[%s327 + $0x10] sm:$0xff] %v3786
      %3819 = vst [vmem:[%s327 + $0x18] sm:$0xff] %v3787
      %3820 = vst [vmem:[%s327 + $0x20] sm:$0xff] %v3788
      %3821 = vst [vmem:[%s327 + $0x28] sm:$0xff] %v3789
      %3822 = vst [vmem:[%s327 + $0x30] sm:$0xff] %v3790
      %3823 = vst [vmem:[%s327 + $0x38] sm:$0xff] %v3791
      %3824 = vst [vmem:[%s327 + $0x40] sm:$0xff] %v3792
      %3825 = vst [vmem:[%s327 + $0x48] sm:$0xff] %v3793
      %3826 = vst [vmem:[%s327 + $0x50] sm:$0xff] %v3794
      %3827 = vst [vmem:[%s327 + $0x58] sm:$0xff] %v3795
      %3828 = vst [vmem:[%s327 + $0x60] sm:$0xff] %v3796
      %3829 = vst [vmem:[%s327 + $0x68] sm:$0xff] %v3797
      %3830 = vst [vmem:[%s327 + $0x70] sm:$0xff] %v3798
      %3831 = vst [vmem:[%s327 + $0x78] sm:$0xff] %v3799
      %3832 = vst [vmem:[%s327 + $0x80] sm:$0xff] %v3800
      %3833 = vst [vmem:[%s327 + $0x88] sm:$0xff] %v3801
      %3834 = vst [vmem:[%s327 + $0x90] sm:$0xff] %v3802
      %3835 = vst [vmem:[%s327 + $0x98] sm:$0xff] %v3803
      %3836 = vst [vmem:[%s327 + $0xa0] sm:$0xff] %v3804
      %3837 = vst [vmem:[%s327 + $0xa8] sm:$0xff] %v3805
      %3838 = vst [vmem:[%s327 + $0xb0] sm:$0xff] %v3806
      %3839 = vst [vmem:[%s327 + $0xb8] sm:$0xff] %v3807
      %3840 = vst [vmem:[%s327 + $0xc0] sm:$0xff] %v3808
      %3841 = vst [vmem:[%s327 + $0xc8] sm:$0xff] %v3809
      %3842 = vst [vmem:[%s327 + $0xd0] sm:$0xff] %v3810
      %3843 = vst [vmem:[%s327 + $0xd8] sm:$0xff] %v3811
      %3844 = vst [vmem:[%s327 + $0xe0] sm:$0xff] %v3812
      %3845 = vst [vmem:[%s327 + $0xe8] sm:$0xff] %v3813
      %3846 = vst [vmem:[%s327 + $0xf0] sm:$0xff] %v3814
      %3847 = vst [vmem:[%s327 + $0xf8] sm:$0xff] %v3815
      %v3848 = vadd.f32 %v3784, %v3785
      %v3849 = vadd.f32 %v3848, %v3786
      %v3850 = vadd.f32 %v3849, %v3787
      %v3851 = vadd.f32 %v3850, %v3788
      %v3852 = vadd.f32 %v3851, %v3789
      %v3853 = vadd.f32 %v3852, %v3790
      %v3854 = vadd.f32 %v3853, %v3791
      %v3855 = vadd.f32 %v3854, %v3792
      %v3856 = vadd.f32 %v3855, %v3793
      %v3857 = vadd.f32 %v3856, %v3794
      %v3858 = vadd.f32 %v3857, %v3795
      %v3859 = vadd.f32 %v3858, %v3796
      %v3860 = vadd.f32 %v3859, %v3797
      %v3861 = vadd.f32 %v3860, %v3798
      %v3862 = vadd.f32 %v3861, %v3799
      %v3863 = vadd.f32 %v3862, %v3800
      %v3864 = vadd.f32 %v3863, %v3801
      %v3865 = vadd.f32 %v3864, %v3802
      %v3866 = vadd.f32 %v3865, %v3803
      %v3867 = vadd.f32 %v3866, %v3804
      %v3868 = vadd.f32 %v3867, %v3805
      %v3869 = vadd.f32 %v3868, %v3806
      %v3870 = vadd.f32 %v3869, %v3807
      %v3871 = vadd.f32 %v3870, %v3808
      %v3872 = vadd.f32 %v3871, %v3809
      %v3873 = vadd.f32 %v3872, %v3810
      %v3874 = vadd.f32 %v3873, %v3811
      %v3875 = vadd.f32 %v3874, %v3812
      %v3876 = vadd.f32 %v3875, %v3813
      %v3877 = vadd.f32 %v3876, %v3814
      %v3878 = vadd.f32 %v3877, %v3815
      %v3879 = vrot.slane %v3878, 4
      %v3880 = vadd.f32 %v3878, %v3879
      %v3881 = vrot.slane %v3880, 2
      %v3882 = vadd.f32 %v3880, %v3881
      %v3883 = vrot.slane %v3882, 1
      %v3884 = vadd.f32 %v3882, %v3883
      %3885 = vst [vmem:[%s334] sm:$0x1] %v3884
      %v3886 = vmul.f32 %v3784, %v3784
      %v3887 = vmul.f32 %v3785, %v3785
      %v3888 = vmul.f32 %v3786, %v3786
      %v3889 = vmul.f32 %v3787, %v3787
      %v3890 = vmul.f32 %v3788, %v3788
      %v3891 = vmul.f32 %v3789, %v3789
      %v3892 = vmul.f32 %v3790, %v3790
      %v3893 = vmul.f32 %v3791, %v3791
      %v3894 = vmul.f32 %v3792, %v3792
      %v3895 = vmul.f32 %v3793, %v3793
      %v3896 = vmul.f32 %v3794, %v3794
      %v3897 = vmul.f32 %v3795, %v3795
      %v3898 = vmul.f32 %v3796, %v3796
      %v3899 = vmul.f32 %v3797, %v3797
      %v3900 = vmul.f32 %v3798, %v3798
      %v3901 = vmul.f32 %v3799, %v3799
      %v3902 = vmul.f32 %v3800, %v3800
      %v3903 = vmul.f32 %v3801, %v3801
      %v3904 = vmul.f32 %v3802, %v3802
      %v3905 = vmul.f32 %v3803, %v3803
      %v3906 = vmul.f32 %v3804, %v3804
      %v3907 = vmul.f32 %v3805, %v3805
      %v3908 = vmul.f32 %v3806, %v3806
      %v3909 = vmul.f32 %v3807, %v3807
      %v3910 = vmul.f32 %v3808, %v3808
      %v3911 = vmul.f32 %v3809, %v3809
      %v3912 = vmul.f32 %v3810, %v3810
      %v3913 = vmul.f32 %v3811, %v3811
      %v3914 = vmul.f32 %v3812, %v3812
      %v3915 = vmul.f32 %v3813, %v3813
      %v3916 = vmul.f32 %v3814, %v3814
      %v3917 = vmul.f32 %v3815, %v3815
      %v3918 = vadd.f32 %v3886, %v3887
      %v3919 = vadd.f32 %v3918, %v3888
      %v3920 = vadd.f32 %v3919, %v3889
      %v3921 = vadd.f32 %v3920, %v3890
      %v3922 = vadd.f32 %v3921, %v3891
      %v3923 = vadd.f32 %v3922, %v3892
      %v3924 = vadd.f32 %v3923, %v3893
      %v3925 = vadd.f32 %v3924, %v3894
      %v3926 = vadd.f32 %v3925, %v3895
      %v3927 = vadd.f32 %v3926, %v3896
      %v3928 = vadd.f32 %v3927, %v3897
      %v3929 = vadd.f32 %v3928, %v3898
      %v3930 = vadd.f32 %v3929, %v3899
      %v3931 = vadd.f32 %v3930, %v3900
      %v3932 = vadd.f32 %v3931, %v3901
      %v3933 = vadd.f32 %v3932, %v3902
      %v3934 = vadd.f32 %v3933, %v3903
      %v3935 = vadd.f32 %v3934, %v3904
      %v3936 = vadd.f32 %v3935, %v3905
      %v3937 = vadd.f32 %v3936, %v3906
      %v3938 = vadd.f32 %v3937, %v3907
      %v3939 = vadd.f32 %v3938, %v3908
      %v3940 = vadd.f32 %v3939, %v3909
      %v3941 = vadd.f32 %v3940, %v3910
      %v3942 = vadd.f32 %v3941, %v3911
      %v3943 = vadd.f32 %v3942, %v3912
      %v3944 = vadd.f32 %v3943, %v3913
      %v3945 = vadd.f32 %v3944, %v3914
      %v3946 = vadd.f32 %v3945, %v3915
      %v3947 = vadd.f32 %v3946, %v3916
      %v3948 = vadd.f32 %v3947, %v3917
      %v3949 = vrot.slane %v3948, 4
      %v3950 = vadd.f32 %v3948, %v3949
      %v3951 = vrot.slane %v3950, 2
      %v3952 = vadd.f32 %v3950, %v3951
      %v3953 = vrot.slane %v3952, 1
      %v3954 = vadd.f32 %v3952, %v3953
      %3955 = vst [vmem:[%s334 + $0x1] sm:$0x1] %v3954
      %p3956 = scmp.lt.s32.totalorder %s23, 1
      %s3957 = scalar_select %p3956, %s23, 1
      %p3958 = scmp.lt.s32.totalorder %s24, 0
      %s3959 = scalar_select %p3958, %s24, 0
      %s3960 = smul.addr %s3957, 32
      %s3961 = sadd.s32 %s3959, %s3960
      %s3962 = smul.addr %s3961, 8
      %s3963 = scalar_lea.vmem %s6, %s3962
      %p3964 = scmp.lt.s32.totalorder %s23, 1
      %s3965 = scalar_select %p3964, %s23, 1
      %p3966 = scmp.lt.s32.totalorder %s24, 0
      %s3967 = scalar_select %p3966, %s24, 0
      %s3968 = sadd.s32 %s3967, %s3965
      %s3969 = smul.addr %s3968, 2
      %s3970 = scalar_lea.vmem %s7, %s3969
      // Predicated region
      $region49: #{resblk_forward.4} parent=43 // pred_check
        %p3971 = pneg %p187
      $region50: #{resblk_forward.4} parent=43 // pred_check_branch
        %3973 = sbr.rel (%p3971) target = $region52
      $region51: #{resblk_forward.4} parent=43 // pred_region
        _
      $region52: #{resblk_forward.4} parent=43 // pred_fallthru
        _
      // Predicated region
      $region53: #{resblk_forward.4} parent=43 // pred_check
        %p3974 = pneg %p215
      $region54: #{resblk_forward.4} parent=43 // pred_check_branch
        %3976 = sbr.rel (%p3974) target = $region56
      $region55: #{resblk_forward.4} parent=43 // pred_region
        _
      $region56: #{resblk_forward.4} parent=43 // pred_fallthru
        _
    $region44: #{resblk_forward.4} parent=5 // pred_fallthru
      _
    %p3977 = scmp.le.s32.totalorder 2, %s14
    // Predicated region
    $region57: #{resblk_forward.4} parent=5 // pred_check
      %p3978 = pneg %p3977
    $region58: #{resblk_forward.4} parent=5 // pred_check_branch
      %3980 = sbr.rel (%p3978) target = $region60
    $region59: #{resblk_forward.4} parent=5 // pred_region
      %s3981 = ssub.s32 %s14, 2
      // Predicated region
      $region61: #{resblk_forward.4} parent=59 // pred_check
        %p3982 = pneg %p193
      $region62: #{resblk_forward.4} parent=59 // pred_check_branch
        %3984 = sbr.rel (%p3982) target = $region64
      $region63: #{resblk_forward.4} parent=59 // pred_region
        %p3985 = scmp.lt.s32.totalorder %s25, 1
        %s3986 = scalar_select %p3985, %s25, 1
        %p3987 = scmp.lt.s32.totalorder %s26, 0
        %s3988 = scalar_select %p3987, %s26, 0
        %s3989 = smul.addr %s3986, 32
        %s3990 = sadd.s32 %s3988, %s3989
        %s3991 = smul.addr %s3990, 8
        %s3992 = scalar_lea.vmem %s6, %s3991
      $region64: #{resblk_forward.4} parent=59 // pred_fallthru
        _
      // Predicated region
      $region65: #{resblk_forward.4} parent=59 // pred_check
        %p3993 = pneg %p221
      $region66: #{resblk_forward.4} parent=59 // pred_check_branch
        %3995 = sbr.rel (%p3993) target = $region68
      $region67: #{resblk_forward.4} parent=59 // pred_region
        %p3996 = scmp.lt.s32.totalorder %s25, 1
        %s3997 = scalar_select %p3996, %s25, 1
        %p3998 = scmp.lt.s32.totalorder %s26, 0
        %s3999 = scalar_select %p3998, %s26, 0
        %s4000 = sadd.s32 %s3999, %s3997
        %s4001 = smul.addr %s4000, 2
        %s4002 = scalar_lea.vmem %s7, %s4001
      $region68: #{resblk_forward.4} parent=59 // pred_fallthru
        _
    $region60: #{resblk_forward.4} parent=5 // pred_fallthru
      _
  $region6: #{resblk_forward.4} parent=0 // loop_footer
    %s18 = sadd.s32 1, %s14
  $region7: #{resblk_forward.4} parent=0 // loop_footer_branch
    %13 = sbr.rel target = $region3
  $region8: #{resblk_forward.4} parent=0 // loop_exit
    _

// kernel: resblk_forward.3
$region0: #{resblk_forward.3}
  #allocation0 [shape = 'u32[]', space=smem, size = 0x4, offset = 0x4, fixed_abs, tag = 'smem constant byte address 0x4 - core index']
  #allocation1 [shape = 'u32[144,128]{1,0:T(1,128)}', space=vmem, size = 0x12000, scoped, tag = 'internal scratch']
  %s0 = inlined_call_operand.vmem [shape: f32[2,304,128], index: 0, kind: input, shape index: {}]
  %s1 = inlined_call_operand.vmem [shape: f32[256,1], index: 1, kind: input, shape index: {}]
  %s2 = inlined_call_operand.vmem [shape: f32[256,1], index: 2, kind: input, shape index: {}]
  %s3 = inlined_call_operand.vmem [shape: f32[9,128,128], index: 3, kind: input, shape index: {}]
  %s4 = inlined_call_operand.vmem [shape: f32[128,128], index: 4, kind: input, shape index: {}]
  %s5 = inlined_call_operand.vmem [shape: f32[2,256,128], index: 5, kind: output, shape index: {0}]
  %s6 = inlined_call_operand.vmem [shape: f32[2,2,128], index: 6, kind: output, shape index: {1}]
  %s7 = inlined_call_operand.vmem [shape: f32[2,2,128], index: 7, kind: output, shape index: {2}]
  %8 = xla_tuple %s5, %s6, %s7
  %s9 = sld [smem:[#allocation0]]
  $region69: #{resblk_forward.3} parent=0
    _
  %s11 = ssub.s32 1, %s9
  %s12 = scalar_select 0, %s11, %s9
  loop: start=0, step=1, limit=4
  $region2: #{resblk_forward.3} parent=0 // loop_pre_header
    _
  $region3: #{resblk_forward.3} parent=0 // loop_header
    %s14 = sphi 0, %s18
    %p15 = scmp.ge.s32.totalorder %s14, 4
    %s21 = sphi 0, %s33
    %s22 = sphi 0, %s29
    %s23 = sphi 0, %s21
    %s24 = sphi 0, %s22
    %s25 = sphi 0, %s23
    %s26 = sphi 0, %s24
    %s36 = sphi 0, %s38
    %s39 = sphi 0, %s36
    %s40 = sphi 0, %s39
    %s56 = sphi 0, %s40
    %s60 = sphi 0, %s60
    %s62 = sphi 0, %s60
    %s63 = sphi 0, %s62
    %s77 = sphi 0, %s63
    %s81 = sphi 0, %s81
    %s83 = sphi 0, %s81
    %s84 = sphi 0, %s83
    %s98 = sphi 0, %s84
    %s104 = sphi 0, %s106
    %s107 = sphi 0, %s104
    %s108 = sphi 0, %s107
    %s124 = sphi 0, %s108
    %s130 = sphi 0, %s132
    %s133 = sphi 0, %s130
    %s134 = sphi 0, %s133
    %s150 = sphi 0, %s134
    %s158 = sphi 0, %s160
    %s161 = sphi 0, %s158
    %s162 = sphi 0, %s161
    %s178 = sphi 0, %s162
    %s186 = sphi 0, %s188
    %s189 = sphi 0, %s186
    %s190 = sphi 0, %s189
    %s206 = sphi 0, %s190
    %s214 = sphi 0, %s216
    %s217 = sphi 0, %s214
    %s218 = sphi 0, %s217
    %s234 = sphi 0, %s218
  $region4: #{resblk_forward.3} parent=0 // loop_header_branch
    %17 = sbr.rel (%p15) target = $region8
  $region5: #{resblk_forward.3} parent=0 // loop_body
    %s19 = ssub.s32 %s14, 1
    %s20 = ssub.s32 %s14, 2
    %s27 = sadd.s32 1, %s22
    %p28 = scmp.ge.s32.totalorder %s27, 1
    %s29 = scalar_select %p28, 0, %s27
    %s30 = sadd.s32 1, %s21
    %s31 = scalar_select %p28, %s30, %s21
    %p32 = scmp.ge.s32.totalorder %s31, 2
    %s33 = scalar_select %p32, 0, %s31
    %s34 = ssub.s32 %s21, %s33
    %p35 = scmp.eq.s32.totalorder %s34, 0
    %s37 = sadd.s32 %s36, 1
    %s38 = scalar_select %p35, %s36, %s37
    %p41 = pneg %p35
    %p42 = scmp.eq.s32.totalorder %s14, 1
    %p43 = por %p41, %p42
    %p44 = scmp.ne.s32.totalorder %s36, %s39
    %p45 = scmp.eq.s32.totalorder %s14, 0
    %p46 = por %p44, %p45
    %p47 = scmp.ne.s32.totalorder %s36, %s39
    %p48 = scmp.eq.s32.totalorder %s19, 1
    %p49 = por %p47, %p48
    %p50 = scmp.ne.s32.totalorder %s39, %s40
    %p51 = scmp.eq.s32.totalorder %s19, 0
    %p52 = por %p50, %p51
    %p53 = scmp.ne.s32.totalorder %s39, %s40
    %p54 = scmp.eq.s32.totalorder %s20, 1
    %p55 = por %p53, %p54
    %p57 = scmp.ne.s32.totalorder %s40, %s56
    %p58 = scmp.eq.s32.totalorder %s20, 0
    %p59 = por %p57, %p58
    %s61 = sadd.s32 %s60, 1
    %p64 = scmp.eq.s32.totalorder %s14, 1
    %p65 = scmp.ne.s32.totalorder %s60, %s62
    %p66 = scmp.eq.s32.totalorder %s14, 0
    %p67 = por %p65, %p66
    %p68 = scmp.ne.s32.totalorder %s60, %s62
    %p69 = scmp.eq.s32.totalorder %s19, 1
    %p70 = por %p68, %p69
    %p71 = scmp.ne.s32.totalorder %s62, %s63
    %p72 = scmp.eq.s32.totalorder %s19, 0
    %p73 = por %p71, %p72
    %p74 = scmp.ne.s32.totalorder %s62, %s63
    %p75 = scmp.eq.s32.totalorder %s20, 1
    %p76 = por %p74, %p75
    %p78 = scmp.ne.s32.totalorder %s63, %s77
    %p79 = scmp.eq.s32.totalorder %s20, 0
    %p80 = por %p78, %p79
    %s82 = sadd.s32 %s81, 1
    %p85 = scmp.eq.s32.totalorder %s14, 1
    %p86 = scmp.ne.s32.totalorder %s81, %s83
    %p87 = scmp.eq.s32.totalorder %s14, 0
    %p88 = por %p86, %p87
    %p89 = scmp.ne.s32.totalorder %s81, %s83
    %p90 = scmp.eq.s32.totalorder %s19, 1
    %p91 = por %p89, %p90
    %p92 = scmp.ne.s32.totalorder %s83, %s84
    %p93 = scmp.eq.s32.totalorder %s19, 0
    %p94 = por %p92, %p93
    %p95 = scmp.ne.s32.totalorder %s83, %s84
    %p96 = scmp.eq.s32.totalorder %s20, 1
    %p97 = por %p95, %p96
    %p99 = scmp.ne.s32.totalorder %s84, %s98
    %p100 = scmp.eq.s32.totalorder %s20, 0
    %p101 = por %p99, %p100
    %s102 = ssub.s32 %s22, %s29
    %p103 = scmp.eq.s32.totalorder %s102, 0
    %s105 = sadd.s32 %s104, 1
    %s106 = scalar_select %p103, %s104, %s105
    %p109 = pneg %p103
    %p110 = scmp.eq.s32.totalorder %s14, 1
    %p111 = por %p109, %p110
    %p112 = scmp.ne.s32.totalorder %s104, %s107
    %p113 = scmp.eq.s32.totalorder %s14, 0
    %p114 = por %p112, %p113
    %p115 = scmp.ne.s32.totalorder %s104, %s107
    %p116 = scmp.eq.s32.totalorder %s19, 1
    %p117 = por %p115, %p116
    %p118 = scmp.ne.s32.totalorder %s107, %s108
    %p119 = scmp.eq.s32.totalorder %s19, 0
    %p120 = por %p118, %p119
    %p121 = scmp.ne.s32.totalorder %s107, %s108
    %p122 = scmp.eq.s32.totalorder %s20, 1
    %p123 = por %p121, %p122
    %p125 = scmp.ne.s32.totalorder %s108, %s124
    %p126 = scmp.eq.s32.totalorder %s20, 0
    %p127 = por %p125, %p126
    %s128 = ssub.s32 %s22, %s29
    %p129 = scmp.eq.s32.totalorder %s128, 0
    %s131 = sadd.s32 %s130, 1
    %s132 = scalar_select %p129, %s130, %s131
    %p135 = pneg %p129
    %p136 = scmp.eq.s32.totalorder %s14, 1
    %p137 = por %p135, %p136
    %p138 = scmp.ne.s32.totalorder %s130, %s133
    %p139 = scmp.eq.s32.totalorder %s14, 0
    %p140 = por %p138, %p139
    %p141 = scmp.ne.s32.totalorder %s130, %s133
    %p142 = scmp.eq.s32.totalorder %s19, 1
    %p143 = por %p141, %p142
    %p144 = scmp.ne.s32.totalorder %s133, %s134
    %p145 = scmp.eq.s32.totalorder %s19, 0
    %p146 = por %p144, %p145
    %p147 = scmp.ne.s32.totalorder %s133, %s134
    %p148 = scmp.eq.s32.totalorder %s20, 1
    %p149 = por %p147, %p148
    %p151 = scmp.ne.s32.totalorder %s134, %s150
    %p152 = scmp.eq.s32.totalorder %s20, 0
    %p153 = por %p151, %p152
    %s154 = ssub.s32 %s21, %s33
    %s155 = ssub.s32 %s22, %s29
    %s156 = sor.u32 %s154, %s155
    %p157 = scmp.eq.s32.totalorder %s156, 0
    %s159 = sadd.s32 %s158, 1
    %s160 = scalar_select %p157, %s158, %s159
    %p163 = pneg %p157
    %p164 = scmp.eq.s32.totalorder %s14, 1
    %p165 = por %p163, %p164
    %p166 = scmp.ne.s32.totalorder %s158, %s161
    %p167 = scmp.eq.s32.totalorder %s14, 0
    %p168 = por %p166, %p167
    %p169 = scmp.ne.s32.totalorder %s158, %s161
    %p170 = scmp.eq.s32.totalorder %s19, 1
    %p171 = por %p169, %p170
    %p172 = scmp.ne.s32.totalorder %s161, %s162
    %p173 = scmp.eq.s32.totalorder %s19, 0
    %p174 = por %p172, %p173
    %p175 = scmp.ne.s32.totalorder %s161, %s162
    %p176 = scmp.eq.s32.totalorder %s20, 1
    %p177 = por %p175, %p176
    %p179 = scmp.ne.s32.totalorder %s162, %s178
    %p180 = scmp.eq.s32.totalorder %s20, 0
    %p181 = por %p179, %p180
    %s182 = ssub.s32 %s21, %s33
    %s183 = ssub.s32 %s22, %s29
    %s184 = sor.u32 %s182, %s183
    %p185 = scmp.eq.s32.totalorder %s184, 0
    %s187 = sadd.s32 %s186, 1
    %s188 = scalar_select %p185, %s186, %s187
    %p191 = pneg %p185
    %p192 = scmp.eq.s32.totalorder %s14, 1
    %p193 = por %p191, %p192
    %p194 = scmp.ne.s32.totalorder %s186, %s189
    %p195 = scmp.eq.s32.totalorder %s14, 0
    %p196 = por %p194, %p195
    %p197 = scmp.ne.s32.totalorder %s186, %s189
    %p198 = scmp.eq.s32.totalorder %s19, 1
    %p199 = por %p197, %p198
    %p200 = scmp.ne.s32.totalorder %s189, %s190
    %p201 = scmp.eq.s32.totalorder %s19, 0
    %p202 = por %p200, %p201
    %p203 = scmp.ne.s32.totalorder %s189, %s190
    %p204 = scmp.eq.s32.totalorder %s20, 1
    %p205 = por %p203, %p204
    %p207 = scmp.ne.s32.totalorder %s190, %s206
    %p208 = scmp.eq.s32.totalorder %s20, 0
    %p209 = por %p207, %p208
    %s210 = ssub.s32 %s21, %s33
    %s211 = ssub.s32 %s22, %s29
    %s212 = sor.u32 %s210, %s211
    %p213 = scmp.eq.s32.totalorder %s212, 0
    %s215 = sadd.s32 %s214, 1
    %s216 = scalar_select %p213, %s214, %s215
    %p219 = pneg %p213
    %p220 = scmp.eq.s32.totalorder %s14, 1
    %p221 = por %p219, %p220
    %p222 = scmp.ne.s32.totalorder %s214, %s217
    %p223 = scmp.eq.s32.totalorder %s14, 0
    %p224 = por %p222, %p223
    %p225 = scmp.ne.s32.totalorder %s214, %s217
    %p226 = scmp.eq.s32.totalorder %s19, 1
    %p227 = por %p225, %p226
    %p228 = scmp.ne.s32.totalorder %s217, %s218
    %p229 = scmp.eq.s32.totalorder %s19, 0
    %p230 = por %p228, %p229
    %p231 = scmp.ne.s32.totalorder %s217, %s218
    %p232 = scmp.eq.s32.totalorder %s20, 1
    %p233 = por %p231, %p232
    %p235 = scmp.ne.s32.totalorder %s218, %s234
    %p236 = scmp.eq.s32.totalorder %s20, 0
    %p237 = por %p235, %p236
    %p238 = scmp.le.s32.totalorder 1, %s14
    %p239 = scmp.lt.s32.totalorder %s14, 3
    %p240 = pnand %p238, %p239
    %p241 = pneg %p240
    // Predicated region
    $region9: #{resblk_forward.3} parent=5 // pred_check
      _
    $region10: #{resblk_forward.3} parent=5 // pred_check_branch
      %243 = sbr.rel (%p240) target = $region12
    $region11: #{resblk_forward.3} parent=5 // pred_region
      %s244 = ssub.s32 %s14, 1
      // Predicated region
      $region13: #{resblk_forward.3} parent=11 // pred_check
        %p245 = pneg %p73
      $region14: #{resblk_forward.3} parent=11 // pred_check_branch
        %247 = sbr.rel (%p245) target = $region16
      $region15: #{resblk_forward.3} parent=11 // pred_region
        _
      $region16: #{resblk_forward.3} parent=11 // pred_fallthru
        _
      // Predicated region
      $region17: #{resblk_forward.3} parent=11 // pred_check
        %p248 = pneg %p94
      $region18: #{resblk_forward.3} parent=11 // pred_check_branch
        %250 = sbr.rel (%p248) target = $region20
      $region19: #{resblk_forward.3} parent=11 // pred_region
        _
      $region20: #{resblk_forward.3} parent=11 // pred_fallthru
        _
      // Predicated region
      $region21: #{resblk_forward.3} parent=11 // pred_check
        %p251 = pneg %p120
      $region22: #{resblk_forward.3} parent=11 // pred_check_branch
        %253 = sbr.rel (%p251) target = $region24
      $region23: #{resblk_forward.3} parent=11 // pred_region
        %p254 = scmp.lt.s32.totalorder %s24, 0
        %s255 = scalar_select %p254, %s24, 0
        %s256 = smul.addr %s255, 8
        %s257 = scalar_lea.vmem %s3, %s256
      $region24: #{resblk_forward.3} parent=11 // pred_fallthru
        _
      // Predicated region
      $region25: #{resblk_forward.3} parent=11 // pred_check
        %p258 = pneg %p146
      $region26: #{resblk_forward.3} parent=11 // pred_check_branch
        %260 = sbr.rel (%p258) target = $region28
      $region27: #{resblk_forward.3} parent=11 // pred_region
        %p261 = scmp.lt.s32.totalorder %s24, 0
        %s262 = scalar_select %p261, %s24, 0
        %s263 = smul.addr %s262, 8
        %s264 = scalar_lea.vmem %s4, %s263
      $region28: #{resblk_forward.3} parent=11 // pred_fallthru
        _
    $region12: #{resblk_forward.3} parent=5 // pred_fallthru
      _
    %p265 = scmp.lt.s32.totalorder %s14, 2
    // Predicated region
    $region29: #{resblk_forward.3} parent=5 // pred_check
      %p266 = pneg %p265
    $region30: #{resblk_forward.3} parent=5 // pred_check_branch
      %268 = sbr.rel (%p266) target = $region32
    $region31: #{resblk_forward.3} parent=5 // pred_region
      // Predicated region
      $region33: #{resblk_forward.3} parent=31 // pred_check
        %p269 = pneg %p46
      $region34: #{resblk_forward.3} parent=31 // pred_check_branch
        %271 = sbr.rel (%p269) target = $region36
      $region35: #{resblk_forward.3} parent=31 // pred_region
        %p272 = scmp.lt.s32.totalorder %s21, 1
        %s273 = scalar_select %p272, %s21, 1
        %s274 = smul.addr %s273, 38
        %s275 = smul.addr %s274, 8
        %s276 = scalar_lea.vmem %s0, %s275
      $region36: #{resblk_forward.3} parent=31 // pred_fallthru
        _
    $region32: #{resblk_forward.3} parent=5 // pred_fallthru
      _
    %p277 = scmp.le.s32.totalorder 1, %s14
    %p278 = scmp.lt.s32.totalorder %s14, 3
    %p279 = pnand %p277, %p278
    %p280 = pneg %p279
    // Predicated region
    $region37: #{resblk_forward.3} parent=5 // pred_check
      _
    $region38: #{resblk_forward.3} parent=5 // pred_check_branch
      %282 = sbr.rel (%p279) target = $region40
    $region39: #{resblk_forward.3} parent=5 // pred_region
      %s283 = ssub.s32 %s14, 1
      %p284 = scmp.lt.s32.totalorder %s23, 1
      %s285 = scalar_select %p284, %s23, 1
      %s286 = smul.addr %s285, 38
      %s287 = smul.addr %s286, 8
      %s288 = scalar_lea.vmem %s0, %s287
      %p289 = pneg %p52
      %p290 = pneg %p49
      %p291 = pneg %p73
      %p292 = pneg %p70
      %p293 = pneg %p94
      %p294 = pneg %p91
      %p295 = scmp.lt.s32.totalorder %s24, 0
      %s296 = scalar_select %p295, %s24, 0
      %s297 = smul.addr %s296, 8
      %s298 = scalar_lea.vmem %s3, %s297
      %p299 = pneg %p120
      %p300 = pneg %p117
      %p301 = scmp.lt.s32.totalorder %s24, 0
      %s302 = scalar_select %p301, %s24, 0
      %s303 = smul.addr %s302, 8
      %s304 = scalar_lea.vmem %s4, %s303
      %p305 = pneg %p146
      %p306 = pneg %p143
      %p307 = pneg %p174
      %p308 = pneg %p171
      %p309 = scmp.lt.s32.totalorder %s23, 1
      %s310 = scalar_select %p309, %s23, 1
      %p311 = scmp.lt.s32.totalorder %s24, 0
      %s312 = scalar_select %p311, %s24, 0
      %s313 = smul.addr %s310, 32
      %s314 = sadd.s32 %s312, %s313
      %s315 = smul.addr %s314, 8
      %s316 = scalar_lea.vmem %s5, %s315
      %p317 = pneg %p202
      %p318 = pneg %p199
      %p319 = scmp.lt.s32.totalorder %s23, 1
      %s320 = scalar_select %p319, %s23, 1
      %p321 = scmp.lt.s32.totalorder %s24, 0
      %s322 = scalar_select %p321, %s24, 0
      %s323 = sadd.s32 %s322, %s320
      %s324 = smul.addr %s323, 2
      %s325 = scalar_lea.vmem %s6, %s324
      %p326 = pneg %p230
      %p327 = pneg %p227
      %p328 = scmp.lt.s32.totalorder %s23, 1
      %s329 = scalar_select %p328, %s23, 1
      %p330 = scmp.lt.s32.totalorder %s24, 0
      %s331 = scalar_select %p330, %s24, 0
      %s332 = sadd.s32 %s331, %s329
      %s333 = smul.addr %s332, 2
      %s334 = scalar_lea.vmem %s7, %s333
      %p335 = scmp.lt.s32.totalorder %s23, 1
      %s336 = scalar_select %p335, %s23, 1
      %s337 = smul.addr %s336, 38
      %s338 = smul.addr %s337, 8
      %s339 = scalar_lea.vmem %s0, %s338
      %p340 = scmp.lt.s32.totalorder %s24, 0
      %s341 = scalar_select %p340, %s24, 0
      %s342 = smul.addr %s341, 8
      %s343 = scalar_lea.vmem %s3, %s342
      %p344 = scmp.lt.s32.totalorder %s24, 0
      %s345 = scalar_select %p344, %s24, 0
      %s346 = smul.addr %s345, 8
      %s347 = scalar_lea.vmem %s4, %s346
      %p348 = scmp.lt.s32.totalorder %s23, 1
      %s349 = scalar_select %p348, %s23, 1
      %p350 = scmp.lt.s32.totalorder %s24, 0
      %s351 = scalar_select %p350, %s24, 0
      %s352 = smul.addr %s349, 32
      %s353 = sadd.s32 %s351, %s352
      %s354 = smul.addr %s353, 8
      %s355 = scalar_lea.vmem %s5, %s354
      %p356 = scmp.lt.s32.totalorder %s23, 1
      %s357 = scalar_select %p356, %s23, 1
      %p358 = scmp.lt.s32.totalorder %s24, 0
      %s359 = scalar_select %p358, %s24, 0
      %s360 = sadd.s32 %s359, %s357
      %s361 = smul.addr %s360, 2
      %s362 = scalar_lea.vmem %s6, %s361
      %p363 = scmp.lt.s32.totalorder %s23, 1
      %s364 = scalar_select %p363, %s23, 1
      %p365 = scmp.lt.s32.totalorder %s24, 0
      %s366 = scalar_select %p365, %s24, 0
      %s367 = sadd.s32 %s366, %s364
      %s368 = smul.addr %s367, 2
      %s369 = scalar_lea.vmem %s7, %s368
      %v370 = vld [vmem:[%s1] sm:$0xff]
      %v371 = vld [vmem:[%s1 + $0x8] sm:$0xff]
      %v372 = vld [vmem:[%s1 + $0x10] sm:$0xff]
      %v373 = vld [vmem:[%s1 + $0x18] sm:$0xff]
      %v374 = vld [vmem:[%s1 + $0x20] sm:$0xff]
      %v375 = vld [vmem:[%s1 + $0x28] sm:$0xff]
      %v376 = vld [vmem:[%s1 + $0x30] sm:$0xff]
      %v377 = vld [vmem:[%s1 + $0x38] sm:$0xff]
      %v378 = vld [vmem:[%s1 + $0x40] sm:$0xff]
      %v379 = vld [vmem:[%s1 + $0x48] sm:$0xff]
      %v380 = vld [vmem:[%s1 + $0x50] sm:$0xff]
      %v381 = vld [vmem:[%s1 + $0x58] sm:$0xff]
      %v382 = vld [vmem:[%s1 + $0x60] sm:$0xff]
      %v383 = vld [vmem:[%s1 + $0x68] sm:$0xff]
      %v384 = vld [vmem:[%s1 + $0x70] sm:$0xff]
      %v385 = vld [vmem:[%s1 + $0x78] sm:$0xff]
      %v386 = vld [vmem:[%s1 + $0x80] sm:$0xff]
      %v387 = vld [vmem:[%s1 + $0x88] sm:$0xff]
      %v388 = vld [vmem:[%s1 + $0x90] sm:$0xff]
      %v389 = vld [vmem:[%s1 + $0x98] sm:$0xff]
      %v390 = vld [vmem:[%s1 + $0xa0] sm:$0xff]
      %v391 = vld [vmem:[%s1 + $0xa8] sm:$0xff]
      %v392 = vld [vmem:[%s1 + $0xb0] sm:$0xff]
      %v393 = vld [vmem:[%s1 + $0xb8] sm:$0xff]
      %v394 = vld [vmem:[%s1 + $0xc0] sm:$0xff]
      %v395 = vld [vmem:[%s1 + $0xc8] sm:$0xff]
      %v396 = vld [vmem:[%s1 + $0xd0] sm:$0xff]
      %v397 = vld [vmem:[%s1 + $0xd8] sm:$0xff]
      %v398 = vld [vmem:[%s1 + $0xe0] sm:$0xff]
      %v399 = vld [vmem:[%s1 + $0xe8] sm:$0xff]
      %v400 = vld [vmem:[%s1 + $0xf0] sm:$0xff]
      %v401 = vld [vmem:[%s1 + $0xf8] sm:$0xff]
      %v402 = vld [vmem:[%s2] sm:$0xff]
      %v403 = vld [vmem:[%s2 + $0x8] sm:$0xff]
      %v404 = vld [vmem:[%s2 + $0x10] sm:$0xff]
      %v405 = vld [vmem:[%s2 + $0x18] sm:$0xff]
      %v406 = vld [vmem:[%s2 + $0x20] sm:$0xff]
      %v407 = vld [vmem:[%s2 + $0x28] sm:$0xff]
      %v408 = vld [vmem:[%s2 + $0x30] sm:$0xff]
      %v409 = vld [vmem:[%s2 + $0x38] sm:$0xff]
      %v410 = vld [vmem:[%s2 + $0x40] sm:$0xff]
      %v411 = vld [vmem:[%s2 + $0x48] sm:$0xff]
      %v412 = vld [vmem:[%s2 + $0x50] sm:$0xff]
      %v413 = vld [vmem:[%s2 + $0x58] sm:$0xff]
      %v414 = vld [vmem:[%s2 + $0x60] sm:$0xff]
      %v415 = vld [vmem:[%s2 + $0x68] sm:$0xff]
      %v416 = vld [vmem:[%s2 + $0x70] sm:$0xff]
      %v417 = vld [vmem:[%s2 + $0x78] sm:$0xff]
      %v418 = vld [vmem:[%s2 + $0x80] sm:$0xff]
      %v419 = vld [vmem:[%s2 + $0x88] sm:$0xff]
      %v420 = vld [vmem:[%s2 + $0x90] sm:$0xff]
      %v421 = vld [vmem:[%s2 + $0x98] sm:$0xff]
      %v422 = vld [vmem:[%s2 + $0xa0] sm:$0xff]
      %v423 = vld [vmem:[%s2 + $0xa8] sm:$0xff]
      %v424 = vld [vmem:[%s2 + $0xb0] sm:$0xff]
      %v425 = vld [vmem:[%s2 + $0xb8] sm:$0xff]
      %v426 = vld [vmem:[%s2 + $0xc0] sm:$0xff]
      %v427 = vld [vmem:[%s2 + $0xc8] sm:$0xff]
      %v428 = vld [vmem:[%s2 + $0xd0] sm:$0xff]
      %v429 = vld [vmem:[%s2 + $0xd8] sm:$0xff]
      %v430 = vld [vmem:[%s2 + $0xe0] sm:$0xff]
      %v431 = vld [vmem:[%s2 + $0xe8] sm:$0xff]
      %v432 = vld [vmem:[%s2 + $0xf0] sm:$0xff]
      %v433 = vld [vmem:[%s2 + $0xf8] sm:$0xff]
      %v434 = vld [vmem:[%s339 + $0x7] sm:$0xff]
      %v435 = vld [vmem:[%s339 + $0xf] sm:$0xff]
      %v436 = vld [vmem:[%s339 + $0x17] sm:$0xff]
      %v437 = vld [vmem:[%s339 + $0x1f] sm:$0xff]
      %v438 = vld [vmem:[%s339 + $0x27] sm:$0xff]
      %v439 = vld [vmem:[%s339 + $0x2f] sm:$0xff]
      %v440 = vld [vmem:[%s339 + $0x37] sm:$0xff]
      %v441 = vld [vmem:[%s339 + $0x3f] sm:$0xff]
      %v442 = vld [vmem:[%s339 + $0x47] sm:$0xff]
      %v443 = vld [vmem:[%s339 + $0x4f] sm:$0xff]
      %v444 = vld [vmem:[%s339 + $0x57] sm:$0xff]
      %v445 = vld [vmem:[%s339 + $0x5f] sm:$0xff]
      %v446 = vld [vmem:[%s339 + $0x67] sm:$0xff]
      %v447 = vld [vmem:[%s339 + $0x6f] sm:$0xff]
      %v448 = vld [vmem:[%s339 + $0x77] sm:$0xff]
      %v449 = vld [vmem:[%s339 + $0x7f] sm:$0xff]
      %v450 = vld [vmem:[%s339 + $0x87] sm:$0xff]
      %v451 = vld [vmem:[%s339 + $0x8f] sm:$0xff]
      %v452 = vld [vmem:[%s339 + $0x97] sm:$0xff]
      %v453 = vld [vmem:[%s339 + $0x9f] sm:$0xff]
      %v454 = vld [vmem:[%s339 + $0xa7] sm:$0xff]
      %v455 = vld [vmem:[%s339 + $0xaf] sm:$0xff]
      %v456 = vld [vmem:[%s339 + $0xb7] sm:$0xff]
      %v457 = vld [vmem:[%s339 + $0xbf] sm:$0xff]
      %v458 = vld [vmem:[%s339 + $0xc7] sm:$0xff]
      %v459 = vld [vmem:[%s339 + $0xcf] sm:$0xff]
      %v460 = vld [vmem:[%s339 + $0xd7] sm:$0xff]
      %v461 = vld [vmem:[%s339 + $0xdf] sm:$0xff]
      %v462 = vld [vmem:[%s339 + $0xe7] sm:$0xff]
      %v463 = vld [vmem:[%s339 + $0xef] sm:$0xff]
      %v464 = vld [vmem:[%s339 + $0xf7] sm:$0xff]
      %v465 = vld [vmem:[%s339 + $0xff] sm:$0xff]
      %467 = vset.pattern.permute.xlu0 0
      %468 = vperm.xlu0 %467, %v370
      %v469 = vpop.permute.xlu0 %468
      %472 = vset.pattern.permute.xlu0 0
      %473 = vperm.xlu0 %472, %v371
      %v474 = vpop.permute.xlu0 %473
      %477 = vset.pattern.permute.xlu0 0
      %478 = vperm.xlu0 %477, %v372
      %v479 = vpop.permute.xlu0 %478
      %482 = vset.pattern.permute.xlu0 0
      %483 = vperm.xlu0 %482, %v373
      %v484 = vpop.permute.xlu0 %483
      %487 = vset.pattern.permute.xlu0 0
      %488 = vperm.xlu0 %487, %v374
      %v489 = vpop.permute.xlu0 %488
      %492 = vset.pattern.permute.xlu0 0
      %493 = vperm.xlu0 %492, %v375
      %v494 = vpop.permute.xlu0 %493
      %497 = vset.pattern.permute.xlu0 0
      %498 = vperm.xlu0 %497, %v376
      %v499 = vpop.permute.xlu0 %498
      %502 = vset.pattern.permute.xlu0 0
      %503 = vperm.xlu0 %502, %v377
      %v504 = vpop.permute.xlu0 %503
      %507 = vset.pattern.permute.xlu0 0
      %508 = vperm.xlu0 %507, %v378
      %v509 = vpop.permute.xlu0 %508
      %512 = vset.pattern.permute.xlu0 0
      %513 = vperm.xlu0 %512, %v379
      %v514 = vpop.permute.xlu0 %513
      %517 = vset.pattern.permute.xlu0 0
      %518 = vperm.xlu0 %517, %v380
      %v519 = vpop.permute.xlu0 %518
      %522 = vset.pattern.permute.xlu0 0
      %523 = vperm.xlu0 %522, %v381
      %v524 = vpop.permute.xlu0 %523
      %527 = vset.pattern.permute.xlu0 0
      %528 = vperm.xlu0 %527, %v382
      %v529 = vpop.permute.xlu0 %528
      %532 = vset.pattern.permute.xlu0 0
      %533 = vperm.xlu0 %532, %v383
      %v534 = vpop.permute.xlu0 %533
      %537 = vset.pattern.permute.xlu0 0
      %538 = vperm.xlu0 %537, %v384
      %v539 = vpop.permute.xlu0 %538
      %542 = vset.pattern.permute.xlu0 0
      %543 = vperm.xlu0 %542, %v385
      %v544 = vpop.permute.xlu0 %543
      %547 = vset.pattern.permute.xlu0 0
      %548 = vperm.xlu0 %547, %v386
      %v549 = vpop.permute.xlu0 %548
      %552 = vset.pattern.permute.xlu0 0
      %553 = vperm.xlu0 %552, %v387
      %v554 = vpop.permute.xlu0 %553
      %557 = vset.pattern.permute.xlu0 0
      %558 = vperm.xlu0 %557, %v388
      %v559 = vpop.permute.xlu0 %558
      %562 = vset.pattern.permute.xlu0 0
      %563 = vperm.xlu0 %562, %v389
      %v564 = vpop.permute.xlu0 %563
      %567 = vset.pattern.permute.xlu0 0
      %568 = vperm.xlu0 %567, %v390
      %v569 = vpop.permute.xlu0 %568
      %572 = vset.pattern.permute.xlu0 0
      %573 = vperm.xlu0 %572, %v391
      %v574 = vpop.permute.xlu0 %573
      %577 = vset.pattern.permute.xlu0 0
      %578 = vperm.xlu0 %577, %v392
      %v579 = vpop.permute.xlu0 %578
      %582 = vset.pattern.permute.xlu0 0
      %583 = vperm.xlu0 %582, %v393
      %v584 = vpop.permute.xlu0 %583
      %587 = vset.pattern.permute.xlu0 0
      %588 = vperm.xlu0 %587, %v394
      %v589 = vpop.permute.xlu0 %588
      %592 = vset.pattern.permute.xlu0 0
      %593 = vperm.xlu0 %592, %v395
      %v594 = vpop.permute.xlu0 %593
      %597 = vset.pattern.permute.xlu0 0
      %598 = vperm.xlu0 %597, %v396
      %v599 = vpop.permute.xlu0 %598
      %602 = vset.pattern.permute.xlu0 0
      %603 = vperm.xlu0 %602, %v397
      %v604 = vpop.permute.xlu0 %603
      %607 = vset.pattern.permute.xlu0 0
      %608 = vperm.xlu0 %607, %v398
      %v609 = vpop.permute.xlu0 %608
      %612 = vset.pattern.permute.xlu0 0
      %613 = vperm.xlu0 %612, %v399
      %v614 = vpop.permute.xlu0 %613
      %617 = vset.pattern.permute.xlu0 0
      %618 = vperm.xlu0 %617, %v400
      %v619 = vpop.permute.xlu0 %618
      %622 = vset.pattern.permute.xlu0 0
      %623 = vperm.xlu0 %622, %v401
      %v624 = vpop.permute.xlu0 %623
      %v626 = vmul.f32 %v434, %v469
      %v627 = vmul.f32 %v435, %v474
      %v628 = vmul.f32 %v436, %v479
      %v629 = vmul.f32 %v437, %v484
      %v630 = vmul.f32 %v438, %v489
      %v631 = vmul.f32 %v439, %v494
      %v632 = vmul.f32 %v440, %v499
      %v633 = vmul.f32 %v441, %v504
      %v634 = vmul.f32 %v442, %v509
      %v635 = vmul.f32 %v443, %v514
      %v636 = vmul.f32 %v444, %v519
      %v637 = vmul.f32 %v445, %v524
      %v638 = vmul.f32 %v446, %v529
      %v639 = vmul.f32 %v447, %v534
      %v640 = vmul.f32 %v448, %v539
      %v641 = vmul.f32 %v449, %v544
      %v642 = vmul.f32 %v450, %v549
      %v643 = vmul.f32 %v451, %v554
      %v644 = vmul.f32 %v452, %v559
      %v645 = vmul.f32 %v453, %v564
      %v646 = vmul.f32 %v454, %v569
      %v647 = vmul.f32 %v455, %v574
      %v648 = vmul.f32 %v456, %v579
      %v649 = vmul.f32 %v457, %v584
      %v650 = vmul.f32 %v458, %v589
      %v651 = vmul.f32 %v459, %v594
      %v652 = vmul.f32 %v460, %v599
      %v653 = vmul.f32 %v461, %v604
      %v654 = vmul.f32 %v462, %v609
      %v655 = vmul.f32 %v463, %v614
      %v656 = vmul.f32 %v464, %v619
      %v657 = vmul.f32 %v465, %v624
      %v658 = vld [vmem:[%s343] sm:$0xff]
      %v659 = vld [vmem:[%s343 + $0x8] sm:$0xff]
      %v660 = vld [vmem:[%s343 + $0x10] sm:$0xff]
      %v661 = vld [vmem:[%s343 + $0x18] sm:$0xff]
      %v662 = vld [vmem:[%s343 + $0x20] sm:$0xff]
      %v663 = vld [vmem:[%s343 + $0x28] sm:$0xff]
      %v664 = vld [vmem:[%s343 + $0x30] sm:$0xff]
      %v665 = vld [vmem:[%s343 + $0x38] sm:$0xff]
      %v666 = vld [vmem:[%s343 + $0x40] sm:$0xff]
      %v667 = vld [vmem:[%s343 + $0x48] sm:$0xff]
      %v668 = vld [vmem:[%s343 + $0x50] sm:$0xff]
      %v669 = vld [vmem:[%s343 + $0x58] sm:$0xff]
      %v670 = vld [vmem:[%s343 + $0x60] sm:$0xff]
      %v671 = vld [vmem:[%s343 + $0x68] sm:$0xff]
      %v672 = vld [vmem:[%s343 + $0x70] sm:$0xff]
      %v673 = vld [vmem:[%s343 + $0x78] sm:$0xff]
      %v674 = vld [vmem:[%s339 + $0x8] sm:$0xff]
      %v675 = vld [vmem:[%s339 + $0x10] sm:$0xff]
      %v676 = vld [vmem:[%s339 + $0x18] sm:$0xff]
      %v677 = vld [vmem:[%s339 + $0x20] sm:$0xff]
      %v678 = vld [vmem:[%s339 + $0x28] sm:$0xff]
      %v679 = vld [vmem:[%s339 + $0x30] sm:$0xff]
      %v680 = vld [vmem:[%s339 + $0x38] sm:$0xff]
      %v681 = vld [vmem:[%s339 + $0x40] sm:$0xff]
      %v682 = vld [vmem:[%s339 + $0x48] sm:$0xff]
      %v683 = vld [vmem:[%s339 + $0x50] sm:$0xff]
      %v684 = vld [vmem:[%s339 + $0x58] sm:$0xff]
      %v685 = vld [vmem:[%s339 + $0x60] sm:$0xff]
      %v686 = vld [vmem:[%s339 + $0x68] sm:$0xff]
      %v687 = vld [vmem:[%s339 + $0x70] sm:$0xff]
      %v688 = vld [vmem:[%s339 + $0x78] sm:$0xff]
      %v689 = vld [vmem:[%s339 + $0x80] sm:$0xff]
      %v690 = vld [vmem:[%s339 + $0x88] sm:$0xff]
      %v691 = vld [vmem:[%s339 + $0x90] sm:$0xff]
      %v692 = vld [vmem:[%s339 + $0x98] sm:$0xff]
      %v693 = vld [vmem:[%s339 + $0xa0] sm:$0xff]
      %v694 = vld [vmem:[%s339 + $0xa8] sm:$0xff]
      %v695 = vld [vmem:[%s339 + $0xb0] sm:$0xff]
      %v696 = vld [vmem:[%s339 + $0xb8] sm:$0xff]
      %v697 = vld [vmem:[%s339 + $0xc0] sm:$0xff]
      %v698 = vld [vmem:[%s339 + $0xc8] sm:$0xff]
      %v699 = vld [vmem:[%s339 + $0xd0] sm:$0xff]
      %v700 = vld [vmem:[%s339 + $0xd8] sm:$0xff]
      %v701 = vld [vmem:[%s339 + $0xe0] sm:$0xff]
      %v702 = vld [vmem:[%s339 + $0xe8] sm:$0xff]
      %v703 = vld [vmem:[%s339 + $0xf0] sm:$0xff]
      %v704 = vld [vmem:[%s339 + $0xf8] sm:$0xff]
      %v705 = vld [vmem:[%s339 + $0x100] sm:$0xff]
      %s706 = scalar_lea.vmem %s343, 128
      %v707 = vld [vmem:[%s706] sm:$0xff]
      %v708 = vld [vmem:[%s706 + $0x8] sm:$0xff]
      %v709 = vld [vmem:[%s706 + $0x10] sm:$0xff]
      %v710 = vld [vmem:[%s706 + $0x18] sm:$0xff]
      %v711 = vld [vmem:[%s706 + $0x20] sm:$0xff]
      %v712 = vld [vmem:[%s706 + $0x28] sm:$0xff]
      %v713 = vld [vmem:[%s706 + $0x30] sm:$0xff]
      %v714 = vld [vmem:[%s706 + $0x38] sm:$0xff]
      %v715 = vld [vmem:[%s706 + $0x40] sm:$0xff]
      %v716 = vld [vmem:[%s706 + $0x48] sm:$0xff]
      %v717 = vld [vmem:[%s706 + $0x50] sm:$0xff]
      %v718 = vld [vmem:[%s706 + $0x58] sm:$0xff]
      %v719 = vld [vmem:[%s706 + $0x60] sm:$0xff]
      %v720 = vld [vmem:[%s706 + $0x68] sm:$0xff]
      %v721 = vld [vmem:[%s706 + $0x70] sm:$0xff]
      %v722 = vld [vmem:[%s706 + $0x78] sm:$0xff]
      %723 = vmatprep.subr.mxu0 0.0
      %724 = vmatpush1.msra.mxu0 %v707
      %725 = vmatprep.subr.mxu0 0.0
      %726 = vmatpush1.msra.mxu0 %v708
      %727 = vmatprep.subr.mxu0 0.0
      %728 = vmatpush1.msra.mxu0 %v709
      %729 = vmatprep.subr.mxu0 0.0
      %730 = vmatpush1.msra.mxu0 %v710
      %731 = vmatprep.subr.mxu0 0.0
      %732 = vmatpush1.msra.mxu0 %v711
      %733 = vmatprep.subr.mxu0 0.0
      %734 = vmatpush1.msra.mxu0 %v712
      %735 = vmatprep.subr.mxu0 0.0
      %736 = vmatpush1.msra.mxu0 %v713
      %737 = vmatprep.subr.mxu0 0.0
      %738 = vmatpush1.msra.mxu0 %v714
      %739 = vmatprep.subr.mxu0 0.0
      %740 = vmatpush1.msra.mxu0 %v715
      %741 = vmatprep.subr.mxu0 0.0
      %742 = vmatpush1.msra.mxu0 %v716
      %743 = vmatprep.subr.mxu0 0.0
      %744 = vmatpush1.msra.mxu0 %v717
      %745 = vmatprep.subr.mxu0 0.0
      %746 = vmatpush1.msra.mxu0 %v718
      %747 = vmatprep.subr.mxu0 0.0
      %748 = vmatpush1.msra.mxu0 %v719
      %749 = vmatprep.subr.mxu0 0.0
      %750 = vmatpush1.msra.mxu0 %v720
      %751 = vmatprep.subr.mxu0 0.0
      %752 = vmatpush1.msra.mxu0 %v721
      %753 = vmatprep.subr.mxu0 0.0
      %754 = vmatpush1.msra.mxu0 %v722
      %755 = vmatprep.subr.mxu0 0.0
      %756 = vmatpush1.msra.mxu0 0.0
      %757 = vmatprep.subr.mxu0 0.0
      %758 = vmatpush1.msra.mxu0 0.0
      %759 = vmatprep.subr.mxu0 0.0
      %760 = vmatpush1.msra.mxu0 0.0
      %761 = vmatprep.subr.mxu0 0.0
      %762 = vmatpush1.msra.mxu0 0.0
      %763 = vmatprep.subr.mxu0 0.0
      %764 = vmatpush1.msra.mxu0 0.0
      %765 = vmatprep.subr.mxu0 0.0
      %766 = vmatpush1.msra.mxu0 0.0
      %767 = vmatprep.subr.mxu0 0.0
      %768 = vmatpush1.msra.mxu0 0.0
      %769 = vmatprep.subr.mxu0 0.0
      %770 = vmatpush1.msra.mxu0 0.0
      %771 = vmatprep.subr.mxu0 0.0
      %772 = vmatpush1.msra.mxu0 0.0
      %773 = vmatprep.subr.mxu0 0.0
      %774 = vmatpush1.msra.mxu0 0.0
      %775 = vmatprep.subr.mxu0 0.0
      %776 = vmatpush1.msra.mxu0 0.0
      %777 = vmatprep.subr.mxu0 0.0
      %778 = vmatpush1.msra.mxu0 0.0
      %779 = vmatprep.subr.mxu0 0.0
      %780 = vmatpush1.msra.mxu0 0.0
      %781 = vmatprep.subr.mxu0 0.0
      %782 = vmatpush1.msra.mxu0 0.0
      %783 = vmatprep.subr.mxu0 0.0
      %784 = vmatpush1.msra.mxu0 0.0
      %785 = vmatprep.subr.mxu0 0.0
      %786 = vmatpush1.msra.mxu0 0.0
      %787 = vmatprep.mubr.f32.mxu0 0.0
      %788 = vmatmul.mubr.f32.gmra.mrb[0].mxu0 %v674
      %v789 = vpop.f32.mrb[0].mxu0
      %v790 = vadd.f32 0.0, %v789
      %v791 = vpop.f32.mrb[0].mxu0
      %792 = vmatprep.mubr.f32.mxu0 0.0
      %793 = vmatmul.mubr.f32.gmra.mrb[0].mxu0 %v675
      %v794 = vpop.f32.mrb[0].mxu0
      %v795 = vadd.f32 0.0, %v794
      %v796 = vpop.f32.mrb[0].mxu0
      %797 = vmatprep.mubr.f32.mxu0 0.0
      %798 = vmatmul.mubr.f32.gmra.mrb[0].mxu0 %v676
      %v799 = vpop.f32.mrb[0].mxu0
      %v800 = vadd.f32 0.0, %v799
      %v801 = vpop.f32.mrb[0].mxu0
      %802 = vmatprep.mubr.f32.mxu0 0.0
      %803 = vmatmul.mubr.f32.gmra.mrb[0].mxu0 %v677
      %v804 = vpop.f32.mrb[0].mxu0
      %v805 = vadd.f32 0.0, %v804
      %v806 = vpop.f32.mrb[0].mxu0
      %807 = vmatprep.mubr.f32.mxu0 0.0
      %808 = vmatmul.mubr.f32.gmra.mrb[0].mxu0 %v678
      %v809 = vpop.f32.mrb[0].mxu0
      %v810 = vadd.f32 0.0, %v809
      %v811 = vpop.f32.mrb[0].mxu0
      %812 = vmatprep.mubr.f32.mxu0 0.0
      %813 = vmatmul.mubr.f32.gmra.mrb[0].mxu0 %v679
      %v814 = vpop.f32.mrb[0].mxu0
      %v815 = vadd.f32 0.0, %v814
      %v816 = vpop.f32.mrb[0].mxu0
      %817 = vmatprep.mubr.f32.mxu0 0.0
      %818 = vmatmul.mubr.f32.gmra.mrb[0].mxu0 %v680
      %v819 = vpop.f32.mrb[0].mxu0
      %v820 = vadd.f32 0.0, %v819
      %v821 = vpop.f32.mrb[0].mxu0
      %822 = vmatprep.mubr.f32.mxu0 0.0
      %823 = vmatmul.mubr.f32.gmra.mrb[0].mxu0 %v681
      %v824 = vpop.f32.mrb[0].mxu0
      %v825 = vadd.f32 0.0, %v824
      %v826 = vpop.f32.mrb[0].mxu0
      %827 = vmatprep.mubr.f32.mxu0 0.0
      %828 = vmatmul.mubr.f32.gmra.mrb[0].mxu0 %v682
      %v829 = vpop.f32.mrb[0].mxu0
      %v830 = vadd.f32 0.0, %v829
      %v831 = vpop.f32.mrb[0].mxu0
      %832 = vmatprep.mubr.f32.mxu0 0.0
      %833 = vmatmul.mubr.f32.gmra.mrb[0].mxu0 %v683
      %v834 = vpop.f32.mrb[0].mxu0
      %v835 = vadd.f32 0.0, %v834
      %v836 = vpop.f32.mrb[0].mxu0
      %837 = vmatprep.mubr.f32.mxu0 0.0
      %838 = vmatmul.mubr.f32.gmra.mrb[0].mxu0 %v684
      %v839 = vpop.f32.mrb[0].mxu0
      %v840 = vadd.f32 0.0, %v839
      %v841 = vpop.f32.mrb[0].mxu0
      %842 = vmatprep.mubr.f32.mxu0 0.0
      %843 = vmatmul.mubr.f32.gmra.mrb[0].mxu0 %v685
      %v844 = vpop.f32.mrb[0].mxu0
      %v845 = vadd.f32 0.0, %v844
      %v846 = vpop.f32.mrb[0].mxu0
      %847 = vmatprep.mubr.f32.mxu0 0.0
      %848 = vmatmul.mubr.f32.gmra.mrb[0].mxu0 %v686
      %v849 = vpop.f32.mrb[0].mxu0
      %v850 = vadd.f32 0.0, %v849
      %v851 = vpop.f32.mrb[0].mxu0
      %852 = vmatprep.mubr.f32.mxu0 0.0
      %853 = vmatmul.mubr.f32.gmra.mrb[0].mxu0 %v687
      %v854 = vpop.f32.mrb[0].mxu0
      %v855 = vadd.f32 0.0, %v854
      %v856 = vpop.f32.mrb[0].mxu0
      %857 = vmatprep.mubr.f32.mxu0 0.0
      %858 = vmatmul.mubr.f32.gmra.mrb[0].mxu0 %v688
      %v859 = vpop.f32.mrb[0].mxu0
      %v860 = vadd.f32 0.0, %v859
      %v861 = vpop.f32.mrb[0].mxu0
      %862 = vmatprep.mubr.f32.mxu0 0.0
      %863 = vmatmul.mubr.f32.gmra.mrb[0].mxu0 %v689
      %v864 = vpop.f32.mrb[0].mxu0
      %v865 = vadd.f32 0.0, %v864
      %v866 = vpop.f32.mrb[0].mxu0
      %867 = vmatprep.mubr.f32.mxu0 0.0
      %868 = vmatmul.mubr.f32.gmra.mrb[0].mxu0 %v690
      %v869 = vpop.f32.mrb[0].mxu0
      %v870 = vadd.f32 0.0, %v869
      %v871 = vpop.f32.mrb[0].mxu0
      %872 = vmatprep.mubr.f32.mxu0 0.0
      %873 = vmatmul.mubr.f32.gmra.mrb[0].mxu0 %v691
      %v874 = vpop.f32.mrb[0].mxu0
      %v875 = vadd.f32 0.0, %v874
      %v876 = vpop.f32.mrb[0].mxu0
      %877 = vmatprep.mubr.f32.mxu0 0.0
      %878 = vmatmul.mubr.f32.gmra.mrb[0].mxu0 %v692
      %v879 = vpop.f32.mrb[0].mxu0
      %v880 = vadd.f32 0.0, %v879
      %v881 = vpop.f32.mrb[0].mxu0
      %882 = vmatprep.mubr.f32.mxu0 0.0
      %883 = vmatmul.mubr.f32.gmra.mrb[0].mxu0 %v693
      %v884 = vpop.f32.mrb[0].mxu0
      %v885 = vadd.f32 0.0, %v884
      %v886 = vpop.f32.mrb[0].mxu0
      %887 = vmatprep.mubr.f32.mxu0 0.0
      %888 = vmatmul.mubr.f32.gmra.mrb[0].mxu0 %v694
      %v889 = vpop.f32.mrb[0].mxu0
      %v890 = vadd.f32 0.0, %v889
      %v891 = vpop.f32.mrb[0].mxu0
      %892 = vmatprep.mubr.f32.mxu0 0.0
      %893 = vmatmul.mubr.f32.gmra.mrb[0].mxu0 %v695
      %v894 = vpop.f32.mrb[0].mxu0
      %v895 = vadd.f32 0.0, %v894
      %v896 = vpop.f32.mrb[0].mxu0
      %897 = vmatprep.mubr.f32.mxu0 0.0
      %898 = vmatmul.mubr.f32.gmra.mrb[0].mxu0 %v696
      %v899 = vpop.f32.mrb[0].mxu0
      %v900 = vadd.f32 0.0, %v899
      %v901 = vpop.f32.mrb[0].mxu0
      %902 = vmatprep.mubr.f32.mxu0 0.0
      %903 = vmatmul.mubr.f32.gmra.mrb[0].mxu0 %v697
      %v904 = vpop.f32.mrb[0].mxu0
      %v905 = vadd.f32 0.0, %v904
      %v906 = vpop.f32.mrb[0].mxu0
      %907 = vmatprep.mubr.f32.mxu0 0.0
      %908 = vmatmul.mubr.f32.gmra.mrb[0].mxu0 %v698
      %v909 = vpop.f32.mrb[0].mxu0
      %v910 = vadd.f32 0.0, %v909
      %v911 = vpop.f32.mrb[0].mxu0
      %912 = vmatprep.mubr.f32.mxu0 0.0
      %913 = vmatmul.mubr.f32.gmra.mrb[0].mxu0 %v699
      %v914 = vpop.f32.mrb[0].mxu0
      %v915 = vadd.f32 0.0, %v914
      %v916 = vpop.f32.mrb[0].mxu0
      %917 = vmatprep.mubr.f32.mxu0 0.0
      %918 = vmatmul.mubr.f32.gmra.mrb[0].mxu0 %v700
      %v919 = vpop.f32.mrb[0].mxu0
      %v920 = vadd.f32 0.0, %v919
      %v921 = vpop.f32.mrb[0].mxu0
      %922 = vmatprep.mubr.f32.mxu0 0.0
      %923 = vmatmul.mubr.f32.gmra.mrb[0].mxu0 %v701
      %v924 = vpop.f32.mrb[0].mxu0
      %v925 = vadd.f32 0.0, %v924
      %v926 = vpop.f32.mrb[0].mxu0
      %927 = vmatprep.mubr.f32.mxu0 0.0
      %928 = vmatmul.mubr.f32.gmra.mrb[0].mxu0 %v702
      %v929 = vpop.f32.mrb[0].mxu0
      %v930 = vadd.f32 0.0, %v929
      %v931 = vpop.f32.mrb[0].mxu0
      %932 = vmatprep.mubr.f32.mxu0 0.0
      %933 = vmatmul.mubr.f32.gmra.mrb[0].mxu0 %v703
      %v934 = vpop.f32.mrb[0].mxu0
      %v935 = vadd.f32 0.0, %v934
      %v936 = vpop.f32.mrb[0].mxu0
      %937 = vmatprep.mubr.f32.mxu0 0.0
      %938 = vmatmul.mubr.f32.gmra.mrb[0].mxu0 %v704
      %v939 = vpop.f32.mrb[0].mxu0
      %v940 = vadd.f32 0.0, %v939
      %v941 = vpop.f32.mrb[0].mxu0
      %942 = vmatprep.mubr.f32.mxu0 0.0
      %943 = vmatmul.mubr.f32.gmra.mrb[0].mxu0 %v705
      %v944 = vpop.f32.mrb[0].mxu0
      %v945 = vadd.f32 0.0, %v944
      %v946 = vpop.f32.mrb[0].mxu0
      %947 = vdwg.mxu0
      %948 = vmatprep.subr.mxu0 0.0
      %949 = vmatpush1.msra.mxu0 %v658
      %950 = vmatprep.subr.mxu0 0.0
      %951 = vmatpush1.msra.mxu0 %v659
      %952 = vmatprep.subr.mxu0 0.0
      %953 = vmatpush1.msra.mxu0 %v660
      %954 = vmatprep.subr.mxu0 0.0
      %955 = vmatpush1.msra.mxu0 %v661
      %956 = vmatprep.subr.mxu0 0.0
      %957 = vmatpush1.msra.mxu0 %v662
      %958 = vmatprep.subr.mxu0 0.0
      %959 = vmatpush1.msra.mxu0 %v663
      %960 = vmatprep.subr.mxu0 0.0
      %961 = vmatpush1.msra.mxu0 %v664
      %962 = vmatprep.subr.mxu0 0.0
      %963 = vmatpush1.msra.mxu0 %v665
      %964 = vmatprep.subr.mxu0 0.0
      %965 = vmatpush1.msra.mxu0 %v666
      %966 = vmatprep.subr.mxu0 0.0
      %967 = vmatpush1.msra.mxu0 %v667
      %968 = vmatprep.subr.mxu0 0.0
      %969 = vmatpush1.msra.mxu0 %v668
      %970 = vmatprep.subr.mxu0 0.0
      %971 = vmatpush1.msra.mxu0 %v669
      %972 = vmatprep.subr.mxu0 0.0
      %973 = vmatpush1.msra.mxu0 %v670
      %974 = vmatprep.subr.mxu0 0.0
      %975 = vmatpush1.msra.mxu0 %v671
      %976 = vmatprep.subr.mxu0 0.0
      %977 = vmatpush1.msra.mxu0 %v672
      %978 = vmatprep.subr.mxu0 0.0
      %979 = vmatpush1.msra.mxu0 %v673
      %980 = vmatprep.subr.mxu0 0.0
      %981 = vmatpush1.msra.mxu0 0.0
      %982 = vmatprep.subr.mxu0 0.0
      %983 = vmatpush1.msra.mxu0 0.0
      %984 = vmatprep.subr.mxu0 0.0
      %985 = vmatpush1.msra.mxu0 0.0
      %986 = vmatprep.subr.mxu0 0.0
      %987 = vmatpush1.msra.mxu0 0.0
      %988 = vmatprep.subr.mxu0 0.0
      %989 = vmatpush1.msra.mxu0 0.0
      %990 = vmatprep.subr.mxu0 0.0
      %991 = vmatpush1.msra.mxu0 0.0
      %992 = vmatprep.subr.mxu0 0.0
      %993 = vmatpush1.msra.mxu0 0.0
      %994 = vmatprep.subr.mxu0 0.0
      %995 = vmatpush1.msra.mxu0 0.0
      %996 = vmatprep.subr.mxu0 0.0
      %997 = vmatpush1.msra.mxu0 0.0
      %998 = vmatprep.subr.mxu0 0.0
      %999 = vmatpush1.msra.mxu0 0.0
      %1000 = vmatprep.subr.mxu0 0.0
      %1001 = vmatpush1.msra.mxu0 0.0
      %1002 = vmatprep.subr.mxu0 0.0
      %1003 = vmatpush1.msra.mxu0 0.0
      %1004 = vmatprep.subr.mxu0 0.0
      %1005 = vmatpush1.msra.mxu0 0.0
      %1006 = vmatprep.subr.mxu0 0.0
      %1007 = vmatpush1.msra.mxu0 0.0
      %1008 = vmatprep.subr.mxu0 0.0
      %1009 = vmatpush1.msra.mxu0 0.0
      %1010 = vmatprep.subr.mxu0 0.0
      %1011 = vmatpush1.msra.mxu0 0.0
      %1012 = vmatprep.mubr.f32.mxu0 0.0
      %1013 = vmatmul.mubr.f32.gmra.mrb[0].mxu0 %v626
      %v1014 = vpop.f32.mrb[0].mxu0
      %v1015 = vadd.f32 %v790, %v1014
      %v1016 = vpop.f32.mrb[0].mxu0
      %1017 = vmatprep.mubr.f32.mxu0 0.0
      %1018 = vmatmul.mubr.f32.gmra.mrb[0].mxu0 %v627
      %v1019 = vpop.f32.mrb[0].mxu0
      %v1020 = vadd.f32 %v795, %v1019
      %v1021 = vpop.f32.mrb[0].mxu0
      %1022 = vmatprep.mubr.f32.mxu0 0.0
      %1023 = vmatmul.mubr.f32.gmra.mrb[0].mxu0 %v628
      %v1024 = vpop.f32.mrb[0].mxu0
      %v1025 = vadd.f32 %v800, %v1024
      %v1026 = vpop.f32.mrb[0].mxu0
      %1027 = vmatprep.mubr.f32.mxu0 0.0
      %1028 = vmatmul.mubr.f32.gmra.mrb[0].mxu0 %v629
      %v1029 = vpop.f32.mrb[0].mxu0
      %v1030 = vadd.f32 %v805, %v1029
      %v1031 = vpop.f32.mrb[0].mxu0
      %1032 = vmatprep.mubr.f32.mxu0 0.0
      %1033 = vmatmul.mubr.f32.gmra.mrb[0].mxu0 %v630
      %v1034 = vpop.f32.mrb[0].mxu0
      %v1035 = vadd.f32 %v810, %v1034
      %v1036 = vpop.f32.mrb[0].mxu0
      %1037 = vmatprep.mubr.f32.mxu0 0.0
      %1038 = vmatmul.mubr.f32.gmra.mrb[0].mxu0 %v631
      %v1039 = vpop.f32.mrb[0].mxu0
      %v1040 = vadd.f32 %v815, %v1039
      %v1041 = vpop.f32.mrb[0].mxu0
      %1042 = vmatprep.mubr.f32.mxu0 0.0
      %1043 = vmatmul.mubr.f32.gmra.mrb[0].mxu0 %v632
      %v1044 = vpop.f32.mrb[0].mxu0
      %v1045 = vadd.f32 %v820, %v1044
      %v1046 = vpop.f32.mrb[0].mxu0
      %1047 = vmatprep.mubr.f32.mxu0 0.0
      %1048 = vmatmul.mubr.f32.gmra.mrb[0].mxu0 %v633
      %v1049 = vpop.f32.mrb[0].mxu0
      %v1050 = vadd.f32 %v825, %v1049
      %v1051 = vpop.f32.mrb[0].mxu0
      %1052 = vmatprep.mubr.f32.mxu0 0.0
      %1053 = vmatmul.mubr.f32.gmra.mrb[0].mxu0 %v634
      %v1054 = vpop.f32.mrb[0].mxu0
      %v1055 = vadd.f32 %v830, %v1054
      %v1056 = vpop.f32.mrb[0].mxu0
      %1057 = vmatprep.mubr.f32.mxu0 0.0
      %1058 = vmatmul.mubr.f32.gmra.mrb[0].mxu0 %v635
      %v1059 = vpop.f32.mrb[0].mxu0
      %v1060 = vadd.f32 %v835, %v1059
      %v1061 = vpop.f32.mrb[0].mxu0
      %1062 = vmatprep.mubr.f32.mxu0 0.0
      %1063 = vmatmul.mubr.f32.gmra.mrb[0].mxu0 %v636
      %v1064 = vpop.f32.mrb[0].mxu0
      %v1065 = vadd.f32 %v840, %v1064
      %v1066 = vpop.f32.mrb[0].mxu0
      %1067 = vmatprep.mubr.f32.mxu0 0.0
      %1068 = vmatmul.mubr.f32.gmra.mrb[0].mxu0 %v637
      %v1069 = vpop.f32.mrb[0].mxu0
      %v1070 = vadd.f32 %v845, %v1069
      %v1071 = vpop.f32.mrb[0].mxu0
      %1072 = vmatprep.mubr.f32.mxu0 0.0
      %1073 = vmatmul.mubr.f32.gmra.mrb[0].mxu0 %v638
      %v1074 = vpop.f32.mrb[0].mxu0
      %v1075 = vadd.f32 %v850, %v1074
      %v1076 = vpop.f32.mrb[0].mxu0
      %1077 = vmatprep.mubr.f32.mxu0 0.0
      %1078 = vmatmul.mubr.f32.gmra.mrb[0].mxu0 %v639
      %v1079 = vpop.f32.mrb[0].mxu0
      %v1080 = vadd.f32 %v855, %v1079
      %v1081 = vpop.f32.mrb[0].mxu0
      %1082 = vmatprep.mubr.f32.mxu0 0.0
      %1083 = vmatmul.mubr.f32.gmra.mrb[0].mxu0 %v640
      %v1084 = vpop.f32.mrb[0].mxu0
      %v1085 = vadd.f32 %v860, %v1084
      %v1086 = vpop.f32.mrb[0].mxu0
      %1087 = vmatprep.mubr.f32.mxu0 0.0
      %1088 = vmatmul.mubr.f32.gmra.mrb[0].mxu0 %v641
      %v1089 = vpop.f32.mrb[0].mxu0
      %v1090 = vadd.f32 %v865, %v1089
      %v1091 = vpop.f32.mrb[0].mxu0
      %1092 = vmatprep.mubr.f32.mxu0 0.0
      %1093 = vmatmul.mubr.f32.gmra.mrb[0].mxu0 %v642
      %v1094 = vpop.f32.mrb[0].mxu0
      %v1095 = vadd.f32 %v870, %v1094
      %v1096 = vpop.f32.mrb[0].mxu0
      %1097 = vmatprep.mubr.f32.mxu0 0.0
      %1098 = vmatmul.mubr.f32.gmra.mrb[0].mxu0 %v643
      %v1099 = vpop.f32.mrb[0].mxu0
      %v1100 = vadd.f32 %v875, %v1099
      %v1101 = vpop.f32.mrb[0].mxu0
      %1102 = vmatprep.mubr.f32.mxu0 0.0
      %1103 = vmatmul.mubr.f32.gmra.mrb[0].mxu0 %v644
      %v1104 = vpop.f32.mrb[0].mxu0
      %v1105 = vadd.f32 %v880, %v1104
      %v1106 = vpop.f32.mrb[0].mxu0
      %1107 = vmatprep.mubr.f32.mxu0 0.0
      %1108 = vmatmul.mubr.f32.gmra.mrb[0].mxu0 %v645
      %v1109 = vpop.f32.mrb[0].mxu0
      %v1110 = vadd.f32 %v885, %v1109
      %v1111 = vpop.f32.mrb[0].mxu0
      %1112 = vmatprep.mubr.f32.mxu0 0.0
      %1113 = vmatmul.mubr.f32.gmra.mrb[0].mxu0 %v646
      %v1114 = vpop.f32.mrb[0].mxu0
      %v1115 = vadd.f32 %v890, %v1114
      %v1116 = vpop.f32.mrb[0].mxu0
      %1117 = vmatprep.mubr.f32.mxu0 0.0
      %1118 = vmatmul.mubr.f32.gmra.mrb[0].mxu0 %v647
      %v1119 = vpop.f32.mrb[0].mxu0
      %v1120 = vadd.f32 %v895, %v1119
      %v1121 = vpop.f32.mrb[0].mxu0
      %1122 = vmatprep.mubr.f32.mxu0 0.0
      %1123 = vmatmul.mubr.f32.gmra.mrb[0].mxu0 %v648
      %v1124 = vpop.f32.mrb[0].mxu0
      %v1125 = vadd.f32 %v900, %v1124
      %v1126 = vpop.f32.mrb[0].mxu0
      %1127 = vmatprep.mubr.f32.mxu0 0.0
      %1128 = vmatmul.mubr.f32.gmra.mrb[0].mxu0 %v649
      %v1129 = vpop.f32.mrb[0].mxu0
      %v1130 = vadd.f32 %v905, %v1129
      %v1131 = vpop.f32.mrb[0].mxu0
      %1132 = vmatprep.mubr.f32.mxu0 0.0
      %1133 = vmatmul.mubr.f32.gmra.mrb[0].mxu0 %v650
      %v1134 = vpop.f32.mrb[0].mxu0
      %v1135 = vadd.f32 %v910, %v1134
      %v1136 = vpop.f32.mrb[0].mxu0
      %1137 = vmatprep.mubr.f32.mxu0 0.0
      %1138 = vmatmul.mubr.f32.gmra.mrb[0].mxu0 %v651
      %v1139 = vpop.f32.mrb[0].mxu0
      %v1140 = vadd.f32 %v915, %v1139
      %v1141 = vpop.f32.mrb[0].mxu0
      %1142 = vmatprep.mubr.f32.mxu0 0.0
      %1143 = vmatmul.mubr.f32.gmra.mrb[0].mxu0 %v652
      %v1144 = vpop.f32.mrb[0].mxu0
      %v1145 = vadd.f32 %v920, %v1144
      %v1146 = vpop.f32.mrb[0].mxu0
      %1147 = vmatprep.mubr.f32.mxu0 0.0
      %1148 = vmatmul.mubr.f32.gmra.mrb[0].mxu0 %v653
      %v1149 = vpop.f32.mrb[0].mxu0
      %v1150 = vadd.f32 %v925, %v1149
      %v1151 = vpop.f32.mrb[0].mxu0
      %1152 = vmatprep.mubr.f32.mxu0 0.0
      %1153 = vmatmul.mubr.f32.gmra.mrb[0].mxu0 %v654
      %v1154 = vpop.f32.mrb[0].mxu0
      %v1155 = vadd.f32 %v930, %v1154
      %v1156 = vpop.f32.mrb[0].mxu0
      %1157 = vmatprep.mubr.f32.mxu0 0.0
      %1158 = vmatmul.mubr.f32.gmra.mrb[0].mxu0 %v655
      %v1159 = vpop.f32.mrb[0].mxu0
      %v1160 = vadd.f32 %v935, %v1159
      %v1161 = vpop.f32.mrb[0].mxu0
      %1162 = vmatprep.mubr.f32.mxu0 0.0
      %1163 = vmatmul.mubr.f32.gmra.mrb[0].mxu0 %v656
      %v1164 = vpop.f32.mrb[0].mxu0
      %v1165 = vadd.f32 %v940, %v1164
      %v1166 = vpop.f32.mrb[0].mxu0
      %1167 = vmatprep.mubr.f32.mxu0 0.0
      %1168 = vmatmul.mubr.f32.gmra.mrb[0].mxu0 %v657
      %v1169 = vpop.f32.mrb[0].mxu0
      %v1170 = vadd.f32 %v945, %v1169
      %v1171 = vpop.f32.mrb[0].mxu0
      %1172 = vdwg.mxu0
      %v1173 = vld [vmem:[%s339 + $0x9] sm:$0xff]
      %v1174 = vld [vmem:[%s339 + $0x11] sm:$0xff]
      %v1175 = vld [vmem:[%s339 + $0x19] sm:$0xff]
      %v1176 = vld [vmem:[%s339 + $0x21] sm:$0xff]
      %v1177 = vld [vmem:[%s339 + $0x29] sm:$0xff]
      %v1178 = vld [vmem:[%s339 + $0x31] sm:$0xff]
      %v1179 = vld [vmem:[%s339 + $0x39] sm:$0xff]
      %v1180 = vld [vmem:[%s339 + $0x41] sm:$0xff]
      %v1181 = vld [vmem:[%s339 + $0x49] sm:$0xff]
      %v1182 = vld [vmem:[%s339 + $0x51] sm:$0xff]
      %v1183 = vld [vmem:[%s339 + $0x59] sm:$0xff]
      %v1184 = vld [vmem:[%s339 + $0x61] sm:$0xff]
      %v1185 = vld [vmem:[%s339 + $0x69] sm:$0xff]
      %v1186 = vld [vmem:[%s339 + $0x71] sm:$0xff]
      %v1187 = vld [vmem:[%s339 + $0x79] sm:$0xff]
      %v1188 = vld [vmem:[%s339 + $0x81] sm:$0xff]
      %v1189 = vld [vmem:[%s339 + $0x89] sm:$0xff]
      %v1190 = vld [vmem:[%s339 + $0x91] sm:$0xff]
      %v1191 = vld [vmem:[%s339 + $0x99] sm:$0xff]
      %v1192 = vld [vmem:[%s339 + $0xa1] sm:$0xff]
      %v1193 = vld [vmem:[%s339 + $0xa9] sm:$0xff]
      %v1194 = vld [vmem:[%s339 + $0xb1] sm:$0xff]
      %v1195 = vld [vmem:[%s339 + $0xb9] sm:$0xff]
      %v1196 = vld [vmem:[%s339 + $0xc1] sm:$0xff]
      %v1197 = vld [vmem:[%s339 + $0xc9] sm:$0xff]
      %v1198 = vld [vmem:[%s339 + $0xd1] sm:$0xff]
      %v1199 = vld [vmem:[%s339 + $0xd9] sm:$0xff]
      %v1200 = vld [vmem:[%s339 + $0xe1] sm:$0xff]
      %v1201 = vld [vmem:[%s339 + $0xe9] sm:$0xff]
      %v1202 = vld [vmem:[%s339 + $0xf1] sm:$0xff]
      %v1203 = vld [vmem:[%s339 + $0xf9] sm:$0xff]
      %v1204 = vld [vmem:[%s339 + $0x101] sm:$0xff]
      %1206 = vset.pattern.permute.xlu0 0
      %1207 = vperm.xlu0 %1206, %v402
      %v1208 = vpop.permute.xlu0 %1207
      %1211 = vset.pattern.permute.xlu0 0
      %1212 = vperm.xlu0 %1211, %v403
      %v1213 = vpop.permute.xlu0 %1212
      %1216 = vset.pattern.permute.xlu0 0
      %1217 = vperm.xlu0 %1216, %v404
      %v1218 = vpop.permute.xlu0 %1217
      %1221 = vset.pattern.permute.xlu0 0
      %1222 = vperm.xlu0 %1221, %v405
      %v1223 = vpop.permute.xlu0 %1222
      %1226 = vset.pattern.permute.xlu0 0
      %1227 = vperm.xlu0 %1226, %v406
      %v1228 = vpop.permute.xlu0 %1227
      %1231 = vset.pattern.permute.xlu0 0
      %1232 = vperm.xlu0 %1231, %v407
      %v1233 = vpop.permute.xlu0 %1232
      %1236 = vset.pattern.permute.xlu0 0
      %1237 = vperm.xlu0 %1236, %v408
      %v1238 = vpop.permute.xlu0 %1237
      %1241 = vset.pattern.permute.xlu0 0
      %1242 = vperm.xlu0 %1241, %v409
      %v1243 = vpop.permute.xlu0 %1242
      %1246 = vset.pattern.permute.xlu0 0
      %1247 = vperm.xlu0 %1246, %v410
      %v1248 = vpop.permute.xlu0 %1247
      %1251 = vset.pattern.permute.xlu0 0
      %1252 = vperm.xlu0 %1251, %v411
      %v1253 = vpop.permute.xlu0 %1252
      %1256 = vset.pattern.permute.xlu0 0
      %1257 = vperm.xlu0 %1256, %v412
      %v1258 = vpop.permute.xlu0 %1257
      %1261 = vset.pattern.permute.xlu0 0
      %1262 = vperm.xlu0 %1261, %v413
      %v1263 = vpop.permute.xlu0 %1262
      %1266 = vset.pattern.permute.xlu0 0
      %1267 = vperm.xlu0 %1266, %v414
      %v1268 = vpop.permute.xlu0 %1267
      %1271 = vset.pattern.permute.xlu0 0
      %1272 = vperm.xlu0 %1271, %v415
      %v1273 = vpop.permute.xlu0 %1272
      %1276 = vset.pattern.permute.xlu0 0
      %1277 = vperm.xlu0 %1276, %v416
      %v1278 = vpop.permute.xlu0 %1277
      %1281 = vset.pattern.permute.xlu0 0
      %1282 = vperm.xlu0 %1281, %v417
      %v1283 = vpop.permute.xlu0 %1282
      %1286 = vset.pattern.permute.xlu0 0
      %1287 = vperm.xlu0 %1286, %v418
      %v1288 = vpop.permute.xlu0 %1287
      %1291 = vset.pattern.permute.xlu0 0
      %1292 = vperm.xlu0 %1291, %v419
      %v1293 = vpop.permute.xlu0 %1292
      %1296 = vset.pattern.permute.xlu0 0
      %1297 = vperm.xlu0 %1296, %v420
      %v1298 = vpop.permute.xlu0 %1297
      %1301 = vset.pattern.permute.xlu0 0
      %1302 = vperm.xlu0 %1301, %v421
      %v1303 = vpop.permute.xlu0 %1302
      %1306 = vset.pattern.permute.xlu0 0
      %1307 = vperm.xlu0 %1306, %v422
      %v1308 = vpop.permute.xlu0 %1307
      %1311 = vset.pattern.permute.xlu0 0
      %1312 = vperm.xlu0 %1311, %v423
      %v1313 = vpop.permute.xlu0 %1312
      %1316 = vset.pattern.permute.xlu0 0
      %1317 = vperm.xlu0 %1316, %v424
      %v1318 = vpop.permute.xlu0 %1317
      %1321 = vset.pattern.permute.xlu0 0
      %1322 = vperm.xlu0 %1321, %v425
      %v1323 = vpop.permute.xlu0 %1322
      %1326 = vset.pattern.permute.xlu0 0
      %1327 = vperm.xlu0 %1326, %v426
      %v1328 = vpop.permute.xlu0 %1327
      %1331 = vset.pattern.permute.xlu0 0
      %1332 = vperm.xlu0 %1331, %v427
      %v1333 = vpop.permute.xlu0 %1332
      %1336 = vset.pattern.permute.xlu0 0
      %1337 = vperm.xlu0 %1336, %v428
      %v1338 = vpop.permute.xlu0 %1337
      %1341 = vset.pattern.permute.xlu0 0
      %1342 = vperm.xlu0 %1341, %v429
      %v1343 = vpop.permute.xlu0 %1342
      %1346 = vset.pattern.permute.xlu0 0
      %1347 = vperm.xlu0 %1346, %v430
      %v1348 = vpop.permute.xlu0 %1347
      %1351 = vset.pattern.permute.xlu0 0
      %1352 = vperm.xlu0 %1351, %v431
      %v1353 = vpop.permute.xlu0 %1352
      %1356 = vset.pattern.permute.xlu0 0
      %1357 = vperm.xlu0 %1356, %v432
      %v1358 = vpop.permute.xlu0 %1357
      %1361 = vset.pattern.permute.xlu0 0
      %1362 = vperm.xlu0 %1361, %v433
      %v1363 = vpop.permute.xlu0 %1362
      %v1365 = vmul.f32 %v1173, %v1208
      %v1366 = vmul.f32 %v1174, %v1213
      %v1367 = vmul.f32 %v1175, %v1218
      %v1368 = vmul.f32 %v1176, %v1223
      %v1369 = vmul.f32 %v1177, %v1228
      %v1370 = vmul.f32 %v1178, %v1233
      %v1371 = vmul.f32 %v1179, %v1238
      %v1372 = vmul.f32 %v1180, %v1243
      %v1373 = vmul.f32 %v1181, %v1248
      %v1374 = vmul.f32 %v1182, %v1253
      %v1375 = vmul.f32 %v1183, %v1258
      %v1376 = vmul.f32 %v1184, %v1263
      %v1377 = vmul.f32 %v1185, %v1268
      %v1378 = vmul.f32 %v1186, %v1273
      %v1379 = vmul.f32 %v1187, %v1278
      %v1380 = vmul.f32 %v1188, %v1283
      %v1381 = vmul.f32 %v1189, %v1288
      %v1382 = vmul.f32 %v1190, %v1293
      %v1383 = vmul.f32 %v1191, %v1298
      %v1384 = vmul.f32 %v1192, %v1303
      %v1385 = vmul.f32 %v1193, %v1308
      %v1386 = vmul.f32 %v1194, %v1313
      %v1387 = vmul.f32 %v1195, %v1318
      %v1388 = vmul.f32 %v1196, %v1323
      %v1389 = vmul.f32 %v1197, %v1328
      %v1390 = vmul.f32 %v1198, %v1333
      %v1391 = vmul.f32 %v1199, %v1338
      %v1392 = vmul.f32 %v1200, %v1343
      %v1393 = vmul.f32 %v1201, %v1348
      %v1394 = vmul.f32 %v1202, %v1353
      %v1395 = vmul.f32 %v1203, %v1358
      %v1396 = vmul.f32 %v1204, %v1363
      %s1397 = scalar_lea.vmem %s343, 256
      %v1398 = vld [vmem:[%s1397] sm:$0xff]
      %v1399 = vld [vmem:[%s1397 + $0x8] sm:$0xff]
      %v1400 = vld [vmem:[%s1397 + $0x10] sm:$0xff]
      %v1401 = vld [vmem:[%s1397 + $0x18] sm:$0xff]
      %v1402 = vld [vmem:[%s1397 + $0x20] sm:$0xff]
      %v1403 = vld [vmem:[%s1397 + $0x28] sm:$0xff]
      %v1404 = vld [vmem:[%s1397 + $0x30] sm:$0xff]
      %v1405 = vld [vmem:[%s1397 + $0x38] sm:$0xff]
      %v1406 = vld [vmem:[%s1397 + $0x40] sm:$0xff]
      %v1407 = vld [vmem:[%s1397 + $0x48] sm:$0xff]
      %v1408 = vld [vmem:[%s1397 + $0x50] sm:$0xff]
      %v1409 = vld [vmem:[%s1397 + $0x58] sm:$0xff]
      %v1410 = vld [vmem:[%s1397 + $0x60] sm:$0xff]
      %v1411 = vld [vmem:[%s1397 + $0x68] sm:$0xff]
      %v1412 = vld [vmem:[%s1397 + $0x70] sm:$0xff]
      %v1413 = vld [vmem:[%s1397 + $0x78] sm:$0xff]
      %1414 = vmatprep.subr.mxu0 0.0
      %1415 = vmatpush1.msra.mxu0 %v1398
      %1416 = vmatprep.subr.mxu0 0.0
      %1417 = vmatpush1.msra.mxu0 %v1399
      %1418 = vmatprep.subr.mxu0 0.0
      %1419 = vmatpush1.msra.mxu0 %v1400
      %1420 = vmatprep.subr.mxu0 0.0
      %1421 = vmatpush1.msra.mxu0 %v1401
      %1422 = vmatprep.subr.mxu0 0.0
      %1423 = vmatpush1.msra.mxu0 %v1402
      %1424 = vmatprep.subr.mxu0 0.0
      %1425 = vmatpush1.msra.mxu0 %v1403
      %1426 = vmatprep.subr.mxu0 0.0
      %1427 = vmatpush1.msra.mxu0 %v1404
      %1428 = vmatprep.subr.mxu0 0.0
      %1429 = vmatpush1.msra.mxu0 %v1405
      %1430 = vmatprep.subr.mxu0 0.0
      %1431 = vmatpush1.msra.mxu0 %v1406
      %1432 = vmatprep.subr.mxu0 0.0
      %1433 = vmatpush1.msra.mxu0 %v1407
      %1434 = vmatprep.subr.mxu0 0.0
      %1435 = vmatpush1.msra.mxu0 %v1408
      %1436 = vmatprep.subr.mxu0 0.0
      %1437 = vmatpush1.msra.mxu0 %v1409
      %1438 = vmatprep.subr.mxu0 0.0
      %1439 = vmatpush1.msra.mxu0 %v1410
      %1440 = vmatprep.subr.mxu0 0.0
      %1441 = vmatpush1.msra.mxu0 %v1411
      %1442 = vmatprep.subr.mxu0 0.0
      %1443 = vmatpush1.msra.mxu0 %v1412
      %1444 = vmatprep.subr.mxu0 0.0
      %1445 = vmatpush1.msra.mxu0 %v1413
      %1446 = vmatprep.subr.mxu0 0.0
      %1447 = vmatpush1.msra.mxu0 0.0
      %1448 = vmatprep.subr.mxu0 0.0
      %1449 = vmatpush1.msra.mxu0 0.0
      %1450 = vmatprep.subr.mxu0 0.0
      %1451 = vmatpush1.msra.mxu0 0.0
      %1452 = vmatprep.subr.mxu0 0.0
      %1453 = vmatpush1.msra.mxu0 0.0
      %1454 = vmatprep.subr.mxu0 0.0
      %1455 = vmatpush1.msra.mxu0 0.0
      %1456 = vmatprep.subr.mxu0 0.0
      %1457 = vmatpush1.msra.mxu0 0.0
      %1458 = vmatprep.subr.mxu0 0.0
      %1459 = vmatpush1.msra.mxu0 0.0
      %1460 = vmatprep.subr.mxu0 0.0
      %1461 = vmatpush1.msra.mxu0 0.0
      %1462 = vmatprep.subr.mxu0 0.0
      %1463 = vmatpush1.msra.mxu0 0.0
      %1464 = vmatprep.subr.mxu0 0.0
      %1465 = vmatpush1.msra.mxu0 0.0
      %1466 = vmatprep.subr.mxu0 0.0
      %1467 = vmatpush1.msra.mxu0 0.0
      %1468 = vmatprep.subr.mxu0 0.0
      %1469 = vmatpush1.msra.mxu0 0.0
      %1470 = vmatprep.subr.mxu0 0.0
      %1471 = vmatpush1.msra.mxu0 0.0
      %1472 = vmatprep.subr.mxu0 0.0
      %1473 = vmatpush1.msra.mxu0 0.0
      %1474 = vmatprep.subr.mxu0 0.0
      %1475 = vmatpush1.msra.mxu0 0.0
      %1476 = vmatprep.subr.mxu0 0.0
      %1477 = vmatpush1.msra.mxu0 0.0
      %1478 = vmatprep.mubr.f32.mxu0 0.0
      %1479 = vmatmul.mubr.f32.gmra.mrb[0].mxu0 %v1365
      %v1480 = vpop.f32.mrb[0].mxu0
      %v1481 = vadd.f32 0.0, %v1480
      %v1482 = vpop.f32.mrb[0].mxu0
      %1483 = vmatprep.mubr.f32.mxu0 0.0
      %1484 = vmatmul.mubr.f32.gmra.mrb[0].mxu0 %v1366
      %v1485 = vpop.f32.mrb[0].mxu0
      %v1486 = vadd.f32 0.0, %v1485
      %v1487 = vpop.f32.mrb[0].mxu0
      %1488 = vmatprep.mubr.f32.mxu0 0.0
      %1489 = vmatmul.mubr.f32.gmra.mrb[0].mxu0 %v1367
      %v1490 = vpop.f32.mrb[0].mxu0
      %v1491 = vadd.f32 0.0, %v1490
      %v1492 = vpop.f32.mrb[0].mxu0
      %1493 = vmatprep.mubr.f32.mxu0 0.0
      %1494 = vmatmul.mubr.f32.gmra.mrb[0].mxu0 %v1368
      %v1495 = vpop.f32.mrb[0].mxu0
      %v1496 = vadd.f32 0.0, %v1495
      %v1497 = vpop.f32.mrb[0].mxu0
      %1498 = vmatprep.mubr.f32.mxu0 0.0
      %1499 = vmatmul.mubr.f32.gmra.mrb[0].mxu0 %v1369
      %v1500 = vpop.f32.mrb[0].mxu0
      %v1501 = vadd.f32 0.0, %v1500
      %v1502 = vpop.f32.mrb[0].mxu0
      %1503 = vmatprep.mubr.f32.mxu0 0.0
      %1504 = vmatmul.mubr.f32.gmra.mrb[0].mxu0 %v1370
      %v1505 = vpop.f32.mrb[0].mxu0
      %v1506 = vadd.f32 0.0, %v1505
      %v1507 = vpop.f32.mrb[0].mxu0
      %1508 = vmatprep.mubr.f32.mxu0 0.0
      %1509 = vmatmul.mubr.f32.gmra.mrb[0].mxu0 %v1371
      %v1510 = vpop.f32.mrb[0].mxu0
      %v1511 = vadd.f32 0.0, %v1510
      %v1512 = vpop.f32.mrb[0].mxu0
      %1513 = vmatprep.mubr.f32.mxu0 0.0
      %1514 = vmatmul.mubr.f32.gmra.mrb[0].mxu0 %v1372
      %v1515 = vpop.f32.mrb[0].mxu0
      %v1516 = vadd.f32 0.0, %v1515
      %v1517 = vpop.f32.mrb[0].mxu0
      %1518 = vmatprep.mubr.f32.mxu0 0.0
      %1519 = vmatmul.mubr.f32.gmra.mrb[0].mxu0 %v1373
      %v1520 = vpop.f32.mrb[0].mxu0
      %v1521 = vadd.f32 0.0, %v1520
      %v1522 = vpop.f32.mrb[0].mxu0
      %1523 = vmatprep.mubr.f32.mxu0 0.0
      %1524 = vmatmul.mubr.f32.gmra.mrb[0].mxu0 %v1374
      %v1525 = vpop.f32.mrb[0].mxu0
      %v1526 = vadd.f32 0.0, %v1525
      %v1527 = vpop.f32.mrb[0].mxu0
      %1528 = vmatprep.mubr.f32.mxu0 0.0
      %1529 = vmatmul.mubr.f32.gmra.mrb[0].mxu0 %v1375
      %v1530 = vpop.f32.mrb[0].mxu0
      %v1531 = vadd.f32 0.0, %v1530
      %v1532 = vpop.f32.mrb[0].mxu0
      %1533 = vmatprep.mubr.f32.mxu0 0.0
      %1534 = vmatmul.mubr.f32.gmra.mrb[0].mxu0 %v1376
      %v1535 = vpop.f32.mrb[0].mxu0
      %v1536 = vadd.f32 0.0, %v1535
      %v1537 = vpop.f32.mrb[0].mxu0
      %1538 = vmatprep.mubr.f32.mxu0 0.0
      %1539 = vmatmul.mubr.f32.gmra.mrb[0].mxu0 %v1377
      %v1540 = vpop.f32.mrb[0].mxu0
      %v1541 = vadd.f32 0.0, %v1540
      %v1542 = vpop.f32.mrb[0].mxu0
      %1543 = vmatprep.mubr.f32.mxu0 0.0
      %1544 = vmatmul.mubr.f32.gmra.mrb[0].mxu0 %v1378
      %v1545 = vpop.f32.mrb[0].mxu0
      %v1546 = vadd.f32 0.0, %v1545
      %v1547 = vpop.f32.mrb[0].mxu0
      %1548 = vmatprep.mubr.f32.mxu0 0.0
      %1549 = vmatmul.mubr.f32.gmra.mrb[0].mxu0 %v1379
      %v1550 = vpop.f32.mrb[0].mxu0
      %v1551 = vadd.f32 0.0, %v1550
      %v1552 = vpop.f32.mrb[0].mxu0
      %1553 = vmatprep.mubr.f32.mxu0 0.0
      %1554 = vmatmul.mubr.f32.gmra.mrb[0].mxu0 %v1380
      %v1555 = vpop.f32.mrb[0].mxu0
      %v1556 = vadd.f32 0.0, %v1555
      %v1557 = vpop.f32.mrb[0].mxu0
      %1558 = vmatprep.mubr.f32.mxu0 0.0
      %1559 = vmatmul.mubr.f32.gmra.mrb[0].mxu0 %v1381
      %v1560 = vpop.f32.mrb[0].mxu0
      %v1561 = vadd.f32 0.0, %v1560
      %v1562 = vpop.f32.mrb[0].mxu0
      %1563 = vmatprep.mubr.f32.mxu0 0.0
      %1564 = vmatmul.mubr.f32.gmra.mrb[0].mxu0 %v1382
      %v1565 = vpop.f32.mrb[0].mxu0
      %v1566 = vadd.f32 0.0, %v1565
      %v1567 = vpop.f32.mrb[0].mxu0
      %1568 = vmatprep.mubr.f32.mxu0 0.0
      %1569 = vmatmul.mubr.f32.gmra.mrb[0].mxu0 %v1383
      %v1570 = vpop.f32.mrb[0].mxu0
      %v1571 = vadd.f32 0.0, %v1570
      %v1572 = vpop.f32.mrb[0].mxu0
      %1573 = vmatprep.mubr.f32.mxu0 0.0
      %1574 = vmatmul.mubr.f32.gmra.mrb[0].mxu0 %v1384
      %v1575 = vpop.f32.mrb[0].mxu0
      %v1576 = vadd.f32 0.0, %v1575
      %v1577 = vpop.f32.mrb[0].mxu0
      %1578 = vmatprep.mubr.f32.mxu0 0.0
      %1579 = vmatmul.mubr.f32.gmra.mrb[0].mxu0 %v1385
      %v1580 = vpop.f32.mrb[0].mxu0
      %v1581 = vadd.f32 0.0, %v1580
      %v1582 = vpop.f32.mrb[0].mxu0
      %1583 = vmatprep.mubr.f32.mxu0 0.0
      %1584 = vmatmul.mubr.f32.gmra.mrb[0].mxu0 %v1386
      %v1585 = vpop.f32.mrb[0].mxu0
      %v1586 = vadd.f32 0.0, %v1585
      %v1587 = vpop.f32.mrb[0].mxu0
      %1588 = vmatprep.mubr.f32.mxu0 0.0
      %1589 = vmatmul.mubr.f32.gmra.mrb[0].mxu0 %v1387
      %v1590 = vpop.f32.mrb[0].mxu0
      %v1591 = vadd.f32 0.0, %v1590
      %v1592 = vpop.f32.mrb[0].mxu0
      %1593 = vmatprep.mubr.f32.mxu0 0.0
      %1594 = vmatmul.mubr.f32.gmra.mrb[0].mxu0 %v1388
      %v1595 = vpop.f32.mrb[0].mxu0
      %v1596 = vadd.f32 0.0, %v1595
      %v1597 = vpop.f32.mrb[0].mxu0
      %1598 = vmatprep.mubr.f32.mxu0 0.0
      %1599 = vmatmul.mubr.f32.gmra.mrb[0].mxu0 %v1389
      %v1600 = vpop.f32.mrb[0].mxu0
      %v1601 = vadd.f32 0.0, %v1600
      %v1602 = vpop.f32.mrb[0].mxu0
      %1603 = vmatprep.mubr.f32.mxu0 0.0
      %1604 = vmatmul.mubr.f32.gmra.mrb[0].mxu0 %v1390
      %v1605 = vpop.f32.mrb[0].mxu0
      %v1606 = vadd.f32 0.0, %v1605
      %v1607 = vpop.f32.mrb[0].mxu0
      %1608 = vmatprep.mubr.f32.mxu0 0.0
      %1609 = vmatmul.mubr.f32.gmra.mrb[0].mxu0 %v1391
      %v1610 = vpop.f32.mrb[0].mxu0
      %v1611 = vadd.f32 0.0, %v1610
      %v1612 = vpop.f32.mrb[0].mxu0
      %1613 = vmatprep.mubr.f32.mxu0 0.0
      %1614 = vmatmul.mubr.f32.gmra.mrb[0].mxu0 %v1392
      %v1615 = vpop.f32.mrb[0].mxu0
      %v1616 = vadd.f32 0.0, %v1615
      %v1617 = vpop.f32.mrb[0].mxu0
      %1618 = vmatprep.mubr.f32.mxu0 0.0
      %1619 = vmatmul.mubr.f32.gmra.mrb[0].mxu0 %v1393
      %v1620 = vpop.f32.mrb[0].mxu0
      %v1621 = vadd.f32 0.0, %v1620
      %v1622 = vpop.f32.mrb[0].mxu0
      %1623 = vmatprep.mubr.f32.mxu0 0.0
      %1624 = vmatmul.mubr.f32.gmra.mrb[0].mxu0 %v1394
      %v1625 = vpop.f32.mrb[0].mxu0
      %v1626 = vadd.f32 0.0, %v1625
      %v1627 = vpop.f32.mrb[0].mxu0
      %1628 = vmatprep.mubr.f32.mxu0 0.0
      %1629 = vmatmul.mubr.f32.gmra.mrb[0].mxu0 %v1395
      %v1630 = vpop.f32.mrb[0].mxu0
      %v1631 = vadd.f32 0.0, %v1630
      %v1632 = vpop.f32.mrb[0].mxu0
      %1633 = vmatprep.mubr.f32.mxu0 0.0
      %1634 = vmatmul.mubr.f32.gmra.mrb[0].mxu0 %v1396
      %v1635 = vpop.f32.mrb[0].mxu0
      %v1636 = vadd.f32 0.0, %v1635
      %v1637 = vpop.f32.mrb[0].mxu0
      %1638 = vdwg.mxu0
      %v1639 = vadd.f32 %v1015, %v1481
      %v1640 = vadd.f32 %v1020, %v1486
      %v1641 = vadd.f32 %v1025, %v1491
      %v1642 = vadd.f32 %v1030, %v1496
      %v1643 = vadd.f32 %v1035, %v1501
      %v1644 = vadd.f32 %v1040, %v1506
      %v1645 = vadd.f32 %v1045, %v1511
      %v1646 = vadd.f32 %v1050, %v1516
      %v1647 = vadd.f32 %v1055, %v1521
      %v1648 = vadd.f32 %v1060, %v1526
      %v1649 = vadd.f32 %v1065, %v1531
      %v1650 = vadd.f32 %v1070, %v1536
      %v1651 = vadd.f32 %v1075, %v1541
      %v1652 = vadd.f32 %v1080, %v1546
      %v1653 = vadd.f32 %v1085, %v1551
      %v1654 = vadd.f32 %v1090, %v1556
      %v1655 = vadd.f32 %v1095, %v1561
      %v1656 = vadd.f32 %v1100, %v1566
      %v1657 = vadd.f32 %v1105, %v1571
      %v1658 = vadd.f32 %v1110, %v1576
      %v1659 = vadd.f32 %v1115, %v1581
      %v1660 = vadd.f32 %v1120, %v1586
      %v1661 = vadd.f32 %v1125, %v1591
      %v1662 = vadd.f32 %v1130, %v1596
      %v1663 = vadd.f32 %v1135, %v1601
      %v1664 = vadd.f32 %v1140, %v1606
      %v1665 = vadd.f32 %v1145, %v1611
      %v1666 = vadd.f32 %v1150, %v1616
      %v1667 = vadd.f32 %v1155, %v1621
      %v1668 = vadd.f32 %v1160, %v1626
      %v1669 = vadd.f32 %v1165, %v1631
      %v1670 = vadd.f32 %v1170, %v1636
      %v1671 = vld [vmem:[%s339 + $0x17] sm:$0xff]
      %v1672 = vld [vmem:[%s339 + $0x1f] sm:$0xff]
      %v1673 = vld [vmem:[%s339 + $0x27] sm:$0xff]
      %v1674 = vld [vmem:[%s339 + $0x2f] sm:$0xff]
      %v1675 = vld [vmem:[%s339 + $0x37] sm:$0xff]
      %v1676 = vld [vmem:[%s339 + $0x3f] sm:$0xff]
      %v1677 = vld [vmem:[%s339 + $0x47] sm:$0xff]
      %v1678 = vld [vmem:[%s339 + $0x4f] sm:$0xff]
      %v1679 = vld [vmem:[%s339 + $0x57] sm:$0xff]
      %v1680 = vld [vmem:[%s339 + $0x5f] sm:$0xff]
      %v1681 = vld [vmem:[%s339 + $0x67] sm:$0xff]
      %v1682 = vld [vmem:[%s339 + $0x6f] sm:$0xff]
      %v1683 = vld [vmem:[%s339 + $0x77] sm:$0xff]
      %v1684 = vld [vmem:[%s339 + $0x7f] sm:$0xff]
      %v1685 = vld [vmem:[%s339 + $0x87] sm:$0xff]
      %v1686 = vld [vmem:[%s339 + $0x8f] sm:$0xff]
      %v1687 = vld [vmem:[%s339 + $0x97] sm:$0xff]
      %v1688 = vld [vmem:[%s339 + $0x9f] sm:$0xff]
      %v1689 = vld [vmem:[%s339 + $0xa7] sm:$0xff]
      %v1690 = vld [vmem:[%s339 + $0xaf] sm:$0xff]
      %v1691 = vld [vmem:[%s339 + $0xb7] sm:$0xff]
      %v1692 = vld [vmem:[%s339 + $0xbf] sm:$0xff]
      %v1693 = vld [vmem:[%s339 + $0xc7] sm:$0xff]
      %v1694 = vld [vmem:[%s339 + $0xcf] sm:$0xff]
      %v1695 = vld [vmem:[%s339 + $0xd7] sm:$0xff]
      %v1696 = vld [vmem:[%s339 + $0xdf] sm:$0xff]
      %v1697 = vld [vmem:[%s339 + $0xe7] sm:$0xff]
      %v1698 = vld [vmem:[%s339 + $0xef] sm:$0xff]
      %v1699 = vld [vmem:[%s339 + $0xf7] sm:$0xff]
      %v1700 = vld [vmem:[%s339 + $0xff] sm:$0xff]
      %v1701 = vld [vmem:[%s339 + $0x107] sm:$0xff]
      %v1702 = vld [vmem:[%s339 + $0x10f] sm:$0xff]
      %v1703 = vmul.f32 %v1671, %v469
      %v1704 = vmul.f32 %v1672, %v474
      %v1705 = vmul.f32 %v1673, %v479
      %v1706 = vmul.f32 %v1674, %v484
      %v1707 = vmul.f32 %v1675, %v489
      %v1708 = vmul.f32 %v1676, %v494
      %v1709 = vmul.f32 %v1677, %v499
      %v1710 = vmul.f32 %v1678, %v504
      %v1711 = vmul.f32 %v1679, %v509
      %v1712 = vmul.f32 %v1680, %v514
      %v1713 = vmul.f32 %v1681, %v519
      %v1714 = vmul.f32 %v1682, %v524
      %v1715 = vmul.f32 %v1683, %v529
      %v1716 = vmul.f32 %v1684, %v534
      %v1717 = vmul.f32 %v1685, %v539
      %v1718 = vmul.f32 %v1686, %v544
      %v1719 = vmul.f32 %v1687, %v549
      %v1720 = vmul.f32 %v1688, %v554
      %v1721 = vmul.f32 %v1689, %v559
      %v1722 = vmul.f32 %v1690, %v564
      %v1723 = vmul.f32 %v1691, %v569
      %v1724 = vmul.f32 %v1692, %v574
      %v1725 = vmul.f32 %v1693, %v579
      %v1726 = vmul.f32 %v1694, %v584
      %v1727 = vmul.f32 %v1695, %v589
      %v1728 = vmul.f32 %v1696, %v594
      %v1729 = vmul.f32 %v1697, %v599
      %v1730 = vmul.f32 %v1698, %v604
      %v1731 = vmul.f32 %v1699, %v609
      %v1732 = vmul.f32 %v1700, %v614
      %v1733 = vmul.f32 %v1701, %v619
      %v1734 = vmul.f32 %v1702, %v624
      %s1735 = scalar_lea.vmem %s343, 384
      %v1736 = vld [vmem:[%s1735] sm:$0xff]
      %v1737 = vld [vmem:[%s1735 + $0x8] sm:$0xff]
      %v1738 = vld [vmem:[%s1735 + $0x10] sm:$0xff]
      %v1739 = vld [vmem:[%s1735 + $0x18] sm:$0xff]
      %v1740 = vld [vmem:[%s1735 + $0x20] sm:$0xff]
      %v1741 = vld [vmem:[%s1735 + $0x28] sm:$0xff]
      %v1742 = vld [vmem:[%s1735 + $0x30] sm:$0xff]
      %v1743 = vld [vmem:[%s1735 + $0x38] sm:$0xff]
      %v1744 = vld [vmem:[%s1735 + $0x40] sm:$0xff]
      %v1745 = vld [vmem:[%s1735 + $0x48] sm:$0xff]
      %v1746 = vld [vmem:[%s1735 + $0x50] sm:$0xff]
      %v1747 = vld [vmem:[%s1735 + $0x58] sm:$0xff]
      %v1748 = vld [vmem:[%s1735 + $0x60] sm:$0xff]
      %v1749 = vld [vmem:[%s1735 + $0x68] sm:$0xff]
      %v1750 = vld [vmem:[%s1735 + $0x70] sm:$0xff]
      %v1751 = vld [vmem:[%s1735 + $0x78] sm:$0xff]
      %1752 = vmatprep.subr.mxu0 0.0
      %1753 = vmatpush1.msra.mxu0 %v1736
      %1754 = vmatprep.subr.mxu0 0.0
      %1755 = vmatpush1.msra.mxu0 %v1737
      %1756 = vmatprep.subr.mxu0 0.0
      %1757 = vmatpush1.msra.mxu0 %v1738
      %1758 = vmatprep.subr.mxu0 0.0
      %1759 = vmatpush1.msra.mxu0 %v1739
      %1760 = vmatprep.subr.mxu0 0.0
      %1761 = vmatpush1.msra.mxu0 %v1740
      %1762 = vmatprep.subr.mxu0 0.0
      %1763 = vmatpush1.msra.mxu0 %v1741
      %1764 = vmatprep.subr.mxu0 0.0
      %1765 = vmatpush1.msra.mxu0 %v1742
      %1766 = vmatprep.subr.mxu0 0.0
      %1767 = vmatpush1.msra.mxu0 %v1743
      %1768 = vmatprep.subr.mxu0 0.0
      %1769 = vmatpush1.msra.mxu0 %v1744
      %1770 = vmatprep.subr.mxu0 0.0
      %1771 = vmatpush1.msra.mxu0 %v1745
      %1772 = vmatprep.subr.mxu0 0.0
      %1773 = vmatpush1.msra.mxu0 %v1746
      %1774 = vmatprep.subr.mxu0 0.0
      %1775 = vmatpush1.msra.mxu0 %v1747
      %1776 = vmatprep.subr.mxu0 0.0
      %1777 = vmatpush1.msra.mxu0 %v1748
      %1778 = vmatprep.subr.mxu0 0.0
      %1779 = vmatpush1.msra.mxu0 %v1749
      %1780 = vmatprep.subr.mxu0 0.0
      %1781 = vmatpush1.msra.mxu0 %v1750
      %1782 = vmatprep.subr.mxu0 0.0
      %1783 = vmatpush1.msra.mxu0 %v1751
      %1784 = vmatprep.subr.mxu0 0.0
      %1785 = vmatpush1.msra.mxu0 0.0
      %1786 = vmatprep.subr.mxu0 0.0
      %1787 = vmatpush1.msra.mxu0 0.0
      %1788 = vmatprep.subr.mxu0 0.0
      %1789 = vmatpush1.msra.mxu0 0.0
      %1790 = vmatprep.subr.mxu0 0.0
      %1791 = vmatpush1.msra.mxu0 0.0
      %1792 = vmatprep.subr.mxu0 0.0
      %1793 = vmatpush1.msra.mxu0 0.0
      %1794 = vmatprep.subr.mxu0 0.0
      %1795 = vmatpush1.msra.mxu0 0.0
      %1796 = vmatprep.subr.mxu0 0.0
      %1797 = vmatpush1.msra.mxu0 0.0
      %1798 = vmatprep.subr.mxu0 0.0
      %1799 = vmatpush1.msra.mxu0 0.0
      %1800 = vmatprep.subr.mxu0 0.0
      %1801 = vmatpush1.msra.mxu0 0.0
      %1802 = vmatprep.subr.mxu0 0.0
      %1803 = vmatpush1.msra.mxu0 0.0
      %1804 = vmatprep.subr.mxu0 0.0
      %1805 = vmatpush1.msra.mxu0 0.0
      %1806 = vmatprep.subr.mxu0 0.0
      %1807 = vmatpush1.msra.mxu0 0.0
      %1808 = vmatprep.subr.mxu0 0.0
      %1809 = vmatpush1.msra.mxu0 0.0
      %1810 = vmatprep.subr.mxu0 0.0
      %1811 = vmatpush1.msra.mxu0 0.0
      %1812 = vmatprep.subr.mxu0 0.0
      %1813 = vmatpush1.msra.mxu0 0.0
      %1814 = vmatprep.subr.mxu0 0.0
      %1815 = vmatpush1.msra.mxu0 0.0
      %1816 = vmatprep.mubr.f32.mxu0 0.0
      %1817 = vmatmul.mubr.f32.gmra.mrb[0].mxu0 %v1703
      %v1818 = vpop.f32.mrb[0].mxu0
      %v1819 = vadd.f32 0.0, %v1818
      %v1820 = vpop.f32.mrb[0].mxu0
      %1821 = vmatprep.mubr.f32.mxu0 0.0
      %1822 = vmatmul.mubr.f32.gmra.mrb[0].mxu0 %v1704
      %v1823 = vpop.f32.mrb[0].mxu0
      %v1824 = vadd.f32 0.0, %v1823
      %v1825 = vpop.f32.mrb[0].mxu0
      %1826 = vmatprep.mubr.f32.mxu0 0.0
      %1827 = vmatmul.mubr.f32.gmra.mrb[0].mxu0 %v1705
      %v1828 = vpop.f32.mrb[0].mxu0
      %v1829 = vadd.f32 0.0, %v1828
      %v1830 = vpop.f32.mrb[0].mxu0
      %1831 = vmatprep.mubr.f32.mxu0 0.0
      %1832 = vmatmul.mubr.f32.gmra.mrb[0].mxu0 %v1706
      %v1833 = vpop.f32.mrb[0].mxu0
      %v1834 = vadd.f32 0.0, %v1833
      %v1835 = vpop.f32.mrb[0].mxu0
      %1836 = vmatprep.mubr.f32.mxu0 0.0
      %1837 = vmatmul.mubr.f32.gmra.mrb[0].mxu0 %v1707
      %v1838 = vpop.f32.mrb[0].mxu0
      %v1839 = vadd.f32 0.0, %v1838
      %v1840 = vpop.f32.mrb[0].mxu0
      %1841 = vmatprep.mubr.f32.mxu0 0.0
      %1842 = vmatmul.mubr.f32.gmra.mrb[0].mxu0 %v1708
      %v1843 = vpop.f32.mrb[0].mxu0
      %v1844 = vadd.f32 0.0, %v1843
      %v1845 = vpop.f32.mrb[0].mxu0
      %1846 = vmatprep.mubr.f32.mxu0 0.0
      %1847 = vmatmul.mubr.f32.gmra.mrb[0].mxu0 %v1709
      %v1848 = vpop.f32.mrb[0].mxu0
      %v1849 = vadd.f32 0.0, %v1848
      %v1850 = vpop.f32.mrb[0].mxu0
      %1851 = vmatprep.mubr.f32.mxu0 0.0
      %1852 = vmatmul.mubr.f32.gmra.mrb[0].mxu0 %v1710
      %v1853 = vpop.f32.mrb[0].mxu0
      %v1854 = vadd.f32 0.0, %v1853
      %v1855 = vpop.f32.mrb[0].mxu0
      %1856 = vmatprep.mubr.f32.mxu0 0.0
      %1857 = vmatmul.mubr.f32.gmra.mrb[0].mxu0 %v1711
      %v1858 = vpop.f32.mrb[0].mxu0
      %v1859 = vadd.f32 0.0, %v1858
      %v1860 = vpop.f32.mrb[0].mxu0
      %1861 = vmatprep.mubr.f32.mxu0 0.0
      %1862 = vmatmul.mubr.f32.gmra.mrb[0].mxu0 %v1712
      %v1863 = vpop.f32.mrb[0].mxu0
      %v1864 = vadd.f32 0.0, %v1863
      %v1865 = vpop.f32.mrb[0].mxu0
      %1866 = vmatprep.mubr.f32.mxu0 0.0
      %1867 = vmatmul.mubr.f32.gmra.mrb[0].mxu0 %v1713
      %v1868 = vpop.f32.mrb[0].mxu0
      %v1869 = vadd.f32 0.0, %v1868
      %v1870 = vpop.f32.mrb[0].mxu0
      %1871 = vmatprep.mubr.f32.mxu0 0.0
      %1872 = vmatmul.mubr.f32.gmra.mrb[0].mxu0 %v1714
      %v1873 = vpop.f32.mrb[0].mxu0
      %v1874 = vadd.f32 0.0, %v1873
      %v1875 = vpop.f32.mrb[0].mxu0
      %1876 = vmatprep.mubr.f32.mxu0 0.0
      %1877 = vmatmul.mubr.f32.gmra.mrb[0].mxu0 %v1715
      %v1878 = vpop.f32.mrb[0].mxu0
      %v1879 = vadd.f32 0.0, %v1878
      %v1880 = vpop.f32.mrb[0].mxu0
      %1881 = vmatprep.mubr.f32.mxu0 0.0
      %1882 = vmatmul.mubr.f32.gmra.mrb[0].mxu0 %v1716
      %v1883 = vpop.f32.mrb[0].mxu0
      %v1884 = vadd.f32 0.0, %v1883
      %v1885 = vpop.f32.mrb[0].mxu0
      %1886 = vmatprep.mubr.f32.mxu0 0.0
      %1887 = vmatmul.mubr.f32.gmra.mrb[0].mxu0 %v1717
      %v1888 = vpop.f32.mrb[0].mxu0
      %v1889 = vadd.f32 0.0, %v1888
      %v1890 = vpop.f32.mrb[0].mxu0
      %1891 = vmatprep.mubr.f32.mxu0 0.0
      %1892 = vmatmul.mubr.f32.gmra.mrb[0].mxu0 %v1718
      %v1893 = vpop.f32.mrb[0].mxu0
      %v1894 = vadd.f32 0.0, %v1893
      %v1895 = vpop.f32.mrb[0].mxu0
      %1896 = vmatprep.mubr.f32.mxu0 0.0
      %1897 = vmatmul.mubr.f32.gmra.mrb[0].mxu0 %v1719
      %v1898 = vpop.f32.mrb[0].mxu0
      %v1899 = vadd.f32 0.0, %v1898
      %v1900 = vpop.f32.mrb[0].mxu0
      %1901 = vmatprep.mubr.f32.mxu0 0.0
      %1902 = vmatmul.mubr.f32.gmra.mrb[0].mxu0 %v1720
      %v1903 = vpop.f32.mrb[0].mxu0
      %v1904 = vadd.f32 0.0, %v1903
      %v1905 = vpop.f32.mrb[0].mxu0
      %1906 = vmatprep.mubr.f32.mxu0 0.0
      %1907 = vmatmul.mubr.f32.gmra.mrb[0].mxu0 %v1721
      %v1908 = vpop.f32.mrb[0].mxu0
      %v1909 = vadd.f32 0.0, %v1908
      %v1910 = vpop.f32.mrb[0].mxu0
      %1911 = vmatprep.mubr.f32.mxu0 0.0
      %1912 = vmatmul.mubr.f32.gmra.mrb[0].mxu0 %v1722
      %v1913 = vpop.f32.mrb[0].mxu0
      %v1914 = vadd.f32 0.0, %v1913
      %v1915 = vpop.f32.mrb[0].mxu0
      %1916 = vmatprep.mubr.f32.mxu0 0.0
      %1917 = vmatmul.mubr.f32.gmra.mrb[0].mxu0 %v1723
      %v1918 = vpop.f32.mrb[0].mxu0
      %v1919 = vadd.f32 0.0, %v1918
      %v1920 = vpop.f32.mrb[0].mxu0
      %1921 = vmatprep.mubr.f32.mxu0 0.0
      %1922 = vmatmul.mubr.f32.gmra.mrb[0].mxu0 %v1724
      %v1923 = vpop.f32.mrb[0].mxu0
      %v1924 = vadd.f32 0.0, %v1923
      %v1925 = vpop.f32.mrb[0].mxu0
      %1926 = vmatprep.mubr.f32.mxu0 0.0
      %1927 = vmatmul.mubr.f32.gmra.mrb[0].mxu0 %v1725
      %v1928 = vpop.f32.mrb[0].mxu0
      %v1929 = vadd.f32 0.0, %v1928
      %v1930 = vpop.f32.mrb[0].mxu0
      %1931 = vmatprep.mubr.f32.mxu0 0.0
      %1932 = vmatmul.mubr.f32.gmra.mrb[0].mxu0 %v1726
      %v1933 = vpop.f32.mrb[0].mxu0
      %v1934 = vadd.f32 0.0, %v1933
      %v1935 = vpop.f32.mrb[0].mxu0
      %1936 = vmatprep.mubr.f32.mxu0 0.0
      %1937 = vmatmul.mubr.f32.gmra.mrb[0].mxu0 %v1727
      %v1938 = vpop.f32.mrb[0].mxu0
      %v1939 = vadd.f32 0.0, %v1938
      %v1940 = vpop.f32.mrb[0].mxu0
      %1941 = vmatprep.mubr.f32.mxu0 0.0
      %1942 = vmatmul.mubr.f32.gmra.mrb[0].mxu0 %v1728
      %v1943 = vpop.f32.mrb[0].mxu0
      %v1944 = vadd.f32 0.0, %v1943
      %v1945 = vpop.f32.mrb[0].mxu0
      %1946 = vmatprep.mubr.f32.mxu0 0.0
      %1947 = vmatmul.mubr.f32.gmra.mrb[0].mxu0 %v1729
      %v1948 = vpop.f32.mrb[0].mxu0
      %v1949 = vadd.f32 0.0, %v1948
      %v1950 = vpop.f32.mrb[0].mxu0
      %1951 = vmatprep.mubr.f32.mxu0 0.0
      %1952 = vmatmul.mubr.f32.gmra.mrb[0].mxu0 %v1730
      %v1953 = vpop.f32.mrb[0].mxu0
      %v1954 = vadd.f32 0.0, %v1953
      %v1955 = vpop.f32.mrb[0].mxu0
      %1956 = vmatprep.mubr.f32.mxu0 0.0
      %1957 = vmatmul.mubr.f32.gmra.mrb[0].mxu0 %v1731
      %v1958 = vpop.f32.mrb[0].mxu0
      %v1959 = vadd.f32 0.0, %v1958
      %v1960 = vpop.f32.mrb[0].mxu0
      %1961 = vmatprep.mubr.f32.mxu0 0.0
      %1962 = vmatmul.mubr.f32.gmra.mrb[0].mxu0 %v1732
      %v1963 = vpop.f32.mrb[0].mxu0
      %v1964 = vadd.f32 0.0, %v1963
      %v1965 = vpop.f32.mrb[0].mxu0
      %1966 = vmatprep.mubr.f32.mxu0 0.0
      %1967 = vmatmul.mubr.f32.gmra.mrb[0].mxu0 %v1733
      %v1968 = vpop.f32.mrb[0].mxu0
      %v1969 = vadd.f32 0.0, %v1968
      %v1970 = vpop.f32.mrb[0].mxu0
      %1971 = vmatprep.mubr.f32.mxu0 0.0
      %1972 = vmatmul.mubr.f32.gmra.mrb[0].mxu0 %v1734
      %v1973 = vpop.f32.mrb[0].mxu0
      %v1974 = vadd.f32 0.0, %v1973
      %v1975 = vpop.f32.mrb[0].mxu0
      %1976 = vdwg.mxu0
      %v1977 = vadd.f32 %v1639, %v1819
      %v1978 = vadd.f32 %v1640, %v1824
      %v1979 = vadd.f32 %v1641, %v1829
      %v1980 = vadd.f32 %v1642, %v1834
      %v1981 = vadd.f32 %v1643, %v1839
      %v1982 = vadd.f32 %v1644, %v1844
      %v1983 = vadd.f32 %v1645, %v1849
      %v1984 = vadd.f32 %v1646, %v1854
      %v1985 = vadd.f32 %v1647, %v1859
      %v1986 = vadd.f32 %v1648, %v1864
      %v1987 = vadd.f32 %v1649, %v1869
      %v1988 = vadd.f32 %v1650, %v1874
      %v1989 = vadd.f32 %v1651, %v1879
      %v1990 = vadd.f32 %v1652, %v1884
      %v1991 = vadd.f32 %v1653, %v1889
      %v1992 = vadd.f32 %v1654, %v1894
      %v1993 = vadd.f32 %v1655, %v1899
      %v1994 = vadd.f32 %v1656, %v1904
      %v1995 = vadd.f32 %v1657, %v1909
      %v1996 = vadd.f32 %v1658, %v1914
      %v1997 = vadd.f32 %v1659, %v1919
      %v1998 = vadd.f32 %v1660, %v1924
      %v1999 = vadd.f32 %v1661, %v1929
      %v2000 = vadd.f32 %v1662, %v1934
      %v2001 = vadd.f32 %v1663, %v1939
      %v2002 = vadd.f32 %v1664, %v1944
      %v2003 = vadd.f32 %v1665, %v1949
      %v2004 = vadd.f32 %v1666, %v1954
      %v2005 = vadd.f32 %v1667, %v1959
      %v2006 = vadd.f32 %v1668, %v1964
      %v2007 = vadd.f32 %v1669, %v1969
      %v2008 = vadd.f32 %v1670, %v1974
      %v2009 = vld [vmem:[%s339 + $0x18] sm:$0xff]
      %v2010 = vld [vmem:[%s339 + $0x20] sm:$0xff]
      %v2011 = vld [vmem:[%s339 + $0x28] sm:$0xff]
      %v2012 = vld [vmem:[%s339 + $0x30] sm:$0xff]
      %v2013 = vld [vmem:[%s339 + $0x38] sm:$0xff]
      %v2014 = vld [vmem:[%s339 + $0x40] sm:$0xff]
      %v2015 = vld [vmem:[%s339 + $0x48] sm:$0xff]
      %v2016 = vld [vmem:[%s339 + $0x50] sm:$0xff]
      %v2017 = vld [vmem:[%s339 + $0x58] sm:$0xff]
      %v2018 = vld [vmem:[%s339 + $0x60] sm:$0xff]
      %v2019 = vld [vmem:[%s339 + $0x68] sm:$0xff]
      %v2020 = vld [vmem:[%s339 + $0x70] sm:$0xff]
      %v2021 = vld [vmem:[%s339 + $0x78] sm:$0xff]
      %v2022 = vld [vmem:[%s339 + $0x80] sm:$0xff]
      %v2023 = vld [vmem:[%s339 + $0x88] sm:$0xff]
      %v2024 = vld [vmem:[%s339 + $0x90] sm:$0xff]
      %v2025 = vld [vmem:[%s339 + $0x98] sm:$0xff]
      %v2026 = vld [vmem:[%s339 + $0xa0] sm:$0xff]
      %v2027 = vld [vmem:[%s339 + $0xa8] sm:$0xff]
      %v2028 = vld [vmem:[%s339 + $0xb0] sm:$0xff]
      %v2029 = vld [vmem:[%s339 + $0xb8] sm:$0xff]
      %v2030 = vld [vmem:[%s339 + $0xc0] sm:$0xff]
      %v2031 = vld [vmem:[%s339 + $0xc8] sm:$0xff]
      %v2032 = vld [vmem:[%s339 + $0xd0] sm:$0xff]
      %v2033 = vld [vmem:[%s339 + $0xd8] sm:$0xff]
      %v2034 = vld [vmem:[%s339 + $0xe0] sm:$0xff]
      %v2035 = vld [vmem:[%s339 + $0xe8] sm:$0xff]
      %v2036 = vld [vmem:[%s339 + $0xf0] sm:$0xff]
      %v2037 = vld [vmem:[%s339 + $0xf8] sm:$0xff]
      %v2038 = vld [vmem:[%s339 + $0x100] sm:$0xff]
      %v2039 = vld [vmem:[%s339 + $0x108] sm:$0xff]
      %v2040 = vld [vmem:[%s339 + $0x110] sm:$0xff]
      %s2041 = scalar_lea.vmem %s343, 512
      %v2042 = vld [vmem:[%s2041] sm:$0xff]
      %v2043 = vld [vmem:[%s2041 + $0x8] sm:$0xff]
      %v2044 = vld [vmem:[%s2041 + $0x10] sm:$0xff]
      %v2045 = vld [vmem:[%s2041 + $0x18] sm:$0xff]
      %v2046 = vld [vmem:[%s2041 + $0x20] sm:$0xff]
      %v2047 = vld [vmem:[%s2041 + $0x28] sm:$0xff]
      %v2048 = vld [vmem:[%s2041 + $0x30] sm:$0xff]
      %v2049 = vld [vmem:[%s2041 + $0x38] sm:$0xff]
      %v2050 = vld [vmem:[%s2041 + $0x40] sm:$0xff]
      %v2051 = vld [vmem:[%s2041 + $0x48] sm:$0xff]
      %v2052 = vld [vmem:[%s2041 + $0x50] sm:$0xff]
      %v2053 = vld [vmem:[%s2041 + $0x58] sm:$0xff]
      %v2054 = vld [vmem:[%s2041 + $0x60] sm:$0xff]
      %v2055 = vld [vmem:[%s2041 + $0x68] sm:$0xff]
      %v2056 = vld [vmem:[%s2041 + $0x70] sm:$0xff]
      %v2057 = vld [vmem:[%s2041 + $0x78] sm:$0xff]
      %2058 = vmatprep.subr.mxu0 0.0
      %2059 = vmatpush1.msra.mxu0 %v2042
      %2060 = vmatprep.subr.mxu0 0.0
      %2061 = vmatpush1.msra.mxu0 %v2043
      %2062 = vmatprep.subr.mxu0 0.0
      %2063 = vmatpush1.msra.mxu0 %v2044
      %2064 = vmatprep.subr.mxu0 0.0
      %2065 = vmatpush1.msra.mxu0 %v2045
      %2066 = vmatprep.subr.mxu0 0.0
      %2067 = vmatpush1.msra.mxu0 %v2046
      %2068 = vmatprep.subr.mxu0 0.0
      %2069 = vmatpush1.msra.mxu0 %v2047
      %2070 = vmatprep.subr.mxu0 0.0
      %2071 = vmatpush1.msra.mxu0 %v2048
      %2072 = vmatprep.subr.mxu0 0.0
      %2073 = vmatpush1.msra.mxu0 %v2049
      %2074 = vmatprep.subr.mxu0 0.0
      %2075 = vmatpush1.msra.mxu0 %v2050
      %2076 = vmatprep.subr.mxu0 0.0
      %2077 = vmatpush1.msra.mxu0 %v2051
      %2078 = vmatprep.subr.mxu0 0.0
      %2079 = vmatpush1.msra.mxu0 %v2052
      %2080 = vmatprep.subr.mxu0 0.0
      %2081 = vmatpush1.msra.mxu0 %v2053
      %2082 = vmatprep.subr.mxu0 0.0
      %2083 = vmatpush1.msra.mxu0 %v2054
      %2084 = vmatprep.subr.mxu0 0.0
      %2085 = vmatpush1.msra.mxu0 %v2055
      %2086 = vmatprep.subr.mxu0 0.0
      %2087 = vmatpush1.msra.mxu0 %v2056
      %2088 = vmatprep.subr.mxu0 0.0
      %2089 = vmatpush1.msra.mxu0 %v2057
      %2090 = vmatprep.subr.mxu0 0.0
      %2091 = vmatpush1.msra.mxu0 0.0
      %2092 = vmatprep.subr.mxu0 0.0
      %2093 = vmatpush1.msra.mxu0 0.0
      %2094 = vmatprep.subr.mxu0 0.0
      %2095 = vmatpush1.msra.mxu0 0.0
      %2096 = vmatprep.subr.mxu0 0.0
      %2097 = vmatpush1.msra.mxu0 0.0
      %2098 = vmatprep.subr.mxu0 0.0
      %2099 = vmatpush1.msra.mxu0 0.0
      %2100 = vmatprep.subr.mxu0 0.0
      %2101 = vmatpush1.msra.mxu0 0.0
      %2102 = vmatprep.subr.mxu0 0.0
      %2103 = vmatpush1.msra.mxu0 0.0
      %2104 = vmatprep.subr.mxu0 0.0
      %2105 = vmatpush1.msra.mxu0 0.0
      %2106 = vmatprep.subr.mxu0 0.0
      %2107 = vmatpush1.msra.mxu0 0.0
      %2108 = vmatprep.subr.mxu0 0.0
      %2109 = vmatpush1.msra.mxu0 0.0
      %2110 = vmatprep.subr.mxu0 0.0
      %2111 = vmatpush1.msra.mxu0 0.0
      %2112 = vmatprep.subr.mxu0 0.0
      %2113 = vmatpush1.msra.mxu0 0.0
      %2114 = vmatprep.subr.mxu0 0.0
      %2115 = vmatpush1.msra.mxu0 0.0
      %2116 = vmatprep.subr.mxu0 0.0
      %2117 = vmatpush1.msra.mxu0 0.0
      %2118 = vmatprep.subr.mxu0 0.0
      %2119 = vmatpush1.msra.mxu0 0.0
      %2120 = vmatprep.subr.mxu0 0.0
      %2121 = vmatpush1.msra.mxu0 0.0
      %2122 = vmatprep.mubr.f32.mxu0 0.0
      %2123 = vmatmul.mubr.f32.gmra.mrb[0].mxu0 %v2009
      %v2124 = vpop.f32.mrb[0].mxu0
      %v2125 = vadd.f32 0.0, %v2124
      %v2126 = vpop.f32.mrb[0].mxu0
      %2127 = vmatprep.mubr.f32.mxu0 0.0
      %2128 = vmatmul.mubr.f32.gmra.mrb[0].mxu0 %v2010
      %v2129 = vpop.f32.mrb[0].mxu0
      %v2130 = vadd.f32 0.0, %v2129
      %v2131 = vpop.f32.mrb[0].mxu0
      %2132 = vmatprep.mubr.f32.mxu0 0.0
      %2133 = vmatmul.mubr.f32.gmra.mrb[0].mxu0 %v2011
      %v2134 = vpop.f32.mrb[0].mxu0
      %v2135 = vadd.f32 0.0, %v2134
      %v2136 = vpop.f32.mrb[0].mxu0
      %2137 = vmatprep.mubr.f32.mxu0 0.0
      %2138 = vmatmul.mubr.f32.gmra.mrb[0].mxu0 %v2012
      %v2139 = vpop.f32.mrb[0].mxu0
      %v2140 = vadd.f32 0.0, %v2139
      %v2141 = vpop.f32.mrb[0].mxu0
      %2142 = vmatprep.mubr.f32.mxu0 0.0
      %2143 = vmatmul.mubr.f32.gmra.mrb[0].mxu0 %v2013
      %v2144 = vpop.f32.mrb[0].mxu0
      %v2145 = vadd.f32 0.0, %v2144
      %v2146 = vpop.f32.mrb[0].mxu0
      %2147 = vmatprep.mubr.f32.mxu0 0.0
      %2148 = vmatmul.mubr.f32.gmra.mrb[0].mxu0 %v2014
      %v2149 = vpop.f32.mrb[0].mxu0
      %v2150 = vadd.f32 0.0, %v2149
      %v2151 = vpop.f32.mrb[0].mxu0
      %2152 = vmatprep.mubr.f32.mxu0 0.0
      %2153 = vmatmul.mubr.f32.gmra.mrb[0].mxu0 %v2015
      %v2154 = vpop.f32.mrb[0].mxu0
      %v2155 = vadd.f32 0.0, %v2154
      %v2156 = vpop.f32.mrb[0].mxu0
      %2157 = vmatprep.mubr.f32.mxu0 0.0
      %2158 = vmatmul.mubr.f32.gmra.mrb[0].mxu0 %v2016
      %v2159 = vpop.f32.mrb[0].mxu0
      %v2160 = vadd.f32 0.0, %v2159
      %v2161 = vpop.f32.mrb[0].mxu0
      %2162 = vmatprep.mubr.f32.mxu0 0.0
      %2163 = vmatmul.mubr.f32.gmra.mrb[0].mxu0 %v2017
      %v2164 = vpop.f32.mrb[0].mxu0
      %v2165 = vadd.f32 0.0, %v2164
      %v2166 = vpop.f32.mrb[0].mxu0
      %2167 = vmatprep.mubr.f32.mxu0 0.0
      %2168 = vmatmul.mubr.f32.gmra.mrb[0].mxu0 %v2018
      %v2169 = vpop.f32.mrb[0].mxu0
      %v2170 = vadd.f32 0.0, %v2169
      %v2171 = vpop.f32.mrb[0].mxu0
      %2172 = vmatprep.mubr.f32.mxu0 0.0
      %2173 = vmatmul.mubr.f32.gmra.mrb[0].mxu0 %v2019
      %v2174 = vpop.f32.mrb[0].mxu0
      %v2175 = vadd.f32 0.0, %v2174
      %v2176 = vpop.f32.mrb[0].mxu0
      %2177 = vmatprep.mubr.f32.mxu0 0.0
      %2178 = vmatmul.mubr.f32.gmra.mrb[0].mxu0 %v2020
      %v2179 = vpop.f32.mrb[0].mxu0
      %v2180 = vadd.f32 0.0, %v2179
      %v2181 = vpop.f32.mrb[0].mxu0
      %2182 = vmatprep.mubr.f32.mxu0 0.0
      %2183 = vmatmul.mubr.f32.gmra.mrb[0].mxu0 %v2021
      %v2184 = vpop.f32.mrb[0].mxu0
      %v2185 = vadd.f32 0.0, %v2184
      %v2186 = vpop.f32.mrb[0].mxu0
      %2187 = vmatprep.mubr.f32.mxu0 0.0
      %2188 = vmatmul.mubr.f32.gmra.mrb[0].mxu0 %v2022
      %v2189 = vpop.f32.mrb[0].mxu0
      %v2190 = vadd.f32 0.0, %v2189
      %v2191 = vpop.f32.mrb[0].mxu0
      %2192 = vmatprep.mubr.f32.mxu0 0.0
      %2193 = vmatmul.mubr.f32.gmra.mrb[0].mxu0 %v2023
      %v2194 = vpop.f32.mrb[0].mxu0
      %v2195 = vadd.f32 0.0, %v2194
      %v2196 = vpop.f32.mrb[0].mxu0
      %2197 = vmatprep.mubr.f32.mxu0 0.0
      %2198 = vmatmul.mubr.f32.gmra.mrb[0].mxu0 %v2024
      %v2199 = vpop.f32.mrb[0].mxu0
      %v2200 = vadd.f32 0.0, %v2199
      %v2201 = vpop.f32.mrb[0].mxu0
      %2202 = vmatprep.mubr.f32.mxu0 0.0
      %2203 = vmatmul.mubr.f32.gmra.mrb[0].mxu0 %v2025
      %v2204 = vpop.f32.mrb[0].mxu0
      %v2205 = vadd.f32 0.0, %v2204
      %v2206 = vpop.f32.mrb[0].mxu0
      %2207 = vmatprep.mubr.f32.mxu0 0.0
      %2208 = vmatmul.mubr.f32.gmra.mrb[0].mxu0 %v2026
      %v2209 = vpop.f32.mrb[0].mxu0
      %v2210 = vadd.f32 0.0, %v2209
      %v2211 = vpop.f32.mrb[0].mxu0
      %2212 = vmatprep.mubr.f32.mxu0 0.0
      %2213 = vmatmul.mubr.f32.gmra.mrb[0].mxu0 %v2027
      %v2214 = vpop.f32.mrb[0].mxu0
      %v2215 = vadd.f32 0.0, %v2214
      %v2216 = vpop.f32.mrb[0].mxu0
      %2217 = vmatprep.mubr.f32.mxu0 0.0
      %2218 = vmatmul.mubr.f32.gmra.mrb[0].mxu0 %v2028
      %v2219 = vpop.f32.mrb[0].mxu0
      %v2220 = vadd.f32 0.0, %v2219
      %v2221 = vpop.f32.mrb[0].mxu0
      %2222 = vmatprep.mubr.f32.mxu0 0.0
      %2223 = vmatmul.mubr.f32.gmra.mrb[0].mxu0 %v2029
      %v2224 = vpop.f32.mrb[0].mxu0
      %v2225 = vadd.f32 0.0, %v2224
      %v2226 = vpop.f32.mrb[0].mxu0
      %2227 = vmatprep.mubr.f32.mxu0 0.0
      %2228 = vmatmul.mubr.f32.gmra.mrb[0].mxu0 %v2030
      %v2229 = vpop.f32.mrb[0].mxu0
      %v2230 = vadd.f32 0.0, %v2229
      %v2231 = vpop.f32.mrb[0].mxu0
      %2232 = vmatprep.mubr.f32.mxu0 0.0
      %2233 = vmatmul.mubr.f32.gmra.mrb[0].mxu0 %v2031
      %v2234 = vpop.f32.mrb[0].mxu0
      %v2235 = vadd.f32 0.0, %v2234
      %v2236 = vpop.f32.mrb[0].mxu0
      %2237 = vmatprep.mubr.f32.mxu0 0.0
      %2238 = vmatmul.mubr.f32.gmra.mrb[0].mxu0 %v2032
      %v2239 = vpop.f32.mrb[0].mxu0
      %v2240 = vadd.f32 0.0, %v2239
      %v2241 = vpop.f32.mrb[0].mxu0
      %2242 = vmatprep.mubr.f32.mxu0 0.0
      %2243 = vmatmul.mubr.f32.gmra.mrb[0].mxu0 %v2033
      %v2244 = vpop.f32.mrb[0].mxu0
      %v2245 = vadd.f32 0.0, %v2244
      %v2246 = vpop.f32.mrb[0].mxu0
      %2247 = vmatprep.mubr.f32.mxu0 0.0
      %2248 = vmatmul.mubr.f32.gmra.mrb[0].mxu0 %v2034
      %v2249 = vpop.f32.mrb[0].mxu0
      %v2250 = vadd.f32 0.0, %v2249
      %v2251 = vpop.f32.mrb[0].mxu0
      %2252 = vmatprep.mubr.f32.mxu0 0.0
      %2253 = vmatmul.mubr.f32.gmra.mrb[0].mxu0 %v2035
      %v2254 = vpop.f32.mrb[0].mxu0
      %v2255 = vadd.f32 0.0, %v2254
      %v2256 = vpop.f32.mrb[0].mxu0
      %2257 = vmatprep.mubr.f32.mxu0 0.0
      %2258 = vmatmul.mubr.f32.gmra.mrb[0].mxu0 %v2036
      %v2259 = vpop.f32.mrb[0].mxu0
      %v2260 = vadd.f32 0.0, %v2259
      %v2261 = vpop.f32.mrb[0].mxu0
      %2262 = vmatprep.mubr.f32.mxu0 0.0
      %2263 = vmatmul.mubr.f32.gmra.mrb[0].mxu0 %v2037
      %v2264 = vpop.f32.mrb[0].mxu0
      %v2265 = vadd.f32 0.0, %v2264
      %v2266 = vpop.f32.mrb[0].mxu0
      %2267 = vmatprep.mubr.f32.mxu0 0.0
      %2268 = vmatmul.mubr.f32.gmra.mrb[0].mxu0 %v2038
      %v2269 = vpop.f32.mrb[0].mxu0
      %v2270 = vadd.f32 0.0, %v2269
      %v2271 = vpop.f32.mrb[0].mxu0
      %2272 = vmatprep.mubr.f32.mxu0 0.0
      %2273 = vmatmul.mubr.f32.gmra.mrb[0].mxu0 %v2039
      %v2274 = vpop.f32.mrb[0].mxu0
      %v2275 = vadd.f32 0.0, %v2274
      %v2276 = vpop.f32.mrb[0].mxu0
      %2277 = vmatprep.mubr.f32.mxu0 0.0
      %2278 = vmatmul.mubr.f32.gmra.mrb[0].mxu0 %v2040
      %v2279 = vpop.f32.mrb[0].mxu0
      %v2280 = vadd.f32 0.0, %v2279
      %v2281 = vpop.f32.mrb[0].mxu0
      %2282 = vdwg.mxu0
      %v2283 = vadd.f32 %v1977, %v2125
      %v2284 = vadd.f32 %v1978, %v2130
      %v2285 = vadd.f32 %v1979, %v2135
      %v2286 = vadd.f32 %v1980, %v2140
      %v2287 = vadd.f32 %v1981, %v2145
      %v2288 = vadd.f32 %v1982, %v2150
      %v2289 = vadd.f32 %v1983, %v2155
      %v2290 = vadd.f32 %v1984, %v2160
      %v2291 = vadd.f32 %v1985, %v2165
      %v2292 = vadd.f32 %v1986, %v2170
      %v2293 = vadd.f32 %v1987, %v2175
      %v2294 = vadd.f32 %v1988, %v2180
      %v2295 = vadd.f32 %v1989, %v2185
      %v2296 = vadd.f32 %v1990, %v2190
      %v2297 = vadd.f32 %v1991, %v2195
      %v2298 = vadd.f32 %v1992, %v2200
      %v2299 = vadd.f32 %v1993, %v2205
      %v2300 = vadd.f32 %v1994, %v2210
      %v2301 = vadd.f32 %v1995, %v2215
      %v2302 = vadd.f32 %v1996, %v2220
      %v2303 = vadd.f32 %v1997, %v2225
      %v2304 = vadd.f32 %v1998, %v2230
      %v2305 = vadd.f32 %v1999, %v2235
      %v2306 = vadd.f32 %v2000, %v2240
      %v2307 = vadd.f32 %v2001, %v2245
      %v2308 = vadd.f32 %v2002, %v2250
      %v2309 = vadd.f32 %v2003, %v2255
      %v2310 = vadd.f32 %v2004, %v2260
      %v2311 = vadd.f32 %v2005, %v2265
      %v2312 = vadd.f32 %v2006, %v2270
      %v2313 = vadd.f32 %v2007, %v2275
      %v2314 = vadd.f32 %v2008, %v2280
      %v2315 = vld [vmem:[%s339 + $0x19] sm:$0xff]
      %v2316 = vld [vmem:[%s339 + $0x21] sm:$0xff]
      %v2317 = vld [vmem:[%s339 + $0x29] sm:$0xff]
      %v2318 = vld [vmem:[%s339 + $0x31] sm:$0xff]
      %v2319 = vld [vmem:[%s339 + $0x39] sm:$0xff]
      %v2320 = vld [vmem:[%s339 + $0x41] sm:$0xff]
      %v2321 = vld [vmem:[%s339 + $0x49] sm:$0xff]
      %v2322 = vld [vmem:[%s339 + $0x51] sm:$0xff]
      %v2323 = vld [vmem:[%s339 + $0x59] sm:$0xff]
      %v2324 = vld [vmem:[%s339 + $0x61] sm:$0xff]
      %v2325 = vld [vmem:[%s339 + $0x69] sm:$0xff]
      %v2326 = vld [vmem:[%s339 + $0x71] sm:$0xff]
      %v2327 = vld [vmem:[%s339 + $0x79] sm:$0xff]
      %v2328 = vld [vmem:[%s339 + $0x81] sm:$0xff]
      %v2329 = vld [vmem:[%s339 + $0x89] sm:$0xff]
      %v2330 = vld [vmem:[%s339 + $0x91] sm:$0xff]
      %v2331 = vld [vmem:[%s339 + $0x99] sm:$0xff]
      %v2332 = vld [vmem:[%s339 + $0xa1] sm:$0xff]
      %v2333 = vld [vmem:[%s339 + $0xa9] sm:$0xff]
      %v2334 = vld [vmem:[%s339 + $0xb1] sm:$0xff]
      %v2335 = vld [vmem:[%s339 + $0xb9] sm:$0xff]
      %v2336 = vld [vmem:[%s339 + $0xc1] sm:$0xff]
      %v2337 = vld [vmem:[%s339 + $0xc9] sm:$0xff]
      %v2338 = vld [vmem:[%s339 + $0xd1] sm:$0xff]
      %v2339 = vld [vmem:[%s339 + $0xd9] sm:$0xff]
      %v2340 = vld [vmem:[%s339 + $0xe1] sm:$0xff]
      %v2341 = vld [vmem:[%s339 + $0xe9] sm:$0xff]
      %v2342 = vld [vmem:[%s339 + $0xf1] sm:$0xff]
      %v2343 = vld [vmem:[%s339 + $0xf9] sm:$0xff]
      %v2344 = vld [vmem:[%s339 + $0x101] sm:$0xff]
      %v2345 = vld [vmem:[%s339 + $0x109] sm:$0xff]
      %v2346 = vld [vmem:[%s339 + $0x111] sm:$0xff]
      %v2347 = vmul.f32 %v2315, %v1208
      %v2348 = vmul.f32 %v2316, %v1213
      %v2349 = vmul.f32 %v2317, %v1218
      %v2350 = vmul.f32 %v2318, %v1223
      %v2351 = vmul.f32 %v2319, %v1228
      %v2352 = vmul.f32 %v2320, %v1233
      %v2353 = vmul.f32 %v2321, %v1238
      %v2354 = vmul.f32 %v2322, %v1243
      %v2355 = vmul.f32 %v2323, %v1248
      %v2356 = vmul.f32 %v2324, %v1253
      %v2357 = vmul.f32 %v2325, %v1258
      %v2358 = vmul.f32 %v2326, %v1263
      %v2359 = vmul.f32 %v2327, %v1268
      %v2360 = vmul.f32 %v2328, %v1273
      %v2361 = vmul.f32 %v2329, %v1278
      %v2362 = vmul.f32 %v2330, %v1283
      %v2363 = vmul.f32 %v2331, %v1288
      %v2364 = vmul.f32 %v2332, %v1293
      %v2365 = vmul.f32 %v2333, %v1298
      %v2366 = vmul.f32 %v2334, %v1303
      %v2367 = vmul.f32 %v2335, %v1308
      %v2368 = vmul.f32 %v2336, %v1313
      %v2369 = vmul.f32 %v2337, %v1318
      %v2370 = vmul.f32 %v2338, %v1323
      %v2371 = vmul.f32 %v2339, %v1328
      %v2372 = vmul.f32 %v2340, %v1333
      %v2373 = vmul.f32 %v2341, %v1338
      %v2374 = vmul.f32 %v2342, %v1343
      %v2375 = vmul.f32 %v2343, %v1348
      %v2376 = vmul.f32 %v2344, %v1353
      %v2377 = vmul.f32 %v2345, %v1358
      %v2378 = vmul.f32 %v2346, %v1363
      %s2379 = scalar_lea.vmem %s343, 640
      %v2380 = vld [vmem:[%s2379] sm:$0xff]
      %v2381 = vld [vmem:[%s2379 + $0x8] sm:$0xff]
      %v2382 = vld [vmem:[%s2379 + $0x10] sm:$0xff]
      %v2383 = vld [vmem:[%s2379 + $0x18] sm:$0xff]
      %v2384 = vld [vmem:[%s2379 + $0x20] sm:$0xff]
      %v2385 = vld [vmem:[%s2379 + $0x28] sm:$0xff]
      %v2386 = vld [vmem:[%s2379 + $0x30] sm:$0xff]
      %v2387 = vld [vmem:[%s2379 + $0x38] sm:$0xff]
      %v2388 = vld [vmem:[%s2379 + $0x40] sm:$0xff]
      %v2389 = vld [vmem:[%s2379 + $0x48] sm:$0xff]
      %v2390 = vld [vmem:[%s2379 + $0x50] sm:$0xff]
      %v2391 = vld [vmem:[%s2379 + $0x58] sm:$0xff]
      %v2392 = vld [vmem:[%s2379 + $0x60] sm:$0xff]
      %v2393 = vld [vmem:[%s2379 + $0x68] sm:$0xff]
      %v2394 = vld [vmem:[%s2379 + $0x70] sm:$0xff]
      %v2395 = vld [vmem:[%s2379 + $0x78] sm:$0xff]
      %2396 = vmatprep.subr.mxu0 0.0
      %2397 = vmatpush1.msra.mxu0 %v2380
      %2398 = vmatprep.subr.mxu0 0.0
      %2399 = vmatpush1.msra.mxu0 %v2381
      %2400 = vmatprep.subr.mxu0 0.0
      %2401 = vmatpush1.msra.mxu0 %v2382
      %2402 = vmatprep.subr.mxu0 0.0
      %2403 = vmatpush1.msra.mxu0 %v2383
      %2404 = vmatprep.subr.mxu0 0.0
      %2405 = vmatpush1.msra.mxu0 %v2384
      %2406 = vmatprep.subr.mxu0 0.0
      %2407 = vmatpush1.msra.mxu0 %v2385
      %2408 = vmatprep.subr.mxu0 0.0
      %2409 = vmatpush1.msra.mxu0 %v2386
      %2410 = vmatprep.subr.mxu0 0.0
      %2411 = vmatpush1.msra.mxu0 %v2387
      %2412 = vmatprep.subr.mxu0 0.0
      %2413 = vmatpush1.msra.mxu0 %v2388
      %2414 = vmatprep.subr.mxu0 0.0
      %2415 = vmatpush1.msra.mxu0 %v2389
      %2416 = vmatprep.subr.mxu0 0.0
      %2417 = vmatpush1.msra.mxu0 %v2390
      %2418 = vmatprep.subr.mxu0 0.0
      %2419 = vmatpush1.msra.mxu0 %v2391
      %2420 = vmatprep.subr.mxu0 0.0
      %2421 = vmatpush1.msra.mxu0 %v2392
      %2422 = vmatprep.subr.mxu0 0.0
      %2423 = vmatpush1.msra.mxu0 %v2393
      %2424 = vmatprep.subr.mxu0 0.0
      %2425 = vmatpush1.msra.mxu0 %v2394
      %2426 = vmatprep.subr.mxu0 0.0
      %2427 = vmatpush1.msra.mxu0 %v2395
      %2428 = vmatprep.subr.mxu0 0.0
      %2429 = vmatpush1.msra.mxu0 0.0
      %2430 = vmatprep.subr.mxu0 0.0
      %2431 = vmatpush1.msra.mxu0 0.0
      %2432 = vmatprep.subr.mxu0 0.0
      %2433 = vmatpush1.msra.mxu0 0.0
      %2434 = vmatprep.subr.mxu0 0.0
      %2435 = vmatpush1.msra.mxu0 0.0
      %2436 = vmatprep.subr.mxu0 0.0
      %2437 = vmatpush1.msra.mxu0 0.0
      %2438 = vmatprep.subr.mxu0 0.0
      %2439 = vmatpush1.msra.mxu0 0.0
      %2440 = vmatprep.subr.mxu0 0.0
      %2441 = vmatpush1.msra.mxu0 0.0
      %2442 = vmatprep.subr.mxu0 0.0
      %2443 = vmatpush1.msra.mxu0 0.0
      %2444 = vmatprep.subr.mxu0 0.0
      %2445 = vmatpush1.msra.mxu0 0.0
      %2446 = vmatprep.subr.mxu0 0.0
      %2447 = vmatpush1.msra.mxu0 0.0
      %2448 = vmatprep.subr.mxu0 0.0
      %2449 = vmatpush1.msra.mxu0 0.0
      %2450 = vmatprep.subr.mxu0 0.0
      %2451 = vmatpush1.msra.mxu0 0.0
      %2452 = vmatprep.subr.mxu0 0.0
      %2453 = vmatpush1.msra.mxu0 0.0
      %2454 = vmatprep.subr.mxu0 0.0
      %2455 = vmatpush1.msra.mxu0 0.0
      %2456 = vmatprep.subr.mxu0 0.0
      %2457 = vmatpush1.msra.mxu0 0.0
      %2458 = vmatprep.subr.mxu0 0.0
      %2459 = vmatpush1.msra.mxu0 0.0
      %2460 = vmatprep.mubr.f32.mxu0 0.0
      %2461 = vmatmul.mubr.f32.gmra.mrb[0].mxu0 %v2347
      %v2462 = vpop.f32.mrb[0].mxu0
      %v2463 = vadd.f32 0.0, %v2462
      %v2464 = vpop.f32.mrb[0].mxu0
      %2465 = vmatprep.mubr.f32.mxu0 0.0
      %2466 = vmatmul.mubr.f32.gmra.mrb[0].mxu0 %v2348
      %v2467 = vpop.f32.mrb[0].mxu0
      %v2468 = vadd.f32 0.0, %v2467
      %v2469 = vpop.f32.mrb[0].mxu0
      %2470 = vmatprep.mubr.f32.mxu0 0.0
      %2471 = vmatmul.mubr.f32.gmra.mrb[0].mxu0 %v2349
      %v2472 = vpop.f32.mrb[0].mxu0
      %v2473 = vadd.f32 0.0, %v2472
      %v2474 = vpop.f32.mrb[0].mxu0
      %2475 = vmatprep.mubr.f32.mxu0 0.0
      %2476 = vmatmul.mubr.f32.gmra.mrb[0].mxu0 %v2350
      %v2477 = vpop.f32.mrb[0].mxu0
      %v2478 = vadd.f32 0.0, %v2477
      %v2479 = vpop.f32.mrb[0].mxu0
      %2480 = vmatprep.mubr.f32.mxu0 0.0
      %2481 = vmatmul.mubr.f32.gmra.mrb[0].mxu0 %v2351
      %v2482 = vpop.f32.mrb[0].mxu0
      %v2483 = vadd.f32 0.0, %v2482
      %v2484 = vpop.f32.mrb[0].mxu0
      %2485 = vmatprep.mubr.f32.mxu0 0.0
      %2486 = vmatmul.mubr.f32.gmra.mrb[0].mxu0 %v2352
      %v2487 = vpop.f32.mrb[0].mxu0
      %v2488 = vadd.f32 0.0, %v2487
      %v2489 = vpop.f32.mrb[0].mxu0
      %2490 = vmatprep.mubr.f32.mxu0 0.0
      %2491 = vmatmul.mubr.f32.gmra.mrb[0].mxu0 %v2353
      %v2492 = vpop.f32.mrb[0].mxu0
      %v2493 = vadd.f32 0.0, %v2492
      %v2494 = vpop.f32.mrb[0].mxu0
      %2495 = vmatprep.mubr.f32.mxu0 0.0
      %2496 = vmatmul.mubr.f32.gmra.mrb[0].mxu0 %v2354
      %v2497 = vpop.f32.mrb[0].mxu0
      %v2498 = vadd.f32 0.0, %v2497
      %v2499 = vpop.f32.mrb[0].mxu0
      %2500 = vmatprep.mubr.f32.mxu0 0.0
      %2501 = vmatmul.mubr.f32.gmra.mrb[0].mxu0 %v2355
      %v2502 = vpop.f32.mrb[0].mxu0
      %v2503 = vadd.f32 0.0, %v2502
      %v2504 = vpop.f32.mrb[0].mxu0
      %2505 = vmatprep.mubr.f32.mxu0 0.0
      %2506 = vmatmul.mubr.f32.gmra.mrb[0].mxu0 %v2356
      %v2507 = vpop.f32.mrb[0].mxu0
      %v2508 = vadd.f32 0.0, %v2507
      %v2509 = vpop.f32.mrb[0].mxu0
      %2510 = vmatprep.mubr.f32.mxu0 0.0
      %2511 = vmatmul.mubr.f32.gmra.mrb[0].mxu0 %v2357
      %v2512 = vpop.f32.mrb[0].mxu0
      %v2513 = vadd.f32 0.0, %v2512
      %v2514 = vpop.f32.mrb[0].mxu0
      %2515 = vmatprep.mubr.f32.mxu0 0.0
      %2516 = vmatmul.mubr.f32.gmra.mrb[0].mxu0 %v2358
      %v2517 = vpop.f32.mrb[0].mxu0
      %v2518 = vadd.f32 0.0, %v2517
      %v2519 = vpop.f32.mrb[0].mxu0
      %2520 = vmatprep.mubr.f32.mxu0 0.0
      %2521 = vmatmul.mubr.f32.gmra.mrb[0].mxu0 %v2359
      %v2522 = vpop.f32.mrb[0].mxu0
      %v2523 = vadd.f32 0.0, %v2522
      %v2524 = vpop.f32.mrb[0].mxu0
      %2525 = vmatprep.mubr.f32.mxu0 0.0
      %2526 = vmatmul.mubr.f32.gmra.mrb[0].mxu0 %v2360
      %v2527 = vpop.f32.mrb[0].mxu0
      %v2528 = vadd.f32 0.0, %v2527
      %v2529 = vpop.f32.mrb[0].mxu0
      %2530 = vmatprep.mubr.f32.mxu0 0.0
      %2531 = vmatmul.mubr.f32.gmra.mrb[0].mxu0 %v2361
      %v2532 = vpop.f32.mrb[0].mxu0
      %v2533 = vadd.f32 0.0, %v2532
      %v2534 = vpop.f32.mrb[0].mxu0
      %2535 = vmatprep.mubr.f32.mxu0 0.0
      %2536 = vmatmul.mubr.f32.gmra.mrb[0].mxu0 %v2362
      %v2537 = vpop.f32.mrb[0].mxu0
      %v2538 = vadd.f32 0.0, %v2537
      %v2539 = vpop.f32.mrb[0].mxu0
      %2540 = vmatprep.mubr.f32.mxu0 0.0
      %2541 = vmatmul.mubr.f32.gmra.mrb[0].mxu0 %v2363
      %v2542 = vpop.f32.mrb[0].mxu0
      %v2543 = vadd.f32 0.0, %v2542
      %v2544 = vpop.f32.mrb[0].mxu0
      %2545 = vmatprep.mubr.f32.mxu0 0.0
      %2546 = vmatmul.mubr.f32.gmra.mrb[0].mxu0 %v2364
      %v2547 = vpop.f32.mrb[0].mxu0
      %v2548 = vadd.f32 0.0, %v2547
      %v2549 = vpop.f32.mrb[0].mxu0
      %2550 = vmatprep.mubr.f32.mxu0 0.0
      %2551 = vmatmul.mubr.f32.gmra.mrb[0].mxu0 %v2365
      %v2552 = vpop.f32.mrb[0].mxu0
      %v2553 = vadd.f32 0.0, %v2552
      %v2554 = vpop.f32.mrb[0].mxu0
      %2555 = vmatprep.mubr.f32.mxu0 0.0
      %2556 = vmatmul.mubr.f32.gmra.mrb[0].mxu0 %v2366
      %v2557 = vpop.f32.mrb[0].mxu0
      %v2558 = vadd.f32 0.0, %v2557
      %v2559 = vpop.f32.mrb[0].mxu0
      %2560 = vmatprep.mubr.f32.mxu0 0.0
      %2561 = vmatmul.mubr.f32.gmra.mrb[0].mxu0 %v2367
      %v2562 = vpop.f32.mrb[0].mxu0
      %v2563 = vadd.f32 0.0, %v2562
      %v2564 = vpop.f32.mrb[0].mxu0
      %2565 = vmatprep.mubr.f32.mxu0 0.0
      %2566 = vmatmul.mubr.f32.gmra.mrb[0].mxu0 %v2368
      %v2567 = vpop.f32.mrb[0].mxu0
      %v2568 = vadd.f32 0.0, %v2567
      %v2569 = vpop.f32.mrb[0].mxu0
      %2570 = vmatprep.mubr.f32.mxu0 0.0
      %2571 = vmatmul.mubr.f32.gmra.mrb[0].mxu0 %v2369
      %v2572 = vpop.f32.mrb[0].mxu0
      %v2573 = vadd.f32 0.0, %v2572
      %v2574 = vpop.f32.mrb[0].mxu0
      %2575 = vmatprep.mubr.f32.mxu0 0.0
      %2576 = vmatmul.mubr.f32.gmra.mrb[0].mxu0 %v2370
      %v2577 = vpop.f32.mrb[0].mxu0
      %v2578 = vadd.f32 0.0, %v2577
      %v2579 = vpop.f32.mrb[0].mxu0
      %2580 = vmatprep.mubr.f32.mxu0 0.0
      %2581 = vmatmul.mubr.f32.gmra.mrb[0].mxu0 %v2371
      %v2582 = vpop.f32.mrb[0].mxu0
      %v2583 = vadd.f32 0.0, %v2582
      %v2584 = vpop.f32.mrb[0].mxu0
      %2585 = vmatprep.mubr.f32.mxu0 0.0
      %2586 = vmatmul.mubr.f32.gmra.mrb[0].mxu0 %v2372
      %v2587 = vpop.f32.mrb[0].mxu0
      %v2588 = vadd.f32 0.0, %v2587
      %v2589 = vpop.f32.mrb[0].mxu0
      %2590 = vmatprep.mubr.f32.mxu0 0.0
      %2591 = vmatmul.mubr.f32.gmra.mrb[0].mxu0 %v2373
      %v2592 = vpop.f32.mrb[0].mxu0
      %v2593 = vadd.f32 0.0, %v2592
      %v2594 = vpop.f32.mrb[0].mxu0
      %2595 = vmatprep.mubr.f32.mxu0 0.0
      %2596 = vmatmul.mubr.f32.gmra.mrb[0].mxu0 %v2374
      %v2597 = vpop.f32.mrb[0].mxu0
      %v2598 = vadd.f32 0.0, %v2597
      %v2599 = vpop.f32.mrb[0].mxu0
      %2600 = vmatprep.mubr.f32.mxu0 0.0
      %2601 = vmatmul.mubr.f32.gmra.mrb[0].mxu0 %v2375
      %v2602 = vpop.f32.mrb[0].mxu0
      %v2603 = vadd.f32 0.0, %v2602
      %v2604 = vpop.f32.mrb[0].mxu0
      %2605 = vmatprep.mubr.f32.mxu0 0.0
      %2606 = vmatmul.mubr.f32.gmra.mrb[0].mxu0 %v2376
      %v2607 = vpop.f32.mrb[0].mxu0
      %v2608 = vadd.f32 0.0, %v2607
      %v2609 = vpop.f32.mrb[0].mxu0
      %2610 = vmatprep.mubr.f32.mxu0 0.0
      %2611 = vmatmul.mubr.f32.gmra.mrb[0].mxu0 %v2377
      %v2612 = vpop.f32.mrb[0].mxu0
      %v2613 = vadd.f32 0.0, %v2612
      %v2614 = vpop.f32.mrb[0].mxu0
      %2615 = vmatprep.mubr.f32.mxu0 0.0
      %2616 = vmatmul.mubr.f32.gmra.mrb[0].mxu0 %v2378
      %v2617 = vpop.f32.mrb[0].mxu0
      %v2618 = vadd.f32 0.0, %v2617
      %v2619 = vpop.f32.mrb[0].mxu0
      %2620 = vdwg.mxu0
      %v2621 = vadd.f32 %v2283, %v2463
      %v2622 = vadd.f32 %v2284, %v2468
      %v2623 = vadd.f32 %v2285, %v2473
      %v2624 = vadd.f32 %v2286, %v2478
      %v2625 = vadd.f32 %v2287, %v2483
      %v2626 = vadd.f32 %v2288, %v2488
      %v2627 = vadd.f32 %v2289, %v2493
      %v2628 = vadd.f32 %v2290, %v2498
      %v2629 = vadd.f32 %v2291, %v2503
      %v2630 = vadd.f32 %v2292, %v2508
      %v2631 = vadd.f32 %v2293, %v2513
      %v2632 = vadd.f32 %v2294, %v2518
      %v2633 = vadd.f32 %v2295, %v2523
      %v2634 = vadd.f32 %v2296, %v2528
      %v2635 = vadd.f32 %v2297, %v2533
      %v2636 = vadd.f32 %v2298, %v2538
      %v2637 = vadd.f32 %v2299, %v2543
      %v2638 = vadd.f32 %v2300, %v2548
      %v2639 = vadd.f32 %v2301, %v2553
      %v2640 = vadd.f32 %v2302, %v2558
      %v2641 = vadd.f32 %v2303, %v2563
      %v2642 = vadd.f32 %v2304, %v2568
      %v2643 = vadd.f32 %v2305, %v2573
      %v2644 = vadd.f32 %v2306, %v2578
      %v2645 = vadd.f32 %v2307, %v2583
      %v2646 = vadd.f32 %v2308, %v2588
      %v2647 = vadd.f32 %v2309, %v2593
      %v2648 = vadd.f32 %v2310, %v2598
      %v2649 = vadd.f32 %v2311, %v2603
      %v2650 = vadd.f32 %v2312, %v2608
      %v2651 = vadd.f32 %v2313, %v2613
      %v2652 = vadd.f32 %v2314, %v2618
      %v2653 = vld [vmem:[%s339 + $0x27] sm:$0xff]
      %v2654 = vld [vmem:[%s339 + $0x2f] sm:$0xff]
      %v2655 = vld [vmem:[%s339 + $0x37] sm:$0xff]
      %v2656 = vld [vmem:[%s339 + $0x3f] sm:$0xff]
      %v2657 = vld [vmem:[%s339 + $0x47] sm:$0xff]
      %v2658 = vld [vmem:[%s339 + $0x4f] sm:$0xff]
      %v2659 = vld [vmem:[%s339 + $0x57] sm:$0xff]
      %v2660 = vld [vmem:[%s339 + $0x5f] sm:$0xff]
      %v2661 = vld [vmem:[%s339 + $0x67] sm:$0xff]
      %v2662 = vld [vmem:[%s339 + $0x6f] sm:$0xff]
      %v2663 = vld [vmem:[%s339 + $0x77] sm:$0xff]
      %v2664 = vld [vmem:[%s339 + $0x7f] sm:$0xff]
      %v2665 = vld [vmem:[%s339 + $0x87] sm:$0xff]
      %v2666 = vld [vmem:[%s339 + $0x8f] sm:$0xff]
      %v2667 = vld [vmem:[%s339 + $0x97] sm:$0xff]
      %v2668 = vld [vmem:[%s339 + $0x9f] sm:$0xff]
      %v2669 = vld [vmem:[%s339 + $0xa7] sm:$0xff]
      %v2670 = vld [vmem:[%s339 + $0xaf] sm:$0xff]
      %v2671 = vld [vmem:[%s339 + $0xb7] sm:$0xff]
      %v2672 = vld [vmem:[%s339 + $0xbf] sm:$0xff]
      %v2673 = vld [vmem:[%s339 + $0xc7] sm:$0xff]
      %v2674 = vld [vmem:[%s339 + $0xcf] sm:$0xff]
      %v2675 = vld [vmem:[%s339 + $0xd7] sm:$0xff]
      %v2676 = vld [vmem:[%s339 + $0xdf] sm:$0xff]
      %v2677 = vld [vmem:[%s339 + $0xe7] sm:$0xff]
      %v2678 = vld [vmem:[%s339 + $0xef] sm:$0xff]
      %v2679 = vld [vmem:[%s339 + $0xf7] sm:$0xff]
      %v2680 = vld [vmem:[%s339 + $0xff] sm:$0xff]
      %v2681 = vld [vmem:[%s339 + $0x107] sm:$0xff]
      %v2682 = vld [vmem:[%s339 + $0x10f] sm:$0xff]
      %v2683 = vld [vmem:[%s339 + $0x117] sm:$0xff]
      %v2684 = vld [vmem:[%s339 + $0x11f] sm:$0xff]
      %v2685 = vmul.f32 %v2653, %v469
      %v2686 = vmul.f32 %v2654, %v474
      %v2687 = vmul.f32 %v2655, %v479
      %v2688 = vmul.f32 %v2656, %v484
      %v2689 = vmul.f32 %v2657, %v489
      %v2690 = vmul.f32 %v2658, %v494
      %v2691 = vmul.f32 %v2659, %v499
      %v2692 = vmul.f32 %v2660, %v504
      %v2693 = vmul.f32 %v2661, %v509
      %v2694 = vmul.f32 %v2662, %v514
      %v2695 = vmul.f32 %v2663, %v519
      %v2696 = vmul.f32 %v2664, %v524
      %v2697 = vmul.f32 %v2665, %v529
      %v2698 = vmul.f32 %v2666, %v534
      %v2699 = vmul.f32 %v2667, %v539
      %v2700 = vmul.f32 %v2668, %v544
      %v2701 = vmul.f32 %v2669, %v549
      %v2702 = vmul.f32 %v2670, %v554
      %v2703 = vmul.f32 %v2671, %v559
      %v2704 = vmul.f32 %v2672, %v564
      %v2705 = vmul.f32 %v2673, %v569
      %v2706 = vmul.f32 %v2674, %v574
      %v2707 = vmul.f32 %v2675, %v579
      %v2708 = vmul.f32 %v2676, %v584
      %v2709 = vmul.f32 %v2677, %v589
      %v2710 = vmul.f32 %v2678, %v594
      %v2711 = vmul.f32 %v2679, %v599
      %v2712 = vmul.f32 %v2680, %v604
      %v2713 = vmul.f32 %v2681, %v609
      %v2714 = vmul.f32 %v2682, %v614
      %v2715 = vmul.f32 %v2683, %v619
      %v2716 = vmul.f32 %v2684, %v624
      %s2717 = scalar_lea.vmem %s343, 768
      %v2718 = vld [vmem:[%s2717] sm:$0xff]
      %v2719 = vld [vmem:[%s2717 + $0x8] sm:$0xff]
      %v2720 = vld [vmem:[%s2717 + $0x10] sm:$0xff]
      %v2721 = vld [vmem:[%s2717 + $0x18] sm:$0xff]
      %v2722 = vld [vmem:[%s2717 + $0x20] sm:$0xff]
      %v2723 = vld [vmem:[%s2717 + $0x28] sm:$0xff]
      %v2724 = vld [vmem:[%s2717 + $0x30] sm:$0xff]
      %v2725 = vld [vmem:[%s2717 + $0x38] sm:$0xff]
      %v2726 = vld [vmem:[%s2717 + $0x40] sm:$0xff]
      %v2727 = vld [vmem:[%s2717 + $0x48] sm:$0xff]
      %v2728 = vld [vmem:[%s2717 + $0x50] sm:$0xff]
      %v2729 = vld [vmem:[%s2717 + $0x58] sm:$0xff]
      %v2730 = vld [vmem:[%s2717 + $0x60] sm:$0xff]
      %v2731 = vld [vmem:[%s2717 + $0x68] sm:$0xff]
      %v2732 = vld [vmem:[%s2717 + $0x70] sm:$0xff]
      %v2733 = vld [vmem:[%s2717 + $0x78] sm:$0xff]
      %2734 = vmatprep.subr.mxu0 0.0
      %2735 = vmatpush1.msra.mxu0 %v2718
      %2736 = vmatprep.subr.mxu0 0.0
      %2737 = vmatpush1.msra.mxu0 %v2719
      %2738 = vmatprep.subr.mxu0 0.0
      %2739 = vmatpush1.msra.mxu0 %v2720
      %2740 = vmatprep.subr.mxu0 0.0
      %2741 = vmatpush1.msra.mxu0 %v2721
      %2742 = vmatprep.subr.mxu0 0.0
      %2743 = vmatpush1.msra.mxu0 %v2722
      %2744 = vmatprep.subr.mxu0 0.0
      %2745 = vmatpush1.msra.mxu0 %v2723
      %2746 = vmatprep.subr.mxu0 0.0
      %2747 = vmatpush1.msra.mxu0 %v2724
      %2748 = vmatprep.subr.mxu0 0.0
      %2749 = vmatpush1.msra.mxu0 %v2725
      %2750 = vmatprep.subr.mxu0 0.0
      %2751 = vmatpush1.msra.mxu0 %v2726
      %2752 = vmatprep.subr.mxu0 0.0
      %2753 = vmatpush1.msra.mxu0 %v2727
      %2754 = vmatprep.subr.mxu0 0.0
      %2755 = vmatpush1.msra.mxu0 %v2728
      %2756 = vmatprep.subr.mxu0 0.0
      %2757 = vmatpush1.msra.mxu0 %v2729
      %2758 = vmatprep.subr.mxu0 0.0
      %2759 = vmatpush1.msra.mxu0 %v2730
      %2760 = vmatprep.subr.mxu0 0.0
      %2761 = vmatpush1.msra.mxu0 %v2731
      %2762 = vmatprep.subr.mxu0 0.0
      %2763 = vmatpush1.msra.mxu0 %v2732
      %2764 = vmatprep.subr.mxu0 0.0
      %2765 = vmatpush1.msra.mxu0 %v2733
      %2766 = vmatprep.subr.mxu0 0.0
      %2767 = vmatpush1.msra.mxu0 0.0
      %2768 = vmatprep.subr.mxu0 0.0
      %2769 = vmatpush1.msra.mxu0 0.0
      %2770 = vmatprep.subr.mxu0 0.0
      %2771 = vmatpush1.msra.mxu0 0.0
      %2772 = vmatprep.subr.mxu0 0.0
      %2773 = vmatpush1.msra.mxu0 0.0
      %2774 = vmatprep.subr.mxu0 0.0
      %2775 = vmatpush1.msra.mxu0 0.0
      %2776 = vmatprep.subr.mxu0 0.0
      %2777 = vmatpush1.msra.mxu0 0.0
      %2778 = vmatprep.subr.mxu0 0.0
      %2779 = vmatpush1.msra.mxu0 0.0
      %2780 = vmatprep.subr.mxu0 0.0
      %2781 = vmatpush1.msra.mxu0 0.0
      %2782 = vmatprep.subr.mxu0 0.0
      %2783 = vmatpush1.msra.mxu0 0.0
      %2784 = vmatprep.subr.mxu0 0.0
      %2785 = vmatpush1.msra.mxu0 0.0
      %2786 = vmatprep.subr.mxu0 0.0
      %2787 = vmatpush1.msra.mxu0 0.0
      %2788 = vmatprep.subr.mxu0 0.0
      %2789 = vmatpush1.msra.mxu0 0.0
      %2790 = vmatprep.subr.mxu0 0.0
      %2791 = vmatpush1.msra.mxu0 0.0
      %2792 = vmatprep.subr.mxu0 0.0
      %2793 = vmatpush1.msra.mxu0 0.0
      %2794 = vmatprep.subr.mxu0 0.0
      %2795 = vmatpush1.msra.mxu0 0.0
      %2796 = vmatprep.subr.mxu0 0.0
      %2797 = vmatpush1.msra.mxu0 0.0
      %2798 = vmatprep.mubr.f32.mxu0 0.0
      %2799 = vmatmul.mubr.f32.gmra.mrb[0].mxu0 %v2685
      %v2800 = vpop.f32.mrb[0].mxu0
      %v2801 = vadd.f32 0.0, %v2800
      %v2802 = vpop.f32.mrb[0].mxu0
      %2803 = vmatprep.mubr.f32.mxu0 0.0
      %2804 = vmatmul.mubr.f32.gmra.mrb[0].mxu0 %v2686
      %v2805 = vpop.f32.mrb[0].mxu0
      %v2806 = vadd.f32 0.0, %v2805
      %v2807 = vpop.f32.mrb[0].mxu0
      %2808 = vmatprep.mubr.f32.mxu0 0.0
      %2809 = vmatmul.mubr.f32.gmra.mrb[0].mxu0 %v2687
      %v2810 = vpop.f32.mrb[0].mxu0
      %v2811 = vadd.f32 0.0, %v2810
      %v2812 = vpop.f32.mrb[0].mxu0
      %2813 = vmatprep.mubr.f32.mxu0 0.0
      %2814 = vmatmul.mubr.f32.gmra.mrb[0].mxu0 %v2688
      %v2815 = vpop.f32.mrb[0].mxu0
      %v2816 = vadd.f32 0.0, %v2815
      %v2817 = vpop.f32.mrb[0].mxu0
      %2818 = vmatprep.mubr.f32.mxu0 0.0
      %2819 = vmatmul.mubr.f32.gmra.mrb[0].mxu0 %v2689
      %v2820 = vpop.f32.mrb[0].mxu0
      %v2821 = vadd.f32 0.0, %v2820
      %v2822 = vpop.f32.mrb[0].mxu0
      %2823 = vmatprep.mubr.f32.mxu0 0.0
      %2824 = vmatmul.mubr.f32.gmra.mrb[0].mxu0 %v2690
      %v2825 = vpop.f32.mrb[0].mxu0
      %v2826 = vadd.f32 0.0, %v2825
      %v2827 = vpop.f32.mrb[0].mxu0
      %2828 = vmatprep.mubr.f32.mxu0 0.0
      %2829 = vmatmul.mubr.f32.gmra.mrb[0].mxu0 %v2691
      %v2830 = vpop.f32.mrb[0].mxu0
      %v2831 = vadd.f32 0.0, %v2830
      %v2832 = vpop.f32.mrb[0].mxu0
      %2833 = vmatprep.mubr.f32.mxu0 0.0
      %2834 = vmatmul.mubr.f32.gmra.mrb[0].mxu0 %v2692
      %v2835 = vpop.f32.mrb[0].mxu0
      %v2836 = vadd.f32 0.0, %v2835
      %v2837 = vpop.f32.mrb[0].mxu0
      %2838 = vmatprep.mubr.f32.mxu0 0.0
      %2839 = vmatmul.mubr.f32.gmra.mrb[0].mxu0 %v2693
      %v2840 = vpop.f32.mrb[0].mxu0
      %v2841 = vadd.f32 0.0, %v2840
      %v2842 = vpop.f32.mrb[0].mxu0
      %2843 = vmatprep.mubr.f32.mxu0 0.0
      %2844 = vmatmul.mubr.f32.gmra.mrb[0].mxu0 %v2694
      %v2845 = vpop.f32.mrb[0].mxu0
      %v2846 = vadd.f32 0.0, %v2845
      %v2847 = vpop.f32.mrb[0].mxu0
      %2848 = vmatprep.mubr.f32.mxu0 0.0
      %2849 = vmatmul.mubr.f32.gmra.mrb[0].mxu0 %v2695
      %v2850 = vpop.f32.mrb[0].mxu0
      %v2851 = vadd.f32 0.0, %v2850
      %v2852 = vpop.f32.mrb[0].mxu0
      %2853 = vmatprep.mubr.f32.mxu0 0.0
      %2854 = vmatmul.mubr.f32.gmra.mrb[0].mxu0 %v2696
      %v2855 = vpop.f32.mrb[0].mxu0
      %v2856 = vadd.f32 0.0, %v2855
      %v2857 = vpop.f32.mrb[0].mxu0
      %2858 = vmatprep.mubr.f32.mxu0 0.0
      %2859 = vmatmul.mubr.f32.gmra.mrb[0].mxu0 %v2697
      %v2860 = vpop.f32.mrb[0].mxu0
      %v2861 = vadd.f32 0.0, %v2860
      %v2862 = vpop.f32.mrb[0].mxu0
      %2863 = vmatprep.mubr.f32.mxu0 0.0
      %2864 = vmatmul.mubr.f32.gmra.mrb[0].mxu0 %v2698
      %v2865 = vpop.f32.mrb[0].mxu0
      %v2866 = vadd.f32 0.0, %v2865
      %v2867 = vpop.f32.mrb[0].mxu0
      %2868 = vmatprep.mubr.f32.mxu0 0.0
      %2869 = vmatmul.mubr.f32.gmra.mrb[0].mxu0 %v2699
      %v2870 = vpop.f32.mrb[0].mxu0
      %v2871 = vadd.f32 0.0, %v2870
      %v2872 = vpop.f32.mrb[0].mxu0
      %2873 = vmatprep.mubr.f32.mxu0 0.0
      %2874 = vmatmul.mubr.f32.gmra.mrb[0].mxu0 %v2700
      %v2875 = vpop.f32.mrb[0].mxu0
      %v2876 = vadd.f32 0.0, %v2875
      %v2877 = vpop.f32.mrb[0].mxu0
      %2878 = vmatprep.mubr.f32.mxu0 0.0
      %2879 = vmatmul.mubr.f32.gmra.mrb[0].mxu0 %v2701
      %v2880 = vpop.f32.mrb[0].mxu0
      %v2881 = vadd.f32 0.0, %v2880
      %v2882 = vpop.f32.mrb[0].mxu0
      %2883 = vmatprep.mubr.f32.mxu0 0.0
      %2884 = vmatmul.mubr.f32.gmra.mrb[0].mxu0 %v2702
      %v2885 = vpop.f32.mrb[0].mxu0
      %v2886 = vadd.f32 0.0, %v2885
      %v2887 = vpop.f32.mrb[0].mxu0
      %2888 = vmatprep.mubr.f32.mxu0 0.0
      %2889 = vmatmul.mubr.f32.gmra.mrb[0].mxu0 %v2703
      %v2890 = vpop.f32.mrb[0].mxu0
      %v2891 = vadd.f32 0.0, %v2890
      %v2892 = vpop.f32.mrb[0].mxu0
      %2893 = vmatprep.mubr.f32.mxu0 0.0
      %2894 = vmatmul.mubr.f32.gmra.mrb[0].mxu0 %v2704
      %v2895 = vpop.f32.mrb[0].mxu0
      %v2896 = vadd.f32 0.0, %v2895
      %v2897 = vpop.f32.mrb[0].mxu0
      %2898 = vmatprep.mubr.f32.mxu0 0.0
      %2899 = vmatmul.mubr.f32.gmra.mrb[0].mxu0 %v2705
      %v2900 = vpop.f32.mrb[0].mxu0
      %v2901 = vadd.f32 0.0, %v2900
      %v2902 = vpop.f32.mrb[0].mxu0
      %2903 = vmatprep.mubr.f32.mxu0 0.0
      %2904 = vmatmul.mubr.f32.gmra.mrb[0].mxu0 %v2706
      %v2905 = vpop.f32.mrb[0].mxu0
      %v2906 = vadd.f32 0.0, %v2905
      %v2907 = vpop.f32.mrb[0].mxu0
      %2908 = vmatprep.mubr.f32.mxu0 0.0
      %2909 = vmatmul.mubr.f32.gmra.mrb[0].mxu0 %v2707
      %v2910 = vpop.f32.mrb[0].mxu0
      %v2911 = vadd.f32 0.0, %v2910
      %v2912 = vpop.f32.mrb[0].mxu0
      %2913 = vmatprep.mubr.f32.mxu0 0.0
      %2914 = vmatmul.mubr.f32.gmra.mrb[0].mxu0 %v2708
      %v2915 = vpop.f32.mrb[0].mxu0
      %v2916 = vadd.f32 0.0, %v2915
      %v2917 = vpop.f32.mrb[0].mxu0
      %2918 = vmatprep.mubr.f32.mxu0 0.0
      %2919 = vmatmul.mubr.f32.gmra.mrb[0].mxu0 %v2709
      %v2920 = vpop.f32.mrb[0].mxu0
      %v2921 = vadd.f32 0.0, %v2920
      %v2922 = vpop.f32.mrb[0].mxu0
      %2923 = vmatprep.mubr.f32.mxu0 0.0
      %2924 = vmatmul.mubr.f32.gmra.mrb[0].mxu0 %v2710
      %v2925 = vpop.f32.mrb[0].mxu0
      %v2926 = vadd.f32 0.0, %v2925
      %v2927 = vpop.f32.mrb[0].mxu0
      %2928 = vmatprep.mubr.f32.mxu0 0.0
      %2929 = vmatmul.mubr.f32.gmra.mrb[0].mxu0 %v2711
      %v2930 = vpop.f32.mrb[0].mxu0
      %v2931 = vadd.f32 0.0, %v2930
      %v2932 = vpop.f32.mrb[0].mxu0
      %2933 = vmatprep.mubr.f32.mxu0 0.0
      %2934 = vmatmul.mubr.f32.gmra.mrb[0].mxu0 %v2712
      %v2935 = vpop.f32.mrb[0].mxu0
      %v2936 = vadd.f32 0.0, %v2935
      %v2937 = vpop.f32.mrb[0].mxu0
      %2938 = vmatprep.mubr.f32.mxu0 0.0
      %2939 = vmatmul.mubr.f32.gmra.mrb[0].mxu0 %v2713
      %v2940 = vpop.f32.mrb[0].mxu0
      %v2941 = vadd.f32 0.0, %v2940
      %v2942 = vpop.f32.mrb[0].mxu0
      %2943 = vmatprep.mubr.f32.mxu0 0.0
      %2944 = vmatmul.mubr.f32.gmra.mrb[0].mxu0 %v2714
      %v2945 = vpop.f32.mrb[0].mxu0
      %v2946 = vadd.f32 0.0, %v2945
      %v2947 = vpop.f32.mrb[0].mxu0
      %2948 = vmatprep.mubr.f32.mxu0 0.0
      %2949 = vmatmul.mubr.f32.gmra.mrb[0].mxu0 %v2715
      %v2950 = vpop.f32.mrb[0].mxu0
      %v2951 = vadd.f32 0.0, %v2950
      %v2952 = vpop.f32.mrb[0].mxu0
      %2953 = vmatprep.mubr.f32.mxu0 0.0
      %2954 = vmatmul.mubr.f32.gmra.mrb[0].mxu0 %v2716
      %v2955 = vpop.f32.mrb[0].mxu0
      %v2956 = vadd.f32 0.0, %v2955
      %v2957 = vpop.f32.mrb[0].mxu0
      %2958 = vdwg.mxu0
      %v2959 = vadd.f32 %v2621, %v2801
      %v2960 = vadd.f32 %v2622, %v2806
      %v2961 = vadd.f32 %v2623, %v2811
      %v2962 = vadd.f32 %v2624, %v2816
      %v2963 = vadd.f32 %v2625, %v2821
      %v2964 = vadd.f32 %v2626, %v2826
      %v2965 = vadd.f32 %v2627, %v2831
      %v2966 = vadd.f32 %v2628, %v2836
      %v2967 = vadd.f32 %v2629, %v2841
      %v2968 = vadd.f32 %v2630, %v2846
      %v2969 = vadd.f32 %v2631, %v2851
      %v2970 = vadd.f32 %v2632, %v2856
      %v2971 = vadd.f32 %v2633, %v2861
      %v2972 = vadd.f32 %v2634, %v2866
      %v2973 = vadd.f32 %v2635, %v2871
      %v2974 = vadd.f32 %v2636, %v2876
      %v2975 = vadd.f32 %v2637, %v2881
      %v2976 = vadd.f32 %v2638, %v2886
      %v2977 = vadd.f32 %v2639, %v2891
      %v2978 = vadd.f32 %v2640, %v2896
      %v2979 = vadd.f32 %v2641, %v2901
      %v2980 = vadd.f32 %v2642, %v2906
      %v2981 = vadd.f32 %v2643, %v2911
      %v2982 = vadd.f32 %v2644, %v2916
      %v2983 = vadd.f32 %v2645, %v2921
      %v2984 = vadd.f32 %v2646, %v2926
      %v2985 = vadd.f32 %v2647, %v2931
      %v2986 = vadd.f32 %v2648, %v2936
      %v2987 = vadd.f32 %v2649, %v2941
      %v2988 = vadd.f32 %v2650, %v2946
      %v2989 = vadd.f32 %v2651, %v2951
      %v2990 = vadd.f32 %v2652, %v2956
      %v2991 = vld [vmem:[%s339 + $0x28] sm:$0xff]
      %v2992 = vld [vmem:[%s339 + $0x30] sm:$0xff]
      %v2993 = vld [vmem:[%s339 + $0x38] sm:$0xff]
      %v2994 = vld [vmem:[%s339 + $0x40] sm:$0xff]
      %v2995 = vld [vmem:[%s339 + $0x48] sm:$0xff]
      %v2996 = vld [vmem:[%s339 + $0x50] sm:$0xff]
      %v2997 = vld [vmem:[%s339 + $0x58] sm:$0xff]
      %v2998 = vld [vmem:[%s339 + $0x60] sm:$0xff]
      %v2999 = vld [vmem:[%s339 + $0x68] sm:$0xff]
      %v3000 = vld [vmem:[%s339 + $0x70] sm:$0xff]
      %v3001 = vld [vmem:[%s339 + $0x78] sm:$0xff]
      %v3002 = vld [vmem:[%s339 + $0x80] sm:$0xff]
      %v3003 = vld [vmem:[%s339 + $0x88] sm:$0xff]
      %v3004 = vld [vmem:[%s339 + $0x90] sm:$0xff]
      %v3005 = vld [vmem:[%s339 + $0x98] sm:$0xff]
      %v3006 = vld [vmem:[%s339 + $0xa0] sm:$0xff]
      %v3007 = vld [vmem:[%s339 + $0xa8] sm:$0xff]
      %v3008 = vld [vmem:[%s339 + $0xb0] sm:$0xff]
      %v3009 = vld [vmem:[%s339 + $0xb8] sm:$0xff]
      %v3010 = vld [vmem:[%s339 + $0xc0] sm:$0xff]
      %v3011 = vld [vmem:[%s339 + $0xc8] sm:$0xff]
      %v3012 = vld [vmem:[%s339 + $0xd0] sm:$0xff]
      %v3013 = vld [vmem:[%s339 + $0xd8] sm:$0xff]
      %v3014 = vld [vmem:[%s339 + $0xe0] sm:$0xff]
      %v3015 = vld [vmem:[%s339 + $0xe8] sm:$0xff]
      %v3016 = vld [vmem:[%s339 + $0xf0] sm:$0xff]
      %v3017 = vld [vmem:[%s339 + $0xf8] sm:$0xff]
      %v3018 = vld [vmem:[%s339 + $0x100] sm:$0xff]
      %v3019 = vld [vmem:[%s339 + $0x108] sm:$0xff]
      %v3020 = vld [vmem:[%s339 + $0x110] sm:$0xff]
      %v3021 = vld [vmem:[%s339 + $0x118] sm:$0xff]
      %v3022 = vld [vmem:[%s339 + $0x120] sm:$0xff]
      %s3023 = scalar_lea.vmem %s343, 896
      %v3024 = vld [vmem:[%s3023] sm:$0xff]
      %v3025 = vld [vmem:[%s3023 + $0x8] sm:$0xff]
      %v3026 = vld [vmem:[%s3023 + $0x10] sm:$0xff]
      %v3027 = vld [vmem:[%s3023 + $0x18] sm:$0xff]
      %v3028 = vld [vmem:[%s3023 + $0x20] sm:$0xff]
      %v3029 = vld [vmem:[%s3023 + $0x28] sm:$0xff]
      %v3030 = vld [vmem:[%s3023 + $0x30] sm:$0xff]
      %v3031 = vld [vmem:[%s3023 + $0x38] sm:$0xff]
      %v3032 = vld [vmem:[%s3023 + $0x40] sm:$0xff]
      %v3033 = vld [vmem:[%s3023 + $0x48] sm:$0xff]
      %v3034 = vld [vmem:[%s3023 + $0x50] sm:$0xff]
      %v3035 = vld [vmem:[%s3023 + $0x58] sm:$0xff]
      %v3036 = vld [vmem:[%s3023 + $0x60] sm:$0xff]
      %v3037 = vld [vmem:[%s3023 + $0x68] sm:$0xff]
      %v3038 = vld [vmem:[%s3023 + $0x70] sm:$0xff]
      %v3039 = vld [vmem:[%s3023 + $0x78] sm:$0xff]
      %3040 = vmatprep.subr.mxu0 0.0
      %3041 = vmatpush1.msra.mxu0 %v3024
      %3042 = vmatprep.subr.mxu0 0.0
      %3043 = vmatpush1.msra.mxu0 %v3025
      %3044 = vmatprep.subr.mxu0 0.0
      %3045 = vmatpush1.msra.mxu0 %v3026
      %3046 = vmatprep.subr.mxu0 0.0
      %3047 = vmatpush1.msra.mxu0 %v3027
      %3048 = vmatprep.subr.mxu0 0.0
      %3049 = vmatpush1.msra.mxu0 %v3028
      %3050 = vmatprep.subr.mxu0 0.0
      %3051 = vmatpush1.msra.mxu0 %v3029
      %3052 = vmatprep.subr.mxu0 0.0
      %3053 = vmatpush1.msra.mxu0 %v3030
      %3054 = vmatprep.subr.mxu0 0.0
      %3055 = vmatpush1.msra.mxu0 %v3031
      %3056 = vmatprep.subr.mxu0 0.0
      %3057 = vmatpush1.msra.mxu0 %v3032
      %3058 = vmatprep.subr.mxu0 0.0
      %3059 = vmatpush1.msra.mxu0 %v3033
      %3060 = vmatprep.subr.mxu0 0.0
      %3061 = vmatpush1.msra.mxu0 %v3034
      %3062 = vmatprep.subr.mxu0 0.0
      %3063 = vmatpush1.msra.mxu0 %v3035
      %3064 = vmatprep.subr.mxu0 0.0
      %3065 = vmatpush1.msra.mxu0 %v3036
      %3066 = vmatprep.subr.mxu0 0.0
      %3067 = vmatpush1.msra.mxu0 %v3037
      %3068 = vmatprep.subr.mxu0 0.0
      %3069 = vmatpush1.msra.mxu0 %v3038
      %3070 = vmatprep.subr.mxu0 0.0
      %3071 = vmatpush1.msra.mxu0 %v3039
      %3072 = vmatprep.subr.mxu0 0.0
      %3073 = vmatpush1.msra.mxu0 0.0
      %3074 = vmatprep.subr.mxu0 0.0
      %3075 = vmatpush1.msra.mxu0 0.0
      %3076 = vmatprep.subr.mxu0 0.0
      %3077 = vmatpush1.msra.mxu0 0.0
      %3078 = vmatprep.subr.mxu0 0.0
      %3079 = vmatpush1.msra.mxu0 0.0
      %3080 = vmatprep.subr.mxu0 0.0
      %3081 = vmatpush1.msra.mxu0 0.0
      %3082 = vmatprep.subr.mxu0 0.0
      %3083 = vmatpush1.msra.mxu0 0.0
      %3084 = vmatprep.subr.mxu0 0.0
      %3085 = vmatpush1.msra.mxu0 0.0
      %3086 = vmatprep.subr.mxu0 0.0
      %3087 = vmatpush1.msra.mxu0 0.0
      %3088 = vmatprep.subr.mxu0 0.0
      %3089 = vmatpush1.msra.mxu0 0.0
      %3090 = vmatprep.subr.mxu0 0.0
      %3091 = vmatpush1.msra.mxu0 0.0
      %3092 = vmatprep.subr.mxu0 0.0
      %3093 = vmatpush1.msra.mxu0 0.0
      %3094 = vmatprep.subr.mxu0 0.0
      %3095 = vmatpush1.msra.mxu0 0.0
      %3096 = vmatprep.subr.mxu0 0.0
      %3097 = vmatpush1.msra.mxu0 0.0
      %3098 = vmatprep.subr.mxu0 0.0
      %3099 = vmatpush1.msra.mxu0 0.0
      %3100 = vmatprep.subr.mxu0 0.0
      %3101 = vmatpush1.msra.mxu0 0.0
      %3102 = vmatprep.subr.mxu0 0.0
      %3103 = vmatpush1.msra.mxu0 0.0
      %3104 = vmatprep.mubr.f32.mxu0 0.0
      %3105 = vmatmul.mubr.f32.gmra.mrb[0].mxu0 %v2991
      %v3106 = vpop.f32.mrb[0].mxu0
      %v3107 = vadd.f32 0.0, %v3106
      %v3108 = vpop.f32.mrb[0].mxu0
      %3109 = vmatprep.mubr.f32.mxu0 0.0
      %3110 = vmatmul.mubr.f32.gmra.mrb[0].mxu0 %v2992
      %v3111 = vpop.f32.mrb[0].mxu0
      %v3112 = vadd.f32 0.0, %v3111
      %v3113 = vpop.f32.mrb[0].mxu0
      %3114 = vmatprep.mubr.f32.mxu0 0.0
      %3115 = vmatmul.mubr.f32.gmra.mrb[0].mxu0 %v2993
      %v3116 = vpop.f32.mrb[0].mxu0
      %v3117 = vadd.f32 0.0, %v3116
      %v3118 = vpop.f32.mrb[0].mxu0
      %3119 = vmatprep.mubr.f32.mxu0 0.0
      %3120 = vmatmul.mubr.f32.gmra.mrb[0].mxu0 %v2994
      %v3121 = vpop.f32.mrb[0].mxu0
      %v3122 = vadd.f32 0.0, %v3121
      %v3123 = vpop.f32.mrb[0].mxu0
      %3124 = vmatprep.mubr.f32.mxu0 0.0
      %3125 = vmatmul.mubr.f32.gmra.mrb[0].mxu0 %v2995
      %v3126 = vpop.f32.mrb[0].mxu0
      %v3127 = vadd.f32 0.0, %v3126
      %v3128 = vpop.f32.mrb[0].mxu0
      %3129 = vmatprep.mubr.f32.mxu0 0.0
      %3130 = vmatmul.mubr.f32.gmra.mrb[0].mxu0 %v2996
      %v3131 = vpop.f32.mrb[0].mxu0
      %v3132 = vadd.f32 0.0, %v3131
      %v3133 = vpop.f32.mrb[0].mxu0
      %3134 = vmatprep.mubr.f32.mxu0 0.0
      %3135 = vmatmul.mubr.f32.gmra.mrb[0].mxu0 %v2997
      %v3136 = vpop.f32.mrb[0].mxu0
      %v3137 = vadd.f32 0.0, %v3136
      %v3138 = vpop.f32.mrb[0].mxu0
      %3139 = vmatprep.mubr.f32.mxu0 0.0
      %3140 = vmatmul.mubr.f32.gmra.mrb[0].mxu0 %v2998
      %v3141 = vpop.f32.mrb[0].mxu0
      %v3142 = vadd.f32 0.0, %v3141
      %v3143 = vpop.f32.mrb[0].mxu0
      %3144 = vmatprep.mubr.f32.mxu0 0.0
      %3145 = vmatmul.mubr.f32.gmra.mrb[0].mxu0 %v2999
      %v3146 = vpop.f32.mrb[0].mxu0
      %v3147 = vadd.f32 0.0, %v3146
      %v3148 = vpop.f32.mrb[0].mxu0
      %3149 = vmatprep.mubr.f32.mxu0 0.0
      %3150 = vmatmul.mubr.f32.gmra.mrb[0].mxu0 %v3000
      %v3151 = vpop.f32.mrb[0].mxu0
      %v3152 = vadd.f32 0.0, %v3151
      %v3153 = vpop.f32.mrb[0].mxu0
      %3154 = vmatprep.mubr.f32.mxu0 0.0
      %3155 = vmatmul.mubr.f32.gmra.mrb[0].mxu0 %v3001
      %v3156 = vpop.f32.mrb[0].mxu0
      %v3157 = vadd.f32 0.0, %v3156
      %v3158 = vpop.f32.mrb[0].mxu0
      %3159 = vmatprep.mubr.f32.mxu0 0.0
      %3160 = vmatmul.mubr.f32.gmra.mrb[0].mxu0 %v3002
      %v3161 = vpop.f32.mrb[0].mxu0
      %v3162 = vadd.f32 0.0, %v3161
      %v3163 = vpop.f32.mrb[0].mxu0
      %3164 = vmatprep.mubr.f32.mxu0 0.0
      %3165 = vmatmul.mubr.f32.gmra.mrb[0].mxu0 %v3003
      %v3166 = vpop.f32.mrb[0].mxu0
      %v3167 = vadd.f32 0.0, %v3166
      %v3168 = vpop.f32.mrb[0].mxu0
      %3169 = vmatprep.mubr.f32.mxu0 0.0
      %3170 = vmatmul.mubr.f32.gmra.mrb[0].mxu0 %v3004
      %v3171 = vpop.f32.mrb[0].mxu0
      %v3172 = vadd.f32 0.0, %v3171
      %v3173 = vpop.f32.mrb[0].mxu0
      %3174 = vmatprep.mubr.f32.mxu0 0.0
      %3175 = vmatmul.mubr.f32.gmra.mrb[0].mxu0 %v3005
      %v3176 = vpop.f32.mrb[0].mxu0
      %v3177 = vadd.f32 0.0, %v3176
      %v3178 = vpop.f32.mrb[0].mxu0
      %3179 = vmatprep.mubr.f32.mxu0 0.0
      %3180 = vmatmul.mubr.f32.gmra.mrb[0].mxu0 %v3006
      %v3181 = vpop.f32.mrb[0].mxu0
      %v3182 = vadd.f32 0.0, %v3181
      %v3183 = vpop.f32.mrb[0].mxu0
      %3184 = vmatprep.mubr.f32.mxu0 0.0
      %3185 = vmatmul.mubr.f32.gmra.mrb[0].mxu0 %v3007
      %v3186 = vpop.f32.mrb[0].mxu0
      %v3187 = vadd.f32 0.0, %v3186
      %v3188 = vpop.f32.mrb[0].mxu0
      %3189 = vmatprep.mubr.f32.mxu0 0.0
      %3190 = vmatmul.mubr.f32.gmra.mrb[0].mxu0 %v3008
      %v3191 = vpop.f32.mrb[0].mxu0
      %v3192 = vadd.f32 0.0, %v3191
      %v3193 = vpop.f32.mrb[0].mxu0
      %3194 = vmatprep.mubr.f32.mxu0 0.0
      %3195 = vmatmul.mubr.f32.gmra.mrb[0].mxu0 %v3009
      %v3196 = vpop.f32.mrb[0].mxu0
      %v3197 = vadd.f32 0.0, %v3196
      %v3198 = vpop.f32.mrb[0].mxu0
      %3199 = vmatprep.mubr.f32.mxu0 0.0
      %3200 = vmatmul.mubr.f32.gmra.mrb[0].mxu0 %v3010
      %v3201 = vpop.f32.mrb[0].mxu0
      %v3202 = vadd.f32 0.0, %v3201
      %v3203 = vpop.f32.mrb[0].mxu0
      %3204 = vmatprep.mubr.f32.mxu0 0.0
      %3205 = vmatmul.mubr.f32.gmra.mrb[0].mxu0 %v3011
      %v3206 = vpop.f32.mrb[0].mxu0
      %v3207 = vadd.f32 0.0, %v3206
      %v3208 = vpop.f32.mrb[0].mxu0
      %3209 = vmatprep.mubr.f32.mxu0 0.0
      %3210 = vmatmul.mubr.f32.gmra.mrb[0].mxu0 %v3012
      %v3211 = vpop.f32.mrb[0].mxu0
      %v3212 = vadd.f32 0.0, %v3211
      %v3213 = vpop.f32.mrb[0].mxu0
      %3214 = vmatprep.mubr.f32.mxu0 0.0
      %3215 = vmatmul.mubr.f32.gmra.mrb[0].mxu0 %v3013
      %v3216 = vpop.f32.mrb[0].mxu0
      %v3217 = vadd.f32 0.0, %v3216
      %v3218 = vpop.f32.mrb[0].mxu0
      %3219 = vmatprep.mubr.f32.mxu0 0.0
      %3220 = vmatmul.mubr.f32.gmra.mrb[0].mxu0 %v3014
      %v3221 = vpop.f32.mrb[0].mxu0
      %v3222 = vadd.f32 0.0, %v3221
      %v3223 = vpop.f32.mrb[0].mxu0
      %3224 = vmatprep.mubr.f32.mxu0 0.0
      %3225 = vmatmul.mubr.f32.gmra.mrb[0].mxu0 %v3015
      %v3226 = vpop.f32.mrb[0].mxu0
      %v3227 = vadd.f32 0.0, %v3226
      %v3228 = vpop.f32.mrb[0].mxu0
      %3229 = vmatprep.mubr.f32.mxu0 0.0
      %3230 = vmatmul.mubr.f32.gmra.mrb[0].mxu0 %v3016
      %v3231 = vpop.f32.mrb[0].mxu0
      %v3232 = vadd.f32 0.0, %v3231
      %v3233 = vpop.f32.mrb[0].mxu0
      %3234 = vmatprep.mubr.f32.mxu0 0.0
      %3235 = vmatmul.mubr.f32.gmra.mrb[0].mxu0 %v3017
      %v3236 = vpop.f32.mrb[0].mxu0
      %v3237 = vadd.f32 0.0, %v3236
      %v3238 = vpop.f32.mrb[0].mxu0
      %3239 = vmatprep.mubr.f32.mxu0 0.0
      %3240 = vmatmul.mubr.f32.gmra.mrb[0].mxu0 %v3018
      %v3241 = vpop.f32.mrb[0].mxu0
      %v3242 = vadd.f32 0.0, %v3241
      %v3243 = vpop.f32.mrb[0].mxu0
      %3244 = vmatprep.mubr.f32.mxu0 0.0
      %3245 = vmatmul.mubr.f32.gmra.mrb[0].mxu0 %v3019
      %v3246 = vpop.f32.mrb[0].mxu0
      %v3247 = vadd.f32 0.0, %v3246
      %v3248 = vpop.f32.mrb[0].mxu0
      %3249 = vmatprep.mubr.f32.mxu0 0.0
      %3250 = vmatmul.mubr.f32.gmra.mrb[0].mxu0 %v3020
      %v3251 = vpop.f32.mrb[0].mxu0
      %v3252 = vadd.f32 0.0, %v3251
      %v3253 = vpop.f32.mrb[0].mxu0
      %3254 = vmatprep.mubr.f32.mxu0 0.0
      %3255 = vmatmul.mubr.f32.gmra.mrb[0].mxu0 %v3021
      %v3256 = vpop.f32.mrb[0].mxu0
      %v3257 = vadd.f32 0.0, %v3256
      %v3258 = vpop.f32.mrb[0].mxu0
      %3259 = vmatprep.mubr.f32.mxu0 0.0
      %3260 = vmatmul.mubr.f32.gmra.mrb[0].mxu0 %v3022
      %v3261 = vpop.f32.mrb[0].mxu0
      %v3262 = vadd.f32 0.0, %v3261
      %v3263 = vpop.f32.mrb[0].mxu0
      %3264 = vdwg.mxu0
      %v3265 = vadd.f32 %v2959, %v3107
      %v3266 = vadd.f32 %v2960, %v3112
      %v3267 = vadd.f32 %v2961, %v3117
      %v3268 = vadd.f32 %v2962, %v3122
      %v3269 = vadd.f32 %v2963, %v3127
      %v3270 = vadd.f32 %v2964, %v3132
      %v3271 = vadd.f32 %v2965, %v3137
      %v3272 = vadd.f32 %v2966, %v3142
      %v3273 = vadd.f32 %v2967, %v3147
      %v3274 = vadd.f32 %v2968, %v3152
      %v3275 = vadd.f32 %v2969, %v3157
      %v3276 = vadd.f32 %v2970, %v3162
      %v3277 = vadd.f32 %v2971, %v3167
      %v3278 = vadd.f32 %v2972, %v3172
      %v3279 = vadd.f32 %v2973, %v3177
      %v3280 = vadd.f32 %v2974, %v3182
      %v3281 = vadd.f32 %v2975, %v3187
      %v3282 = vadd.f32 %v2976, %v3192
      %v3283 = vadd.f32 %v2977, %v3197
      %v3284 = vadd.f32 %v2978, %v3202
      %v3285 = vadd.f32 %v2979, %v3207
      %v3286 = vadd.f32 %v2980, %v3212
      %v3287 = vadd.f32 %v2981, %v3217
      %v3288 = vadd.f32 %v2982, %v3222
      %v3289 = vadd.f32 %v2983, %v3227
      %v3290 = vadd.f32 %v2984, %v3232
      %v3291 = vadd.f32 %v2985, %v3237
      %v3292 = vadd.f32 %v2986, %v3242
      %v3293 = vadd.f32 %v2987, %v3247
      %v3294 = vadd.f32 %v2988, %v3252
      %v3295 = vadd.f32 %v2989, %v3257
      %v3296 = vadd.f32 %v2990, %v3262
      %v3297 = vld [vmem:[%s339 + $0x29] sm:$0xff]
      %v3298 = vld [vmem:[%s339 + $0x31] sm:$0xff]
      %v3299 = vld [vmem:[%s339 + $0x39] sm:$0xff]
      %v3300 = vld [vmem:[%s339 + $0x41] sm:$0xff]
      %v3301 = vld [vmem:[%s339 + $0x49] sm:$0xff]
      %v3302 = vld [vmem:[%s339 + $0x51] sm:$0xff]
      %v3303 = vld [vmem:[%s339 + $0x59] sm:$0xff]
      %v3304 = vld [vmem:[%s339 + $0x61] sm:$0xff]
      %v3305 = vld [vmem:[%s339 + $0x69] sm:$0xff]
      %v3306 = vld [vmem:[%s339 + $0x71] sm:$0xff]
      %v3307 = vld [vmem:[%s339 + $0x79] sm:$0xff]
      %v3308 = vld [vmem:[%s339 + $0x81] sm:$0xff]
      %v3309 = vld [vmem:[%s339 + $0x89] sm:$0xff]
      %v3310 = vld [vmem:[%s339 + $0x91] sm:$0xff]
      %v3311 = vld [vmem:[%s339 + $0x99] sm:$0xff]
      %v3312 = vld [vmem:[%s339 + $0xa1] sm:$0xff]
      %v3313 = vld [vmem:[%s339 + $0xa9] sm:$0xff]
      %v3314 = vld [vmem:[%s339 + $0xb1] sm:$0xff]
      %v3315 = vld [vmem:[%s339 + $0xb9] sm:$0xff]
      %v3316 = vld [vmem:[%s339 + $0xc1] sm:$0xff]
      %v3317 = vld [vmem:[%s339 + $0xc9] sm:$0xff]
      %v3318 = vld [vmem:[%s339 + $0xd1] sm:$0xff]
      %v3319 = vld [vmem:[%s339 + $0xd9] sm:$0xff]
      %v3320 = vld [vmem:[%s339 + $0xe1] sm:$0xff]
      %v3321 = vld [vmem:[%s339 + $0xe9] sm:$0xff]
      %v3322 = vld [vmem:[%s339 + $0xf1] sm:$0xff]
      %v3323 = vld [vmem:[%s339 + $0xf9] sm:$0xff]
      %v3324 = vld [vmem:[%s339 + $0x101] sm:$0xff]
      %v3325 = vld [vmem:[%s339 + $0x109] sm:$0xff]
      %v3326 = vld [vmem:[%s339 + $0x111] sm:$0xff]
      %v3327 = vld [vmem:[%s339 + $0x119] sm:$0xff]
      %v3328 = vld [vmem:[%s339 + $0x121] sm:$0xff]
      %v3329 = vmul.f32 %v3297, %v1208
      %v3330 = vmul.f32 %v3298, %v1213
      %v3331 = vmul.f32 %v3299, %v1218
      %v3332 = vmul.f32 %v3300, %v1223
      %v3333 = vmul.f32 %v3301, %v1228
      %v3334 = vmul.f32 %v3302, %v1233
      %v3335 = vmul.f32 %v3303, %v1238
      %v3336 = vmul.f32 %v3304, %v1243
      %v3337 = vmul.f32 %v3305, %v1248
      %v3338 = vmul.f32 %v3306, %v1253
      %v3339 = vmul.f32 %v3307, %v1258
      %v3340 = vmul.f32 %v3308, %v1263
      %v3341 = vmul.f32 %v3309, %v1268
      %v3342 = vmul.f32 %v3310, %v1273
      %v3343 = vmul.f32 %v3311, %v1278
      %v3344 = vmul.f32 %v3312, %v1283
      %v3345 = vmul.f32 %v3313, %v1288
      %v3346 = vmul.f32 %v3314, %v1293
      %v3347 = vmul.f32 %v3315, %v1298
      %v3348 = vmul.f32 %v3316, %v1303
      %v3349 = vmul.f32 %v3317, %v1308
      %v3350 = vmul.f32 %v3318, %v1313
      %v3351 = vmul.f32 %v3319, %v1318
      %v3352 = vmul.f32 %v3320, %v1323
      %v3353 = vmul.f32 %v3321, %v1328
      %v3354 = vmul.f32 %v3322, %v1333
      %v3355 = vmul.f32 %v3323, %v1338
      %v3356 = vmul.f32 %v3324, %v1343
      %v3357 = vmul.f32 %v3325, %v1348
      %v3358 = vmul.f32 %v3326, %v1353
      %v3359 = vmul.f32 %v3327, %v1358
      %v3360 = vmul.f32 %v3328, %v1363
      %s3361 = scalar_lea.vmem %s343, 1024
      %v3362 = vld [vmem:[%s3361] sm:$0xff]
      %v3363 = vld [vmem:[%s3361 + $0x8] sm:$0xff]
      %v3364 = vld [vmem:[%s3361 + $0x10] sm:$0xff]
      %v3365 = vld [vmem:[%s3361 + $0x18] sm:$0xff]
      %v3366 = vld [vmem:[%s3361 + $0x20] sm:$0xff]
      %v3367 = vld [vmem:[%s3361 + $0x28] sm:$0xff]
      %v3368 = vld [vmem:[%s3361 + $0x30] sm:$0xff]
      %v3369 = vld [vmem:[%s3361 + $0x38] sm:$0xff]
      %v3370 = vld [vmem:[%s3361 + $0x40] sm:$0xff]
      %v3371 = vld [vmem:[%s3361 + $0x48] sm:$0xff]
      %v3372 = vld [vmem:[%s3361 + $0x50] sm:$0xff]
      %v3373 = vld [vmem:[%s3361 + $0x58] sm:$0xff]
      %v3374 = vld [vmem:[%s3361 + $0x60] sm:$0xff]
      %v3375 = vld [vmem:[%s3361 + $0x68] sm:$0xff]
      %v3376 = vld [vmem:[%s3361 + $0x70] sm:$0xff]
      %v3377 = vld [vmem:[%s3361 + $0x78] sm:$0xff]
      %3378 = vmatprep.subr.mxu0 0.0
      %3379 = vmatpush1.msra.mxu0 %v3362
      %3380 = vmatprep.subr.mxu0 0.0
      %3381 = vmatpush1.msra.mxu0 %v3363
      %3382 = vmatprep.subr.mxu0 0.0
      %3383 = vmatpush1.msra.mxu0 %v3364
      %3384 = vmatprep.subr.mxu0 0.0
      %3385 = vmatpush1.msra.mxu0 %v3365
      %3386 = vmatprep.subr.mxu0 0.0
      %3387 = vmatpush1.msra.mxu0 %v3366
      %3388 = vmatprep.subr.mxu0 0.0
      %3389 = vmatpush1.msra.mxu0 %v3367
      %3390 = vmatprep.subr.mxu0 0.0
      %3391 = vmatpush1.msra.mxu0 %v3368
      %3392 = vmatprep.subr.mxu0 0.0
      %3393 = vmatpush1.msra.mxu0 %v3369
      %3394 = vmatprep.subr.mxu0 0.0
      %3395 = vmatpush1.msra.mxu0 %v3370
      %3396 = vmatprep.subr.mxu0 0.0
      %3397 = vmatpush1.msra.mxu0 %v3371
      %3398 = vmatprep.subr.mxu0 0.0
      %3399 = vmatpush1.msra.mxu0 %v3372
      %3400 = vmatprep.subr.mxu0 0.0
      %3401 = vmatpush1.msra.mxu0 %v3373
      %3402 = vmatprep.subr.mxu0 0.0
      %3403 = vmatpush1.msra.mxu0 %v3374
      %3404 = vmatprep.subr.mxu0 0.0
      %3405 = vmatpush1.msra.mxu0 %v3375
      %3406 = vmatprep.subr.mxu0 0.0
      %3407 = vmatpush1.msra.mxu0 %v3376
      %3408 = vmatprep.subr.mxu0 0.0
      %3409 = vmatpush1.msra.mxu0 %v3377
      %3410 = vmatprep.subr.mxu0 0.0
      %3411 = vmatpush1.msra.mxu0 0.0
      %3412 = vmatprep.subr.mxu0 0.0
      %3413 = vmatpush1.msra.mxu0 0.0
      %3414 = vmatprep.subr.mxu0 0.0
      %3415 = vmatpush1.msra.mxu0 0.0
      %3416 = vmatprep.subr.mxu0 0.0
      %3417 = vmatpush1.msra.mxu0 0.0
      %3418 = vmatprep.subr.mxu0 0.0
      %3419 = vmatpush1.msra.mxu0 0.0
      %3420 = vmatprep.subr.mxu0 0.0
      %3421 = vmatpush1.msra.mxu0 0.0
      %3422 = vmatprep.subr.mxu0 0.0
      %3423 = vmatpush1.msra.mxu0 0.0
      %3424 = vmatprep.subr.mxu0 0.0
      %3425 = vmatpush1.msra.mxu0 0.0
      %3426 = vmatprep.subr.mxu0 0.0
      %3427 = vmatpush1.msra.mxu0 0.0
      %3428 = vmatprep.subr.mxu0 0.0
      %3429 = vmatpush1.msra.mxu0 0.0
      %3430 = vmatprep.subr.mxu0 0.0
      %3431 = vmatpush1.msra.mxu0 0.0
      %3432 = vmatprep.subr.mxu0 0.0
      %3433 = vmatpush1.msra.mxu0 0.0
      %3434 = vmatprep.subr.mxu0 0.0
      %3435 = vmatpush1.msra.mxu0 0.0
      %3436 = vmatprep.subr.mxu0 0.0
      %3437 = vmatpush1.msra.mxu0 0.0
      %3438 = vmatprep.subr.mxu0 0.0
      %3439 = vmatpush1.msra.mxu0 0.0
      %3440 = vmatprep.subr.mxu0 0.0
      %3441 = vmatpush1.msra.mxu0 0.0
      %3442 = vmatprep.mubr.f32.mxu0 0.0
      %3443 = vmatmul.mubr.f32.gmra.mrb[0].mxu0 %v3329
      %v3444 = vpop.f32.mrb[0].mxu0
      %v3445 = vadd.f32 0.0, %v3444
      %v3446 = vpop.f32.mrb[0].mxu0
      %3447 = vmatprep.mubr.f32.mxu0 0.0
      %3448 = vmatmul.mubr.f32.gmra.mrb[0].mxu0 %v3330
      %v3449 = vpop.f32.mrb[0].mxu0
      %v3450 = vadd.f32 0.0, %v3449
      %v3451 = vpop.f32.mrb[0].mxu0
      %3452 = vmatprep.mubr.f32.mxu0 0.0
      %3453 = vmatmul.mubr.f32.gmra.mrb[0].mxu0 %v3331
      %v3454 = vpop.f32.mrb[0].mxu0
      %v3455 = vadd.f32 0.0, %v3454
      %v3456 = vpop.f32.mrb[0].mxu0
      %3457 = vmatprep.mubr.f32.mxu0 0.0
      %3458 = vmatmul.mubr.f32.gmra.mrb[0].mxu0 %v3332
      %v3459 = vpop.f32.mrb[0].mxu0
      %v3460 = vadd.f32 0.0, %v3459
      %v3461 = vpop.f32.mrb[0].mxu0
      %3462 = vmatprep.mubr.f32.mxu0 0.0
      %3463 = vmatmul.mubr.f32.gmra.mrb[0].mxu0 %v3333
      %v3464 = vpop.f32.mrb[0].mxu0
      %v3465 = vadd.f32 0.0, %v3464
      %v3466 = vpop.f32.mrb[0].mxu0
      %3467 = vmatprep.mubr.f32.mxu0 0.0
      %3468 = vmatmul.mubr.f32.gmra.mrb[0].mxu0 %v3334
      %v3469 = vpop.f32.mrb[0].mxu0
      %v3470 = vadd.f32 0.0, %v3469
      %v3471 = vpop.f32.mrb[0].mxu0
      %3472 = vmatprep.mubr.f32.mxu0 0.0
      %3473 = vmatmul.mubr.f32.gmra.mrb[0].mxu0 %v3335
      %v3474 = vpop.f32.mrb[0].mxu0
      %v3475 = vadd.f32 0.0, %v3474
      %v3476 = vpop.f32.mrb[0].mxu0
      %3477 = vmatprep.mubr.f32.mxu0 0.0
      %3478 = vmatmul.mubr.f32.gmra.mrb[0].mxu0 %v3336
      %v3479 = vpop.f32.mrb[0].mxu0
      %v3480 = vadd.f32 0.0, %v3479
      %v3481 = vpop.f32.mrb[0].mxu0
      %3482 = vmatprep.mubr.f32.mxu0 0.0
      %3483 = vmatmul.mubr.f32.gmra.mrb[0].mxu0 %v3337
      %v3484 = vpop.f32.mrb[0].mxu0
      %v3485 = vadd.f32 0.0, %v3484
      %v3486 = vpop.f32.mrb[0].mxu0
      %3487 = vmatprep.mubr.f32.mxu0 0.0
      %3488 = vmatmul.mubr.f32.gmra.mrb[0].mxu0 %v3338
      %v3489 = vpop.f32.mrb[0].mxu0
      %v3490 = vadd.f32 0.0, %v3489
      %v3491 = vpop.f32.mrb[0].mxu0
      %3492 = vmatprep.mubr.f32.mxu0 0.0
      %3493 = vmatmul.mubr.f32.gmra.mrb[0].mxu0 %v3339
      %v3494 = vpop.f32.mrb[0].mxu0
      %v3495 = vadd.f32 0.0, %v3494
      %v3496 = vpop.f32.mrb[0].mxu0
      %3497 = vmatprep.mubr.f32.mxu0 0.0
      %3498 = vmatmul.mubr.f32.gmra.mrb[0].mxu0 %v3340
      %v3499 = vpop.f32.mrb[0].mxu0
      %v3500 = vadd.f32 0.0, %v3499
      %v3501 = vpop.f32.mrb[0].mxu0
      %3502 = vmatprep.mubr.f32.mxu0 0.0
      %3503 = vmatmul.mubr.f32.gmra.mrb[0].mxu0 %v3341
      %v3504 = vpop.f32.mrb[0].mxu0
      %v3505 = vadd.f32 0.0, %v3504
      %v3506 = vpop.f32.mrb[0].mxu0
      %3507 = vmatprep.mubr.f32.mxu0 0.0
      %3508 = vmatmul.mubr.f32.gmra.mrb[0].mxu0 %v3342
      %v3509 = vpop.f32.mrb[0].mxu0
      %v3510 = vadd.f32 0.0, %v3509
      %v3511 = vpop.f32.mrb[0].mxu0
      %3512 = vmatprep.mubr.f32.mxu0 0.0
      %3513 = vmatmul.mubr.f32.gmra.mrb[0].mxu0 %v3343
      %v3514 = vpop.f32.mrb[0].mxu0
      %v3515 = vadd.f32 0.0, %v3514
      %v3516 = vpop.f32.mrb[0].mxu0
      %3517 = vmatprep.mubr.f32.mxu0 0.0
      %3518 = vmatmul.mubr.f32.gmra.mrb[0].mxu0 %v3344
      %v3519 = vpop.f32.mrb[0].mxu0
      %v3520 = vadd.f32 0.0, %v3519
      %v3521 = vpop.f32.mrb[0].mxu0
      %3522 = vmatprep.mubr.f32.mxu0 0.0
      %3523 = vmatmul.mubr.f32.gmra.mrb[0].mxu0 %v3345
      %v3524 = vpop.f32.mrb[0].mxu0
      %v3525 = vadd.f32 0.0, %v3524
      %v3526 = vpop.f32.mrb[0].mxu0
      %3527 = vmatprep.mubr.f32.mxu0 0.0
      %3528 = vmatmul.mubr.f32.gmra.mrb[0].mxu0 %v3346
      %v3529 = vpop.f32.mrb[0].mxu0
      %v3530 = vadd.f32 0.0, %v3529
      %v3531 = vpop.f32.mrb[0].mxu0
      %3532 = vmatprep.mubr.f32.mxu0 0.0
      %3533 = vmatmul.mubr.f32.gmra.mrb[0].mxu0 %v3347
      %v3534 = vpop.f32.mrb[0].mxu0
      %v3535 = vadd.f32 0.0, %v3534
      %v3536 = vpop.f32.mrb[0].mxu0
      %3537 = vmatprep.mubr.f32.mxu0 0.0
      %3538 = vmatmul.mubr.f32.gmra.mrb[0].mxu0 %v3348
      %v3539 = vpop.f32.mrb[0].mxu0
      %v3540 = vadd.f32 0.0, %v3539
      %v3541 = vpop.f32.mrb[0].mxu0
      %3542 = vmatprep.mubr.f32.mxu0 0.0
      %3543 = vmatmul.mubr.f32.gmra.mrb[0].mxu0 %v3349
      %v3544 = vpop.f32.mrb[0].mxu0
      %v3545 = vadd.f32 0.0, %v3544
      %v3546 = vpop.f32.mrb[0].mxu0
      %3547 = vmatprep.mubr.f32.mxu0 0.0
      %3548 = vmatmul.mubr.f32.gmra.mrb[0].mxu0 %v3350
      %v3549 = vpop.f32.mrb[0].mxu0
      %v3550 = vadd.f32 0.0, %v3549
      %v3551 = vpop.f32.mrb[0].mxu0
      %3552 = vmatprep.mubr.f32.mxu0 0.0
      %3553 = vmatmul.mubr.f32.gmra.mrb[0].mxu0 %v3351
      %v3554 = vpop.f32.mrb[0].mxu0
      %v3555 = vadd.f32 0.0, %v3554
      %v3556 = vpop.f32.mrb[0].mxu0
      %3557 = vmatprep.mubr.f32.mxu0 0.0
      %3558 = vmatmul.mubr.f32.gmra.mrb[0].mxu0 %v3352
      %v3559 = vpop.f32.mrb[0].mxu0
      %v3560 = vadd.f32 0.0, %v3559
      %v3561 = vpop.f32.mrb[0].mxu0
      %3562 = vmatprep.mubr.f32.mxu0 0.0
      %3563 = vmatmul.mubr.f32.gmra.mrb[0].mxu0 %v3353
      %v3564 = vpop.f32.mrb[0].mxu0
      %v3565 = vadd.f32 0.0, %v3564
      %v3566 = vpop.f32.mrb[0].mxu0
      %3567 = vmatprep.mubr.f32.mxu0 0.0
      %3568 = vmatmul.mubr.f32.gmra.mrb[0].mxu0 %v3354
      %v3569 = vpop.f32.mrb[0].mxu0
      %v3570 = vadd.f32 0.0, %v3569
      %v3571 = vpop.f32.mrb[0].mxu0
      %3572 = vmatprep.mubr.f32.mxu0 0.0
      %3573 = vmatmul.mubr.f32.gmra.mrb[0].mxu0 %v3355
      %v3574 = vpop.f32.mrb[0].mxu0
      %v3575 = vadd.f32 0.0, %v3574
      %v3576 = vpop.f32.mrb[0].mxu0
      %3577 = vmatprep.mubr.f32.mxu0 0.0
      %3578 = vmatmul.mubr.f32.gmra.mrb[0].mxu0 %v3356
      %v3579 = vpop.f32.mrb[0].mxu0
      %v3580 = vadd.f32 0.0, %v3579
      %v3581 = vpop.f32.mrb[0].mxu0
      %3582 = vmatprep.mubr.f32.mxu0 0.0
      %3583 = vmatmul.mubr.f32.gmra.mrb[0].mxu0 %v3357
      %v3584 = vpop.f32.mrb[0].mxu0
      %v3585 = vadd.f32 0.0, %v3584
      %v3586 = vpop.f32.mrb[0].mxu0
      %3587 = vmatprep.mubr.f32.mxu0 0.0
      %3588 = vmatmul.mubr.f32.gmra.mrb[0].mxu0 %v3358
      %v3589 = vpop.f32.mrb[0].mxu0
      %v3590 = vadd.f32 0.0, %v3589
      %v3591 = vpop.f32.mrb[0].mxu0
      %3592 = vmatprep.mubr.f32.mxu0 0.0
      %3593 = vmatmul.mubr.f32.gmra.mrb[0].mxu0 %v3359
      %v3594 = vpop.f32.mrb[0].mxu0
      %v3595 = vadd.f32 0.0, %v3594
      %v3596 = vpop.f32.mrb[0].mxu0
      %3597 = vmatprep.mubr.f32.mxu0 0.0
      %3598 = vmatmul.mubr.f32.gmra.mrb[0].mxu0 %v3360
      %v3599 = vpop.f32.mrb[0].mxu0
      %v3600 = vadd.f32 0.0, %v3599
      %v3601 = vpop.f32.mrb[0].mxu0
      %3602 = vdwg.mxu0
      %v3603 = vadd.f32 %v3265, %v3445
      %v3604 = vadd.f32 %v3266, %v3450
      %v3605 = vadd.f32 %v3267, %v3455
      %v3606 = vadd.f32 %v3268, %v3460
      %v3607 = vadd.f32 %v3269, %v3465
      %v3608 = vadd.f32 %v3270, %v3470
      %v3609 = vadd.f32 %v3271, %v3475
      %v3610 = vadd.f32 %v3272, %v3480
      %v3611 = vadd.f32 %v3273, %v3485
      %v3612 = vadd.f32 %v3274, %v3490
      %v3613 = vadd.f32 %v3275, %v3495
      %v3614 = vadd.f32 %v3276, %v3500
      %v3615 = vadd.f32 %v3277, %v3505
      %v3616 = vadd.f32 %v3278, %v3510
      %v3617 = vadd.f32 %v3279, %v3515
      %v3618 = vadd.f32 %v3280, %v3520
      %v3619 = vadd.f32 %v3281, %v3525
      %v3620 = vadd.f32 %v3282, %v3530
      %v3621 = vadd.f32 %v3283, %v3535
      %v3622 = vadd.f32 %v3284, %v3540
      %v3623 = vadd.f32 %v3285, %v3545
      %v3624 = vadd.f32 %v3286, %v3550
      %v3625 = vadd.f32 %v3287, %v3555
      %v3626 = vadd.f32 %v3288, %v3560
      %v3627 = vadd.f32 %v3289, %v3565
      %v3628 = vadd.f32 %v3290, %v3570
      %v3629 = vadd.f32 %v3291, %v3575
      %v3630 = vadd.f32 %v3292, %v3580
      %v3631 = vadd.f32 %v3293, %v3585
      %v3632 = vadd.f32 %v3294, %v3590
      %v3633 = vadd.f32 %v3295, %v3595
      %v3634 = vadd.f32 %v3296, %v3600
      %3635 = vst [vmem:[%s355] sm:$0xff] %v3603
      %3636 = vst [vmem:[%s355 + $0x8] sm:$0xff] %v3604
      %3637 = vst [vmem:[%s355 + $0x10] sm:$0xff] %v3605
      %3638 = vst [vmem:[%s355 + $0x18] sm:$0xff] %v3606
      %3639 = vst [vmem:[%s355 + $0x20] sm:$0xff] %v3607
      %3640 = vst [vmem:[%s355 + $0x28] sm:$0xff] %v3608
      %3641 = vst [vmem:[%s355 + $0x30] sm:$0xff] %v3609
      %3642 = vst [vmem:[%s355 + $0x38] sm:$0xff] %v3610
      %3643 = vst [vmem:[%s355 + $0x40] sm:$0xff] %v3611
      %3644 = vst [vmem:[%s355 + $0x48] sm:$0xff] %v3612
      %3645 = vst [vmem:[%s355 + $0x50] sm:$0xff] %v3613
      %3646 = vst [vmem:[%s355 + $0x58] sm:$0xff] %v3614
      %3647 = vst [vmem:[%s355 + $0x60] sm:$0xff] %v3615
      %3648 = vst [vmem:[%s355 + $0x68] sm:$0xff] %v3616
      %3649 = vst [vmem:[%s355 + $0x70] sm:$0xff] %v3617
      %3650 = vst [vmem:[%s355 + $0x78] sm:$0xff] %v3618
      %3651 = vst [vmem:[%s355 + $0x80] sm:$0xff] %v3619
      %3652 = vst [vmem:[%s355 + $0x88] sm:$0xff] %v3620
      %3653 = vst [vmem:[%s355 + $0x90] sm:$0xff] %v3621
      %3654 = vst [vmem:[%s355 + $0x98] sm:$0xff] %v3622
      %3655 = vst [vmem:[%s355 + $0xa0] sm:$0xff] %v3623
      %3656 = vst [vmem:[%s355 + $0xa8] sm:$0xff] %v3624
      %3657 = vst [vmem:[%s355 + $0xb0] sm:$0xff] %v3625
      %3658 = vst [vmem:[%s355 + $0xb8] sm:$0xff] %v3626
      %3659 = vst [vmem:[%s355 + $0xc0] sm:$0xff] %v3627
      %3660 = vst [vmem:[%s355 + $0xc8] sm:$0xff] %v3628
      %3661 = vst [vmem:[%s355 + $0xd0] sm:$0xff] %v3629
      %3662 = vst [vmem:[%s355 + $0xd8] sm:$0xff] %v3630
      %3663 = vst [vmem:[%s355 + $0xe0] sm:$0xff] %v3631
      %3664 = vst [vmem:[%s355 + $0xe8] sm:$0xff] %v3632
      %3665 = vst [vmem:[%s355 + $0xf0] sm:$0xff] %v3633
      %3666 = vst [vmem:[%s355 + $0xf8] sm:$0xff] %v3634
      %v3667 = vadd.f32 %v3603, %v3604
      %v3668 = vadd.f32 %v3667, %v3605
      %v3669 = vadd.f32 %v3668, %v3606
      %v3670 = vadd.f32 %v3669, %v3607
      %v3671 = vadd.f32 %v3670, %v3608
      %v3672 = vadd.f32 %v3671, %v3609
      %v3673 = vadd.f32 %v3672, %v3610
      %v3674 = vadd.f32 %v3673, %v3611
      %v3675 = vadd.f32 %v3674, %v3612
      %v3676 = vadd.f32 %v3675, %v3613
      %v3677 = vadd.f32 %v3676, %v3614
      %v3678 = vadd.f32 %v3677, %v3615
      %v3679 = vadd.f32 %v3678, %v3616
      %v3680 = vadd.f32 %v3679, %v3617
      %v3681 = vadd.f32 %v3680, %v3618
      %v3682 = vadd.f32 %v3681, %v3619
      %v3683 = vadd.f32 %v3682, %v3620
      %v3684 = vadd.f32 %v3683, %v3621
      %v3685 = vadd.f32 %v3684, %v3622
      %v3686 = vadd.f32 %v3685, %v3623
      %v3687 = vadd.f32 %v3686, %v3624
      %v3688 = vadd.f32 %v3687, %v3625
      %v3689 = vadd.f32 %v3688, %v3626
      %v3690 = vadd.f32 %v3689, %v3627
      %v3691 = vadd.f32 %v3690, %v3628
      %v3692 = vadd.f32 %v3691, %v3629
      %v3693 = vadd.f32 %v3692, %v3630
      %v3694 = vadd.f32 %v3693, %v3631
      %v3695 = vadd.f32 %v3694, %v3632
      %v3696 = vadd.f32 %v3695, %v3633
      %v3697 = vadd.f32 %v3696, %v3634
      %v3698 = vrot.slane %v3697, 4
      %v3699 = vadd.f32 %v3697, %v3698
      %v3700 = vrot.slane %v3699, 2
      %v3701 = vadd.f32 %v3699, %v3700
      %v3702 = vrot.slane %v3701, 1
      %v3703 = vadd.f32 %v3701, %v3702
      %3704 = vst [vmem:[%s362] sm:$0x1] %v3703
      %v3705 = vmul.f32 %v3603, %v3603
      %v3706 = vmul.f32 %v3604, %v3604
      %v3707 = vmul.f32 %v3605, %v3605
      %v3708 = vmul.f32 %v3606, %v3606
      %v3709 = vmul.f32 %v3607, %v3607
      %v3710 = vmul.f32 %v3608, %v3608
      %v3711 = vmul.f32 %v3609, %v3609
      %v3712 = vmul.f32 %v3610, %v3610
      %v3713 = vmul.f32 %v3611, %v3611
      %v3714 = vmul.f32 %v3612, %v3612
      %v3715 = vmul.f32 %v3613, %v3613
      %v3716 = vmul.f32 %v3614, %v3614
      %v3717 = vmul.f32 %v3615, %v3615
      %v3718 = vmul.f32 %v3616, %v3616
      %v3719 = vmul.f32 %v3617, %v3617
      %v3720 = vmul.f32 %v3618, %v3618
      %v3721 = vmul.f32 %v3619, %v3619
      %v3722 = vmul.f32 %v3620, %v3620
      %v3723 = vmul.f32 %v3621, %v3621
      %v3724 = vmul.f32 %v3622, %v3622
      %v3725 = vmul.f32 %v3623, %v3623
      %v3726 = vmul.f32 %v3624, %v3624
      %v3727 = vmul.f32 %v3625, %v3625
      %v3728 = vmul.f32 %v3626, %v3626
      %v3729 = vmul.f32 %v3627, %v3627
      %v3730 = vmul.f32 %v3628, %v3628
      %v3731 = vmul.f32 %v3629, %v3629
      %v3732 = vmul.f32 %v3630, %v3630
      %v3733 = vmul.f32 %v3631, %v3631
      %v3734 = vmul.f32 %v3632, %v3632
      %v3735 = vmul.f32 %v3633, %v3633
      %v3736 = vmul.f32 %v3634, %v3634
      %v3737 = vadd.f32 %v3705, %v3706
      %v3738 = vadd.f32 %v3737, %v3707
      %v3739 = vadd.f32 %v3738, %v3708
      %v3740 = vadd.f32 %v3739, %v3709
      %v3741 = vadd.f32 %v3740, %v3710
      %v3742 = vadd.f32 %v3741, %v3711
      %v3743 = vadd.f32 %v3742, %v3712
      %v3744 = vadd.f32 %v3743, %v3713
      %v3745 = vadd.f32 %v3744, %v3714
      %v3746 = vadd.f32 %v3745, %v3715
      %v3747 = vadd.f32 %v3746, %v3716
      %v3748 = vadd.f32 %v3747, %v3717
      %v3749 = vadd.f32 %v3748, %v3718
      %v3750 = vadd.f32 %v3749, %v3719
      %v3751 = vadd.f32 %v3750, %v3720
      %v3752 = vadd.f32 %v3751, %v3721
      %v3753 = vadd.f32 %v3752, %v3722
      %v3754 = vadd.f32 %v3753, %v3723
      %v3755 = vadd.f32 %v3754, %v3724
      %v3756 = vadd.f32 %v3755, %v3725
      %v3757 = vadd.f32 %v3756, %v3726
      %v3758 = vadd.f32 %v3757, %v3727
      %v3759 = vadd.f32 %v3758, %v3728
      %v3760 = vadd.f32 %v3759, %v3729
      %v3761 = vadd.f32 %v3760, %v3730
      %v3762 = vadd.f32 %v3761, %v3731
      %v3763 = vadd.f32 %v3762, %v3732
      %v3764 = vadd.f32 %v3763, %v3733
      %v3765 = vadd.f32 %v3764, %v3734
      %v3766 = vadd.f32 %v3765, %v3735
      %v3767 = vadd.f32 %v3766, %v3736
      %v3768 = vrot.slane %v3767, 4
      %v3769 = vadd.f32 %v3767, %v3768
      %v3770 = vrot.slane %v3769, 2
      %v3771 = vadd.f32 %v3769, %v3770
      %v3772 = vrot.slane %v3771, 1
      %v3773 = vadd.f32 %v3771, %v3772
      %3774 = vst [vmem:[%s362 + $0x1] sm:$0x1] %v3773
      %v3775 = vld [vmem:[%s347] sm:$0xff]
      %v3776 = vld [vmem:[%s347 + $0x8] sm:$0xff]
      %v3777 = vld [vmem:[%s347 + $0x10] sm:$0xff]
      %v3778 = vld [vmem:[%s347 + $0x18] sm:$0xff]
      %v3779 = vld [vmem:[%s347 + $0x20] sm:$0xff]
      %v3780 = vld [vmem:[%s347 + $0x28] sm:$0xff]
      %v3781 = vld [vmem:[%s347 + $0x30] sm:$0xff]
      %v3782 = vld [vmem:[%s347 + $0x38] sm:$0xff]
      %v3783 = vld [vmem:[%s347 + $0x40] sm:$0xff]
      %v3784 = vld [vmem:[%s347 + $0x48] sm:$0xff]
      %v3785 = vld [vmem:[%s347 + $0x50] sm:$0xff]
      %v3786 = vld [vmem:[%s347 + $0x58] sm:$0xff]
      %v3787 = vld [vmem:[%s347 + $0x60] sm:$0xff]
      %v3788 = vld [vmem:[%s347 + $0x68] sm:$0xff]
      %v3789 = vld [vmem:[%s347 + $0x70] sm:$0xff]
      %v3790 = vld [vmem:[%s347 + $0x78] sm:$0xff]
      %3791 = vmatprep.subr.mxu0 0.0
      %3792 = vmatpush1.msra.mxu0 %v3775
      %3793 = vmatprep.subr.mxu0 0.0
      %3794 = vmatpush1.msra.mxu0 %v3776
      %3795 = vmatprep.subr.mxu0 0.0
      %3796 = vmatpush1.msra.mxu0 %v3777
      %3797 = vmatprep.subr.mxu0 0.0
      %3798 = vmatpush1.msra.mxu0 %v3778
      %3799 = vmatprep.subr.mxu0 0.0
      %3800 = vmatpush1.msra.mxu0 %v3779
      %3801 = vmatprep.subr.mxu0 0.0
      %3802 = vmatpush1.msra.mxu0 %v3780
      %3803 = vmatprep.subr.mxu0 0.0
      %3804 = vmatpush1.msra.mxu0 %v3781
      %3805 = vmatprep.subr.mxu0 0.0
      %3806 = vmatpush1.msra.mxu0 %v3782
      %3807 = vmatprep.subr.mxu0 0.0
      %3808 = vmatpush1.msra.mxu0 %v3783
      %3809 = vmatprep.subr.mxu0 0.0
      %3810 = vmatpush1.msra.mxu0 %v3784
      %3811 = vmatprep.subr.mxu0 0.0
      %3812 = vmatpush1.msra.mxu0 %v3785
      %3813 = vmatprep.subr.mxu0 0.0
      %3814 = vmatpush1.msra.mxu0 %v3786
      %3815 = vmatprep.subr.mxu0 0.0
      %3816 = vmatpush1.msra.mxu0 %v3787
      %3817 = vmatprep.subr.mxu0 0.0
      %3818 = vmatpush1.msra.mxu0 %v3788
      %3819 = vmatprep.subr.mxu0 0.0
      %3820 = vmatpush1.msra.mxu0 %v3789
      %3821 = vmatprep.subr.mxu0 0.0
      %3822 = vmatpush1.msra.mxu0 %v3790
      %3823 = vmatprep.subr.mxu0 0.0
      %3824 = vmatpush1.msra.mxu0 0.0
      %3825 = vmatprep.subr.mxu0 0.0
      %3826 = vmatpush1.msra.mxu0 0.0
      %3827 = vmatprep.subr.mxu0 0.0
      %3828 = vmatpush1.msra.mxu0 0.0
      %3829 = vmatprep.subr.mxu0 0.0
      %3830 = vmatpush1.msra.mxu0 0.0
      %3831 = vmatprep.subr.mxu0 0.0
      %3832 = vmatpush1.msra.mxu0 0.0
      %3833 = vmatprep.subr.mxu0 0.0
      %3834 = vmatpush1.msra.mxu0 0.0
      %3835 = vmatprep.subr.mxu0 0.0
      %3836 = vmatpush1.msra.mxu0 0.0
      %3837 = vmatprep.subr.mxu0 0.0
      %3838 = vmatpush1.msra.mxu0 0.0
      %3839 = vmatprep.subr.mxu0 0.0
      %3840 = vmatpush1.msra.mxu0 0.0
      %3841 = vmatprep.subr.mxu0 0.0
      %3842 = vmatpush1.msra.mxu0 0.0
      %3843 = vmatprep.subr.mxu0 0.0
      %3844 = vmatpush1.msra.mxu0 0.0
      %3845 = vmatprep.subr.mxu0 0.0
      %3846 = vmatpush1.msra.mxu0 0.0
      %3847 = vmatprep.subr.mxu0 0.0
      %3848 = vmatpush1.msra.mxu0 0.0
      %3849 = vmatprep.subr.mxu0 0.0
      %3850 = vmatpush1.msra.mxu0 0.0
      %3851 = vmatprep.subr.mxu0 0.0
      %3852 = vmatpush1.msra.mxu0 0.0
      %3853 = vmatprep.subr.mxu0 0.0
      %3854 = vmatpush1.msra.mxu0 0.0
      %3855 = vmatprep.mubr.f32.mxu0 0.0
      %3856 = vmatmul.mubr.f32.gmra.mrb[0].mxu0 %v2009
      %v3857 = vpop.f32.mrb[0].mxu0
      %v3858 = vadd.f32 0.0, %v3857
      %v3859 = vpop.f32.mrb[0].mxu0
      %3860 = vmatprep.mubr.f32.mxu0 0.0
      %3861 = vmatmul.mubr.f32.gmra.mrb[0].mxu0 %v2010
      %v3862 = vpop.f32.mrb[0].mxu0
      %v3863 = vadd.f32 0.0, %v3862
      %v3864 = vpop.f32.mrb[0].mxu0
      %3865 = vmatprep.mubr.f32.mxu0 0.0
      %3866 = vmatmul.mubr.f32.gmra.mrb[0].mxu0 %v2011
      %v3867 = vpop.f32.mrb[0].mxu0
      %v3868 = vadd.f32 0.0, %v3867
      %v3869 = vpop.f32.mrb[0].mxu0
      %3870 = vmatprep.mubr.f32.mxu0 0.0
      %3871 = vmatmul.mubr.f32.gmra.mrb[0].mxu0 %v2012
      %v3872 = vpop.f32.mrb[0].mxu0
      %v3873 = vadd.f32 0.0, %v3872
      %v3874 = vpop.f32.mrb[0].mxu0
      %3875 = vmatprep.mubr.f32.mxu0 0.0
      %3876 = vmatmul.mubr.f32.gmra.mrb[0].mxu0 %v2013
      %v3877 = vpop.f32.mrb[0].mxu0
      %v3878 = vadd.f32 0.0, %v3877
      %v3879 = vpop.f32.mrb[0].mxu0
      %3880 = vmatprep.mubr.f32.mxu0 0.0
      %3881 = vmatmul.mubr.f32.gmra.mrb[0].mxu0 %v2014
      %v3882 = vpop.f32.mrb[0].mxu0
      %v3883 = vadd.f32 0.0, %v3882
      %v3884 = vpop.f32.mrb[0].mxu0
      %3885 = vmatprep.mubr.f32.mxu0 0.0
      %3886 = vmatmul.mubr.f32.gmra.mrb[0].mxu0 %v2015
      %v3887 = vpop.f32.mrb[0].mxu0
      %v3888 = vadd.f32 0.0, %v3887
      %v3889 = vpop.f32.mrb[0].mxu0
      %3890 = vmatprep.mubr.f32.mxu0 0.0
      %3891 = vmatmul.mubr.f32.gmra.mrb[0].mxu0 %v2016
      %v3892 = vpop.f32.mrb[0].mxu0
      %v3893 = vadd.f32 0.0, %v3892
      %v3894 = vpop.f32.mrb[0].mxu0
      %3895 = vmatprep.mubr.f32.mxu0 0.0
      %3896 = vmatmul.mubr.f32.gmra.mrb[0].mxu0 %v2017
      %v3897 = vpop.f32.mrb[0].mxu0
      %v3898 = vadd.f32 0.0, %v3897
      %v3899 = vpop.f32.mrb[0].mxu0
      %3900 = vmatprep.mubr.f32.mxu0 0.0
      %3901 = vmatmul.mubr.f32.gmra.mrb[0].mxu0 %v2018
      %v3902 = vpop.f32.mrb[0].mxu0
      %v3903 = vadd.f32 0.0, %v3902
      %v3904 = vpop.f32.mrb[0].mxu0
      %3905 = vmatprep.mubr.f32.mxu0 0.0
      %3906 = vmatmul.mubr.f32.gmra.mrb[0].mxu0 %v2019
      %v3907 = vpop.f32.mrb[0].mxu0
      %v3908 = vadd.f32 0.0, %v3907
      %v3909 = vpop.f32.mrb[0].mxu0
      %3910 = vmatprep.mubr.f32.mxu0 0.0
      %3911 = vmatmul.mubr.f32.gmra.mrb[0].mxu0 %v2020
      %v3912 = vpop.f32.mrb[0].mxu0
      %v3913 = vadd.f32 0.0, %v3912
      %v3914 = vpop.f32.mrb[0].mxu0
      %3915 = vmatprep.mubr.f32.mxu0 0.0
      %3916 = vmatmul.mubr.f32.gmra.mrb[0].mxu0 %v2021
      %v3917 = vpop.f32.mrb[0].mxu0
      %v3918 = vadd.f32 0.0, %v3917
      %v3919 = vpop.f32.mrb[0].mxu0
      %3920 = vmatprep.mubr.f32.mxu0 0.0
      %3921 = vmatmul.mubr.f32.gmra.mrb[0].mxu0 %v2022
      %v3922 = vpop.f32.mrb[0].mxu0
      %v3923 = vadd.f32 0.0, %v3922
      %v3924 = vpop.f32.mrb[0].mxu0
      %3925 = vmatprep.mubr.f32.mxu0 0.0
      %3926 = vmatmul.mubr.f32.gmra.mrb[0].mxu0 %v2023
      %v3927 = vpop.f32.mrb[0].mxu0
      %v3928 = vadd.f32 0.0, %v3927
      %v3929 = vpop.f32.mrb[0].mxu0
      %3930 = vmatprep.mubr.f32.mxu0 0.0
      %3931 = vmatmul.mubr.f32.gmra.mrb[0].mxu0 %v2024
      %v3932 = vpop.f32.mrb[0].mxu0
      %v3933 = vadd.f32 0.0, %v3932
      %v3934 = vpop.f32.mrb[0].mxu0
      %3935 = vmatprep.mubr.f32.mxu0 0.0
      %3936 = vmatmul.mubr.f32.gmra.mrb[0].mxu0 %v2025
      %v3937 = vpop.f32.mrb[0].mxu0
      %v3938 = vadd.f32 0.0, %v3937
      %v3939 = vpop.f32.mrb[0].mxu0
      %3940 = vmatprep.mubr.f32.mxu0 0.0
      %3941 = vmatmul.mubr.f32.gmra.mrb[0].mxu0 %v2026
      %v3942 = vpop.f32.mrb[0].mxu0
      %v3943 = vadd.f32 0.0, %v3942
      %v3944 = vpop.f32.mrb[0].mxu0
      %3945 = vmatprep.mubr.f32.mxu0 0.0
      %3946 = vmatmul.mubr.f32.gmra.mrb[0].mxu0 %v2027
      %v3947 = vpop.f32.mrb[0].mxu0
      %v3948 = vadd.f32 0.0, %v3947
      %v3949 = vpop.f32.mrb[0].mxu0
      %3950 = vmatprep.mubr.f32.mxu0 0.0
      %3951 = vmatmul.mubr.f32.gmra.mrb[0].mxu0 %v2028
      %v3952 = vpop.f32.mrb[0].mxu0
      %v3953 = vadd.f32 0.0, %v3952
      %v3954 = vpop.f32.mrb[0].mxu0
      %3955 = vmatprep.mubr.f32.mxu0 0.0
      %3956 = vmatmul.mubr.f32.gmra.mrb[0].mxu0 %v2029
      %v3957 = vpop.f32.mrb[0].mxu0
      %v3958 = vadd.f32 0.0, %v3957
      %v3959 = vpop.f32.mrb[0].mxu0
      %3960 = vmatprep.mubr.f32.mxu0 0.0
      %3961 = vmatmul.mubr.f32.gmra.mrb[0].mxu0 %v2030
      %v3962 = vpop.f32.mrb[0].mxu0
      %v3963 = vadd.f32 0.0, %v3962
      %v3964 = vpop.f32.mrb[0].mxu0
      %3965 = vmatprep.mubr.f32.mxu0 0.0
      %3966 = vmatmul.mubr.f32.gmra.mrb[0].mxu0 %v2031
      %v3967 = vpop.f32.mrb[0].mxu0
      %v3968 = vadd.f32 0.0, %v3967
      %v3969 = vpop.f32.mrb[0].mxu0
      %3970 = vmatprep.mubr.f32.mxu0 0.0
      %3971 = vmatmul.mubr.f32.gmra.mrb[0].mxu0 %v2032
      %v3972 = vpop.f32.mrb[0].mxu0
      %v3973 = vadd.f32 0.0, %v3972
      %v3974 = vpop.f32.mrb[0].mxu0
      %3975 = vmatprep.mubr.f32.mxu0 0.0
      %3976 = vmatmul.mubr.f32.gmra.mrb[0].mxu0 %v2033
      %v3977 = vpop.f32.mrb[0].mxu0
      %v3978 = vadd.f32 0.0, %v3977
      %v3979 = vpop.f32.mrb[0].mxu0
      %3980 = vmatprep.mubr.f32.mxu0 0.0
      %3981 = vmatmul.mubr.f32.gmra.mrb[0].mxu0 %v2034
      %v3982 = vpop.f32.mrb[0].mxu0
      %v3983 = vadd.f32 0.0, %v3982
      %v3984 = vpop.f32.mrb[0].mxu0
      %3985 = vmatprep.mubr.f32.mxu0 0.0
      %3986 = vmatmul.mubr.f32.gmra.mrb[0].mxu0 %v2035
      %v3987 = vpop.f32.mrb[0].mxu0
      %v3988 = vadd.f32 0.0, %v3987
      %v3989 = vpop.f32.mrb[0].mxu0
      %3990 = vmatprep.mubr.f32.mxu0 0.0
      %3991 = vmatmul.mubr.f32.gmra.mrb[0].mxu0 %v2036
      %v3992 = vpop.f32.mrb[0].mxu0
      %v3993 = vadd.f32 0.0, %v3992
      %v3994 = vpop.f32.mrb[0].mxu0
      %3995 = vmatprep.mubr.f32.mxu0 0.0
      %3996 = vmatmul.mubr.f32.gmra.mrb[0].mxu0 %v2037
      %v3997 = vpop.f32.mrb[0].mxu0
      %v3998 = vadd.f32 0.0, %v3997
      %v3999 = vpop.f32.mrb[0].mxu0
      %4000 = vmatprep.mubr.f32.mxu0 0.0
      %4001 = vmatmul.mubr.f32.gmra.mrb[0].mxu0 %v2038
      %v4002 = vpop.f32.mrb[0].mxu0
      %v4003 = vadd.f32 0.0, %v4002
      %v4004 = vpop.f32.mrb[0].mxu0
      %4005 = vmatprep.mubr.f32.mxu0 0.0
      %4006 = vmatmul.mubr.f32.gmra.mrb[0].mxu0 %v2039
      %v4007 = vpop.f32.mrb[0].mxu0
      %v4008 = vadd.f32 0.0, %v4007
      %v4009 = vpop.f32.mrb[0].mxu0
      %4010 = vmatprep.mubr.f32.mxu0 0.0
      %4011 = vmatmul.mubr.f32.gmra.mrb[0].mxu0 %v2040
      %v4012 = vpop.f32.mrb[0].mxu0
      %v4013 = vadd.f32 0.0, %v4012
      %v4014 = vpop.f32.mrb[0].mxu0
      %4015 = vdwg.mxu0
      %v4016 = vadd.f32 %v3858, %v3863
      %v4017 = vadd.f32 %v4016, %v3868
      %v4018 = vadd.f32 %v4017, %v3873
      %v4019 = vadd.f32 %v4018, %v3878
      %v4020 = vadd.f32 %v4019, %v3883
      %v4021 = vadd.f32 %v4020, %v3888
      %v4022 = vadd.f32 %v4021, %v3893
      %v4023 = vadd.f32 %v4022, %v3898
      %v4024 = vadd.f32 %v4023, %v3903
      %v4025 = vadd.f32 %v4024, %v3908
      %v4026 = vadd.f32 %v4025, %v3913
      %v4027 = vadd.f32 %v4026, %v3918
      %v4028 = vadd.f32 %v4027, %v3923
      %v4029 = vadd.f32 %v4028, %v3928
      %v4030 = vadd.f32 %v4029, %v3933
      %v4031 = vadd.f32 %v4030, %v3938
      %v4032 = vadd.f32 %v4031, %v3943
      %v4033 = vadd.f32 %v4032, %v3948
      %v4034 = vadd.f32 %v4033, %v3953
      %v4035 = vadd.f32 %v4034, %v3958
      %v4036 = vadd.f32 %v4035, %v3963
      %v4037 = vadd.f32 %v4036, %v3968
      %v4038 = vadd.f32 %v4037, %v3973
      %v4039 = vadd.f32 %v4038, %v3978
      %v4040 = vadd.f32 %v4039, %v3983
      %v4041 = vadd.f32 %v4040, %v3988
      %v4042 = vadd.f32 %v4041, %v3993
      %v4043 = vadd.f32 %v4042, %v3998
      %v4044 = vadd.f32 %v4043, %v4003
      %v4045 = vadd.f32 %v4044, %v4008
      %v4046 = vadd.f32 %v4045, %v4013
      %v4047 = vrot.slane %v4046, 4
      %v4048 = vadd.f32 %v4046, %v4047
      %v4049 = vrot.slane %v4048, 2
      %v4050 = vadd.f32 %v4048, %v4049
      %v4051 = vrot.slane %v4050, 1
      %v4052 = vadd.f32 %v4050, %v4051
      %4053 = vst [vmem:[%s369] sm:$0x1] %v4052
      %v4054 = vmul.f32 %v3858, %v3858
      %v4055 = vmul.f32 %v3863, %v3863
      %v4056 = vmul.f32 %v3868, %v3868
      %v4057 = vmul.f32 %v3873, %v3873
      %v4058 = vmul.f32 %v3878, %v3878
      %v4059 = vmul.f32 %v3883, %v3883
      %v4060 = vmul.f32 %v3888, %v3888
      %v4061 = vmul.f32 %v3893, %v3893
      %v4062 = vmul.f32 %v3898, %v3898
      %v4063 = vmul.f32 %v3903, %v3903
      %v4064 = vmul.f32 %v3908, %v3908
      %v4065 = vmul.f32 %v3913, %v3913
      %v4066 = vmul.f32 %v3918, %v3918
      %v4067 = vmul.f32 %v3923, %v3923
      %v4068 = vmul.f32 %v3928, %v3928
      %v4069 = vmul.f32 %v3933, %v3933
      %v4070 = vmul.f32 %v3938, %v3938
      %v4071 = vmul.f32 %v3943, %v3943
      %v4072 = vmul.f32 %v3948, %v3948
      %v4073 = vmul.f32 %v3953, %v3953
      %v4074 = vmul.f32 %v3958, %v3958
      %v4075 = vmul.f32 %v3963, %v3963
      %v4076 = vmul.f32 %v3968, %v3968
      %v4077 = vmul.f32 %v3973, %v3973
      %v4078 = vmul.f32 %v3978, %v3978
      %v4079 = vmul.f32 %v3983, %v3983
      %v4080 = vmul.f32 %v3988, %v3988
      %v4081 = vmul.f32 %v3993, %v3993
      %v4082 = vmul.f32 %v3998, %v3998
      %v4083 = vmul.f32 %v4003, %v4003
      %v4084 = vmul.f32 %v4008, %v4008
      %v4085 = vmul.f32 %v4013, %v4013
      %v4086 = vadd.f32 %v4054, %v4055
      %v4087 = vadd.f32 %v4086, %v4056
      %v4088 = vadd.f32 %v4087, %v4057
      %v4089 = vadd.f32 %v4088, %v4058
      %v4090 = vadd.f32 %v4089, %v4059
      %v4091 = vadd.f32 %v4090, %v4060
      %v4092 = vadd.f32 %v4091, %v4061
      %v4093 = vadd.f32 %v4092, %v4062
      %v4094 = vadd.f32 %v4093, %v4063
      %v4095 = vadd.f32 %v4094, %v4064
      %v4096 = vadd.f32 %v4095, %v4065
      %v4097 = vadd.f32 %v4096, %v4066
      %v4098 = vadd.f32 %v4097, %v4067
      %v4099 = vadd.f32 %v4098, %v4068
      %v4100 = vadd.f32 %v4099, %v4069
      %v4101 = vadd.f32 %v4100, %v4070
      %v4102 = vadd.f32 %v4101, %v4071
      %v4103 = vadd.f32 %v4102, %v4072
      %v4104 = vadd.f32 %v4103, %v4073
      %v4105 = vadd.f32 %v4104, %v4074
      %v4106 = vadd.f32 %v4105, %v4075
      %v4107 = vadd.f32 %v4106, %v4076
      %v4108 = vadd.f32 %v4107, %v4077
      %v4109 = vadd.f32 %v4108, %v4078
      %v4110 = vadd.f32 %v4109, %v4079
      %v4111 = vadd.f32 %v4110, %v4080
      %v4112 = vadd.f32 %v4111, %v4081
      %v4113 = vadd.f32 %v4112, %v4082
      %v4114 = vadd.f32 %v4113, %v4083
      %v4115 = vadd.f32 %v4114, %v4084
      %v4116 = vadd.f32 %v4115, %v4085
      %v4117 = vrot.slane %v4116, 4
      %v4118 = vadd.f32 %v4116, %v4117
      %v4119 = vrot.slane %v4118, 2
      %v4120 = vadd.f32 %v4118, %v4119
      %v4121 = vrot.slane %v4120, 1
      %v4122 = vadd.f32 %v4120, %v4121
      %4123 = vst [vmem:[%s369 + $0x1] sm:$0x1] %v4122
      %p4124 = scmp.lt.s32.totalorder %s23, 1
      %s4125 = scalar_select %p4124, %s23, 1
      %p4126 = scmp.lt.s32.totalorder %s24, 0
      %s4127 = scalar_select %p4126, %s24, 0
      %s4128 = smul.addr %s4125, 32
      %s4129 = sadd.s32 %s4127, %s4128
      %s4130 = smul.addr %s4129, 8
      %s4131 = scalar_lea.vmem %s5, %s4130
      %p4132 = scmp.lt.s32.totalorder %s23, 1
      %s4133 = scalar_select %p4132, %s23, 1
      %p4134 = scmp.lt.s32.totalorder %s24, 0
      %s4135 = scalar_select %p4134, %s24, 0
      %s4136 = sadd.s32 %s4135, %s4133
      %s4137 = smul.addr %s4136, 2
      %s4138 = scalar_lea.vmem %s6, %s4137
      %p4139 = scmp.lt.s32.totalorder %s23, 1
      %s4140 = scalar_select %p4139, %s23, 1
      %p4141 = scmp.lt.s32.totalorder %s24, 0
      %s4142 = scalar_select %p4141, %s24, 0
      %s4143 = sadd.s32 %s4142, %s4140
      %s4144 = smul.addr %s4143, 2
      %s4145 = scalar_lea.vmem %s7, %s4144
      // Predicated region
      $region41: #{resblk_forward.3} parent=39 // pred_check
        %p4146 = pneg %p171
      $region42: #{resblk_forward.3} parent=39 // pred_check_branch
        %4148 = sbr.rel (%p4146) target = $region44
      $region43: #{resblk_forward.3} parent=39 // pred_region
        _
      $region44: #{resblk_forward.3} parent=39 // pred_fallthru
        _
      // Predicated region
      $region45: #{resblk_forward.3} parent=39 // pred_check
        %p4149 = pneg %p199
      $region46: #{resblk_forward.3} parent=39 // pred_check_branch
        %4151 = sbr.rel (%p4149) target = $region48
      $region47: #{resblk_forward.3} parent=39 // pred_region
        _
      $region48: #{resblk_forward.3} parent=39 // pred_fallthru
        _
      // Predicated region
      $region49: #{resblk_forward.3} parent=39 // pred_check
        %p4152 = pneg %p227
      $region50: #{resblk_forward.3} parent=39 // pred_check_branch
        %4154 = sbr.rel (%p4152) target = $region52
      $region51: #{resblk_forward.3} parent=39 // pred_region
        _
      $region52: #{resblk_forward.3} parent=39 // pred_fallthru
        _
    $region40: #{resblk_forward.3} parent=5 // pred_fallthru
      _
    %p4155 = scmp.le.s32.totalorder 2, %s14
    // Predicated region
    $region53: #{resblk_forward.3} parent=5 // pred_check
      %p4156 = pneg %p4155
    $region54: #{resblk_forward.3} parent=5 // pred_check_branch
      %4158 = sbr.rel (%p4156) target = $region56
    $region55: #{resblk_forward.3} parent=5 // pred_region
      %s4159 = ssub.s32 %s14, 2
      // Predicated region
      $region57: #{resblk_forward.3} parent=55 // pred_check
        %p4160 = pneg %p177
      $region58: #{resblk_forward.3} parent=55 // pred_check_branch
        %4162 = sbr.rel (%p4160) target = $region60
      $region59: #{resblk_forward.3} parent=55 // pred_region
        %p4163 = scmp.lt.s32.totalorder %s25, 1
        %s4164 = scalar_select %p4163, %s25, 1
        %p4165 = scmp.lt.s32.totalorder %s26, 0
        %s4166 = scalar_select %p4165, %s26, 0
        %s4167 = smul.addr %s4164, 32
        %s4168 = sadd.s32 %s4166, %s4167
        %s4169 = smul.addr %s4168, 8
        %s4170 = scalar_lea.vmem %s5, %s4169
      $region60: #{resblk_forward.3} parent=55 // pred_fallthru
        _
      // Predicated region
      $region61: #{resblk_forward.3} parent=55 // pred_check
        %p4171 = pneg %p205
      $region62: #{resblk_forward.3} parent=55 // pred_check_branch
        %4173 = sbr.rel (%p4171) target = $region64
      $region63: #{resblk_forward.3} parent=55 // pred_region
        %p4174 = scmp.lt.s32.totalorder %s25, 1
        %s4175 = scalar_select %p4174, %s25, 1
        %p4176 = scmp.lt.s32.totalorder %s26, 0
        %s4177 = scalar_select %p4176, %s26, 0
        %s4178 = sadd.s32 %s4177, %s4175
        %s4179 = smul.addr %s4178, 2
        %s4180 = scalar_lea.vmem %s6, %s4179
      $region64: #{resblk_forward.3} parent=55 // pred_fallthru
        _
      // Predicated region
      $region65: #{resblk_forward.3} parent=55 // pred_check
        %p4181 = pneg %p233
      $region66: #{resblk_forward.3} parent=55 // pred_check_branch
        %4183 = sbr.rel (%p4181) target = $region68
      $region67: #{resblk_forward.3} parent=55 // pred_region
        %p4184 = scmp.lt.s32.totalorder %s25, 1
        %s4185 = scalar_select %p4184, %s25, 1
        %p4186 = scmp.lt.s32.totalorder %s26, 0
        %s4187 = scalar_select %p4186, %s26, 0
        %s4188 = sadd.s32 %s4187, %s4185
        %s4189 = smul.addr %s4188, 2
        %s4190 = scalar_lea.vmem %s7, %s4189
      $region68: #{resblk_forward.3} parent=55 // pred_fallthru
        _
    $region56: #{resblk_forward.3} parent=5 // pred_fallthru
      _
  $region6: #{resblk_forward.3} parent=0 // loop_footer
    %s18 = sadd.s32 1, %s14
  $region7: #{resblk_forward.3} parent=0 // loop_footer_branch
    %13 = sbr.rel target = $region3
  $region8: #{resblk_forward.3} parent=0 // loop_exit
    _

</llo_original>
